<compile_context>
chip_gen: v6e
topology: v6e:2x2x1
jax: 0.10.0
libtpu: 0.0.40
codegen_flags: <defaults>
</compile_context>

<pallas_src>
import functools

import jax
import jax.numpy as jnp
from jax import lax
from jax.experimental import pallas as pl
from jax.experimental.pallas import tpu as pltpu


def _round_up(n, m):
    return ((n + m - 1) // m) * m


def _pad_to(a, shape):
    return jnp.pad(a, [(0, s - d) for d, s in zip(a.shape, shape)])


def _vmem_limit_bytes():
    # Use most of physical VMEM (128 MiB v5e/v6e, 64 MiB v7x) instead of the
    # 32 MiB scoped default; leave headroom for compiler-internal scratch.
    try:
        cap = int(pltpu.get_tpu_info().vmem_capacity_bytes)
    except Exception:
        cap = 64 * 1024 * 1024
    cap = max(32 * 1024 * 1024, min(cap, 128 * 1024 * 1024))
    return (cap * 3) // 4


def _gate_dtype():
    # v6e/v7x have bf16 VPU/EUP paths -> bf16 transcendentals roughly halve the
    # serial per-step gate tail.  v5e (and older) do not: keep gate math f32.
    try:
        kind = jax.devices()[0].device_kind.lower()
    except Exception:
        return jnp.float32
    if any(tag in kind for tag in ("v6", "v7", "7x")):
        return jnp.bfloat16
    return jnp.float32


# --------------------------------------------------------------------------- #
# Fused kernel: per-chunk x@W_ih projection + serial LSTM recurrence + fc head
# --------------------------------------------------------------------------- #
def lstm_kernel(x_ref,     # (t_chunk, Bb, I)   f32   (pipelined over time chunks)
                wih_ref,   # (I, 4Hp)           bf16  (resident)
                whh_ref,   # (Hp, 4Hp)          bf16  (resident)
                b_ref,     # (1, 4Hp)           f32   (resident)
                wfc_ref,   # (Hp, Op)           bf16  (resident)
                bfc_ref,   # (1, Op)            f32   (resident)
                out_ref,   # (Bb, Op)           f32
                h_ref,     # (Bb, Hp)           bf16 scratch (shadow of h)
                c_ref,     # (Bb, Hp)           f32  scratch
                xg_ref,    # (t_chunk, Bb, 4Hp) f32  scratch (chunk's x-gates)
                *, seq_len, gate_dtype, time_padded, conservative):
    tc = pl.program_id(1)
    n_tc = pl.num_programs(1)
    t_chunk, block_b, in_sz = x_ref.shape
    Hp = whh_ref.shape[0]

    @pl.when(tc == 0)
    def _init():
        h_ref[...] = jnp.zeros_like(h_ref)
        c_ref[...] = jnp.zeros_like(c_ref)

    if not conservative:
        # Chunk-level input projection: one (t_chunk*Bb, I) @ (I, 4Hp) MXU push
        # per chunk, off the serial critical path.  Bias add stays f32.
        x_flat = x_ref[...].reshape(t_chunk * block_b, in_sz).astype(jnp.bfloat16)
        xg_ref[...] = (
            jnp.dot(x_flat, wih_ref[...], preferred_element_type=jnp.float32)
            + b_ref[...]
        ).reshape(t_chunk, block_b, 4 * Hp)

    def x_gates(s):
        if conservative:
            # Fallback path: per-step projection (previously-validated shape).
            return (jnp.dot(x_ref[s].astype(jnp.bfloat16), wih_ref[...],
                            preferred_element_type=jnp.float32) + b_ref[...])
        return xg_ref[s]

    def step(s, carry):
        # Only h @ W_hh (plus the gate tail) is on the per-step serial path.
        gates = (x_gates(s)
                 + jnp.dot(h_ref[...], whh_ref[...],
                           preferred_element_type=jnp.float32)
                 ).astype(gate_dtype)
        i_g = jax.nn.sigmoid(gates[:, 0 * Hp:1 * Hp])
        f_g = jax.nn.sigmoid(gates[:, 1 * Hp:2 * Hp])
        g_g = jnp.tanh(gates[:, 2 * Hp:3 * Hp])
        o_g = jax.nn.sigmoid(gates[:, 3 * Hp:4 * Hp])
        # c accumulates in f32 regardless of gate_dtype.
        c_new = (f_g.astype(jnp.float32) * c_ref[...]
                 + (i_g * g_g).astype(jnp.float32))
        h_new = o_g * jnp.tanh(c_new.astype(gate_dtype))

        def commit():
            c_ref[...] = c_new
            h_ref[...] = h_new.astype(jnp.bfloat16)

        if time_padded:
            # Zero-padded timesteps must never advance the LSTM state.
            pl.when(tc * t_chunk + s < seq_len)(commit)
        else:
            commit()
        return carry

    if conservative:
        for s in range(t_chunk):
            step(s, 0)
    else:
        lax.fori_loop(0, t_chunk, step, 0, unroll=True)

    @pl.when(tc == n_tc - 1)
    def _head():
        out_ref[...] = (
            jnp.dot(h_ref[...], wfc_ref[...],
                    preferred_element_type=jnp.float32)
            + bfc_ref[...]
        )


# --------------------------------------------------------------------------- #
# Wrapper
# --------------------------------------------------------------------------- #
def lstm_model_forward(x, params, *, conservative=False):
    """x: (B, T, I) f32. Returns (B, O) f32, matching LSTMModel.forward."""
    B, T, I = x.shape
    w_ih, w_hh, b_ih, b_hh, w_fc, b_fc = (
        params["w_ih"], params["w_hh"], params["b_ih"],
        params["b_hh"], params["w_fc"], params["b_fc"])
    H = w_hh.shape[1]
    O = w_fc.shape[0]

    Hp = _round_up(H, 128)      # lane-aligned gate blocks
    Op = _round_up(O, 128)      # lane-dense, unmasked output store
    G = 4 * Hp

    # Batch blocking: aim for nb >= 2 so the "parallel" batch axis can shard
    # across both v7x TensorCores; cap at 128 (native MXU tile), sublane-align.
    block_b = min(128, max(8, _round_up((B + 1) // 2, 8)))
    Bp = _round_up(max(B, block_b), block_b)
    nb = Bp // block_b

    # Time chunking: 8-16 steps per grid step amortizes per-grid-step overhead
    # on the serial axis; padded steps are masked in-kernel.
    t_chunk = min(16, _round_up(T, 8))
    Tp = _round_up(T, t_chunk)
    nt = Tp // t_chunk
    time_padded = Tp != T

    gate_dtype = jnp.float32 if conservative else _gate_dtype()

    # --- weight/bias repacking (PyTorch gate order [i, f, g, o]) ---
    wih_p = jnp.transpose(
        _pad_to(w_ih.reshape(4, H, I), (4, Hp, I)), (2, 0, 1)
    ).reshape(I, G).astype(jnp.bfloat16)                                 # (I, 4Hp)
    whh_p = jnp.transpose(
        _pad_to(w_hh.reshape(4, H, H), (4, Hp, Hp)), (2, 0, 1)
    ).reshape(Hp, G).astype(jnp.bfloat16)                                # (Hp, 4Hp)
    b_p = _pad_to((b_ih + b_hh).reshape(4, H), (4, Hp)
                  ).reshape(1, G).astype(jnp.float32)                    # (1, 4Hp)
    wfc_p = _pad_to(jnp.transpose(w_fc), (Hp, Op)).astype(jnp.bfloat16)  # (Hp, Op)
    bfc_p = _pad_to(b_fc.reshape(1, O), (1, Op)).astype(jnp.float32)     # (1, Op)

    # Time-major x so each timestep inside the kernel is a leading-dim view.
    # Zero time-padding is safe: padded steps never commit to h/c.
    x_p = _pad_to(jnp.transpose(x.astype(jnp.float32), (1, 0, 2)), (Tp, Bp, I))

    def resident(shape, index_map):
        # Constant-index (resident) weights: single pipeline buffer halves
        # their VMEM footprint (matters for large H on v7x's 64 MiB VMEM).
        if conservative:
            return pl.BlockSpec(shape, index_map)
        return pl.BlockSpec(shape, index_map, pipeline_mode=pl.Buffered(1))

    kernel = functools.partial(
        lstm_kernel, seq_len=T, gate_dtype=gate_dtype,
        time_padded=time_padded, conservative=conservative)

    out_full = pl.pallas_call(
        kernel,
        out_shape=jax.ShapeDtypeStruct((Bp, Op), jnp.float32),
        grid=(nb, nt),
        in_specs=[
            pl.BlockSpec((t_chunk, block_b, I), lambda b, tc: (tc, b, 0)),
            resident((I, G), lambda b, tc: (0, 0)),
            resident((Hp, G), lambda b, tc: (0, 0)),
            resident((1, G), lambda b, tc: (0, 0)),
            resident((Hp, Op), lambda b, tc: (0, 0)),
            resident((1, Op), lambda b, tc: (0, 0)),
        ],
        out_specs=pl.BlockSpec((block_b, Op), lambda b, tc: (b, 0)),
        scratch_shapes=[
            pltpu.VMEM((block_b, Hp), jnp.bfloat16),          # h (bf16 shadow)
            pltpu.VMEM((block_b, Hp), jnp.float32),           # c
            pltpu.VMEM((t_chunk, block_b, G), jnp.float32),   # chunk x-gates
        ],
        compiler_params=pltpu.CompilerParams(
            dimension_semantics=("parallel", "arbitrary"),
            vmem_limit_bytes=_vmem_limit_bytes()),
    )(x_p, wih_p, whh_p, b_p, wfc_p, bfc_p)

    return out_full[:B, :O]


# --------------------------------------------------------------------------- #
# Pure-JAX f32 reference (PyTorch semantics) for verification
# --------------------------------------------------------------------------- #
def lstm_model_reference(x, params):
    w_ih, w_hh, b_ih, b_hh, w_fc, b_fc = (
        params["w_ih"], params["w_hh"], params["b_ih"],
        params["b_hh"], params["w_fc"], params["b_fc"])
    B, T, I = x.shape
    H = w_hh.shape[1]

    def cell(carry, x_t):
        h, c = carry
        gates = x_t @ w_ih.T + h @ w_hh.T + b_ih + b_hh
        i_g = jax.nn.sigmoid(gates[:, 0 * H:1 * H])
        f_g = jax.nn.sigmoid(gates[:, 1 * H:2 * H])
        g_g = jnp.tanh(gates[:, 2 * H:3 * H])
        o_g = jax.nn.sigmoid(gates[:, 3 * H:4 * H])
        c_new = f_g * c + i_g * g_g
        h_new = o_g * jnp.tanh(c_new)
        return (h_new, c_new), h_new

    h0 = jnp.zeros((B, H), jnp.float32)
    c0 = jnp.zeros((B, H), jnp.float32)
    (h_T, _), _ = lax.scan(cell, (h0, c0), jnp.transpose(x, (1, 0, 2)))
    return h_T @ w_fc.T + b_fc


def init_params(key, input_size, hidden_size, output_size):
    """U(-1/sqrt(H), 1/sqrt(H)) init, matching PyTorch's convention."""
    ks = jax.random.split(key, 6)
    k_lstm = 1.0 / jnp.sqrt(hidden_size)
    k_fc = 1.0 / jnp.sqrt(hidden_size)
    u = lambda k, shape, s: jax.random.uniform(k, shape, jnp.float32, -s, s)
    return {
        "w_ih": u(ks[0], (4 * hidden_size, input_size), k_lstm),
        "w_hh": u(ks[1], (4 * hidden_size, hidden_size), k_lstm),
        "b_ih": u(ks[2], (4 * hidden_size,), k_lstm),
        "b_hh": u(ks[3], (4 * hidden_size,), k_lstm),
        "w_fc": u(ks[4], (output_size, hidden_size), k_fc),
        "b_fc": u(ks[5], (output_size,), k_fc),
    }


if __name__ == "__main__":
    B, T, I, H, O = 2, 8, 16, 32, 4

    key = jax.random.PRNGKey(0)
    k_x, k_p = jax.random.split(key)
    x = jax.random.normal(k_x, (B, T, I), jnp.float32)
    params = init_params(k_p, I, H, O)

    try:
        out = jax.block_until_ready(jax.jit(lstm_model_forward)(x, params))
    except Exception:
        # Conservative fallback (f32 gates, default double-buffered weights,
        # per-step projection, static unroll) if the optimized configuration
        # fails to lower on this jax/libtpu combination.
        out = jax.block_until_ready(
            jax.jit(functools.partial(lstm_model_forward, conservative=True))(
                x, params))

    ref = jax.block_until_ready(lstm_model_reference(x, params))
    assert out.shape == (B, O), out.shape
    # bf16 MXU inputs (+ bf16 gate transcendentals on v6e/v7x) vs. a pure-f32
    # reference; error compounds over T, hence the modest tolerance.
    err = float(jnp.max(jnp.abs(out - ref)))
    assert jnp.allclose(out, ref, atol=5e-2, rtol=5e-2), (err, out, ref)
    print("KERNEL_OK")
</pallas_src>

<mosaic_0001>
module attributes {stable_mosaic.version = 11 : i64} {
  func.func @lstm_kernel(%arg0: i32, %arg1: i32, %arg2: memref<8x8x16xf32, #tpu.memory_space<vmem>>, %arg3: memref<16x512xbf16, #tpu.memory_space<vmem>>, %arg4: memref<128x512xbf16, #tpu.memory_space<vmem>>, %arg5: memref<1x512xf32, #tpu.memory_space<vmem>>, %arg6: memref<128x128xbf16, #tpu.memory_space<vmem>>, %arg7: memref<1x128xf32, #tpu.memory_space<vmem>>, %arg8: memref<8x128xf32, #tpu.memory_space<vmem>>, %arg9: memref<8x128xbf16, #tpu.memory_space<vmem>>, %arg10: memref<8x128xf32, #tpu.memory_space<vmem>>, %arg11: memref<8x8x512xf32, #tpu.memory_space<vmem>>) attributes {dimension_semantics = [#tpu.dimension_semantics<parallel>, #tpu.dimension_semantics<arbitrary>], iteration_bounds = array<i64: 1, 1>, scalar_prefetch = 0 : i64, scratch_operands = 3 : i64, tpu.core_type = #tpu.core_type<tc>, window_params = [{transform_indices = @transform_0, window_bounds = array<i64: 8, 8, 16>}, {pipeline_mode = #tpu.pipeline_mode<synchronous>, transform_indices = @transform_1, window_bounds = array<i64: 16, 512>}, {pipeline_mode = #tpu.pipeline_mode<synchronous>, transform_indices = @transform_2, window_bounds = array<i64: 128, 512>}, {pipeline_mode = #tpu.pipeline_mode<synchronous>, transform_indices = @transform_3, window_bounds = array<i64: 1, 512>}, {pipeline_mode = #tpu.pipeline_mode<synchronous>, transform_indices = @transform_4, window_bounds = array<i64: 128, 128>}, {pipeline_mode = #tpu.pipeline_mode<synchronous>, transform_indices = @transform_5, window_bounds = array<i64: 1, 128>}, {transform_indices = @transform_6, window_bounds = array<i64: 8, 128>}]} {
    %c0_i32 = arith.constant 0 : i32
    %0 = arith.cmpi eq, %arg1, %c0_i32 : i32
    %1 = arith.extui %0 : i1 to i32
    %c0_i32_0 = arith.constant 0 : i32
    %2 = arith.cmpi ne, %1, %c0_i32_0 : i32
    scf.if %2 {
      %cst_141 = arith.constant 0.000000e+00 : bf16
      %304 = vector.broadcast %cst_141 : bf16 to vector<8x128xbf16>
      %c0_142 = arith.constant 0 : index
      %c0_143 = arith.constant 0 : index
      %305 = vector.load %arg9[%c0_142, %c0_143] : memref<8x128xbf16, #tpu.memory_space<vmem>>, vector<8x128xbf16>
      tpu.vector_store %arg9[%c0_142, %c0_143], %304 {strides = array<i32>} : memref<8x128xbf16, #tpu.memory_space<vmem>>, vector<8x128xbf16>,
      %cst_144 = arith.constant 0.000000e+00 : f32
      %306 = vector.broadcast %cst_144 : f32 to vector<8x128xf32>
      %c0_145 = arith.constant 0 : index
      %c0_146 = arith.constant 0 : index
      %307 = vector.load %arg10[%c0_145, %c0_146] : memref<8x128xf32, #tpu.memory_space<vmem>>, vector<8x128xf32>
      tpu.vector_store %arg10[%c0_145, %c0_146], %306 {strides = array<i32>} : memref<8x128xf32, #tpu.memory_space<vmem>>, vector<8x128xf32>,
    } else {
    }
    %c0 = arith.constant 0 : index
    %c0_1 = arith.constant 0 : index
    %c0_2 = arith.constant 0 : index
    %3 = vector.load %arg2[%c0, %c0_1, %c0_2] : memref<8x8x16xf32, #tpu.memory_space<vmem>>, vector<8x8x16xf32>
    %4 = vector.shape_cast %3 : vector<8x8x16xf32> to vector<64x16xf32>
    %5 = arith.truncf %4 : vector<64x16xf32> to vector<64x16xbf16>
    %c0_3 = arith.constant 0 : index
    %c0_4 = arith.constant 0 : index
    %6 = vector.load %arg3[%c0_3, %c0_4] : memref<16x512xbf16, #tpu.memory_space<vmem>>, vector<16x512xbf16>
    %cst = arith.constant dense<0.000000e+00> : vector<64x512xf32>
    %7 = tpu.matmul %5, %6, %cst {dimension_numbers = #tpu.dot_dimension_numbers<[1], [0], [0], [1], [0, 0, 1, 1], [], []>} : vector<64x16xbf16>, vector<16x512xbf16>, vector<64x512xf32> -> vector<64x512xf32>
    %c0_5 = arith.constant 0 : index
    %c0_6 = arith.constant 0 : index
    %8 = vector.load %arg5[%c0_5, %c0_6] : memref<1x512xf32, #tpu.memory_space<vmem>>, vector<1x512xf32>
    %9 = vector.broadcast %8 : vector<1x512xf32> to vector<64x512xf32>
    %10 = arith.addf %7, %9 : vector<64x512xf32>
    %11 = vector.shape_cast %10 : vector<64x512xf32> to vector<8x8x512xf32>
    %c0_7 = arith.constant 0 : index
    %c0_8 = arith.constant 0 : index
    %c0_9 = arith.constant 0 : index
    %12 = vector.load %arg11[%c0_7, %c0_8, %c0_9] : memref<8x8x512xf32, #tpu.memory_space<vmem>>, vector<8x8x512xf32>
    tpu.vector_store %arg11[%c0_7, %c0_8, %c0_9], %11 {strides = array<i32>} : memref<8x8x512xf32, #tpu.memory_space<vmem>>, vector<8x8x512xf32>,
    %c0_i32_10 = arith.constant 0 : i32
    %13 = arith.index_cast %c0_i32_10 : i32 to index
    %c0_11 = arith.constant 0 : index
    %c0_12 = arith.constant 0 : index
    %14 = vector.load %arg11[%13, %c0_11, %c0_12] : memref<8x8x512xf32, #tpu.memory_space<vmem>>, vector<1x8x512xf32>
    %15 = vector.shape_cast %14 : vector<1x8x512xf32> to vector<8x512xf32>
    %c0_13 = arith.constant 0 : index
    %c0_14 = arith.constant 0 : index
    %16 = vector.load %arg9[%c0_13, %c0_14] : memref<8x128xbf16, #tpu.memory_space<vmem>>, vector<8x128xbf16>
    %c0_15 = arith.constant 0 : index
    %c0_16 = arith.constant 0 : index
    %17 = vector.load %arg4[%c0_15, %c0_16] : memref<128x512xbf16, #tpu.memory_space<vmem>>, vector<128x512xbf16>
    %cst_17 = arith.constant dense<0.000000e+00> : vector<8x512xf32>
    %18 = tpu.matmul %16, %17, %cst_17 {dimension_numbers = #tpu.dot_dimension_numbers<[1], [0], [0], [1], [0, 0, 1, 1], [], []>} : vector<8x128xbf16>, vector<128x512xbf16>, vector<8x512xf32> -> vector<8x512xf32>
    %19 = arith.addf %15, %18 : vector<8x512xf32>
    %20 = vector.extract_strided_slice %19 {offsets = [0, 0], sizes = [8, 128], strides = [1, 1]} : vector<8x512xf32> to vector<8x128xf32>
    %21 = arith.negf %20 : vector<8x128xf32>
    %22 = math.exp %21 : vector<8x128xf32>
    %cst_18 = arith.constant 1.000000e+00 : f32
    %23 = vector.broadcast %cst_18 : f32 to vector<8x128xf32>
    %24 = arith.addf %23, %22 : vector<8x128xf32>
    %25 = arith.divf %23, %24 : vector<8x128xf32>
    %26 = vector.extract_strided_slice %19 {offsets = [0, 128], sizes = [8, 128], strides = [1, 1]} : vector<8x512xf32> to vector<8x128xf32>
    %27 = arith.negf %26 : vector<8x128xf32>
    %28 = math.exp %27 : vector<8x128xf32>
    %cst_19 = arith.constant 1.000000e+00 : f32
    %29 = vector.broadcast %cst_19 : f32 to vector<8x128xf32>
    %30 = arith.addf %29, %28 : vector<8x128xf32>
    %31 = arith.divf %29, %30 : vector<8x128xf32>
    %32 = vector.extract_strided_slice %19 {offsets = [0, 256], sizes = [8, 128], strides = [1, 1]} : vector<8x512xf32> to vector<8x128xf32>
    %33 = math.tanh %32 : vector<8x128xf32>
    %34 = vector.extract_strided_slice %19 {offsets = [0, 384], sizes = [8, 128], strides = [1, 1]} : vector<8x512xf32> to vector<8x128xf32>
    %35 = arith.negf %34 : vector<8x128xf32>
    %36 = math.exp %35 : vector<8x128xf32>
    %cst_20 = arith.constant 1.000000e+00 : f32
    %37 = vector.broadcast %cst_20 : f32 to vector<8x128xf32>
    %38 = arith.addf %37, %36 : vector<8x128xf32>
    %39 = arith.divf %37, %38 : vector<8x128xf32>
    %c0_21 = arith.constant 0 : index
    %c0_22 = arith.constant 0 : index
    %40 = vector.load %arg10[%c0_21, %c0_22] : memref<8x128xf32, #tpu.memory_space<vmem>>, vector<8x128xf32>
    %41 = arith.mulf %31, %40 : vector<8x128xf32>
    %42 = arith.mulf %25, %33 : vector<8x128xf32>
    %43 = arith.addf %41, %42 : vector<8x128xf32>
    %44 = math.tanh %43 : vector<8x128xf32>
    %45 = arith.mulf %39, %44 : vector<8x128xf32>
    %c0_23 = arith.constant 0 : index
    %c0_24 = arith.constant 0 : index
    %46 = vector.load %arg10[%c0_23, %c0_24] : memref<8x128xf32, #tpu.memory_space<vmem>>, vector<8x128xf32>
    tpu.vector_store %arg10[%c0_23, %c0_24], %43 {strides = array<i32>} : memref<8x128xf32, #tpu.memory_space<vmem>>, vector<8x128xf32>,
    %47 = arith.truncf %45 : vector<8x128xf32> to vector<8x128xbf16>
    %c0_25 = arith.constant 0 : index
    %c0_26 = arith.constant 0 : index
    %48 = vector.load %arg9[%c0_25, %c0_26] : memref<8x128xbf16, #tpu.memory_space<vmem>>, vector<8x128xbf16>
    tpu.vector_store %arg9[%c0_25, %c0_26], %47 {strides = array<i32>} : memref<8x128xbf16, #tpu.memory_space<vmem>>, vector<8x128xbf16>,
    %c1_i32 = arith.constant 1 : i32
    %49 = arith.index_cast %c1_i32 : i32 to index
    %c0_27 = arith.constant 0 : index
    %c0_28 = arith.constant 0 : index
    %50 = vector.load %arg11[%49, %c0_27, %c0_28] : memref<8x8x512xf32, #tpu.memory_space<vmem>>, vector<1x8x512xf32>
    %51 = vector.shape_cast %50 : vector<1x8x512xf32> to vector<8x512xf32>
    %c0_29 = arith.constant 0 : index
    %c0_30 = arith.constant 0 : index
    %52 = vector.load %arg9[%c0_29, %c0_30] : memref<8x128xbf16, #tpu.memory_space<vmem>>, vector<8x128xbf16>
    %c0_31 = arith.constant 0 : index
    %c0_32 = arith.constant 0 : index
    %53 = vector.load %arg4[%c0_31, %c0_32] : memref<128x512xbf16, #tpu.memory_space<vmem>>, vector<128x512xbf16>
    %cst_33 = arith.constant dense<0.000000e+00> : vector<8x512xf32>
    %54 = tpu.matmul %52, %53, %cst_33 {dimension_numbers = #tpu.dot_dimension_numbers<[1], [0], [0], [1], [0, 0, 1, 1], [], []>} : vector<8x128xbf16>, vector<128x512xbf16>, vector<8x512xf32> -> vector<8x512xf32>
    %55 = arith.addf %51, %54 : vector<8x512xf32>
    %56 = vector.extract_strided_slice %55 {offsets = [0, 0], sizes = [8, 128], strides = [1, 1]} : vector<8x512xf32> to vector<8x128xf32>
    %57 = arith.negf %56 : vector<8x128xf32>
    %58 = math.exp %57 : vector<8x128xf32>
    %cst_34 = arith.constant 1.000000e+00 : f32
    %59 = vector.broadcast %cst_34 : f32 to vector<8x128xf32>
    %60 = arith.addf %59, %58 : vector<8x128xf32>
    %61 = arith.divf %59, %60 : vector<8x128xf32>
    %62 = vector.extract_strided_slice %55 {offsets = [0, 128], sizes = [8, 128], strides = [1, 1]} : vector<8x512xf32> to vector<8x128xf32>
    %63 = arith.negf %62 : vector<8x128xf32>
    %64 = math.exp %63 : vector<8x128xf32>
    %cst_35 = arith.constant 1.000000e+00 : f32
    %65 = vector.broadcast %cst_35 : f32 to vector<8x128xf32>
    %66 = arith.addf %65, %64 : vector<8x128xf32>
    %67 = arith.divf %65, %66 : vector<8x128xf32>
    %68 = vector.extract_strided_slice %55 {offsets = [0, 256], sizes = [8, 128], strides = [1, 1]} : vector<8x512xf32> to vector<8x128xf32>
    %69 = math.tanh %68 : vector<8x128xf32>
    %70 = vector.extract_strided_slice %55 {offsets = [0, 384], sizes = [8, 128], strides = [1, 1]} : vector<8x512xf32> to vector<8x128xf32>
    %71 = arith.negf %70 : vector<8x128xf32>
    %72 = math.exp %71 : vector<8x128xf32>
    %cst_36 = arith.constant 1.000000e+00 : f32
    %73 = vector.broadcast %cst_36 : f32 to vector<8x128xf32>
    %74 = arith.addf %73, %72 : vector<8x128xf32>
    %75 = arith.divf %73, %74 : vector<8x128xf32>
    %c0_37 = arith.constant 0 : index
    %c0_38 = arith.constant 0 : index
    %76 = vector.load %arg10[%c0_37, %c0_38] : memref<8x128xf32, #tpu.memory_space<vmem>>, vector<8x128xf32>
    %77 = arith.mulf %67, %76 : vector<8x128xf32>
    %78 = arith.mulf %61, %69 : vector<8x128xf32>
    %79 = arith.addf %77, %78 : vector<8x128xf32>
    %80 = math.tanh %79 : vector<8x128xf32>
    %81 = arith.mulf %75, %80 : vector<8x128xf32>
    %c0_39 = arith.constant 0 : index
    %c0_40 = arith.constant 0 : index
    %82 = vector.load %arg10[%c0_39, %c0_40] : memref<8x128xf32, #tpu.memory_space<vmem>>, vector<8x128xf32>
    tpu.vector_store %arg10[%c0_39, %c0_40], %79 {strides = array<i32>} : memref<8x128xf32, #tpu.memory_space<vmem>>, vector<8x128xf32>,
    %83 = arith.truncf %81 : vector<8x128xf32> to vector<8x128xbf16>
    %c0_41 = arith.constant 0 : index
    %c0_42 = arith.constant 0 : index
    %84 = vector.load %arg9[%c0_41, %c0_42] : memref<8x128xbf16, #tpu.memory_space<vmem>>, vector<8x128xbf16>
    tpu.vector_store %arg9[%c0_41, %c0_42], %83 {strides = array<i32>} : memref<8x128xbf16, #tpu.memory_space<vmem>>, vector<8x128xbf16>,
    %c2_i32 = arith.constant 2 : i32
    %85 = arith.index_cast %c2_i32 : i32 to index
    %c0_43 = arith.constant 0 : index
    %c0_44 = arith.constant 0 : index
    %86 = vector.load %arg11[%85, %c0_43, %c0_44] : memref<8x8x512xf32, #tpu.memory_space<vmem>>, vector<1x8x512xf32>
    %87 = vector.shape_cast %86 : vector<1x8x512xf32> to vector<8x512xf32>
    %c0_45 = arith.constant 0 : index
    %c0_46 = arith.constant 0 : index
    %88 = vector.load %arg9[%c0_45, %c0_46] : memref<8x128xbf16, #tpu.memory_space<vmem>>, vector<8x128xbf16>
    %c0_47 = arith.constant 0 : index
    %c0_48 = arith.constant 0 : index
    %89 = vector.load %arg4[%c0_47, %c0_48] : memref<128x512xbf16, #tpu.memory_space<vmem>>, vector<128x512xbf16>
    %cst_49 = arith.constant dense<0.000000e+00> : vector<8x512xf32>
    %90 = tpu.matmul %88, %89, %cst_49 {dimension_numbers = #tpu.dot_dimension_numbers<[1], [0], [0], [1], [0, 0, 1, 1], [], []>} : vector<8x128xbf16>, vector<128x512xbf16>, vector<8x512xf32> -> vector<8x512xf32>
    %91 = arith.addf %87, %90 : vector<8x512xf32>
    %92 = vector.extract_strided_slice %91 {offsets = [0, 0], sizes = [8, 128], strides = [1, 1]} : vector<8x512xf32> to vector<8x128xf32>
    %93 = arith.negf %92 : vector<8x128xf32>
    %94 = math.exp %93 : vector<8x128xf32>
    %cst_50 = arith.constant 1.000000e+00 : f32
    %95 = vector.broadcast %cst_50 : f32 to vector<8x128xf32>
    %96 = arith.addf %95, %94 : vector<8x128xf32>
    %97 = arith.divf %95, %96 : vector<8x128xf32>
    %98 = vector.extract_strided_slice %91 {offsets = [0, 128], sizes = [8, 128], strides = [1, 1]} : vector<8x512xf32> to vector<8x128xf32>
    %99 = arith.negf %98 : vector<8x128xf32>
    %100 = math.exp %99 : vector<8x128xf32>
    %cst_51 = arith.constant 1.000000e+00 : f32
    %101 = vector.broadcast %cst_51 : f32 to vector<8x128xf32>
    %102 = arith.addf %101, %100 : vector<8x128xf32>
    %103 = arith.divf %101, %102 : vector<8x128xf32>
    %104 = vector.extract_strided_slice %91 {offsets = [0, 256], sizes = [8, 128], strides = [1, 1]} : vector<8x512xf32> to vector<8x128xf32>
    %105 = math.tanh %104 : vector<8x128xf32>
    %106 = vector.extract_strided_slice %91 {offsets = [0, 384], sizes = [8, 128], strides = [1, 1]} : vector<8x512xf32> to vector<8x128xf32>
    %107 = arith.negf %106 : vector<8x128xf32>
    %108 = math.exp %107 : vector<8x128xf32>
    %cst_52 = arith.constant 1.000000e+00 : f32
    %109 = vector.broadcast %cst_52 : f32 to vector<8x128xf32>
    %110 = arith.addf %109, %108 : vector<8x128xf32>
    %111 = arith.divf %109, %110 : vector<8x128xf32>
    %c0_53 = arith.constant 0 : index
    %c0_54 = arith.constant 0 : index
    %112 = vector.load %arg10[%c0_53, %c0_54] : memref<8x128xf32, #tpu.memory_space<vmem>>, vector<8x128xf32>
    %113 = arith.mulf %103, %112 : vector<8x128xf32>
    %114 = arith.mulf %97, %105 : vector<8x128xf32>
    %115 = arith.addf %113, %114 : vector<8x128xf32>
    %116 = math.tanh %115 : vector<8x128xf32>
    %117 = arith.mulf %111, %116 : vector<8x128xf32>
    %c0_55 = arith.constant 0 : index
    %c0_56 = arith.constant 0 : index
    %118 = vector.load %arg10[%c0_55, %c0_56] : memref<8x128xf32, #tpu.memory_space<vmem>>, vector<8x128xf32>
    tpu.vector_store %arg10[%c0_55, %c0_56], %115 {strides = array<i32>} : memref<8x128xf32, #tpu.memory_space<vmem>>, vector<8x128xf32>,
    %119 = arith.truncf %117 : vector<8x128xf32> to vector<8x128xbf16>
    %c0_57 = arith.constant 0 : index
    %c0_58 = arith.constant 0 : index
    %120 = vector.load %arg9[%c0_57, %c0_58] : memref<8x128xbf16, #tpu.memory_space<vmem>>, vector<8x128xbf16>
    tpu.vector_store %arg9[%c0_57, %c0_58], %119 {strides = array<i32>} : memref<8x128xbf16, #tpu.memory_space<vmem>>, vector<8x128xbf16>,
    %c3_i32 = arith.constant 3 : i32
    %121 = arith.index_cast %c3_i32 : i32 to index
    %c0_59 = arith.constant 0 : index
    %c0_60 = arith.constant 0 : index
    %122 = vector.load %arg11[%121, %c0_59, %c0_60] : memref<8x8x512xf32, #tpu.memory_space<vmem>>, vector<1x8x512xf32>
    %123 = vector.shape_cast %122 : vector<1x8x512xf32> to vector<8x512xf32>
    %c0_61 = arith.constant 0 : index
    %c0_62 = arith.constant 0 : index
    %124 = vector.load %arg9[%c0_61, %c0_62] : memref<8x128xbf16, #tpu.memory_space<vmem>>, vector<8x128xbf16>
    %c0_63 = arith.constant 0 : index
    %c0_64 = arith.constant 0 : index
    %125 = vector.load %arg4[%c0_63, %c0_64] : memref<128x512xbf16, #tpu.memory_space<vmem>>, vector<128x512xbf16>
    %cst_65 = arith.constant dense<0.000000e+00> : vector<8x512xf32>
    %126 = tpu.matmul %124, %125, %cst_65 {dimension_numbers = #tpu.dot_dimension_numbers<[1], [0], [0], [1], [0, 0, 1, 1], [], []>} : vector<8x128xbf16>, vector<128x512xbf16>, vector<8x512xf32> -> vector<8x512xf32>
    %127 = arith.addf %123, %126 : vector<8x512xf32>
    %128 = vector.extract_strided_slice %127 {offsets = [0, 0], sizes = [8, 128], strides = [1, 1]} : vector<8x512xf32> to vector<8x128xf32>
    %129 = arith.negf %128 : vector<8x128xf32>
    %130 = math.exp %129 : vector<8x128xf32>
    %cst_66 = arith.constant 1.000000e+00 : f32
    %131 = vector.broadcast %cst_66 : f32 to vector<8x128xf32>
    %132 = arith.addf %131, %130 : vector<8x128xf32>
    %133 = arith.divf %131, %132 : vector<8x128xf32>
    %134 = vector.extract_strided_slice %127 {offsets = [0, 128], sizes = [8, 128], strides = [1, 1]} : vector<8x512xf32> to vector<8x128xf32>
    %135 = arith.negf %134 : vector<8x128xf32>
    %136 = math.exp %135 : vector<8x128xf32>
    %cst_67 = arith.constant 1.000000e+00 : f32
    %137 = vector.broadcast %cst_67 : f32 to vector<8x128xf32>
    %138 = arith.addf %137, %136 : vector<8x128xf32>
    %139 = arith.divf %137, %138 : vector<8x128xf32>
    %140 = vector.extract_strided_slice %127 {offsets = [0, 256], sizes = [8, 128], strides = [1, 1]} : vector<8x512xf32> to vector<8x128xf32>
    %141 = math.tanh %140 : vector<8x128xf32>
    %142 = vector.extract_strided_slice %127 {offsets = [0, 384], sizes = [8, 128], strides = [1, 1]} : vector<8x512xf32> to vector<8x128xf32>
    %143 = arith.negf %142 : vector<8x128xf32>
    %144 = math.exp %143 : vector<8x128xf32>
    %cst_68 = arith.constant 1.000000e+00 : f32
    %145 = vector.broadcast %cst_68 : f32 to vector<8x128xf32>
    %146 = arith.addf %145, %144 : vector<8x128xf32>
    %147 = arith.divf %145, %146 : vector<8x128xf32>
    %c0_69 = arith.constant 0 : index
    %c0_70 = arith.constant 0 : index
    %148 = vector.load %arg10[%c0_69, %c0_70] : memref<8x128xf32, #tpu.memory_space<vmem>>, vector<8x128xf32>
    %149 = arith.mulf %139, %148 : vector<8x128xf32>
    %150 = arith.mulf %133, %141 : vector<8x128xf32>
    %151 = arith.addf %149, %150 : vector<8x128xf32>
    %152 = math.tanh %151 : vector<8x128xf32>
    %153 = arith.mulf %147, %152 : vector<8x128xf32>
    %c0_71 = arith.constant 0 : index
    %c0_72 = arith.constant 0 : index
    %154 = vector.load %arg10[%c0_71, %c0_72] : memref<8x128xf32, #tpu.memory_space<vmem>>, vector<8x128xf32>
    tpu.vector_store %arg10[%c0_71, %c0_72], %151 {strides = array<i32>} : memref<8x128xf32, #tpu.memory_space<vmem>>, vector<8x128xf32>,
    %155 = arith.truncf %153 : vector<8x128xf32> to vector<8x128xbf16>
    %c0_73 = arith.constant 0 : index
    %c0_74 = arith.constant 0 : index
    %156 = vector.load %arg9[%c0_73, %c0_74] : memref<8x128xbf16, #tpu.memory_space<vmem>>, vector<8x128xbf16>
    tpu.vector_store %arg9[%c0_73, %c0_74], %155 {strides = array<i32>} : memref<8x128xbf16, #tpu.memory_space<vmem>>, vector<8x128xbf16>,
    %c4_i32 = arith.constant 4 : i32
    %157 = arith.index_cast %c4_i32 : i32 to index
    %c0_75 = arith.constant 0 : index
    %c0_76 = arith.constant 0 : index
    %158 = vector.load %arg11[%157, %c0_75, %c0_76] : memref<8x8x512xf32, #tpu.memory_space<vmem>>, vector<1x8x512xf32>
    %159 = vector.shape_cast %158 : vector<1x8x512xf32> to vector<8x512xf32>
    %c0_77 = arith.constant 0 : index
    %c0_78 = arith.constant 0 : index
    %160 = vector.load %arg9[%c0_77, %c0_78] : memref<8x128xbf16, #tpu.memory_space<vmem>>, vector<8x128xbf16>
    %c0_79 = arith.constant 0 : index
    %c0_80 = arith.constant 0 : index
    %161 = vector.load %arg4[%c0_79, %c0_80] : memref<128x512xbf16, #tpu.memory_space<vmem>>, vector<128x512xbf16>
    %cst_81 = arith.constant dense<0.000000e+00> : vector<8x512xf32>
    %162 = tpu.matmul %160, %161, %cst_81 {dimension_numbers = #tpu.dot_dimension_numbers<[1], [0], [0], [1], [0, 0, 1, 1], [], []>} : vector<8x128xbf16>, vector<128x512xbf16>, vector<8x512xf32> -> vector<8x512xf32>
    %163 = arith.addf %159, %162 : vector<8x512xf32>
    %164 = vector.extract_strided_slice %163 {offsets = [0, 0], sizes = [8, 128], strides = [1, 1]} : vector<8x512xf32> to vector<8x128xf32>
    %165 = arith.negf %164 : vector<8x128xf32>
    %166 = math.exp %165 : vector<8x128xf32>
    %cst_82 = arith.constant 1.000000e+00 : f32
    %167 = vector.broadcast %cst_82 : f32 to vector<8x128xf32>
    %168 = arith.addf %167, %166 : vector<8x128xf32>
    %169 = arith.divf %167, %168 : vector<8x128xf32>
    %170 = vector.extract_strided_slice %163 {offsets = [0, 128], sizes = [8, 128], strides = [1, 1]} : vector<8x512xf32> to vector<8x128xf32>
    %171 = arith.negf %170 : vector<8x128xf32>
    %172 = math.exp %171 : vector<8x128xf32>
    %cst_83 = arith.constant 1.000000e+00 : f32
    %173 = vector.broadcast %cst_83 : f32 to vector<8x128xf32>
    %174 = arith.addf %173, %172 : vector<8x128xf32>
    %175 = arith.divf %173, %174 : vector<8x128xf32>
    %176 = vector.extract_strided_slice %163 {offsets = [0, 256], sizes = [8, 128], strides = [1, 1]} : vector<8x512xf32> to vector<8x128xf32>
    %177 = math.tanh %176 : vector<8x128xf32>
    %178 = vector.extract_strided_slice %163 {offsets = [0, 384], sizes = [8, 128], strides = [1, 1]} : vector<8x512xf32> to vector<8x128xf32>
    %179 = arith.negf %178 : vector<8x128xf32>
    %180 = math.exp %179 : vector<8x128xf32>
    %cst_84 = arith.constant 1.000000e+00 : f32
    %181 = vector.broadcast %cst_84 : f32 to vector<8x128xf32>
    %182 = arith.addf %181, %180 : vector<8x128xf32>
    %183 = arith.divf %181, %182 : vector<8x128xf32>
    %c0_85 = arith.constant 0 : index
    %c0_86 = arith.constant 0 : index
    %184 = vector.load %arg10[%c0_85, %c0_86] : memref<8x128xf32, #tpu.memory_space<vmem>>, vector<8x128xf32>
    %185 = arith.mulf %175, %184 : vector<8x128xf32>
    %186 = arith.mulf %169, %177 : vector<8x128xf32>
    %187 = arith.addf %185, %186 : vector<8x128xf32>
    %188 = math.tanh %187 : vector<8x128xf32>
    %189 = arith.mulf %183, %188 : vector<8x128xf32>
    %c0_87 = arith.constant 0 : index
    %c0_88 = arith.constant 0 : index
    %190 = vector.load %arg10[%c0_87, %c0_88] : memref<8x128xf32, #tpu.memory_space<vmem>>, vector<8x128xf32>
    tpu.vector_store %arg10[%c0_87, %c0_88], %187 {strides = array<i32>} : memref<8x128xf32, #tpu.memory_space<vmem>>, vector<8x128xf32>,
    %191 = arith.truncf %189 : vector<8x128xf32> to vector<8x128xbf16>
    %c0_89 = arith.constant 0 : index
    %c0_90 = arith.constant 0 : index
    %192 = vector.load %arg9[%c0_89, %c0_90] : memref<8x128xbf16, #tpu.memory_space<vmem>>, vector<8x128xbf16>
    tpu.vector_store %arg9[%c0_89, %c0_90], %191 {strides = array<i32>} : memref<8x128xbf16, #tpu.memory_space<vmem>>, vector<8x128xbf16>,
    %c5_i32 = arith.constant 5 : i32
    %193 = arith.index_cast %c5_i32 : i32 to index
    %c0_91 = arith.constant 0 : index
    %c0_92 = arith.constant 0 : index
    %194 = vector.load %arg11[%193, %c0_91, %c0_92] : memref<8x8x512xf32, #tpu.memory_space<vmem>>, vector<1x8x512xf32>
    %195 = vector.shape_cast %194 : vector<1x8x512xf32> to vector<8x512xf32>
    %c0_93 = arith.constant 0 : index
    %c0_94 = arith.constant 0 : index
    %196 = vector.load %arg9[%c0_93, %c0_94] : memref<8x128xbf16, #tpu.memory_space<vmem>>, vector<8x128xbf16>
    %c0_95 = arith.constant 0 : index
    %c0_96 = arith.constant 0 : index
    %197 = vector.load %arg4[%c0_95, %c0_96] : memref<128x512xbf16, #tpu.memory_space<vmem>>, vector<128x512xbf16>
    %cst_97 = arith.constant dense<0.000000e+00> : vector<8x512xf32>
    %198 = tpu.matmul %196, %197, %cst_97 {dimension_numbers = #tpu.dot_dimension_numbers<[1], [0], [0], [1], [0, 0, 1, 1], [], []>} : vector<8x128xbf16>, vector<128x512xbf16>, vector<8x512xf32> -> vector<8x512xf32>
    %199 = arith.addf %195, %198 : vector<8x512xf32>
    %200 = vector.extract_strided_slice %199 {offsets = [0, 0], sizes = [8, 128], strides = [1, 1]} : vector<8x512xf32> to vector<8x128xf32>
    %201 = arith.negf %200 : vector<8x128xf32>
    %202 = math.exp %201 : vector<8x128xf32>
    %cst_98 = arith.constant 1.000000e+00 : f32
    %203 = vector.broadcast %cst_98 : f32 to vector<8x128xf32>
    %204 = arith.addf %203, %202 : vector<8x128xf32>
    %205 = arith.divf %203, %204 : vector<8x128xf32>
    %206 = vector.extract_strided_slice %199 {offsets = [0, 128], sizes = [8, 128], strides = [1, 1]} : vector<8x512xf32> to vector<8x128xf32>
    %207 = arith.negf %206 : vector<8x128xf32>
    %208 = math.exp %207 : vector<8x128xf32>
    %cst_99 = arith.constant 1.000000e+00 : f32
    %209 = vector.broadcast %cst_99 : f32 to vector<8x128xf32>
    %210 = arith.addf %209, %208 : vector<8x128xf32>
    %211 = arith.divf %209, %210 : vector<8x128xf32>
    %212 = vector.extract_strided_slice %199 {offsets = [0, 256], sizes = [8, 128], strides = [1, 1]} : vector<8x512xf32> to vector<8x128xf32>
    %213 = math.tanh %212 : vector<8x128xf32>
    %214 = vector.extract_strided_slice %199 {offsets = [0, 384], sizes = [8, 128], strides = [1, 1]} : vector<8x512xf32> to vector<8x128xf32>
    %215 = arith.negf %214 : vector<8x128xf32>
    %216 = math.exp %215 : vector<8x128xf32>
    %cst_100 = arith.constant 1.000000e+00 : f32
    %217 = vector.broadcast %cst_100 : f32 to vector<8x128xf32>
    %218 = arith.addf %217, %216 : vector<8x128xf32>
    %219 = arith.divf %217, %218 : vector<8x128xf32>
    %c0_101 = arith.constant 0 : index
    %c0_102 = arith.constant 0 : index
    %220 = vector.load %arg10[%c0_101, %c0_102] : memref<8x128xf32, #tpu.memory_space<vmem>>, vector<8x128xf32>
    %221 = arith.mulf %211, %220 : vector<8x128xf32>
    %222 = arith.mulf %205, %213 : vector<8x128xf32>
    %223 = arith.addf %221, %222 : vector<8x128xf32>
    %224 = math.tanh %223 : vector<8x128xf32>
    %225 = arith.mulf %219, %224 : vector<8x128xf32>
    %c0_103 = arith.constant 0 : index
    %c0_104 = arith.constant 0 : index
    %226 = vector.load %arg10[%c0_103, %c0_104] : memref<8x128xf32, #tpu.memory_space<vmem>>, vector<8x128xf32>
    tpu.vector_store %arg10[%c0_103, %c0_104], %223 {strides = array<i32>} : memref<8x128xf32, #tpu.memory_space<vmem>>, vector<8x128xf32>,
    %227 = arith.truncf %225 : vector<8x128xf32> to vector<8x128xbf16>
    %c0_105 = arith.constant 0 : index
    %c0_106 = arith.constant 0 : index
    %228 = vector.load %arg9[%c0_105, %c0_106] : memref<8x128xbf16, #tpu.memory_space<vmem>>, vector<8x128xbf16>
    tpu.vector_store %arg9[%c0_105, %c0_106], %227 {strides = array<i32>} : memref<8x128xbf16, #tpu.memory_space<vmem>>, vector<8x128xbf16>,
    %c6_i32 = arith.constant 6 : i32
    %229 = arith.index_cast %c6_i32 : i32 to index
    %c0_107 = arith.constant 0 : index
    %c0_108 = arith.constant 0 : index
    %230 = vector.load %arg11[%229, %c0_107, %c0_108] : memref<8x8x512xf32, #tpu.memory_space<vmem>>, vector<1x8x512xf32>
    %231 = vector.shape_cast %230 : vector<1x8x512xf32> to vector<8x512xf32>
    %c0_109 = arith.constant 0 : index
    %c0_110 = arith.constant 0 : index
    %232 = vector.load %arg9[%c0_109, %c0_110] : memref<8x128xbf16, #tpu.memory_space<vmem>>, vector<8x128xbf16>
    %c0_111 = arith.constant 0 : index
    %c0_112 = arith.constant 0 : index
    %233 = vector.load %arg4[%c0_111, %c0_112] : memref<128x512xbf16, #tpu.memory_space<vmem>>, vector<128x512xbf16>
    %cst_113 = arith.constant dense<0.000000e+00> : vector<8x512xf32>
    %234 = tpu.matmul %232, %233, %cst_113 {dimension_numbers = #tpu.dot_dimension_numbers<[1], [0], [0], [1], [0, 0, 1, 1], [], []>} : vector<8x128xbf16>, vector<128x512xbf16>, vector<8x512xf32> -> vector<8x512xf32>
    %235 = arith.addf %231, %234 : vector<8x512xf32>
    %236 = vector.extract_strided_slice %235 {offsets = [0, 0], sizes = [8, 128], strides = [1, 1]} : vector<8x512xf32> to vector<8x128xf32>
    %237 = arith.negf %236 : vector<8x128xf32>
    %238 = math.exp %237 : vector<8x128xf32>
    %cst_114 = arith.constant 1.000000e+00 : f32
    %239 = vector.broadcast %cst_114 : f32 to vector<8x128xf32>
    %240 = arith.addf %239, %238 : vector<8x128xf32>
    %241 = arith.divf %239, %240 : vector<8x128xf32>
    %242 = vector.extract_strided_slice %235 {offsets = [0, 128], sizes = [8, 128], strides = [1, 1]} : vector<8x512xf32> to vector<8x128xf32>
    %243 = arith.negf %242 : vector<8x128xf32>
    %244 = math.exp %243 : vector<8x128xf32>
    %cst_115 = arith.constant 1.000000e+00 : f32
    %245 = vector.broadcast %cst_115 : f32 to vector<8x128xf32>
    %246 = arith.addf %245, %244 : vector<8x128xf32>
    %247 = arith.divf %245, %246 : vector<8x128xf32>
    %248 = vector.extract_strided_slice %235 {offsets = [0, 256], sizes = [8, 128], strides = [1, 1]} : vector<8x512xf32> to vector<8x128xf32>
    %249 = math.tanh %248 : vector<8x128xf32>
    %250 = vector.extract_strided_slice %235 {offsets = [0, 384], sizes = [8, 128], strides = [1, 1]} : vector<8x512xf32> to vector<8x128xf32>
    %251 = arith.negf %250 : vector<8x128xf32>
    %252 = math.exp %251 : vector<8x128xf32>
    %cst_116 = arith.constant 1.000000e+00 : f32
    %253 = vector.broadcast %cst_116 : f32 to vector<8x128xf32>
    %254 = arith.addf %253, %252 : vector<8x128xf32>
    %255 = arith.divf %253, %254 : vector<8x128xf32>
    %c0_117 = arith.constant 0 : index
    %c0_118 = arith.constant 0 : index
    %256 = vector.load %arg10[%c0_117, %c0_118] : memref<8x128xf32, #tpu.memory_space<vmem>>, vector<8x128xf32>
    %257 = arith.mulf %247, %256 : vector<8x128xf32>
    %258 = arith.mulf %241, %249 : vector<8x128xf32>
    %259 = arith.addf %257, %258 : vector<8x128xf32>
    %260 = math.tanh %259 : vector<8x128xf32>
    %261 = arith.mulf %255, %260 : vector<8x128xf32>
    %c0_119 = arith.constant 0 : index
    %c0_120 = arith.constant 0 : index
    %262 = vector.load %arg10[%c0_119, %c0_120] : memref<8x128xf32, #tpu.memory_space<vmem>>, vector<8x128xf32>
    tpu.vector_store %arg10[%c0_119, %c0_120], %259 {strides = array<i32>} : memref<8x128xf32, #tpu.memory_space<vmem>>, vector<8x128xf32>,
    %263 = arith.truncf %261 : vector<8x128xf32> to vector<8x128xbf16>
    %c0_121 = arith.constant 0 : index
    %c0_122 = arith.constant 0 : index
    %264 = vector.load %arg9[%c0_121, %c0_122] : memref<8x128xbf16, #tpu.memory_space<vmem>>, vector<8x128xbf16>
    tpu.vector_store %arg9[%c0_121, %c0_122], %263 {strides = array<i32>} : memref<8x128xbf16, #tpu.memory_space<vmem>>, vector<8x128xbf16>,
    %c7_i32 = arith.constant 7 : i32
    %265 = arith.index_cast %c7_i32 : i32 to index
    %c0_123 = arith.constant 0 : index
    %c0_124 = arith.constant 0 : index
    %266 = vector.load %arg11[%265, %c0_123, %c0_124] : memref<8x8x512xf32, #tpu.memory_space<vmem>>, vector<1x8x512xf32>
    %267 = vector.shape_cast %266 : vector<1x8x512xf32> to vector<8x512xf32>
    %c0_125 = arith.constant 0 : index
    %c0_126 = arith.constant 0 : index
    %268 = vector.load %arg9[%c0_125, %c0_126] : memref<8x128xbf16, #tpu.memory_space<vmem>>, vector<8x128xbf16>
    %c0_127 = arith.constant 0 : index
    %c0_128 = arith.constant 0 : index
    %269 = vector.load %arg4[%c0_127, %c0_128] : memref<128x512xbf16, #tpu.memory_space<vmem>>, vector<128x512xbf16>
    %cst_129 = arith.constant dense<0.000000e+00> : vector<8x512xf32>
    %270 = tpu.matmul %268, %269, %cst_129 {dimension_numbers = #tpu.dot_dimension_numbers<[1], [0], [0], [1], [0, 0, 1, 1], [], []>} : vector<8x128xbf16>, vector<128x512xbf16>, vector<8x512xf32> -> vector<8x512xf32>
    %271 = arith.addf %267, %270 : vector<8x512xf32>
    %272 = vector.extract_strided_slice %271 {offsets = [0, 0], sizes = [8, 128], strides = [1, 1]} : vector<8x512xf32> to vector<8x128xf32>
    %273 = arith.negf %272 : vector<8x128xf32>
    %274 = math.exp %273 : vector<8x128xf32>
    %cst_130 = arith.constant 1.000000e+00 : f32
    %275 = vector.broadcast %cst_130 : f32 to vector<8x128xf32>
    %276 = arith.addf %275, %274 : vector<8x128xf32>
    %277 = arith.divf %275, %276 : vector<8x128xf32>
    %278 = vector.extract_strided_slice %271 {offsets = [0, 128], sizes = [8, 128], strides = [1, 1]} : vector<8x512xf32> to vector<8x128xf32>
    %279 = arith.negf %278 : vector<8x128xf32>
    %280 = math.exp %279 : vector<8x128xf32>
    %cst_131 = arith.constant 1.000000e+00 : f32
    %281 = vector.broadcast %cst_131 : f32 to vector<8x128xf32>
    %282 = arith.addf %281, %280 : vector<8x128xf32>
    %283 = arith.divf %281, %282 : vector<8x128xf32>
    %284 = vector.extract_strided_slice %271 {offsets = [0, 256], sizes = [8, 128], strides = [1, 1]} : vector<8x512xf32> to vector<8x128xf32>
    %285 = math.tanh %284 : vector<8x128xf32>
    %286 = vector.extract_strided_slice %271 {offsets = [0, 384], sizes = [8, 128], strides = [1, 1]} : vector<8x512xf32> to vector<8x128xf32>
    %287 = arith.negf %286 : vector<8x128xf32>
    %288 = math.exp %287 : vector<8x128xf32>
    %cst_132 = arith.constant 1.000000e+00 : f32
    %289 = vector.broadcast %cst_132 : f32 to vector<8x128xf32>
    %290 = arith.addf %289, %288 : vector<8x128xf32>
    %291 = arith.divf %289, %290 : vector<8x128xf32>
    %c0_133 = arith.constant 0 : index
    %c0_134 = arith.constant 0 : index
    %292 = vector.load %arg10[%c0_133, %c0_134] : memref<8x128xf32, #tpu.memory_space<vmem>>, vector<8x128xf32>
    %293 = arith.mulf %283, %292 : vector<8x128xf32>
    %294 = arith.mulf %277, %285 : vector<8x128xf32>
    %295 = arith.addf %293, %294 : vector<8x128xf32>
    %296 = math.tanh %295 : vector<8x128xf32>
    %297 = arith.mulf %291, %296 : vector<8x128xf32>
    %c0_135 = arith.constant 0 : index
    %c0_136 = arith.constant 0 : index
    %298 = vector.load %arg10[%c0_135, %c0_136] : memref<8x128xf32, #tpu.memory_space<vmem>>, vector<8x128xf32>
    tpu.vector_store %arg10[%c0_135, %c0_136], %295 {strides = array<i32>} : memref<8x128xf32, #tpu.memory_space<vmem>>, vector<8x128xf32>,
    %299 = arith.truncf %297 : vector<8x128xf32> to vector<8x128xbf16>
    %c0_137 = arith.constant 0 : index
    %c0_138 = arith.constant 0 : index
    %300 = vector.load %arg9[%c0_137, %c0_138] : memref<8x128xbf16, #tpu.memory_space<vmem>>, vector<8x128xbf16>
    tpu.vector_store %arg9[%c0_137, %c0_138], %299 {strides = array<i32>} : memref<8x128xbf16, #tpu.memory_space<vmem>>, vector<8x128xbf16>,
    %c8_i32 = arith.constant 8 : i32
    %c0_i32_139 = arith.constant 0 : i32
    %301 = arith.cmpi eq, %arg1, %c0_i32_139 : i32
    %302 = arith.extui %301 : i1 to i32
    %c0_i32_140 = arith.constant 0 : i32
    %303 = arith.cmpi ne, %302, %c0_i32_140 : i32
    scf.if %303 {
      %c0_141 = arith.constant 0 : index
      %c0_142 = arith.constant 0 : index
      %304 = vector.load %arg9[%c0_141, %c0_142] : memref<8x128xbf16, #tpu.memory_space<vmem>>, vector<8x128xbf16>
      %c0_143 = arith.constant 0 : index
      %c0_144 = arith.constant 0 : index
      %305 = vector.load %arg6[%c0_143, %c0_144] : memref<128x128xbf16, #tpu.memory_space<vmem>>, vector<128x128xbf16>
      %cst_145 = arith.constant dense<0.000000e+00> : vector<8x128xf32>
      %306 = tpu.matmul %304, %305, %cst_145 {dimension_numbers = #tpu.dot_dimension_numbers<[1], [0], [0], [1], [0, 0, 1, 1], [], []>} : vector<8x128xbf16>, vector<128x128xbf16>, vector<8x128xf32> -> vector<8x128xf32>
      %c0_146 = arith.constant 0 : index
      %c0_147 = arith.constant 0 : index
      %307 = vector.load %arg7[%c0_146, %c0_147] : memref<1x128xf32, #tpu.memory_space<vmem>>, vector<1x128xf32>
      %308 = vector.broadcast %307 : vector<1x128xf32> to vector<8x128xf32>
      %309 = arith.addf %306, %308 : vector<8x128xf32>
      %c0_148 = arith.constant 0 : index
      %c0_149 = arith.constant 0 : index
      %310 = vector.load %arg8[%c0_148, %c0_149] : memref<8x128xf32, #tpu.memory_space<vmem>>, vector<8x128xf32>
      tpu.vector_store %arg8[%c0_148, %c0_149], %309 {strides = array<i32>} : memref<8x128xf32, #tpu.memory_space<vmem>>, vector<8x128xf32>,
    } else {
    }
    return
  }
  func.func @transform_0(%arg0: i32, %arg1: i32) -> (i32, i32, i32) {
    %c0_i32 = arith.constant 0 : i32
    %c0_i32_0 = arith.constant 0 : i32
    return %arg1, %arg0, %c0_i32 : i32, i32, i32
  }
  func.func @transform_1(%arg0: i32, %arg1: i32) -> (i32, i32) {
    %c0_i32 = arith.constant 0 : i32
    %c0_i32_0 = arith.constant 0 : i32
    %c0_i32_1 = arith.constant 0 : i32
    return %c0_i32, %c0_i32_0 : i32, i32
  }
  func.func @transform_2(%arg0: i32, %arg1: i32) -> (i32, i32) {
    %c0_i32 = arith.constant 0 : i32
    %c0_i32_0 = arith.constant 0 : i32
    %c0_i32_1 = arith.constant 0 : i32
    return %c0_i32, %c0_i32_0 : i32, i32
  }
  func.func @transform_3(%arg0: i32, %arg1: i32) -> (i32, i32) {
    %c0_i32 = arith.constant 0 : i32
    %c0_i32_0 = arith.constant 0 : i32
    %c0_i32_1 = arith.constant 0 : i32
    return %c0_i32, %c0_i32_0 : i32, i32
  }
  func.func @transform_4(%arg0: i32, %arg1: i32) -> (i32, i32) {
    %c0_i32 = arith.constant 0 : i32
    %c0_i32_0 = arith.constant 0 : i32
    %c0_i32_1 = arith.constant 0 : i32
    return %c0_i32, %c0_i32_0 : i32, i32
  }
  func.func @transform_5(%arg0: i32, %arg1: i32) -> (i32, i32) {
    %c0_i32 = arith.constant 0 : i32
    %c0_i32_0 = arith.constant 0 : i32
    %c0_i32_1 = arith.constant 0 : i32
    return %c0_i32, %c0_i32_0 : i32, i32
  }
  func.func @transform_6(%arg0: i32, %arg1: i32) -> (i32, i32) {
    %c0_i32 = arith.constant 0 : i32
    %c0_i32_0 = arith.constant 0 : i32
    return %arg0, %c0_i32 : i32, i32
  }
}

module attributes {stable_mosaic.version = 11 : i64} {
  func.func @lstm_kernel(%arg0: i32, %arg1: i32, %arg2: memref<8x8x16xf32, #tpu.memory_space<vmem>>, %arg3: memref<16x512xbf16, #tpu.memory_space<vmem>>, %arg4: memref<128x512xbf16, #tpu.memory_space<vmem>>, %arg5: memref<1x512xf32, #tpu.memory_space<vmem>>, %arg6: memref<128x128xbf16, #tpu.memory_space<vmem>>, %arg7: memref<1x128xf32, #tpu.memory_space<vmem>>, %arg8: memref<8x128xf32, #tpu.memory_space<vmem>>, %arg9: memref<8x128xbf16, #tpu.memory_space<vmem>>, %arg10: memref<8x128xf32, #tpu.memory_space<vmem>>, %arg11: memref<8x8x512xf32, #tpu.memory_space<vmem>>) attributes {dimension_semantics = [#tpu.dimension_semantics<parallel>, #tpu.dimension_semantics<arbitrary>], iteration_bounds = array<i64: 1, 1>, scalar_prefetch = 0 : i64, scratch_operands = 3 : i64, tpu.core_type = #tpu.core_type<tc>, window_params = [{transform_indices = @transform_0, window_bounds = array<i64: 8, 8, 16>}, {pipeline_mode = #tpu.pipeline_mode<synchronous>, transform_indices = @transform_1, window_bounds = array<i64: 16, 512>}, {pipeline_mode = #tpu.pipeline_mode<synchronous>, transform_indices = @transform_2, window_bounds = array<i64: 128, 512>}, {pipeline_mode = #tpu.pipeline_mode<synchronous>, transform_indices = @transform_3, window_bounds = array<i64: 1, 512>}, {pipeline_mode = #tpu.pipeline_mode<synchronous>, transform_indices = @transform_4, window_bounds = array<i64: 128, 128>}, {pipeline_mode = #tpu.pipeline_mode<synchronous>, transform_indices = @transform_5, window_bounds = array<i64: 1, 128>}, {transform_indices = @transform_6, window_bounds = array<i64: 8, 128>}]} {
    %c0_i32 = arith.constant 0 : i32
    %0 = arith.cmpi eq, %arg1, %c0_i32 : i32
    %1 = arith.extui %0 : i1 to i32
    %c0_i32_0 = arith.constant 0 : i32
    %2 = arith.cmpi ne, %1, %c0_i32_0 : i32
    scf.if %2 {
      %cst_170 = arith.constant 0.000000e+00 : bf16
      %334 = vector.broadcast %cst_170 : bf16 to vector<8x128xbf16>
      %c0_171 = arith.constant 0 : index
      %c0_172 = arith.constant 0 : index
      %335 = vector.load %arg9[%c0_171, %c0_172] : memref<8x128xbf16, #tpu.memory_space<vmem>>, vector<8x128xbf16>
      tpu.vector_store %arg9[%c0_171, %c0_172], %334 {strides = array<i32>} : memref<8x128xbf16, #tpu.memory_space<vmem>>, vector<8x128xbf16>,
      %cst_173 = arith.constant 0.000000e+00 : f32
      %336 = vector.broadcast %cst_173 : f32 to vector<8x128xf32>
      %c0_174 = arith.constant 0 : index
      %c0_175 = arith.constant 0 : index
      %337 = vector.load %arg10[%c0_174, %c0_175] : memref<8x128xf32, #tpu.memory_space<vmem>>, vector<8x128xf32>
      tpu.vector_store %arg10[%c0_174, %c0_175], %336 {strides = array<i32>} : memref<8x128xf32, #tpu.memory_space<vmem>>, vector<8x128xf32>,
    } else {
    }
    %c0 = arith.constant 0 : index
    %c0_1 = arith.constant 0 : index
    %c0_2 = arith.constant 0 : index
    %3 = vector.load %arg2[%c0, %c0_1, %c0_2] : memref<8x8x16xf32, #tpu.memory_space<vmem>>, vector<1x8x16xf32>
    %4 = vector.shape_cast %3 : vector<1x8x16xf32> to vector<8x16xf32>
    %5 = arith.truncf %4 : vector<8x16xf32> to vector<8x16xbf16>
    %c0_3 = arith.constant 0 : index
    %c0_4 = arith.constant 0 : index
    %6 = vector.load %arg3[%c0_3, %c0_4] : memref<16x512xbf16, #tpu.memory_space<vmem>>, vector<16x512xbf16>
    %cst = arith.constant dense<0.000000e+00> : vector<8x512xf32>
    %7 = tpu.matmul %5, %6, %cst {dimension_numbers = #tpu.dot_dimension_numbers<[1], [0], [0], [1], [0, 0, 1, 1], [], []>} : vector<8x16xbf16>, vector<16x512xbf16>, vector<8x512xf32> -> vector<8x512xf32>
    %c0_5 = arith.constant 0 : index
    %c0_6 = arith.constant 0 : index
    %8 = vector.load %arg5[%c0_5, %c0_6] : memref<1x512xf32, #tpu.memory_space<vmem>>, vector<1x512xf32>
    %9 = vector.broadcast %8 : vector<1x512xf32> to vector<8x512xf32>
    %10 = arith.addf %7, %9 : vector<8x512xf32>
    %c0_7 = arith.constant 0 : index
    %c0_8 = arith.constant 0 : index
    %11 = vector.load %arg9[%c0_7, %c0_8] : memref<8x128xbf16, #tpu.memory_space<vmem>>, vector<8x128xbf16>
    %c0_9 = arith.constant 0 : index
    %c0_10 = arith.constant 0 : index
    %12 = vector.load %arg4[%c0_9, %c0_10] : memref<128x512xbf16, #tpu.memory_space<vmem>>, vector<128x512xbf16>
    %cst_11 = arith.constant dense<0.000000e+00> : vector<8x512xf32>
    %13 = tpu.matmul %11, %12, %cst_11 {dimension_numbers = #tpu.dot_dimension_numbers<[1], [0], [0], [1], [0, 0, 1, 1], [], []>} : vector<8x128xbf16>, vector<128x512xbf16>, vector<8x512xf32> -> vector<8x512xf32>
    %14 = arith.addf %10, %13 : vector<8x512xf32>
    %15 = vector.extract_strided_slice %14 {offsets = [0, 0], sizes = [8, 128], strides = [1, 1]} : vector<8x512xf32> to vector<8x128xf32>
    %16 = arith.negf %15 : vector<8x128xf32>
    %17 = math.exp %16 : vector<8x128xf32>
    %cst_12 = arith.constant 1.000000e+00 : f32
    %18 = vector.broadcast %cst_12 : f32 to vector<8x128xf32>
    %19 = arith.addf %18, %17 : vector<8x128xf32>
    %20 = arith.divf %18, %19 : vector<8x128xf32>
    %21 = vector.extract_strided_slice %14 {offsets = [0, 128], sizes = [8, 128], strides = [1, 1]} : vector<8x512xf32> to vector<8x128xf32>
    %22 = arith.negf %21 : vector<8x128xf32>
    %23 = math.exp %22 : vector<8x128xf32>
    %cst_13 = arith.constant 1.000000e+00 : f32
    %24 = vector.broadcast %cst_13 : f32 to vector<8x128xf32>
    %25 = arith.addf %24, %23 : vector<8x128xf32>
    %26 = arith.divf %24, %25 : vector<8x128xf32>
    %27 = vector.extract_strided_slice %14 {offsets = [0, 256], sizes = [8, 128], strides = [1, 1]} : vector<8x512xf32> to vector<8x128xf32>
    %28 = math.tanh %27 : vector<8x128xf32>
    %29 = vector.extract_strided_slice %14 {offsets = [0, 384], sizes = [8, 128], strides = [1, 1]} : vector<8x512xf32> to vector<8x128xf32>
    %30 = arith.negf %29 : vector<8x128xf32>
    %31 = math.exp %30 : vector<8x128xf32>
    %cst_14 = arith.constant 1.000000e+00 : f32
    %32 = vector.broadcast %cst_14 : f32 to vector<8x128xf32>
    %33 = arith.addf %32, %31 : vector<8x128xf32>
    %34 = arith.divf %32, %33 : vector<8x128xf32>
    %c0_15 = arith.constant 0 : index
    %c0_16 = arith.constant 0 : index
    %35 = vector.load %arg10[%c0_15, %c0_16] : memref<8x128xf32, #tpu.memory_space<vmem>>, vector<8x128xf32>
    %36 = arith.mulf %26, %35 : vector<8x128xf32>
    %37 = arith.mulf %20, %28 : vector<8x128xf32>
    %38 = arith.addf %36, %37 : vector<8x128xf32>
    %39 = math.tanh %38 : vector<8x128xf32>
    %40 = arith.mulf %34, %39 : vector<8x128xf32>
    %c0_17 = arith.constant 0 : index
    %c0_18 = arith.constant 0 : index
    %41 = vector.load %arg10[%c0_17, %c0_18] : memref<8x128xf32, #tpu.memory_space<vmem>>, vector<8x128xf32>
    tpu.vector_store %arg10[%c0_17, %c0_18], %38 {strides = array<i32>} : memref<8x128xf32, #tpu.memory_space<vmem>>, vector<8x128xf32>,
    %42 = arith.truncf %40 : vector<8x128xf32> to vector<8x128xbf16>
    %c0_19 = arith.constant 0 : index
    %c0_20 = arith.constant 0 : index
    %43 = vector.load %arg9[%c0_19, %c0_20] : memref<8x128xbf16, #tpu.memory_space<vmem>>, vector<8x128xbf16>
    tpu.vector_store %arg9[%c0_19, %c0_20], %42 {strides = array<i32>} : memref<8x128xbf16, #tpu.memory_space<vmem>>, vector<8x128xbf16>,
    %c1 = arith.constant 1 : index
    %c0_21 = arith.constant 0 : index
    %c0_22 = arith.constant 0 : index
    %44 = vector.load %arg2[%c1, %c0_21, %c0_22] : memref<8x8x16xf32, #tpu.memory_space<vmem>>, vector<1x8x16xf32>
    %45 = vector.shape_cast %44 : vector<1x8x16xf32> to vector<8x16xf32>
    %46 = arith.truncf %45 : vector<8x16xf32> to vector<8x16xbf16>
    %c0_23 = arith.constant 0 : index
    %c0_24 = arith.constant 0 : index
    %47 = vector.load %arg3[%c0_23, %c0_24] : memref<16x512xbf16, #tpu.memory_space<vmem>>, vector<16x512xbf16>
    %cst_25 = arith.constant dense<0.000000e+00> : vector<8x512xf32>
    %48 = tpu.matmul %46, %47, %cst_25 {dimension_numbers = #tpu.dot_dimension_numbers<[1], [0], [0], [1], [0, 0, 1, 1], [], []>} : vector<8x16xbf16>, vector<16x512xbf16>, vector<8x512xf32> -> vector<8x512xf32>
    %c0_26 = arith.constant 0 : index
    %c0_27 = arith.constant 0 : index
    %49 = vector.load %arg5[%c0_26, %c0_27] : memref<1x512xf32, #tpu.memory_space<vmem>>, vector<1x512xf32>
    %50 = vector.broadcast %49 : vector<1x512xf32> to vector<8x512xf32>
    %51 = arith.addf %48, %50 : vector<8x512xf32>
    %c0_28 = arith.constant 0 : index
    %c0_29 = arith.constant 0 : index
    %52 = vector.load %arg9[%c0_28, %c0_29] : memref<8x128xbf16, #tpu.memory_space<vmem>>, vector<8x128xbf16>
    %c0_30 = arith.constant 0 : index
    %c0_31 = arith.constant 0 : index
    %53 = vector.load %arg4[%c0_30, %c0_31] : memref<128x512xbf16, #tpu.memory_space<vmem>>, vector<128x512xbf16>
    %cst_32 = arith.constant dense<0.000000e+00> : vector<8x512xf32>
    %54 = tpu.matmul %52, %53, %cst_32 {dimension_numbers = #tpu.dot_dimension_numbers<[1], [0], [0], [1], [0, 0, 1, 1], [], []>} : vector<8x128xbf16>, vector<128x512xbf16>, vector<8x512xf32> -> vector<8x512xf32>
    %55 = arith.addf %51, %54 : vector<8x512xf32>
    %56 = vector.extract_strided_slice %55 {offsets = [0, 0], sizes = [8, 128], strides = [1, 1]} : vector<8x512xf32> to vector<8x128xf32>
    %57 = arith.negf %56 : vector<8x128xf32>
    %58 = math.exp %57 : vector<8x128xf32>
    %cst_33 = arith.constant 1.000000e+00 : f32
    %59 = vector.broadcast %cst_33 : f32 to vector<8x128xf32>
    %60 = arith.addf %59, %58 : vector<8x128xf32>
    %61 = arith.divf %59, %60 : vector<8x128xf32>
    %62 = vector.extract_strided_slice %55 {offsets = [0, 128], sizes = [8, 128], strides = [1, 1]} : vector<8x512xf32> to vector<8x128xf32>
    %63 = arith.negf %62 : vector<8x128xf32>
    %64 = math.exp %63 : vector<8x128xf32>
    %cst_34 = arith.constant 1.000000e+00 : f32
    %65 = vector.broadcast %cst_34 : f32 to vector<8x128xf32>
    %66 = arith.addf %65, %64 : vector<8x128xf32>
    %67 = arith.divf %65, %66 : vector<8x128xf32>
    %68 = vector.extract_strided_slice %55 {offsets = [0, 256], sizes = [8, 128], strides = [1, 1]} : vector<8x512xf32> to vector<8x128xf32>
    %69 = math.tanh %68 : vector<8x128xf32>
    %70 = vector.extract_strided_slice %55 {offsets = [0, 384], sizes = [8, 128], strides = [1, 1]} : vector<8x512xf32> to vector<8x128xf32>
    %71 = arith.negf %70 : vector<8x128xf32>
    %72 = math.exp %71 : vector<8x128xf32>
    %cst_35 = arith.constant 1.000000e+00 : f32
    %73 = vector.broadcast %cst_35 : f32 to vector<8x128xf32>
    %74 = arith.addf %73, %72 : vector<8x128xf32>
    %75 = arith.divf %73, %74 : vector<8x128xf32>
    %c0_36 = arith.constant 0 : index
    %c0_37 = arith.constant 0 : index
    %76 = vector.load %arg10[%c0_36, %c0_37] : memref<8x128xf32, #tpu.memory_space<vmem>>, vector<8x128xf32>
    %77 = arith.mulf %67, %76 : vector<8x128xf32>
    %78 = arith.mulf %61, %69 : vector<8x128xf32>
    %79 = arith.addf %77, %78 : vector<8x128xf32>
    %80 = math.tanh %79 : vector<8x128xf32>
    %81 = arith.mulf %75, %80 : vector<8x128xf32>
    %c0_38 = arith.constant 0 : index
    %c0_39 = arith.constant 0 : index
    %82 = vector.load %arg10[%c0_38, %c0_39] : memref<8x128xf32, #tpu.memory_space<vmem>>, vector<8x128xf32>
    tpu.vector_store %arg10[%c0_38, %c0_39], %79 {strides = array<i32>} : memref<8x128xf32, #tpu.memory_space<vmem>>, vector<8x128xf32>,
    %83 = arith.truncf %81 : vector<8x128xf32> to vector<8x128xbf16>
    %c0_40 = arith.constant 0 : index
    %c0_41 = arith.constant 0 : index
    %84 = vector.load %arg9[%c0_40, %c0_41] : memref<8x128xbf16, #tpu.memory_space<vmem>>, vector<8x128xbf16>
    tpu.vector_store %arg9[%c0_40, %c0_41], %83 {strides = array<i32>} : memref<8x128xbf16, #tpu.memory_space<vmem>>, vector<8x128xbf16>,
    %c2 = arith.constant 2 : index
    %c0_42 = arith.constant 0 : index
    %c0_43 = arith.constant 0 : index
    %85 = vector.load %arg2[%c2, %c0_42, %c0_43] : memref<8x8x16xf32, #tpu.memory_space<vmem>>, vector<1x8x16xf32>
    %86 = vector.shape_cast %85 : vector<1x8x16xf32> to vector<8x16xf32>
    %87 = arith.truncf %86 : vector<8x16xf32> to vector<8x16xbf16>
    %c0_44 = arith.constant 0 : index
    %c0_45 = arith.constant 0 : index
    %88 = vector.load %arg3[%c0_44, %c0_45] : memref<16x512xbf16, #tpu.memory_space<vmem>>, vector<16x512xbf16>
    %cst_46 = arith.constant dense<0.000000e+00> : vector<8x512xf32>
    %89 = tpu.matmul %87, %88, %cst_46 {dimension_numbers = #tpu.dot_dimension_numbers<[1], [0], [0], [1], [0, 0, 1, 1], [], []>} : vector<8x16xbf16>, vector<16x512xbf16>, vector<8x512xf32> -> vector<8x512xf32>
    %c0_47 = arith.constant 0 : index
    %c0_48 = arith.constant 0 : index
    %90 = vector.load %arg5[%c0_47, %c0_48] : memref<1x512xf32, #tpu.memory_space<vmem>>, vector<1x512xf32>
    %91 = vector.broadcast %90 : vector<1x512xf32> to vector<8x512xf32>
    %92 = arith.addf %89, %91 : vector<8x512xf32>
    %c0_49 = arith.constant 0 : index
    %c0_50 = arith.constant 0 : index
    %93 = vector.load %arg9[%c0_49, %c0_50] : memref<8x128xbf16, #tpu.memory_space<vmem>>, vector<8x128xbf16>
    %c0_51 = arith.constant 0 : index
    %c0_52 = arith.constant 0 : index
    %94 = vector.load %arg4[%c0_51, %c0_52] : memref<128x512xbf16, #tpu.memory_space<vmem>>, vector<128x512xbf16>
    %cst_53 = arith.constant dense<0.000000e+00> : vector<8x512xf32>
    %95 = tpu.matmul %93, %94, %cst_53 {dimension_numbers = #tpu.dot_dimension_numbers<[1], [0], [0], [1], [0, 0, 1, 1], [], []>} : vector<8x128xbf16>, vector<128x512xbf16>, vector<8x512xf32> -> vector<8x512xf32>
    %96 = arith.addf %92, %95 : vector<8x512xf32>
    %97 = vector.extract_strided_slice %96 {offsets = [0, 0], sizes = [8, 128], strides = [1, 1]} : vector<8x512xf32> to vector<8x128xf32>
    %98 = arith.negf %97 : vector<8x128xf32>
    %99 = math.exp %98 : vector<8x128xf32>
    %cst_54 = arith.constant 1.000000e+00 : f32
    %100 = vector.broadcast %cst_54 : f32 to vector<8x128xf32>
    %101 = arith.addf %100, %99 : vector<8x128xf32>
    %102 = arith.divf %100, %101 : vector<8x128xf32>
    %103 = vector.extract_strided_slice %96 {offsets = [0, 128], sizes = [8, 128], strides = [1, 1]} : vector<8x512xf32> to vector<8x128xf32>
    %104 = arith.negf %103 : vector<8x128xf32>
    %105 = math.exp %104 : vector<8x128xf32>
    %cst_55 = arith.constant 1.000000e+00 : f32
    %106 = vector.broadcast %cst_55 : f32 to vector<8x128xf32>
    %107 = arith.addf %106, %105 : vector<8x128xf32>
    %108 = arith.divf %106, %107 : vector<8x128xf32>
    %109 = vector.extract_strided_slice %96 {offsets = [0, 256], sizes = [8, 128], strides = [1, 1]} : vector<8x512xf32> to vector<8x128xf32>
    %110 = math.tanh %109 : vector<8x128xf32>
    %111 = vector.extract_strided_slice %96 {offsets = [0, 384], sizes = [8, 128], strides = [1, 1]} : vector<8x512xf32> to vector<8x128xf32>
    %112 = arith.negf %111 : vector<8x128xf32>
    %113 = math.exp %112 : vector<8x128xf32>
    %cst_56 = arith.constant 1.000000e+00 : f32
    %114 = vector.broadcast %cst_56 : f32 to vector<8x128xf32>
    %115 = arith.addf %114, %113 : vector<8x128xf32>
    %116 = arith.divf %114, %115 : vector<8x128xf32>
    %c0_57 = arith.constant 0 : index
    %c0_58 = arith.constant 0 : index
    %117 = vector.load %arg10[%c0_57, %c0_58] : memref<8x128xf32, #tpu.memory_space<vmem>>, vector<8x128xf32>
    %118 = arith.mulf %108, %117 : vector<8x128xf32>
    %119 = arith.mulf %102, %110 : vector<8x128xf32>
    %120 = arith.addf %118, %119 : vector<8x128xf32>
    %121 = math.tanh %120 : vector<8x128xf32>
    %122 = arith.mulf %116, %121 : vector<8x128xf32>
    %c0_59 = arith.constant 0 : index
    %c0_60 = arith.constant 0 : index
    %123 = vector.load %arg10[%c0_59, %c0_60] : memref<8x128xf32, #tpu.memory_space<vmem>>, vector<8x128xf32>
    tpu.vector_store %arg10[%c0_59, %c0_60], %120 {strides = array<i32>} : memref<8x128xf32, #tpu.memory_space<vmem>>, vector<8x128xf32>,
    %124 = arith.truncf %122 : vector<8x128xf32> to vector<8x128xbf16>
    %c0_61 = arith.constant 0 : index
    %c0_62 = arith.constant 0 : index
    %125 = vector.load %arg9[%c0_61, %c0_62] : memref<8x128xbf16, #tpu.memory_space<vmem>>, vector<8x128xbf16>
    tpu.vector_store %arg9[%c0_61, %c0_62], %124 {strides = array<i32>} : memref<8x128xbf16, #tpu.memory_space<vmem>>, vector<8x128xbf16>,
    %c3 = arith.constant 3 : index
    %c0_63 = arith.constant 0 : index
    %c0_64 = arith.constant 0 : index
    %126 = vector.load %arg2[%c3, %c0_63, %c0_64] : memref<8x8x16xf32, #tpu.memory_space<vmem>>, vector<1x8x16xf32>
    %127 = vector.shape_cast %126 : vector<1x8x16xf32> to vector<8x16xf32>
    %128 = arith.truncf %127 : vector<8x16xf32> to vector<8x16xbf16>
    %c0_65 = arith.constant 0 : index
    %c0_66 = arith.constant 0 : index
    %129 = vector.load %arg3[%c0_65, %c0_66] : memref<16x512xbf16, #tpu.memory_space<vmem>>, vector<16x512xbf16>
    %cst_67 = arith.constant dense<0.000000e+00> : vector<8x512xf32>
    %130 = tpu.matmul %128, %129, %cst_67 {dimension_numbers = #tpu.dot_dimension_numbers<[1], [0], [0], [1], [0, 0, 1, 1], [], []>} : vector<8x16xbf16>, vector<16x512xbf16>, vector<8x512xf32> -> vector<8x512xf32>
    %c0_68 = arith.constant 0 : index
    %c0_69 = arith.constant 0 : index
    %131 = vector.load %arg5[%c0_68, %c0_69] : memref<1x512xf32, #tpu.memory_space<vmem>>, vector<1x512xf32>
    %132 = vector.broadcast %131 : vector<1x512xf32> to vector<8x512xf32>
    %133 = arith.addf %130, %132 : vector<8x512xf32>
    %c0_70 = arith.constant 0 : index
    %c0_71 = arith.constant 0 : index
    %134 = vector.load %arg9[%c0_70, %c0_71] : memref<8x128xbf16, #tpu.memory_space<vmem>>, vector<8x128xbf16>
    %c0_72 = arith.constant 0 : index
    %c0_73 = arith.constant 0 : index
    %135 = vector.load %arg4[%c0_72, %c0_73] : memref<128x512xbf16, #tpu.memory_space<vmem>>, vector<128x512xbf16>
    %cst_74 = arith.constant dense<0.000000e+00> : vector<8x512xf32>
    %136 = tpu.matmul %134, %135, %cst_74 {dimension_numbers = #tpu.dot_dimension_numbers<[1], [0], [0], [1], [0, 0, 1, 1], [], []>} : vector<8x128xbf16>, vector<128x512xbf16>, vector<8x512xf32> -> vector<8x512xf32>
    %137 = arith.addf %133, %136 : vector<8x512xf32>
    %138 = vector.extract_strided_slice %137 {offsets = [0, 0], sizes = [8, 128], strides = [1, 1]} : vector<8x512xf32> to vector<8x128xf32>
    %139 = arith.negf %138 : vector<8x128xf32>
    %140 = math.exp %139 : vector<8x128xf32>
    %cst_75 = arith.constant 1.000000e+00 : f32
    %141 = vector.broadcast %cst_75 : f32 to vector<8x128xf32>
    %142 = arith.addf %141, %140 : vector<8x128xf32>
    %143 = arith.divf %141, %142 : vector<8x128xf32>
    %144 = vector.extract_strided_slice %137 {offsets = [0, 128], sizes = [8, 128], strides = [1, 1]} : vector<8x512xf32> to vector<8x128xf32>
    %145 = arith.negf %144 : vector<8x128xf32>
    %146 = math.exp %145 : vector<8x128xf32>
    %cst_76 = arith.constant 1.000000e+00 : f32
    %147 = vector.broadcast %cst_76 : f32 to vector<8x128xf32>
    %148 = arith.addf %147, %146 : vector<8x128xf32>
    %149 = arith.divf %147, %148 : vector<8x128xf32>
    %150 = vector.extract_strided_slice %137 {offsets = [0, 256], sizes = [8, 128], strides = [1, 1]} : vector<8x512xf32> to vector<8x128xf32>
    %151 = math.tanh %150 : vector<8x128xf32>
    %152 = vector.extract_strided_slice %137 {offsets = [0, 384], sizes = [8, 128], strides = [1, 1]} : vector<8x512xf32> to vector<8x128xf32>
    %153 = arith.negf %152 : vector<8x128xf32>
    %154 = math.exp %153 : vector<8x128xf32>
    %cst_77 = arith.constant 1.000000e+00 : f32
    %155 = vector.broadcast %cst_77 : f32 to vector<8x128xf32>
    %156 = arith.addf %155, %154 : vector<8x128xf32>
    %157 = arith.divf %155, %156 : vector<8x128xf32>
    %c0_78 = arith.constant 0 : index
    %c0_79 = arith.constant 0 : index
    %158 = vector.load %arg10[%c0_78, %c0_79] : memref<8x128xf32, #tpu.memory_space<vmem>>, vector<8x128xf32>
    %159 = arith.mulf %149, %158 : vector<8x128xf32>
    %160 = arith.mulf %143, %151 : vector<8x128xf32>
    %161 = arith.addf %159, %160 : vector<8x128xf32>
    %162 = math.tanh %161 : vector<8x128xf32>
    %163 = arith.mulf %157, %162 : vector<8x128xf32>
    %c0_80 = arith.constant 0 : index
    %c0_81 = arith.constant 0 : index
    %164 = vector.load %arg10[%c0_80, %c0_81] : memref<8x128xf32, #tpu.memory_space<vmem>>, vector<8x128xf32>
    tpu.vector_store %arg10[%c0_80, %c0_81], %161 {strides = array<i32>} : memref<8x128xf32, #tpu.memory_space<vmem>>, vector<8x128xf32>,
    %165 = arith.truncf %163 : vector<8x128xf32> to vector<8x128xbf16>
    %c0_82 = arith.constant 0 : index
    %c0_83 = arith.constant 0 : index
    %166 = vector.load %arg9[%c0_82, %c0_83] : memref<8x128xbf16, #tpu.memory_space<vmem>>, vector<8x128xbf16>
    tpu.vector_store %arg9[%c0_82, %c0_83], %165 {strides = array<i32>} : memref<8x128xbf16, #tpu.memory_space<vmem>>, vector<8x128xbf16>,
    %c4 = arith.constant 4 : index
    %c0_84 = arith.constant 0 : index
    %c0_85 = arith.constant 0 : index
    %167 = vector.load %arg2[%c4, %c0_84, %c0_85] : memref<8x8x16xf32, #tpu.memory_space<vmem>>, vector<1x8x16xf32>
    %168 = vector.shape_cast %167 : vector<1x8x16xf32> to vector<8x16xf32>
    %169 = arith.truncf %168 : vector<8x16xf32> to vector<8x16xbf16>
    %c0_86 = arith.constant 0 : index
    %c0_87 = arith.constant 0 : index
    %170 = vector.load %arg3[%c0_86, %c0_87] : memref<16x512xbf16, #tpu.memory_space<vmem>>, vector<16x512xbf16>
    %cst_88 = arith.constant dense<0.000000e+00> : vector<8x512xf32>
    %171 = tpu.matmul %169, %170, %cst_88 {dimension_numbers = #tpu.dot_dimension_numbers<[1], [0], [0], [1], [0, 0, 1, 1], [], []>} : vector<8x16xbf16>, vector<16x512xbf16>, vector<8x512xf32> -> vector<8x512xf32>
    %c0_89 = arith.constant 0 : index
    %c0_90 = arith.constant 0 : index
    %172 = vector.load %arg5[%c0_89, %c0_90] : memref<1x512xf32, #tpu.memory_space<vmem>>, vector<1x512xf32>
    %173 = vector.broadcast %172 : vector<1x512xf32> to vector<8x512xf32>
    %174 = arith.addf %171, %173 : vector<8x512xf32>
    %c0_91 = arith.constant 0 : index
    %c0_92 = arith.constant 0 : index
    %175 = vector.load %arg9[%c0_91, %c0_92] : memref<8x128xbf16, #tpu.memory_space<vmem>>, vector<8x128xbf16>
    %c0_93 = arith.constant 0 : index
    %c0_94 = arith.constant 0 : index
    %176 = vector.load %arg4[%c0_93, %c0_94] : memref<128x512xbf16, #tpu.memory_space<vmem>>, vector<128x512xbf16>
    %cst_95 = arith.constant dense<0.000000e+00> : vector<8x512xf32>
    %177 = tpu.matmul %175, %176, %cst_95 {dimension_numbers = #tpu.dot_dimension_numbers<[1], [0], [0], [1], [0, 0, 1, 1], [], []>} : vector<8x128xbf16>, vector<128x512xbf16>, vector<8x512xf32> -> vector<8x512xf32>
    %178 = arith.addf %174, %177 : vector<8x512xf32>
    %179 = vector.extract_strided_slice %178 {offsets = [0, 0], sizes = [8, 128], strides = [1, 1]} : vector<8x512xf32> to vector<8x128xf32>
    %180 = arith.negf %179 : vector<8x128xf32>
    %181 = math.exp %180 : vector<8x128xf32>
    %cst_96 = arith.constant 1.000000e+00 : f32
    %182 = vector.broadcast %cst_96 : f32 to vector<8x128xf32>
    %183 = arith.addf %182, %181 : vector<8x128xf32>
    %184 = arith.divf %182, %183 : vector<8x128xf32>
    %185 = vector.extract_strided_slice %178 {offsets = [0, 128], sizes = [8, 128], strides = [1, 1]} : vector<8x512xf32> to vector<8x128xf32>
    %186 = arith.negf %185 : vector<8x128xf32>
    %187 = math.exp %186 : vector<8x128xf32>
    %cst_97 = arith.constant 1.000000e+00 : f32
    %188 = vector.broadcast %cst_97 : f32 to vector<8x128xf32>
    %189 = arith.addf %188, %187 : vector<8x128xf32>
    %190 = arith.divf %188, %189 : vector<8x128xf32>
    %191 = vector.extract_strided_slice %178 {offsets = [0, 256], sizes = [8, 128], strides = [1, 1]} : vector<8x512xf32> to vector<8x128xf32>
    %192 = math.tanh %191 : vector<8x128xf32>
    %193 = vector.extract_strided_slice %178 {offsets = [0, 384], sizes = [8, 128], strides = [1, 1]} : vector<8x512xf32> to vector<8x128xf32>
    %194 = arith.negf %193 : vector<8x128xf32>
    %195 = math.exp %194 : vector<8x128xf32>
    %cst_98 = arith.constant 1.000000e+00 : f32
    %196 = vector.broadcast %cst_98 : f32 to vector<8x128xf32>
    %197 = arith.addf %196, %195 : vector<8x128xf32>
    %198 = arith.divf %196, %197 : vector<8x128xf32>
    %c0_99 = arith.constant 0 : index
    %c0_100 = arith.constant 0 : index
    %199 = vector.load %arg10[%c0_99, %c0_100] : memref<8x128xf32, #tpu.memory_space<vmem>>, vector<8x128xf32>
    %200 = arith.mulf %190, %199 : vector<8x128xf32>
    %201 = arith.mulf %184, %192 : vector<8x128xf32>
    %202 = arith.addf %200, %201 : vector<8x128xf32>
    %203 = math.tanh %202 : vector<8x128xf32>
    %204 = arith.mulf %198, %203 : vector<8x128xf32>
    %c0_101 = arith.constant 0 : index
    %c0_102 = arith.constant 0 : index
    %205 = vector.load %arg10[%c0_101, %c0_102] : memref<8x128xf32, #tpu.memory_space<vmem>>, vector<8x128xf32>
    tpu.vector_store %arg10[%c0_101, %c0_102], %202 {strides = array<i32>} : memref<8x128xf32, #tpu.memory_space<vmem>>, vector<8x128xf32>,
    %206 = arith.truncf %204 : vector<8x128xf32> to vector<8x128xbf16>
    %c0_103 = arith.constant 0 : index
    %c0_104 = arith.constant 0 : index
    %207 = vector.load %arg9[%c0_103, %c0_104] : memref<8x128xbf16, #tpu.memory_space<vmem>>, vector<8x128xbf16>
    tpu.vector_store %arg9[%c0_103, %c0_104], %206 {strides = array<i32>} : memref<8x128xbf16, #tpu.memory_space<vmem>>, vector<8x128xbf16>,
    %c5 = arith.constant 5 : index
    %c0_105 = arith.constant 0 : index
    %c0_106 = arith.constant 0 : index
    %208 = vector.load %arg2[%c5, %c0_105, %c0_106] : memref<8x8x16xf32, #tpu.memory_space<vmem>>, vector<1x8x16xf32>
    %209 = vector.shape_cast %208 : vector<1x8x16xf32> to vector<8x16xf32>
    %210 = arith.truncf %209 : vector<8x16xf32> to vector<8x16xbf16>
    %c0_107 = arith.constant 0 : index
    %c0_108 = arith.constant 0 : index
    %211 = vector.load %arg3[%c0_107, %c0_108] : memref<16x512xbf16, #tpu.memory_space<vmem>>, vector<16x512xbf16>
    %cst_109 = arith.constant dense<0.000000e+00> : vector<8x512xf32>
    %212 = tpu.matmul %210, %211, %cst_109 {dimension_numbers = #tpu.dot_dimension_numbers<[1], [0], [0], [1], [0, 0, 1, 1], [], []>} : vector<8x16xbf16>, vector<16x512xbf16>, vector<8x512xf32> -> vector<8x512xf32>
    %c0_110 = arith.constant 0 : index
    %c0_111 = arith.constant 0 : index
    %213 = vector.load %arg5[%c0_110, %c0_111] : memref<1x512xf32, #tpu.memory_space<vmem>>, vector<1x512xf32>
    %214 = vector.broadcast %213 : vector<1x512xf32> to vector<8x512xf32>
    %215 = arith.addf %212, %214 : vector<8x512xf32>
    %c0_112 = arith.constant 0 : index
    %c0_113 = arith.constant 0 : index
    %216 = vector.load %arg9[%c0_112, %c0_113] : memref<8x128xbf16, #tpu.memory_space<vmem>>, vector<8x128xbf16>
    %c0_114 = arith.constant 0 : index
    %c0_115 = arith.constant 0 : index
    %217 = vector.load %arg4[%c0_114, %c0_115] : memref<128x512xbf16, #tpu.memory_space<vmem>>, vector<128x512xbf16>
    %cst_116 = arith.constant dense<0.000000e+00> : vector<8x512xf32>
    %218 = tpu.matmul %216, %217, %cst_116 {dimension_numbers = #tpu.dot_dimension_numbers<[1], [0], [0], [1], [0, 0, 1, 1], [], []>} : vector<8x128xbf16>, vector<128x512xbf16>, vector<8x512xf32> -> vector<8x512xf32>
    %219 = arith.addf %215, %218 : vector<8x512xf32>
    %220 = vector.extract_strided_slice %219 {offsets = [0, 0], sizes = [8, 128], strides = [1, 1]} : vector<8x512xf32> to vector<8x128xf32>
    %221 = arith.negf %220 : vector<8x128xf32>
    %222 = math.exp %221 : vector<8x128xf32>
    %cst_117 = arith.constant 1.000000e+00 : f32
    %223 = vector.broadcast %cst_117 : f32 to vector<8x128xf32>
    %224 = arith.addf %223, %222 : vector<8x128xf32>
    %225 = arith.divf %223, %224 : vector<8x128xf32>
    %226 = vector.extract_strided_slice %219 {offsets = [0, 128], sizes = [8, 128], strides = [1, 1]} : vector<8x512xf32> to vector<8x128xf32>
    %227 = arith.negf %226 : vector<8x128xf32>
    %228 = math.exp %227 : vector<8x128xf32>
    %cst_118 = arith.constant 1.000000e+00 : f32
    %229 = vector.broadcast %cst_118 : f32 to vector<8x128xf32>
    %230 = arith.addf %229, %228 : vector<8x128xf32>
    %231 = arith.divf %229, %230 : vector<8x128xf32>
    %232 = vector.extract_strided_slice %219 {offsets = [0, 256], sizes = [8, 128], strides = [1, 1]} : vector<8x512xf32> to vector<8x128xf32>
    %233 = math.tanh %232 : vector<8x128xf32>
    %234 = vector.extract_strided_slice %219 {offsets = [0, 384], sizes = [8, 128], strides = [1, 1]} : vector<8x512xf32> to vector<8x128xf32>
    %235 = arith.negf %234 : vector<8x128xf32>
    %236 = math.exp %235 : vector<8x128xf32>
    %cst_119 = arith.constant 1.000000e+00 : f32
    %237 = vector.broadcast %cst_119 : f32 to vector<8x128xf32>
    %238 = arith.addf %237, %236 : vector<8x128xf32>
    %239 = arith.divf %237, %238 : vector<8x128xf32>
    %c0_120 = arith.constant 0 : index
    %c0_121 = arith.constant 0 : index
    %240 = vector.load %arg10[%c0_120, %c0_121] : memref<8x128xf32, #tpu.memory_space<vmem>>, vector<8x128xf32>
    %241 = arith.mulf %231, %240 : vector<8x128xf32>
    %242 = arith.mulf %225, %233 : vector<8x128xf32>
    %243 = arith.addf %241, %242 : vector<8x128xf32>
    %244 = math.tanh %243 : vector<8x128xf32>
    %245 = arith.mulf %239, %244 : vector<8x128xf32>
    %c0_122 = arith.constant 0 : index
    %c0_123 = arith.constant 0 : index
    %246 = vector.load %arg10[%c0_122, %c0_123] : memref<8x128xf32, #tpu.memory_space<vmem>>, vector<8x128xf32>
    tpu.vector_store %arg10[%c0_122, %c0_123], %243 {strides = array<i32>} : memref<8x128xf32, #tpu.memory_space<vmem>>, vector<8x128xf32>,
    %247 = arith.truncf %245 : vector<8x128xf32> to vector<8x128xbf16>
    %c0_124 = arith.constant 0 : index
    %c0_125 = arith.constant 0 : index
    %248 = vector.load %arg9[%c0_124, %c0_125] : memref<8x128xbf16, #tpu.memory_space<vmem>>, vector<8x128xbf16>
    tpu.vector_store %arg9[%c0_124, %c0_125], %247 {strides = array<i32>} : memref<8x128xbf16, #tpu.memory_space<vmem>>, vector<8x128xbf16>,
    %c6 = arith.constant 6 : index
    %c0_126 = arith.constant 0 : index
    %c0_127 = arith.constant 0 : index
    %249 = vector.load %arg2[%c6, %c0_126, %c0_127] : memref<8x8x16xf32, #tpu.memory_space<vmem>>, vector<1x8x16xf32>
    %250 = vector.shape_cast %249 : vector<1x8x16xf32> to vector<8x16xf32>
    %251 = arith.truncf %250 : vector<8x16xf32> to vector<8x16xbf16>
    %c0_128 = arith.constant 0 : index
    %c0_129 = arith.constant 0 : index
    %252 = vector.load %arg3[%c0_128, %c0_129] : memref<16x512xbf16, #tpu.memory_space<vmem>>, vector<16x512xbf16>
    %cst_130 = arith.constant dense<0.000000e+00> : vector<8x512xf32>
    %253 = tpu.matmul %251, %252, %cst_130 {dimension_numbers = #tpu.dot_dimension_numbers<[1], [0], [0], [1], [0, 0, 1, 1], [], []>} : vector<8x16xbf16>, vector<16x512xbf16>, vector<8x512xf32> -> vector<8x512xf32>
    %c0_131 = arith.constant 0 : index
    %c0_132 = arith.constant 0 : index
    %254 = vector.load %arg5[%c0_131, %c0_132] : memref<1x512xf32, #tpu.memory_space<vmem>>, vector<1x512xf32>
    %255 = vector.broadcast %254 : vector<1x512xf32> to vector<8x512xf32>
    %256 = arith.addf %253, %255 : vector<8x512xf32>
    %c0_133 = arith.constant 0 : index
    %c0_134 = arith.constant 0 : index
    %257 = vector.load %arg9[%c0_133, %c0_134] : memref<8x128xbf16, #tpu.memory_space<vmem>>, vector<8x128xbf16>
    %c0_135 = arith.constant 0 : index
    %c0_136 = arith.constant 0 : index
    %258 = vector.load %arg4[%c0_135, %c0_136] : memref<128x512xbf16, #tpu.memory_space<vmem>>, vector<128x512xbf16>
    %cst_137 = arith.constant dense<0.000000e+00> : vector<8x512xf32>
    %259 = tpu.matmul %257, %258, %cst_137 {dimension_numbers = #tpu.dot_dimension_numbers<[1], [0], [0], [1], [0, 0, 1, 1], [], []>} : vector<8x128xbf16>, vector<128x512xbf16>, vector<8x512xf32> -> vector<8x512xf32>
    %260 = arith.addf %256, %259 : vector<8x512xf32>
    %261 = vector.extract_strided_slice %260 {offsets = [0, 0], sizes = [8, 128], strides = [1, 1]} : vector<8x512xf32> to vector<8x128xf32>
    %262 = arith.negf %261 : vector<8x128xf32>
    %263 = math.exp %262 : vector<8x128xf32>
    %cst_138 = arith.constant 1.000000e+00 : f32
    %264 = vector.broadcast %cst_138 : f32 to vector<8x128xf32>
    %265 = arith.addf %264, %263 : vector<8x128xf32>
    %266 = arith.divf %264, %265 : vector<8x128xf32>
    %267 = vector.extract_strided_slice %260 {offsets = [0, 128], sizes = [8, 128], strides = [1, 1]} : vector<8x512xf32> to vector<8x128xf32>
    %268 = arith.negf %267 : vector<8x128xf32>
    %269 = math.exp %268 : vector<8x128xf32>
    %cst_139 = arith.constant 1.000000e+00 : f32
    %270 = vector.broadcast %cst_139 : f32 to vector<8x128xf32>
    %271 = arith.addf %270, %269 : vector<8x128xf32>
    %272 = arith.divf %270, %271 : vector<8x128xf32>
    %273 = vector.extract_strided_slice %260 {offsets = [0, 256], sizes = [8, 128], strides = [1, 1]} : vector<8x512xf32> to vector<8x128xf32>
    %274 = math.tanh %273 : vector<8x128xf32>
    %275 = vector.extract_strided_slice %260 {offsets = [0, 384], sizes = [8, 128], strides = [1, 1]} : vector<8x512xf32> to vector<8x128xf32>
    %276 = arith.negf %275 : vector<8x128xf32>
    %277 = math.exp %276 : vector<8x128xf32>
    %cst_140 = arith.constant 1.000000e+00 : f32
    %278 = vector.broadcast %cst_140 : f32 to vector<8x128xf32>
    %279 = arith.addf %278, %277 : vector<8x128xf32>
    %280 = arith.divf %278, %279 : vector<8x128xf32>
    %c0_141 = arith.constant 0 : index
    %c0_142 = arith.constant 0 : index
    %281 = vector.load %arg10[%c0_141, %c0_142] : memref<8x128xf32, #tpu.memory_space<vmem>>, vector<8x128xf32>
    %282 = arith.mulf %272, %281 : vector<8x128xf32>
    %283 = arith.mulf %266, %274 : vector<8x128xf32>
    %284 = arith.addf %282, %283 : vector<8x128xf32>
    %285 = math.tanh %284 : vector<8x128xf32>
    %286 = arith.mulf %280, %285 : vector<8x128xf32>
    %c0_143 = arith.constant 0 : index
    %c0_144 = arith.constant 0 : index
    %287 = vector.load %arg10[%c0_143, %c0_144] : memref<8x128xf32, #tpu.memory_space<vmem>>, vector<8x128xf32>
    tpu.vector_store %arg10[%c0_143, %c0_144], %284 {strides = array<i32>} : memref<8x128xf32, #tpu.memory_space<vmem>>, vector<8x128xf32>,
    %288 = arith.truncf %286 : vector<8x128xf32> to vector<8x128xbf16>
    %c0_145 = arith.constant 0 : index
    %c0_146 = arith.constant 0 : index
    %289 = vector.load %arg9[%c0_145, %c0_146] : memref<8x128xbf16, #tpu.memory_space<vmem>>, vector<8x128xbf16>
    tpu.vector_store %arg9[%c0_145, %c0_146], %288 {strides = array<i32>} : memref<8x128xbf16, #tpu.memory_space<vmem>>, vector<8x128xbf16>,
    %c7 = arith.constant 7 : index
    %c0_147 = arith.constant 0 : index
    %c0_148 = arith.constant 0 : index
    %290 = vector.load %arg2[%c7, %c0_147, %c0_148] : memref<8x8x16xf32, #tpu.memory_space<vmem>>, vector<1x8x16xf32>
    %291 = vector.shape_cast %290 : vector<1x8x16xf32> to vector<8x16xf32>
    %292 = arith.truncf %291 : vector<8x16xf32> to vector<8x16xbf16>
    %c0_149 = arith.constant 0 : index
    %c0_150 = arith.constant 0 : index
    %293 = vector.load %arg3[%c0_149, %c0_150] : memref<16x512xbf16, #tpu.memory_space<vmem>>, vector<16x512xbf16>
    %cst_151 = arith.constant dense<0.000000e+00> : vector<8x512xf32>
    %294 = tpu.matmul %292, %293, %cst_151 {dimension_numbers = #tpu.dot_dimension_numbers<[1], [0], [0], [1], [0, 0, 1, 1], [], []>} : vector<8x16xbf16>, vector<16x512xbf16>, vector<8x512xf32> -> vector<8x512xf32>
    %c0_152 = arith.constant 0 : index
    %c0_153 = arith.constant 0 : index
    %295 = vector.load %arg5[%c0_152, %c0_153] : memref<1x512xf32, #tpu.memory_space<vmem>>, vector<1x512xf32>
    %296 = vector.broadcast %295 : vector<1x512xf32> to vector<8x512xf32>
    %297 = arith.addf %294, %296 : vector<8x512xf32>
    %c0_154 = arith.constant 0 : index
    %c0_155 = arith.constant 0 : index
    %298 = vector.load %arg9[%c0_154, %c0_155] : memref<8x128xbf16, #tpu.memory_space<vmem>>, vector<8x128xbf16>
    %c0_156 = arith.constant 0 : index
    %c0_157 = arith.constant 0 : index
    %299 = vector.load %arg4[%c0_156, %c0_157] : memref<128x512xbf16, #tpu.memory_space<vmem>>, vector<128x512xbf16>
    %cst_158 = arith.constant dense<0.000000e+00> : vector<8x512xf32>
    %300 = tpu.matmul %298, %299, %cst_158 {dimension_numbers = #tpu.dot_dimension_numbers<[1], [0], [0], [1], [0, 0, 1, 1], [], []>} : vector<8x128xbf16>, vector<128x512xbf16>, vector<8x512xf32> -> vector<8x512xf32>
    %301 = arith.addf %297, %300 : vector<8x512xf32>
    %302 = vector.extract_strided_slice %301 {offsets = [0, 0], sizes = [8, 128], strides = [1, 1]} : vector<8x512xf32> to vector<8x128xf32>
    %303 = arith.negf %302 : vector<8x128xf32>
    %304 = math.exp %303 : vector<8x128xf32>
    %cst_159 = arith.constant 1.000000e+00 : f32
    %305 = vector.broadcast %cst_159 : f32 to vector<8x128xf32>
    %306 = arith.addf %305, %304 : vector<8x128xf32>
    %307 = arith.divf %305, %306 : vector<8x128xf32>
    %308 = vector.extract_strided_slice %301 {offsets = [0, 128], sizes = [8, 128], strides = [1, 1]} : vector<8x512xf32> to vector<8x128xf32>
    %309 = arith.negf %308 : vector<8x128xf32>
    %310 = math.exp %309 : vector<8x128xf32>
    %cst_160 = arith.constant 1.000000e+00 : f32
    %311 = vector.broadcast %cst_160 : f32 to vector<8x128xf32>
    %312 = arith.addf %311, %310 : vector<8x128xf32>
    %313 = arith.divf %311, %312 : vector<8x128xf32>
    %314 = vector.extract_strided_slice %301 {offsets = [0, 256], sizes = [8, 128], strides = [1, 1]} : vector<8x512xf32> to vector<8x128xf32>
    %315 = math.tanh %314 : vector<8x128xf32>
    %316 = vector.extract_strided_slice %301 {offsets = [0, 384], sizes = [8, 128], strides = [1, 1]} : vector<8x512xf32> to vector<8x128xf32>
    %317 = arith.negf %316 : vector<8x128xf32>
    %318 = math.exp %317 : vector<8x128xf32>
    %cst_161 = arith.constant 1.000000e+00 : f32
    %319 = vector.broadcast %cst_161 : f32 to vector<8x128xf32>
    %320 = arith.addf %319, %318 : vector<8x128xf32>
    %321 = arith.divf %319, %320 : vector<8x128xf32>
    %c0_162 = arith.constant 0 : index
    %c0_163 = arith.constant 0 : index
    %322 = vector.load %arg10[%c0_162, %c0_163] : memref<8x128xf32, #tpu.memory_space<vmem>>, vector<8x128xf32>
    %323 = arith.mulf %313, %322 : vector<8x128xf32>
    %324 = arith.mulf %307, %315 : vector<8x128xf32>
    %325 = arith.addf %323, %324 : vector<8x128xf32>
    %326 = math.tanh %325 : vector<8x128xf32>
    %327 = arith.mulf %321, %326 : vector<8x128xf32>
    %c0_164 = arith.constant 0 : index
    %c0_165 = arith.constant 0 : index
    %328 = vector.load %arg10[%c0_164, %c0_165] : memref<8x128xf32, #tpu.memory_space<vmem>>, vector<8x128xf32>
    tpu.vector_store %arg10[%c0_164, %c0_165], %325 {strides = array<i32>} : memref<8x128xf32, #tpu.memory_space<vmem>>, vector<8x128xf32>,
    %329 = arith.truncf %327 : vector<8x128xf32> to vector<8x128xbf16>
    %c0_166 = arith.constant 0 : index
    %c0_167 = arith.constant 0 : index
    %330 = vector.load %arg9[%c0_166, %c0_167] : memref<8x128xbf16, #tpu.memory_space<vmem>>, vector<8x128xbf16>
    tpu.vector_store %arg9[%c0_166, %c0_167], %329 {strides = array<i32>} : memref<8x128xbf16, #tpu.memory_space<vmem>>, vector<8x128xbf16>,
    %c0_i32_168 = arith.constant 0 : i32
    %331 = arith.cmpi eq, %arg1, %c0_i32_168 : i32
    %332 = arith.extui %331 : i1 to i32
    %c0_i32_169 = arith.constant 0 : i32
    %333 = arith.cmpi ne, %332, %c0_i32_169 : i32
    scf.if %333 {
      %c0_170 = arith.constant 0 : index
      %c0_171 = arith.constant 0 : index
      %334 = vector.load %arg9[%c0_170, %c0_171] : memref<8x128xbf16, #tpu.memory_space<vmem>>, vector<8x128xbf16>
      %c0_172 = arith.constant 0 : index
      %c0_173 = arith.constant 0 : index
      %335 = vector.load %arg6[%c0_172, %c0_173] : memref<128x128xbf16, #tpu.memory_space<vmem>>, vector<128x128xbf16>
      %cst_174 = arith.constant dense<0.000000e+00> : vector<8x128xf32>
      %336 = tpu.matmul %334, %335, %cst_174 {dimension_numbers = #tpu.dot_dimension_numbers<[1], [0], [0], [1], [0, 0, 1, 1], [], []>} : vector<8x128xbf16>, vector<128x128xbf16>, vector<8x128xf32> -> vector<8x128xf32>
      %c0_175 = arith.constant 0 : index
      %c0_176 = arith.constant 0 : index
      %337 = vector.load %arg7[%c0_175, %c0_176] : memref<1x128xf32, #tpu.memory_space<vmem>>, vector<1x128xf32>
      %338 = vector.broadcast %337 : vector<1x128xf32> to vector<8x128xf32>
      %339 = arith.addf %336, %338 : vector<8x128xf32>
      %c0_177 = arith.constant 0 : index
      %c0_178 = arith.constant 0 : index
      %340 = vector.load %arg8[%c0_177, %c0_178] : memref<8x128xf32, #tpu.memory_space<vmem>>, vector<8x128xf32>
      tpu.vector_store %arg8[%c0_177, %c0_178], %339 {strides = array<i32>} : memref<8x128xf32, #tpu.memory_space<vmem>>, vector<8x128xf32>,
    } else {
    }
    return
  }
  func.func @transform_0(%arg0: i32, %arg1: i32) -> (i32, i32, i32) {
    %c0_i32 = arith.constant 0 : i32
    %c0_i32_0 = arith.constant 0 : i32
    return %arg1, %arg0, %c0_i32 : i32, i32, i32
  }
  func.func @transform_1(%arg0: i32, %arg1: i32) -> (i32, i32) {
    %c0_i32 = arith.constant 0 : i32
    %c0_i32_0 = arith.constant 0 : i32
    %c0_i32_1 = arith.constant 0 : i32
    return %c0_i32, %c0_i32_0 : i32, i32
  }
  func.func @transform_2(%arg0: i32, %arg1: i32) -> (i32, i32) {
    %c0_i32 = arith.constant 0 : i32
    %c0_i32_0 = arith.constant 0 : i32
    %c0_i32_1 = arith.constant 0 : i32
    return %c0_i32, %c0_i32_0 : i32, i32
  }
  func.func @transform_3(%arg0: i32, %arg1: i32) -> (i32, i32) {
    %c0_i32 = arith.constant 0 : i32
    %c0_i32_0 = arith.constant 0 : i32
    %c0_i32_1 = arith.constant 0 : i32
    return %c0_i32, %c0_i32_0 : i32, i32
  }
  func.func @transform_4(%arg0: i32, %arg1: i32) -> (i32, i32) {
    %c0_i32 = arith.constant 0 : i32
    %c0_i32_0 = arith.constant 0 : i32
    %c0_i32_1 = arith.constant 0 : i32
    return %c0_i32, %c0_i32_0 : i32, i32
  }
  func.func @transform_5(%arg0: i32, %arg1: i32) -> (i32, i32) {
    %c0_i32 = arith.constant 0 : i32
    %c0_i32_0 = arith.constant 0 : i32
    %c0_i32_1 = arith.constant 0 : i32
    return %c0_i32, %c0_i32_0 : i32, i32
  }
  func.func @transform_6(%arg0: i32, %arg1: i32) -> (i32, i32) {
    %c0_i32 = arith.constant 0 : i32
    %c0_i32_0 = arith.constant 0 : i32
    return %arg0, %c0_i32 : i32, i32
  }
}

</mosaic_0001>

<llo_original>
// kernel: lstm_model_forward.1
$region0: #{lstm_model_forward.1}
  #allocation0 [shape = 'u32[]', space=smem, size = 0x4, offset = 0x4, fixed_abs, tag = 'smem constant byte address 0x4 - core index']
  #allocation1 [shape = 'u32[144,128]{1,0:T(1,128)}', space=vmem, size = 0x12000, scoped, tag = 'internal scratch']
  #allocation2 [shape = 'bf16[8,128]{1,0:T(8,128)(2,1)}', space=vmem, size = 0x800, scoped, tag = 'scratch operand']
  #allocation3 [shape = 'f32[8,128]{1,0:T(8,128)}', space=vmem, size = 0x1000, scoped, tag = 'scratch operand']
  #allocation4 [shape = 'f32[8,8,512]{2,1,0:T(8,128)}', space=vmem, size = 0x20000, scoped, tag = 'scratch operand']
  %s0 = inlined_call_operand.vmem [shape: f32[8,8,16], index: 0, kind: input, shape index: {}]
  %s1 = inlined_call_operand.vmem [shape: bf16[16,512], index: 1, kind: input, shape index: {}]
  %s2 = inlined_call_operand.vmem [shape: bf16[128,512], index: 2, kind: input, shape index: {}]
  %s3 = inlined_call_operand.vmem [shape: f32[1,512], index: 3, kind: input, shape index: {}]
  %s4 = inlined_call_operand.vmem [shape: bf16[128,128], index: 4, kind: input, shape index: {}]
  %s5 = inlined_call_operand.vmem [shape: f32[1,128], index: 5, kind: input, shape index: {}]
  %s6 = inlined_call_operand.vmem [shape: f32[8,128], index: 6, kind: output, shape index: {}]
  %s7 = sld [smem:[#allocation0]]
  $region42: #{lstm_model_forward.1} parent=0
    _
  %s9 = ssub.s32 1, %s7
  %s10 = scalar_select 0, %s9, %s7
  // Predicated region
  $region2: #{lstm_model_forward.1} parent=0 // pred_check
    _
  $region3: #{lstm_model_forward.1} parent=0 // pred_check_branch
    %12 = sbr.rel (0) target = $region5
  $region4: #{lstm_model_forward.1} parent=0 // pred_region
    _
  $region5: #{lstm_model_forward.1} parent=0 // pred_fallthru
    _
  // Predicated region
  $region6: #{lstm_model_forward.1} parent=0 // pred_check
    _
  $region7: #{lstm_model_forward.1} parent=0 // pred_check_branch
    %14 = sbr.rel (0) target = $region9
  $region8: #{lstm_model_forward.1} parent=0 // pred_region
    _
  $region9: #{lstm_model_forward.1} parent=0 // pred_fallthru
    _
  // Predicated region
  $region10: #{lstm_model_forward.1} parent=0 // pred_check
    _
  $region11: #{lstm_model_forward.1} parent=0 // pred_check_branch
    %16 = sbr.rel (0) target = $region13
  $region12: #{lstm_model_forward.1} parent=0 // pred_region
    _
  $region13: #{lstm_model_forward.1} parent=0 // pred_fallthru
    _
  // Predicated region
  $region14: #{lstm_model_forward.1} parent=0 // pred_check
    _
  $region15: #{lstm_model_forward.1} parent=0 // pred_check_branch
    %18 = sbr.rel (0) target = $region17
  $region16: #{lstm_model_forward.1} parent=0 // pred_region
    _
  $region17: #{lstm_model_forward.1} parent=0 // pred_fallthru
    _
  // Predicated region
  $region18: #{lstm_model_forward.1} parent=0 // pred_check
    _
  $region19: #{lstm_model_forward.1} parent=0 // pred_check_branch
    %20 = sbr.rel (0) target = $region21
  $region20: #{lstm_model_forward.1} parent=0 // pred_region
    _
  $region21: #{lstm_model_forward.1} parent=0 // pred_fallthru
    _
  // Predicated region
  $region22: #{lstm_model_forward.1} parent=0 // pred_check
    _
  $region23: #{lstm_model_forward.1} parent=0 // pred_check_branch
    %22 = sbr.rel (0) target = $region25
  $region24: #{lstm_model_forward.1} parent=0 // pred_region
    _
  $region25: #{lstm_model_forward.1} parent=0 // pred_fallthru
    _
  %p24 = scmp.eq.s32.totalorder 0, 0
  // Predicated region
  $region26: #{lstm_model_forward.1} parent=0 // pred_check
    %p25 = pneg %p24
  $region27: #{lstm_model_forward.1} parent=0 // pred_check_branch
    %27 = sbr.rel (%p25) target = $region29
  $region28: #{lstm_model_forward.1} parent=0 // pred_region
    %28 = vst [vmem:[#allocation2] sm:$0xf] 0
    %29 = vst [vmem:[#allocation3] sm:$0xff] 0.0
  $region29: #{lstm_model_forward.1} parent=0 // pred_fallthru
    _
  %v30 = vld [vmem:[%s0] sm:$0xff]
  %v31 = vld [vmem:[%s0 + $0x8] sm:$0xff]
  %v32 = vld [vmem:[%s0 + $0x10] sm:$0xff]
  %v33 = vld [vmem:[%s0 + $0x18] sm:$0xff]
  %v34 = vld [vmem:[%s0 + $0x20] sm:$0xff]
  %v35 = vld [vmem:[%s0 + $0x28] sm:$0xff]
  %v36 = vld [vmem:[%s0 + $0x30] sm:$0xff]
  %v37 = vld [vmem:[%s0 + $0x38] sm:$0xff]
  %v38 = vpack.c.bf16 %v31, %v30
  %v39 = vpack.c.bf16 %v33, %v32
  %v40 = vpack.c.bf16 %v35, %v34
  %v41 = vpack.c.bf16 %v37, %v36
  %v42 = vld [vmem:[%s1] sm:$0xff]
  %v43 = vld [vmem:[%s1 + $0x8] sm:$0xff]
  %v44 = vld [vmem:[%s1 + $0x10] sm:$0xff]
  %v45 = vld [vmem:[%s1 + $0x18] sm:$0xff]
  %v46 = vld [vmem:[%s3] sm:$0xf]
  %v48 = vlaneseq
  %v49 = vshrl.u32 %v48, 7
  %v50 = vsub.s32 0, %v49
  %v51 = vrot.slane %v46, %v50
  %v52 = vlaneseq
  %v53 = vshrl.u32 %v52, 7
  %v54 = vsub.s32 1, %v53
  %v55 = vrot.slane %v46, %v54
  %v56 = vlaneseq
  %v57 = vshrl.u32 %v56, 7
  %v58 = vsub.s32 2, %v57
  %v59 = vrot.slane %v46, %v58
  %v60 = vlaneseq
  %v61 = vshrl.u32 %v60, 7
  %v62 = vsub.s32 3, %v61
  %v63 = vrot.slane %v46, %v62
  %v72 = vunpack.c.l.b16 %v42
  %v73 = vunpack.c.h.b16 %v42
  %v74 = vunpack.c.l.b16 %v43
  %v75 = vunpack.c.h.b16 %v43
  %v76 = vunpack.c.l.b16 %v44
  %v77 = vunpack.c.h.b16 %v44
  %v78 = vunpack.c.l.b16 %v45
  %v79 = vunpack.c.h.b16 %v45
  %v80 = vpack.c.b16 %v76, %v72
  %v81 = vpack.c.b16 %v77, %v73
  %v82 = vpack.c.b16 %v78, %v74
  %v83 = vpack.c.b16 %v79, %v75
  %vm88 = vcmask 130048
  %v90 = vsel %vm88, %v38, 0
  %v93 = vsel %vm88, %v39, 0
  %v96 = vsel %vm88, %v40, 0
  %v99 = vsel %vm88, %v41, 0
  %101 = vmatprep.subr.bf16.mxu0 0
  %102 = vmatpush1.bf16.msra.mxu0 0
  %103 = vmatprep.subr.bf16.mxu0 0
  %104 = vmatpush1.bf16.msra.mxu0 0
  %105 = vmatprep.subr.bf16.mxu0 0
  %106 = vmatpush1.bf16.msra.mxu0 0
  %107 = vmatprep.subr.bf16.mxu0 0
  %108 = vmatpush1.bf16.msra.mxu0 0
  %109 = vmatprep.subr.bf16.mxu0 0
  %110 = vmatpush1.bf16.msra.mxu0 0
  %111 = vmatprep.subr.bf16.mxu0 0
  %112 = vmatpush1.bf16.msra.mxu0 0
  %113 = vmatprep.subr.bf16.mxu0 0
  %114 = vmatpush1.bf16.msra.mxu0 0
  %115 = vmatprep.subr.bf16.mxu0 %v81
  %116 = vmatpush1.bf16.msra.mxu0 %v80
  %117 = vmatprep.subr.bf16.mxu0 0
  %118 = vmatpush2.bf16.msra.mxu0 0
  %119 = vmatprep.subr.bf16.mxu0 0
  %120 = vmatpush2.bf16.msra.mxu0 0
  %121 = vmatprep.subr.bf16.mxu0 0
  %122 = vmatpush2.bf16.msra.mxu0 0
  %123 = vmatprep.subr.bf16.mxu0 0
  %124 = vmatpush2.bf16.msra.mxu0 0
  %125 = vmatprep.subr.bf16.mxu0 0
  %126 = vmatpush2.bf16.msra.mxu0 0
  %127 = vmatprep.subr.bf16.mxu0 0
  %128 = vmatpush2.bf16.msra.mxu0 0
  %129 = vmatprep.subr.bf16.mxu0 0
  %130 = vmatpush2.bf16.msra.mxu0 0
  %131 = vmatprep.subr.bf16.mxu0 0
  %132 = vmatpush2.bf16.msra.mxu0 0
  %133 = vmatprep.mubr.bf16.mxu0 0
  %134 = vmatmul.mubr.bf16.gmra.mxu0 %v90
  %v135 = vpop.f32.mrf.mxu0
  %v136 = vadd.f32 %v51, %v135
  %v137 = vpop.f32.mrf.mxu0
  %v138 = vadd.f32 %v55, %v137
  %v139 = vpop.f32.mrf.mxu0
  %v140 = vadd.f32 %v51, %v139
  %v141 = vpop.f32.mrf.mxu0
  %v142 = vadd.f32 %v55, %v141
  %143 = vmatprep.mubr.bf16.mxu0 0
  %144 = vmatmul.mubr.bf16.gmra.mxu0 %v93
  %v145 = vpop.f32.mrf.mxu0
  %v146 = vadd.f32 %v51, %v145
  %v147 = vpop.f32.mrf.mxu0
  %v148 = vadd.f32 %v55, %v147
  %v149 = vpop.f32.mrf.mxu0
  %v150 = vadd.f32 %v51, %v149
  %v151 = vpop.f32.mrf.mxu0
  %v152 = vadd.f32 %v55, %v151
  %153 = vmatprep.mubr.bf16.mxu0 0
  %154 = vmatmul.mubr.bf16.gmra.mxu0 %v96
  %v155 = vpop.f32.mrf.mxu0
  %v156 = vadd.f32 %v51, %v155
  %v157 = vpop.f32.mrf.mxu0
  %v158 = vadd.f32 %v55, %v157
  %v159 = vpop.f32.mrf.mxu0
  %v160 = vadd.f32 %v51, %v159
  %v161 = vpop.f32.mrf.mxu0
  %v162 = vadd.f32 %v55, %v161
  %163 = vmatprep.mubr.bf16.mxu0 0
  %164 = vmatmul.mubr.bf16.gmra.mxu0 %v99
  %v165 = vpop.f32.mrf.mxu0
  %v166 = vadd.f32 %v51, %v165
  %v167 = vpop.f32.mrf.mxu0
  %v168 = vadd.f32 %v55, %v167
  %v169 = vpop.f32.mrf.mxu0
  %v170 = vadd.f32 %v51, %v169
  %v171 = vpop.f32.mrf.mxu0
  %v172 = vadd.f32 %v55, %v171
  %173 = vdwg.mxu0
  %174 = vmatprep.subr.bf16.mxu0 0
  %175 = vmatpush1.bf16.msra.mxu0 0
  %176 = vmatprep.subr.bf16.mxu0 0
  %177 = vmatpush1.bf16.msra.mxu0 0
  %178 = vmatprep.subr.bf16.mxu0 0
  %179 = vmatpush1.bf16.msra.mxu0 0
  %180 = vmatprep.subr.bf16.mxu0 0
  %181 = vmatpush1.bf16.msra.mxu0 0
  %182 = vmatprep.subr.bf16.mxu0 0
  %183 = vmatpush1.bf16.msra.mxu0 0
  %184 = vmatprep.subr.bf16.mxu0 0
  %185 = vmatpush1.bf16.msra.mxu0 0
  %186 = vmatprep.subr.bf16.mxu0 0
  %187 = vmatpush1.bf16.msra.mxu0 0
  %188 = vmatprep.subr.bf16.mxu0 %v83
  %189 = vmatpush1.bf16.msra.mxu0 %v82
  %190 = vmatprep.subr.bf16.mxu0 0
  %191 = vmatpush2.bf16.msra.mxu0 0
  %192 = vmatprep.subr.bf16.mxu0 0
  %193 = vmatpush2.bf16.msra.mxu0 0
  %194 = vmatprep.subr.bf16.mxu0 0
  %195 = vmatpush2.bf16.msra.mxu0 0
  %196 = vmatprep.subr.bf16.mxu0 0
  %197 = vmatpush2.bf16.msra.mxu0 0
  %198 = vmatprep.subr.bf16.mxu0 0
  %199 = vmatpush2.bf16.msra.mxu0 0
  %200 = vmatprep.subr.bf16.mxu0 0
  %201 = vmatpush2.bf16.msra.mxu0 0
  %202 = vmatprep.subr.bf16.mxu0 0
  %203 = vmatpush2.bf16.msra.mxu0 0
  %204 = vmatprep.subr.bf16.mxu0 0
  %205 = vmatpush2.bf16.msra.mxu0 0
  %206 = vmatprep.mubr.bf16.mxu0 0
  %207 = vmatmul.mubr.bf16.gmra.mxu0 %v90
  %v208 = vpop.f32.mrf.mxu0
  %v209 = vadd.f32 %v59, %v208
  %v210 = vpop.f32.mrf.mxu0
  %v211 = vadd.f32 %v63, %v210
  %v212 = vpop.f32.mrf.mxu0
  %v213 = vadd.f32 %v59, %v212
  %v214 = vpop.f32.mrf.mxu0
  %v215 = vadd.f32 %v63, %v214
  %216 = vmatprep.mubr.bf16.mxu0 0
  %217 = vmatmul.mubr.bf16.gmra.mxu0 %v93
  %v218 = vpop.f32.mrf.mxu0
  %v219 = vadd.f32 %v59, %v218
  %v220 = vpop.f32.mrf.mxu0
  %v221 = vadd.f32 %v63, %v220
  %v222 = vpop.f32.mrf.mxu0
  %v223 = vadd.f32 %v59, %v222
  %v224 = vpop.f32.mrf.mxu0
  %v225 = vadd.f32 %v63, %v224
  %226 = vmatprep.mubr.bf16.mxu0 0
  %227 = vmatmul.mubr.bf16.gmra.mxu0 %v96
  %v228 = vpop.f32.mrf.mxu0
  %v229 = vadd.f32 %v59, %v228
  %v230 = vpop.f32.mrf.mxu0
  %v231 = vadd.f32 %v63, %v230
  %v232 = vpop.f32.mrf.mxu0
  %v233 = vadd.f32 %v59, %v232
  %v234 = vpop.f32.mrf.mxu0
  %v235 = vadd.f32 %v63, %v234
  %236 = vmatprep.mubr.bf16.mxu0 0
  %237 = vmatmul.mubr.bf16.gmra.mxu0 %v99
  %v238 = vpop.f32.mrf.mxu0
  %v239 = vadd.f32 %v59, %v238
  %v240 = vpop.f32.mrf.mxu0
  %v241 = vadd.f32 %v63, %v240
  %v242 = vpop.f32.mrf.mxu0
  %v243 = vadd.f32 %v59, %v242
  %v244 = vpop.f32.mrf.mxu0
  %v245 = vadd.f32 %v63, %v244
  %246 = vdwg.mxu0
  %247 = vst [vmem:[#allocation4] sm:$0xff] %v136
  %248 = vst [vmem:[#allocation4 + $0x8] sm:$0xff] %v138
  %249 = vst [vmem:[#allocation4 + $0x10] sm:$0xff] %v209
  %250 = vst [vmem:[#allocation4 + $0x18] sm:$0xff] %v211
  %251 = vst [vmem:[#allocation4 + $0x20] sm:$0xff] %v140
  %252 = vst [vmem:[#allocation4 + $0x28] sm:$0xff] %v142
  %253 = vst [vmem:[#allocation4 + $0x30] sm:$0xff] %v213
  %254 = vst [vmem:[#allocation4 + $0x38] sm:$0xff] %v215
  %255 = vst [vmem:[#allocation4 + $0x40] sm:$0xff] %v146
  %256 = vst [vmem:[#allocation4 + $0x48] sm:$0xff] %v148
  %257 = vst [vmem:[#allocation4 + $0x50] sm:$0xff] %v219
  %258 = vst [vmem:[#allocation4 + $0x58] sm:$0xff] %v221
  %259 = vst [vmem:[#allocation4 + $0x60] sm:$0xff] %v150
  %260 = vst [vmem:[#allocation4 + $0x68] sm:$0xff] %v152
  %261 = vst [vmem:[#allocation4 + $0x70] sm:$0xff] %v223
  %262 = vst [vmem:[#allocation4 + $0x78] sm:$0xff] %v225
  %263 = vst [vmem:[#allocation4 + $0x80] sm:$0xff] %v156
  %264 = vst [vmem:[#allocation4 + $0x88] sm:$0xff] %v158
  %265 = vst [vmem:[#allocation4 + $0x90] sm:$0xff] %v229
  %266 = vst [vmem:[#allocation4 + $0x98] sm:$0xff] %v231
  %267 = vst [vmem:[#allocation4 + $0xa0] sm:$0xff] %v160
  %268 = vst [vmem:[#allocation4 + $0xa8] sm:$0xff] %v162
  %269 = vst [vmem:[#allocation4 + $0xb0] sm:$0xff] %v233
  %270 = vst [vmem:[#allocation4 + $0xb8] sm:$0xff] %v235
  %271 = vst [vmem:[#allocation4 + $0xc0] sm:$0xff] %v166
  %272 = vst [vmem:[#allocation4 + $0xc8] sm:$0xff] %v168
  %273 = vst [vmem:[#allocation4 + $0xd0] sm:$0xff] %v239
  %274 = vst [vmem:[#allocation4 + $0xd8] sm:$0xff] %v241
  %275 = vst [vmem:[#allocation4 + $0xe0] sm:$0xff] %v170
  %276 = vst [vmem:[#allocation4 + $0xe8] sm:$0xff] %v172
  %277 = vst [vmem:[#allocation4 + $0xf0] sm:$0xff] %v243
  %278 = vst [vmem:[#allocation4 + $0xf8] sm:$0xff] %v245
  %v279 = vld [vmem:[#allocation4] sm:$0xff]
  %v280 = vld [vmem:[#allocation4 + $0x8] sm:$0xff]
  %v281 = vld [vmem:[#allocation4 + $0x10] sm:$0xff]
  %v282 = vld [vmem:[#allocation4 + $0x18] sm:$0xff]
  %v283 = vld [vmem:[#allocation2] sm:$0xf]
  %v284 = vld [vmem:[%s2] sm:$0xff]
  %v285 = vld [vmem:[%s2 + $0x8] sm:$0xff]
  %v286 = vld [vmem:[%s2 + $0x10] sm:$0xff]
  %v287 = vld [vmem:[%s2 + $0x18] sm:$0xff]
  %v288 = vld [vmem:[%s2 + $0x20] sm:$0xff]
  %v289 = vld [vmem:[%s2 + $0x28] sm:$0xff]
  %v290 = vld [vmem:[%s2 + $0x30] sm:$0xff]
  %v291 = vld [vmem:[%s2 + $0x38] sm:$0xff]
  %v292 = vld [vmem:[%s2 + $0x40] sm:$0xff]
  %v293 = vld [vmem:[%s2 + $0x48] sm:$0xff]
  %v294 = vld [vmem:[%s2 + $0x50] sm:$0xff]
  %v295 = vld [vmem:[%s2 + $0x58] sm:$0xff]
  %v296 = vld [vmem:[%s2 + $0x60] sm:$0xff]
  %v297 = vld [vmem:[%s2 + $0x68] sm:$0xff]
  %v298 = vld [vmem:[%s2 + $0x70] sm:$0xff]
  %v299 = vld [vmem:[%s2 + $0x78] sm:$0xff]
  %v300 = vld [vmem:[%s2 + $0x80] sm:$0xff]
  %v301 = vld [vmem:[%s2 + $0x88] sm:$0xff]
  %v302 = vld [vmem:[%s2 + $0x90] sm:$0xff]
  %v303 = vld [vmem:[%s2 + $0x98] sm:$0xff]
  %v304 = vld [vmem:[%s2 + $0xa0] sm:$0xff]
  %v305 = vld [vmem:[%s2 + $0xa8] sm:$0xff]
  %v306 = vld [vmem:[%s2 + $0xb0] sm:$0xff]
  %v307 = vld [vmem:[%s2 + $0xb8] sm:$0xff]
  %v308 = vld [vmem:[%s2 + $0xc0] sm:$0xff]
  %v309 = vld [vmem:[%s2 + $0xc8] sm:$0xff]
  %v310 = vld [vmem:[%s2 + $0xd0] sm:$0xff]
  %v311 = vld [vmem:[%s2 + $0xd8] sm:$0xff]
  %v312 = vld [vmem:[%s2 + $0xe0] sm:$0xff]
  %v313 = vld [vmem:[%s2 + $0xe8] sm:$0xff]
  %v314 = vld [vmem:[%s2 + $0xf0] sm:$0xff]
  %v315 = vld [vmem:[%s2 + $0xf8] sm:$0xff]
  %v348 = vunpack.c.l.b16 %v284
  %v349 = vunpack.c.h.b16 %v284
  %v350 = vunpack.c.l.b16 %v285
  %v351 = vunpack.c.h.b16 %v285
  %v352 = vunpack.c.l.b16 %v286
  %v353 = vunpack.c.h.b16 %v286
  %v354 = vunpack.c.l.b16 %v287
  %v355 = vunpack.c.h.b16 %v287
  %v356 = vunpack.c.l.b16 %v288
  %v357 = vunpack.c.h.b16 %v288
  %v358 = vunpack.c.l.b16 %v289
  %v359 = vunpack.c.h.b16 %v289
  %v360 = vunpack.c.l.b16 %v290
  %v361 = vunpack.c.h.b16 %v290
  %v362 = vunpack.c.l.b16 %v291
  %v363 = vunpack.c.h.b16 %v291
  %v364 = vunpack.c.l.b16 %v292
  %v365 = vunpack.c.h.b16 %v292
  %v366 = vunpack.c.l.b16 %v293
  %v367 = vunpack.c.h.b16 %v293
  %v368 = vunpack.c.l.b16 %v294
  %v369 = vunpack.c.h.b16 %v294
  %v370 = vunpack.c.l.b16 %v295
  %v371 = vunpack.c.h.b16 %v295
  %v372 = vunpack.c.l.b16 %v296
  %v373 = vunpack.c.h.b16 %v296
  %v374 = vunpack.c.l.b16 %v297
  %v375 = vunpack.c.h.b16 %v297
  %v376 = vunpack.c.l.b16 %v298
  %v377 = vunpack.c.h.b16 %v298
  %v378 = vunpack.c.l.b16 %v299
  %v379 = vunpack.c.h.b16 %v299
  %v380 = vunpack.c.l.b16 %v300
  %v381 = vunpack.c.h.b16 %v300
  %v382 = vunpack.c.l.b16 %v301
  %v383 = vunpack.c.h.b16 %v301
  %v384 = vunpack.c.l.b16 %v302
  %v385 = vunpack.c.h.b16 %v302
  %v386 = vunpack.c.l.b16 %v303
  %v387 = vunpack.c.h.b16 %v303
  %v388 = vunpack.c.l.b16 %v304
  %v389 = vunpack.c.h.b16 %v304
  %v390 = vunpack.c.l.b16 %v305
  %v391 = vunpack.c.h.b16 %v305
  %v392 = vunpack.c.l.b16 %v306
  %v393 = vunpack.c.h.b16 %v306
  %v394 = vunpack.c.l.b16 %v307
  %v395 = vunpack.c.h.b16 %v307
  %v396 = vunpack.c.l.b16 %v308
  %v397 = vunpack.c.h.b16 %v308
  %v398 = vunpack.c.l.b16 %v309
  %v399 = vunpack.c.h.b16 %v309
  %v400 = vunpack.c.l.b16 %v310
  %v401 = vunpack.c.h.b16 %v310
  %v402 = vunpack.c.l.b16 %v311
  %v403 = vunpack.c.h.b16 %v311
  %v404 = vunpack.c.l.b16 %v312
  %v405 = vunpack.c.h.b16 %v312
  %v406 = vunpack.c.l.b16 %v313
  %v407 = vunpack.c.h.b16 %v313
  %v408 = vunpack.c.l.b16 %v314
  %v409 = vunpack.c.h.b16 %v314
  %v410 = vunpack.c.l.b16 %v315
  %v411 = vunpack.c.h.b16 %v315
  %v412 = vpack.c.b16 %v352, %v348
  %v413 = vpack.c.b16 %v353, %v349
  %v414 = vpack.c.b16 %v354, %v350
  %v415 = vpack.c.b16 %v355, %v351
  %v416 = vpack.c.b16 %v360, %v356
  %v417 = vpack.c.b16 %v361, %v357
  %v418 = vpack.c.b16 %v362, %v358
  %v419 = vpack.c.b16 %v363, %v359
  %v420 = vpack.c.b16 %v368, %v364
  %v421 = vpack.c.b16 %v369, %v365
  %v422 = vpack.c.b16 %v370, %v366
  %v423 = vpack.c.b16 %v371, %v367
  %v424 = vpack.c.b16 %v376, %v372
  %v425 = vpack.c.b16 %v377, %v373
  %v426 = vpack.c.b16 %v378, %v374
  %v427 = vpack.c.b16 %v379, %v375
  %v428 = vpack.c.b16 %v384, %v380
  %v429 = vpack.c.b16 %v385, %v381
  %v430 = vpack.c.b16 %v386, %v382
  %v431 = vpack.c.b16 %v387, %v383
  %v432 = vpack.c.b16 %v392, %v388
  %v433 = vpack.c.b16 %v393, %v389
  %v434 = vpack.c.b16 %v394, %v390
  %v435 = vpack.c.b16 %v395, %v391
  %v436 = vpack.c.b16 %v400, %v396
  %v437 = vpack.c.b16 %v401, %v397
  %v438 = vpack.c.b16 %v402, %v398
  %v439 = vpack.c.b16 %v403, %v399
  %v440 = vpack.c.b16 %v408, %v404
  %v441 = vpack.c.b16 %v409, %v405
  %v442 = vpack.c.b16 %v410, %v406
  %v443 = vpack.c.b16 %v411, %v407
  %476 = vmatprep.subr.bf16.mxu0 %v441
  %477 = vmatpush1.bf16.msra.mxu0 %v440
  %478 = vmatprep.subr.bf16.mxu0 %v437
  %479 = vmatpush1.bf16.msra.mxu0 %v436
  %480 = vmatprep.subr.bf16.mxu0 %v433
  %481 = vmatpush1.bf16.msra.mxu0 %v432
  %482 = vmatprep.subr.bf16.mxu0 %v429
  %483 = vmatpush1.bf16.msra.mxu0 %v428
  %484 = vmatprep.subr.bf16.mxu0 %v425
  %485 = vmatpush1.bf16.msra.mxu0 %v424
  %486 = vmatprep.subr.bf16.mxu0 %v421
  %487 = vmatpush1.bf16.msra.mxu0 %v420
  %488 = vmatprep.subr.bf16.mxu0 %v417
  %489 = vmatpush1.bf16.msra.mxu0 %v416
  %490 = vmatprep.subr.bf16.mxu0 %v413
  %491 = vmatpush1.bf16.msra.mxu0 %v412
  %492 = vmatprep.subr.bf16.mxu0 0
  %493 = vmatpush2.bf16.msra.mxu0 0
  %494 = vmatprep.subr.bf16.mxu0 0
  %495 = vmatpush2.bf16.msra.mxu0 0
  %496 = vmatprep.subr.bf16.mxu0 0
  %497 = vmatpush2.bf16.msra.mxu0 0
  %498 = vmatprep.subr.bf16.mxu0 0
  %499 = vmatpush2.bf16.msra.mxu0 0
  %500 = vmatprep.subr.bf16.mxu0 0
  %501 = vmatpush2.bf16.msra.mxu0 0
  %502 = vmatprep.subr.bf16.mxu0 0
  %503 = vmatpush2.bf16.msra.mxu0 0
  %504 = vmatprep.subr.bf16.mxu0 0
  %505 = vmatpush2.bf16.msra.mxu0 0
  %506 = vmatprep.subr.bf16.mxu0 0
  %507 = vmatpush2.bf16.msra.mxu0 0
  %508 = vmatprep.mubr.bf16.mxu0 0
  %509 = vmatmul.mubr.bf16.gmra.mxu0 %v283
  %v510 = vpop.f32.mrf.mxu0
  %v511 = vadd.f32 0.0, %v510
  %v512 = vpop.f32.mrf.mxu0
  %v513 = vadd.f32 0.0, %v512
  %v514 = vpop.f32.mrf.mxu0
  %v515 = vpop.f32.mrf.mxu0
  %516 = vdwg.mxu0
  %517 = vmatprep.subr.bf16.mxu0 %v443
  %518 = vmatpush1.bf16.msra.mxu0 %v442
  %519 = vmatprep.subr.bf16.mxu0 %v439
  %520 = vmatpush1.bf16.msra.mxu0 %v438
  %521 = vmatprep.subr.bf16.mxu0 %v435
  %522 = vmatpush1.bf16.msra.mxu0 %v434
  %523 = vmatprep.subr.bf16.mxu0 %v431
  %524 = vmatpush1.bf16.msra.mxu0 %v430
  %525 = vmatprep.subr.bf16.mxu0 %v427
  %526 = vmatpush1.bf16.msra.mxu0 %v426
  %527 = vmatprep.subr.bf16.mxu0 %v423
  %528 = vmatpush1.bf16.msra.mxu0 %v422
  %529 = vmatprep.subr.bf16.mxu0 %v419
  %530 = vmatpush1.bf16.msra.mxu0 %v418
  %531 = vmatprep.subr.bf16.mxu0 %v415
  %532 = vmatpush1.bf16.msra.mxu0 %v414
  %533 = vmatprep.subr.bf16.mxu0 0
  %534 = vmatpush2.bf16.msra.mxu0 0
  %535 = vmatprep.subr.bf16.mxu0 0
  %536 = vmatpush2.bf16.msra.mxu0 0
  %537 = vmatprep.subr.bf16.mxu0 0
  %538 = vmatpush2.bf16.msra.mxu0 0
  %539 = vmatprep.subr.bf16.mxu0 0
  %540 = vmatpush2.bf16.msra.mxu0 0
  %541 = vmatprep.subr.bf16.mxu0 0
  %542 = vmatpush2.bf16.msra.mxu0 0
  %543 = vmatprep.subr.bf16.mxu0 0
  %544 = vmatpush2.bf16.msra.mxu0 0
  %545 = vmatprep.subr.bf16.mxu0 0
  %546 = vmatpush2.bf16.msra.mxu0 0
  %547 = vmatprep.subr.bf16.mxu0 0
  %548 = vmatpush2.bf16.msra.mxu0 0
  %549 = vmatprep.mubr.bf16.mxu0 0
  %550 = vmatmul.mubr.bf16.gmra.mxu0 %v283
  %v551 = vpop.f32.mrf.mxu0
  %v552 = vadd.f32 0.0, %v551
  %v553 = vpop.f32.mrf.mxu0
  %v554 = vadd.f32 0.0, %v553
  %v555 = vpop.f32.mrf.mxu0
  %v556 = vpop.f32.mrf.mxu0
  %557 = vdwg.mxu0
  %v558 = vadd.f32 %v279, %v511
  %v559 = vadd.f32 %v280, %v513
  %v560 = vadd.f32 %v281, %v552
  %v561 = vadd.f32 %v282, %v554
  %v562 = vxor.u32 %v558, 2147483648
  %v563 = vmul.f32 %v562, 1.442695
  %v564 = vpow.pop %v563
  %v565 = vadd.f32 %v564, 1.0
  %v566 = vrcp.pop %v565
  %v567 = vmul.f32 1.0, %v566
  %v568 = vxor.u32 %v559, 2147483648
  %v569 = vmul.f32 %v568, 1.442695
  %v570 = vpow.pop %v569
  %v571 = vadd.f32 %v570, 1.0
  %v572 = vrcp.pop %v571
  %v573 = vmul.f32 1.0, %v572
  %v574 = vtanh.pop %v560
  %v575 = vxor.u32 %v561, 2147483648
  %v576 = vmul.f32 %v575, 1.442695
  %v577 = vpow.pop %v576
  %v578 = vadd.f32 %v577, 1.0
  %v579 = vrcp.pop %v578
  %v580 = vmul.f32 1.0, %v579
  %v581 = vld [vmem:[#allocation3] sm:$0xff]
  %v582 = vmul.f32 %v573, %v581
  %v583 = vmul.f32 %v567, %v574
  %v584 = vadd.f32 %v582, %v583
  %v585 = vtanh.pop %v584
  %v586 = vmul.f32 %v580, %v585
  %587 = vst [vmem:[#allocation3] sm:$0xff] %v584
  %v588 = vpack.c.bf16 %v586, %v586
  %589 = vst [vmem:[#allocation2] sm:$0xf] %v588
  %s590 = scalar_lea.vmem [#allocation4], 32
  %v591 = vld [vmem:[%s590] sm:$0xff]
  %v592 = vld [vmem:[%s590 + $0x8] sm:$0xff]
  %v593 = vld [vmem:[%s590 + $0x10] sm:$0xff]
  %v594 = vld [vmem:[%s590 + $0x18] sm:$0xff]
  %v595 = vld [vmem:[#allocation2] sm:$0xf]
  %v596 = vld [vmem:[%s2] sm:$0xff]
  %v597 = vld [vmem:[%s2 + $0x8] sm:$0xff]
  %v598 = vld [vmem:[%s2 + $0x10] sm:$0xff]
  %v599 = vld [vmem:[%s2 + $0x18] sm:$0xff]
  %v600 = vld [vmem:[%s2 + $0x20] sm:$0xff]
  %v601 = vld [vmem:[%s2 + $0x28] sm:$0xff]
  %v602 = vld [vmem:[%s2 + $0x30] sm:$0xff]
  %v603 = vld [vmem:[%s2 + $0x38] sm:$0xff]
  %v604 = vld [vmem:[%s2 + $0x40] sm:$0xff]
  %v605 = vld [vmem:[%s2 + $0x48] sm:$0xff]
  %v606 = vld [vmem:[%s2 + $0x50] sm:$0xff]
  %v607 = vld [vmem:[%s2 + $0x58] sm:$0xff]
  %v608 = vld [vmem:[%s2 + $0x60] sm:$0xff]
  %v609 = vld [vmem:[%s2 + $0x68] sm:$0xff]
  %v610 = vld [vmem:[%s2 + $0x70] sm:$0xff]
  %v611 = vld [vmem:[%s2 + $0x78] sm:$0xff]
  %v612 = vld [vmem:[%s2 + $0x80] sm:$0xff]
  %v613 = vld [vmem:[%s2 + $0x88] sm:$0xff]
  %v614 = vld [vmem:[%s2 + $0x90] sm:$0xff]
  %v615 = vld [vmem:[%s2 + $0x98] sm:$0xff]
  %v616 = vld [vmem:[%s2 + $0xa0] sm:$0xff]
  %v617 = vld [vmem:[%s2 + $0xa8] sm:$0xff]
  %v618 = vld [vmem:[%s2 + $0xb0] sm:$0xff]
  %v619 = vld [vmem:[%s2 + $0xb8] sm:$0xff]
  %v620 = vld [vmem:[%s2 + $0xc0] sm:$0xff]
  %v621 = vld [vmem:[%s2 + $0xc8] sm:$0xff]
  %v622 = vld [vmem:[%s2 + $0xd0] sm:$0xff]
  %v623 = vld [vmem:[%s2 + $0xd8] sm:$0xff]
  %v624 = vld [vmem:[%s2 + $0xe0] sm:$0xff]
  %v625 = vld [vmem:[%s2 + $0xe8] sm:$0xff]
  %v626 = vld [vmem:[%s2 + $0xf0] sm:$0xff]
  %v627 = vld [vmem:[%s2 + $0xf8] sm:$0xff]
  %v660 = vunpack.c.l.b16 %v596
  %v661 = vunpack.c.h.b16 %v596
  %v662 = vunpack.c.l.b16 %v597
  %v663 = vunpack.c.h.b16 %v597
  %v664 = vunpack.c.l.b16 %v598
  %v665 = vunpack.c.h.b16 %v598
  %v666 = vunpack.c.l.b16 %v599
  %v667 = vunpack.c.h.b16 %v599
  %v668 = vunpack.c.l.b16 %v600
  %v669 = vunpack.c.h.b16 %v600
  %v670 = vunpack.c.l.b16 %v601
  %v671 = vunpack.c.h.b16 %v601
  %v672 = vunpack.c.l.b16 %v602
  %v673 = vunpack.c.h.b16 %v602
  %v674 = vunpack.c.l.b16 %v603
  %v675 = vunpack.c.h.b16 %v603
  %v676 = vunpack.c.l.b16 %v604
  %v677 = vunpack.c.h.b16 %v604
  %v678 = vunpack.c.l.b16 %v605
  %v679 = vunpack.c.h.b16 %v605
  %v680 = vunpack.c.l.b16 %v606
  %v681 = vunpack.c.h.b16 %v606
  %v682 = vunpack.c.l.b16 %v607
  %v683 = vunpack.c.h.b16 %v607
  %v684 = vunpack.c.l.b16 %v608
  %v685 = vunpack.c.h.b16 %v608
  %v686 = vunpack.c.l.b16 %v609
  %v687 = vunpack.c.h.b16 %v609
  %v688 = vunpack.c.l.b16 %v610
  %v689 = vunpack.c.h.b16 %v610
  %v690 = vunpack.c.l.b16 %v611
  %v691 = vunpack.c.h.b16 %v611
  %v692 = vunpack.c.l.b16 %v612
  %v693 = vunpack.c.h.b16 %v612
  %v694 = vunpack.c.l.b16 %v613
  %v695 = vunpack.c.h.b16 %v613
  %v696 = vunpack.c.l.b16 %v614
  %v697 = vunpack.c.h.b16 %v614
  %v698 = vunpack.c.l.b16 %v615
  %v699 = vunpack.c.h.b16 %v615
  %v700 = vunpack.c.l.b16 %v616
  %v701 = vunpack.c.h.b16 %v616
  %v702 = vunpack.c.l.b16 %v617
  %v703 = vunpack.c.h.b16 %v617
  %v704 = vunpack.c.l.b16 %v618
  %v705 = vunpack.c.h.b16 %v618
  %v706 = vunpack.c.l.b16 %v619
  %v707 = vunpack.c.h.b16 %v619
  %v708 = vunpack.c.l.b16 %v620
  %v709 = vunpack.c.h.b16 %v620
  %v710 = vunpack.c.l.b16 %v621
  %v711 = vunpack.c.h.b16 %v621
  %v712 = vunpack.c.l.b16 %v622
  %v713 = vunpack.c.h.b16 %v622
  %v714 = vunpack.c.l.b16 %v623
  %v715 = vunpack.c.h.b16 %v623
  %v716 = vunpack.c.l.b16 %v624
  %v717 = vunpack.c.h.b16 %v624
  %v718 = vunpack.c.l.b16 %v625
  %v719 = vunpack.c.h.b16 %v625
  %v720 = vunpack.c.l.b16 %v626
  %v721 = vunpack.c.h.b16 %v626
  %v722 = vunpack.c.l.b16 %v627
  %v723 = vunpack.c.h.b16 %v627
  %v724 = vpack.c.b16 %v664, %v660
  %v725 = vpack.c.b16 %v665, %v661
  %v726 = vpack.c.b16 %v666, %v662
  %v727 = vpack.c.b16 %v667, %v663
  %v728 = vpack.c.b16 %v672, %v668
  %v729 = vpack.c.b16 %v673, %v669
  %v730 = vpack.c.b16 %v674, %v670
  %v731 = vpack.c.b16 %v675, %v671
  %v732 = vpack.c.b16 %v680, %v676
  %v733 = vpack.c.b16 %v681, %v677
  %v734 = vpack.c.b16 %v682, %v678
  %v735 = vpack.c.b16 %v683, %v679
  %v736 = vpack.c.b16 %v688, %v684
  %v737 = vpack.c.b16 %v689, %v685
  %v738 = vpack.c.b16 %v690, %v686
  %v739 = vpack.c.b16 %v691, %v687
  %v740 = vpack.c.b16 %v696, %v692
  %v741 = vpack.c.b16 %v697, %v693
  %v742 = vpack.c.b16 %v698, %v694
  %v743 = vpack.c.b16 %v699, %v695
  %v744 = vpack.c.b16 %v704, %v700
  %v745 = vpack.c.b16 %v705, %v701
  %v746 = vpack.c.b16 %v706, %v702
  %v747 = vpack.c.b16 %v707, %v703
  %v748 = vpack.c.b16 %v712, %v708
  %v749 = vpack.c.b16 %v713, %v709
  %v750 = vpack.c.b16 %v714, %v710
  %v751 = vpack.c.b16 %v715, %v711
  %v752 = vpack.c.b16 %v720, %v716
  %v753 = vpack.c.b16 %v721, %v717
  %v754 = vpack.c.b16 %v722, %v718
  %v755 = vpack.c.b16 %v723, %v719
  %788 = vmatprep.subr.bf16.mxu0 %v753
  %789 = vmatpush1.bf16.msra.mxu0 %v752
  %790 = vmatprep.subr.bf16.mxu0 %v749
  %791 = vmatpush1.bf16.msra.mxu0 %v748
  %792 = vmatprep.subr.bf16.mxu0 %v745
  %793 = vmatpush1.bf16.msra.mxu0 %v744
  %794 = vmatprep.subr.bf16.mxu0 %v741
  %795 = vmatpush1.bf16.msra.mxu0 %v740
  %796 = vmatprep.subr.bf16.mxu0 %v737
  %797 = vmatpush1.bf16.msra.mxu0 %v736
  %798 = vmatprep.subr.bf16.mxu0 %v733
  %799 = vmatpush1.bf16.msra.mxu0 %v732
  %800 = vmatprep.subr.bf16.mxu0 %v729
  %801 = vmatpush1.bf16.msra.mxu0 %v728
  %802 = vmatprep.subr.bf16.mxu0 %v725
  %803 = vmatpush1.bf16.msra.mxu0 %v724
  %804 = vmatprep.subr.bf16.mxu0 0
  %805 = vmatpush2.bf16.msra.mxu0 0
  %806 = vmatprep.subr.bf16.mxu0 0
  %807 = vmatpush2.bf16.msra.mxu0 0
  %808 = vmatprep.subr.bf16.mxu0 0
  %809 = vmatpush2.bf16.msra.mxu0 0
  %810 = vmatprep.subr.bf16.mxu0 0
  %811 = vmatpush2.bf16.msra.mxu0 0
  %812 = vmatprep.subr.bf16.mxu0 0
  %813 = vmatpush2.bf16.msra.mxu0 0
  %814 = vmatprep.subr.bf16.mxu0 0
  %815 = vmatpush2.bf16.msra.mxu0 0
  %816 = vmatprep.subr.bf16.mxu0 0
  %817 = vmatpush2.bf16.msra.mxu0 0
  %818 = vmatprep.subr.bf16.mxu0 0
  %819 = vmatpush2.bf16.msra.mxu0 0
  %820 = vmatprep.mubr.bf16.mxu0 0
  %821 = vmatmul.mubr.bf16.gmra.mxu0 %v595
  %v822 = vpop.f32.mrf.mxu0
  %v823 = vadd.f32 0.0, %v822
  %v824 = vpop.f32.mrf.mxu0
  %v825 = vadd.f32 0.0, %v824
  %v826 = vpop.f32.mrf.mxu0
  %v827 = vpop.f32.mrf.mxu0
  %828 = vdwg.mxu0
  %829 = vmatprep.subr.bf16.mxu0 %v755
  %830 = vmatpush1.bf16.msra.mxu0 %v754
  %831 = vmatprep.subr.bf16.mxu0 %v751
  %832 = vmatpush1.bf16.msra.mxu0 %v750
  %833 = vmatprep.subr.bf16.mxu0 %v747
  %834 = vmatpush1.bf16.msra.mxu0 %v746
  %835 = vmatprep.subr.bf16.mxu0 %v743
  %836 = vmatpush1.bf16.msra.mxu0 %v742
  %837 = vmatprep.subr.bf16.mxu0 %v739
  %838 = vmatpush1.bf16.msra.mxu0 %v738
  %839 = vmatprep.subr.bf16.mxu0 %v735
  %840 = vmatpush1.bf16.msra.mxu0 %v734
  %841 = vmatprep.subr.bf16.mxu0 %v731
  %842 = vmatpush1.bf16.msra.mxu0 %v730
  %843 = vmatprep.subr.bf16.mxu0 %v727
  %844 = vmatpush1.bf16.msra.mxu0 %v726
  %845 = vmatprep.subr.bf16.mxu0 0
  %846 = vmatpush2.bf16.msra.mxu0 0
  %847 = vmatprep.subr.bf16.mxu0 0
  %848 = vmatpush2.bf16.msra.mxu0 0
  %849 = vmatprep.subr.bf16.mxu0 0
  %850 = vmatpush2.bf16.msra.mxu0 0
  %851 = vmatprep.subr.bf16.mxu0 0
  %852 = vmatpush2.bf16.msra.mxu0 0
  %853 = vmatprep.subr.bf16.mxu0 0
  %854 = vmatpush2.bf16.msra.mxu0 0
  %855 = vmatprep.subr.bf16.mxu0 0
  %856 = vmatpush2.bf16.msra.mxu0 0
  %857 = vmatprep.subr.bf16.mxu0 0
  %858 = vmatpush2.bf16.msra.mxu0 0
  %859 = vmatprep.subr.bf16.mxu0 0
  %860 = vmatpush2.bf16.msra.mxu0 0
  %861 = vmatprep.mubr.bf16.mxu0 0
  %862 = vmatmul.mubr.bf16.gmra.mxu0 %v595
  %v863 = vpop.f32.mrf.mxu0
  %v864 = vadd.f32 0.0, %v863
  %v865 = vpop.f32.mrf.mxu0
  %v866 = vadd.f32 0.0, %v865
  %v867 = vpop.f32.mrf.mxu0
  %v868 = vpop.f32.mrf.mxu0
  %869 = vdwg.mxu0
  %v870 = vadd.f32 %v591, %v823
  %v871 = vadd.f32 %v592, %v825
  %v872 = vadd.f32 %v593, %v864
  %v873 = vadd.f32 %v594, %v866
  %v874 = vxor.u32 %v870, 2147483648
  %v875 = vmul.f32 %v874, 1.442695
  %v876 = vpow.pop %v875
  %v877 = vadd.f32 %v876, 1.0
  %v878 = vrcp.pop %v877
  %v879 = vmul.f32 1.0, %v878
  %v880 = vxor.u32 %v871, 2147483648
  %v881 = vmul.f32 %v880, 1.442695
  %v882 = vpow.pop %v881
  %v883 = vadd.f32 %v882, 1.0
  %v884 = vrcp.pop %v883
  %v885 = vmul.f32 1.0, %v884
  %v886 = vtanh.pop %v872
  %v887 = vxor.u32 %v873, 2147483648
  %v888 = vmul.f32 %v887, 1.442695
  %v889 = vpow.pop %v888
  %v890 = vadd.f32 %v889, 1.0
  %v891 = vrcp.pop %v890
  %v892 = vmul.f32 1.0, %v891
  %v893 = vld [vmem:[#allocation3] sm:$0xff]
  %v894 = vmul.f32 %v885, %v893
  %v895 = vmul.f32 %v879, %v886
  %v896 = vadd.f32 %v894, %v895
  %v897 = vtanh.pop %v896
  %v898 = vmul.f32 %v892, %v897
  %899 = vst [vmem:[#allocation3] sm:$0xff] %v896
  %v900 = vpack.c.bf16 %v898, %v898
  %901 = vst [vmem:[#allocation2] sm:$0xf] %v900
  %s902 = scalar_lea.vmem [#allocation4], 64
  %v903 = vld [vmem:[%s902] sm:$0xff]
  %v904 = vld [vmem:[%s902 + $0x8] sm:$0xff]
  %v905 = vld [vmem:[%s902 + $0x10] sm:$0xff]
  %v906 = vld [vmem:[%s902 + $0x18] sm:$0xff]
  %v907 = vld [vmem:[#allocation2] sm:$0xf]
  %v908 = vld [vmem:[%s2] sm:$0xff]
  %v909 = vld [vmem:[%s2 + $0x8] sm:$0xff]
  %v910 = vld [vmem:[%s2 + $0x10] sm:$0xff]
  %v911 = vld [vmem:[%s2 + $0x18] sm:$0xff]
  %v912 = vld [vmem:[%s2 + $0x20] sm:$0xff]
  %v913 = vld [vmem:[%s2 + $0x28] sm:$0xff]
  %v914 = vld [vmem:[%s2 + $0x30] sm:$0xff]
  %v915 = vld [vmem:[%s2 + $0x38] sm:$0xff]
  %v916 = vld [vmem:[%s2 + $0x40] sm:$0xff]
  %v917 = vld [vmem:[%s2 + $0x48] sm:$0xff]
  %v918 = vld [vmem:[%s2 + $0x50] sm:$0xff]
  %v919 = vld [vmem:[%s2 + $0x58] sm:$0xff]
  %v920 = vld [vmem:[%s2 + $0x60] sm:$0xff]
  %v921 = vld [vmem:[%s2 + $0x68] sm:$0xff]
  %v922 = vld [vmem:[%s2 + $0x70] sm:$0xff]
  %v923 = vld [vmem:[%s2 + $0x78] sm:$0xff]
  %v924 = vld [vmem:[%s2 + $0x80] sm:$0xff]
  %v925 = vld [vmem:[%s2 + $0x88] sm:$0xff]
  %v926 = vld [vmem:[%s2 + $0x90] sm:$0xff]
  %v927 = vld [vmem:[%s2 + $0x98] sm:$0xff]
  %v928 = vld [vmem:[%s2 + $0xa0] sm:$0xff]
  %v929 = vld [vmem:[%s2 + $0xa8] sm:$0xff]
  %v930 = vld [vmem:[%s2 + $0xb0] sm:$0xff]
  %v931 = vld [vmem:[%s2 + $0xb8] sm:$0xff]
  %v932 = vld [vmem:[%s2 + $0xc0] sm:$0xff]
  %v933 = vld [vmem:[%s2 + $0xc8] sm:$0xff]
  %v934 = vld [vmem:[%s2 + $0xd0] sm:$0xff]
  %v935 = vld [vmem:[%s2 + $0xd8] sm:$0xff]
  %v936 = vld [vmem:[%s2 + $0xe0] sm:$0xff]
  %v937 = vld [vmem:[%s2 + $0xe8] sm:$0xff]
  %v938 = vld [vmem:[%s2 + $0xf0] sm:$0xff]
  %v939 = vld [vmem:[%s2 + $0xf8] sm:$0xff]
  %v972 = vunpack.c.l.b16 %v908
  %v973 = vunpack.c.h.b16 %v908
  %v974 = vunpack.c.l.b16 %v909
  %v975 = vunpack.c.h.b16 %v909
  %v976 = vunpack.c.l.b16 %v910
  %v977 = vunpack.c.h.b16 %v910
  %v978 = vunpack.c.l.b16 %v911
  %v979 = vunpack.c.h.b16 %v911
  %v980 = vunpack.c.l.b16 %v912
  %v981 = vunpack.c.h.b16 %v912
  %v982 = vunpack.c.l.b16 %v913
  %v983 = vunpack.c.h.b16 %v913
  %v984 = vunpack.c.l.b16 %v914
  %v985 = vunpack.c.h.b16 %v914
  %v986 = vunpack.c.l.b16 %v915
  %v987 = vunpack.c.h.b16 %v915
  %v988 = vunpack.c.l.b16 %v916
  %v989 = vunpack.c.h.b16 %v916
  %v990 = vunpack.c.l.b16 %v917
  %v991 = vunpack.c.h.b16 %v917
  %v992 = vunpack.c.l.b16 %v918
  %v993 = vunpack.c.h.b16 %v918
  %v994 = vunpack.c.l.b16 %v919
  %v995 = vunpack.c.h.b16 %v919
  %v996 = vunpack.c.l.b16 %v920
  %v997 = vunpack.c.h.b16 %v920
  %v998 = vunpack.c.l.b16 %v921
  %v999 = vunpack.c.h.b16 %v921
  %v1000 = vunpack.c.l.b16 %v922
  %v1001 = vunpack.c.h.b16 %v922
  %v1002 = vunpack.c.l.b16 %v923
  %v1003 = vunpack.c.h.b16 %v923
  %v1004 = vunpack.c.l.b16 %v924
  %v1005 = vunpack.c.h.b16 %v924
  %v1006 = vunpack.c.l.b16 %v925
  %v1007 = vunpack.c.h.b16 %v925
  %v1008 = vunpack.c.l.b16 %v926
  %v1009 = vunpack.c.h.b16 %v926
  %v1010 = vunpack.c.l.b16 %v927
  %v1011 = vunpack.c.h.b16 %v927
  %v1012 = vunpack.c.l.b16 %v928
  %v1013 = vunpack.c.h.b16 %v928
  %v1014 = vunpack.c.l.b16 %v929
  %v1015 = vunpack.c.h.b16 %v929
  %v1016 = vunpack.c.l.b16 %v930
  %v1017 = vunpack.c.h.b16 %v930
  %v1018 = vunpack.c.l.b16 %v931
  %v1019 = vunpack.c.h.b16 %v931
  %v1020 = vunpack.c.l.b16 %v932
  %v1021 = vunpack.c.h.b16 %v932
  %v1022 = vunpack.c.l.b16 %v933
  %v1023 = vunpack.c.h.b16 %v933
  %v1024 = vunpack.c.l.b16 %v934
  %v1025 = vunpack.c.h.b16 %v934
  %v1026 = vunpack.c.l.b16 %v935
  %v1027 = vunpack.c.h.b16 %v935
  %v1028 = vunpack.c.l.b16 %v936
  %v1029 = vunpack.c.h.b16 %v936
  %v1030 = vunpack.c.l.b16 %v937
  %v1031 = vunpack.c.h.b16 %v937
  %v1032 = vunpack.c.l.b16 %v938
  %v1033 = vunpack.c.h.b16 %v938
  %v1034 = vunpack.c.l.b16 %v939
  %v1035 = vunpack.c.h.b16 %v939
  %v1036 = vpack.c.b16 %v976, %v972
  %v1037 = vpack.c.b16 %v977, %v973
  %v1038 = vpack.c.b16 %v978, %v974
  %v1039 = vpack.c.b16 %v979, %v975
  %v1040 = vpack.c.b16 %v984, %v980
  %v1041 = vpack.c.b16 %v985, %v981
  %v1042 = vpack.c.b16 %v986, %v982
  %v1043 = vpack.c.b16 %v987, %v983
  %v1044 = vpack.c.b16 %v992, %v988
  %v1045 = vpack.c.b16 %v993, %v989
  %v1046 = vpack.c.b16 %v994, %v990
  %v1047 = vpack.c.b16 %v995, %v991
  %v1048 = vpack.c.b16 %v1000, %v996
  %v1049 = vpack.c.b16 %v1001, %v997
  %v1050 = vpack.c.b16 %v1002, %v998
  %v1051 = vpack.c.b16 %v1003, %v999
  %v1052 = vpack.c.b16 %v1008, %v1004
  %v1053 = vpack.c.b16 %v1009, %v1005
  %v1054 = vpack.c.b16 %v1010, %v1006
  %v1055 = vpack.c.b16 %v1011, %v1007
  %v1056 = vpack.c.b16 %v1016, %v1012
  %v1057 = vpack.c.b16 %v1017, %v1013
  %v1058 = vpack.c.b16 %v1018, %v1014
  %v1059 = vpack.c.b16 %v1019, %v1015
  %v1060 = vpack.c.b16 %v1024, %v1020
  %v1061 = vpack.c.b16 %v1025, %v1021
  %v1062 = vpack.c.b16 %v1026, %v1022
  %v1063 = vpack.c.b16 %v1027, %v1023
  %v1064 = vpack.c.b16 %v1032, %v1028
  %v1065 = vpack.c.b16 %v1033, %v1029
  %v1066 = vpack.c.b16 %v1034, %v1030
  %v1067 = vpack.c.b16 %v1035, %v1031
  %1100 = vmatprep.subr.bf16.mxu0 %v1065
  %1101 = vmatpush1.bf16.msra.mxu0 %v1064
  %1102 = vmatprep.subr.bf16.mxu0 %v1061
  %1103 = vmatpush1.bf16.msra.mxu0 %v1060
  %1104 = vmatprep.subr.bf16.mxu0 %v1057
  %1105 = vmatpush1.bf16.msra.mxu0 %v1056
  %1106 = vmatprep.subr.bf16.mxu0 %v1053
  %1107 = vmatpush1.bf16.msra.mxu0 %v1052
  %1108 = vmatprep.subr.bf16.mxu0 %v1049
  %1109 = vmatpush1.bf16.msra.mxu0 %v1048
  %1110 = vmatprep.subr.bf16.mxu0 %v1045
  %1111 = vmatpush1.bf16.msra.mxu0 %v1044
  %1112 = vmatprep.subr.bf16.mxu0 %v1041
  %1113 = vmatpush1.bf16.msra.mxu0 %v1040
  %1114 = vmatprep.subr.bf16.mxu0 %v1037
  %1115 = vmatpush1.bf16.msra.mxu0 %v1036
  %1116 = vmatprep.subr.bf16.mxu0 0
  %1117 = vmatpush2.bf16.msra.mxu0 0
  %1118 = vmatprep.subr.bf16.mxu0 0
  %1119 = vmatpush2.bf16.msra.mxu0 0
  %1120 = vmatprep.subr.bf16.mxu0 0
  %1121 = vmatpush2.bf16.msra.mxu0 0
  %1122 = vmatprep.subr.bf16.mxu0 0
  %1123 = vmatpush2.bf16.msra.mxu0 0
  %1124 = vmatprep.subr.bf16.mxu0 0
  %1125 = vmatpush2.bf16.msra.mxu0 0
  %1126 = vmatprep.subr.bf16.mxu0 0
  %1127 = vmatpush2.bf16.msra.mxu0 0
  %1128 = vmatprep.subr.bf16.mxu0 0
  %1129 = vmatpush2.bf16.msra.mxu0 0
  %1130 = vmatprep.subr.bf16.mxu0 0
  %1131 = vmatpush2.bf16.msra.mxu0 0
  %1132 = vmatprep.mubr.bf16.mxu0 0
  %1133 = vmatmul.mubr.bf16.gmra.mxu0 %v907
  %v1134 = vpop.f32.mrf.mxu0
  %v1135 = vadd.f32 0.0, %v1134
  %v1136 = vpop.f32.mrf.mxu0
  %v1137 = vadd.f32 0.0, %v1136
  %v1138 = vpop.f32.mrf.mxu0
  %v1139 = vpop.f32.mrf.mxu0
  %1140 = vdwg.mxu0
  %1141 = vmatprep.subr.bf16.mxu0 %v1067
  %1142 = vmatpush1.bf16.msra.mxu0 %v1066
  %1143 = vmatprep.subr.bf16.mxu0 %v1063
  %1144 = vmatpush1.bf16.msra.mxu0 %v1062
  %1145 = vmatprep.subr.bf16.mxu0 %v1059
  %1146 = vmatpush1.bf16.msra.mxu0 %v1058
  %1147 = vmatprep.subr.bf16.mxu0 %v1055
  %1148 = vmatpush1.bf16.msra.mxu0 %v1054
  %1149 = vmatprep.subr.bf16.mxu0 %v1051
  %1150 = vmatpush1.bf16.msra.mxu0 %v1050
  %1151 = vmatprep.subr.bf16.mxu0 %v1047
  %1152 = vmatpush1.bf16.msra.mxu0 %v1046
  %1153 = vmatprep.subr.bf16.mxu0 %v1043
  %1154 = vmatpush1.bf16.msra.mxu0 %v1042
  %1155 = vmatprep.subr.bf16.mxu0 %v1039
  %1156 = vmatpush1.bf16.msra.mxu0 %v1038
  %1157 = vmatprep.subr.bf16.mxu0 0
  %1158 = vmatpush2.bf16.msra.mxu0 0
  %1159 = vmatprep.subr.bf16.mxu0 0
  %1160 = vmatpush2.bf16.msra.mxu0 0
  %1161 = vmatprep.subr.bf16.mxu0 0
  %1162 = vmatpush2.bf16.msra.mxu0 0
  %1163 = vmatprep.subr.bf16.mxu0 0
  %1164 = vmatpush2.bf16.msra.mxu0 0
  %1165 = vmatprep.subr.bf16.mxu0 0
  %1166 = vmatpush2.bf16.msra.mxu0 0
  %1167 = vmatprep.subr.bf16.mxu0 0
  %1168 = vmatpush2.bf16.msra.mxu0 0
  %1169 = vmatprep.subr.bf16.mxu0 0
  %1170 = vmatpush2.bf16.msra.mxu0 0
  %1171 = vmatprep.subr.bf16.mxu0 0
  %1172 = vmatpush2.bf16.msra.mxu0 0
  %1173 = vmatprep.mubr.bf16.mxu0 0
  %1174 = vmatmul.mubr.bf16.gmra.mxu0 %v907
  %v1175 = vpop.f32.mrf.mxu0
  %v1176 = vadd.f32 0.0, %v1175
  %v1177 = vpop.f32.mrf.mxu0
  %v1178 = vadd.f32 0.0, %v1177
  %v1179 = vpop.f32.mrf.mxu0
  %v1180 = vpop.f32.mrf.mxu0
  %1181 = vdwg.mxu0
  %v1182 = vadd.f32 %v903, %v1135
  %v1183 = vadd.f32 %v904, %v1137
  %v1184 = vadd.f32 %v905, %v1176
  %v1185 = vadd.f32 %v906, %v1178
  %v1186 = vxor.u32 %v1182, 2147483648
  %v1187 = vmul.f32 %v1186, 1.442695
  %v1188 = vpow.pop %v1187
  %v1189 = vadd.f32 %v1188, 1.0
  %v1190 = vrcp.pop %v1189
  %v1191 = vmul.f32 1.0, %v1190
  %v1192 = vxor.u32 %v1183, 2147483648
  %v1193 = vmul.f32 %v1192, 1.442695
  %v1194 = vpow.pop %v1193
  %v1195 = vadd.f32 %v1194, 1.0
  %v1196 = vrcp.pop %v1195
  %v1197 = vmul.f32 1.0, %v1196
  %v1198 = vtanh.pop %v1184
  %v1199 = vxor.u32 %v1185, 2147483648
  %v1200 = vmul.f32 %v1199, 1.442695
  %v1201 = vpow.pop %v1200
  %v1202 = vadd.f32 %v1201, 1.0
  %v1203 = vrcp.pop %v1202
  %v1204 = vmul.f32 1.0, %v1203
  %v1205 = vld [vmem:[#allocation3] sm:$0xff]
  %v1206 = vmul.f32 %v1197, %v1205
  %v1207 = vmul.f32 %v1191, %v1198
  %v1208 = vadd.f32 %v1206, %v1207
  %v1209 = vtanh.pop %v1208
  %v1210 = vmul.f32 %v1204, %v1209
  %1211 = vst [vmem:[#allocation3] sm:$0xff] %v1208
  %v1212 = vpack.c.bf16 %v1210, %v1210
  %1213 = vst [vmem:[#allocation2] sm:$0xf] %v1212
  %s1214 = scalar_lea.vmem [#allocation4], 96
  %v1215 = vld [vmem:[%s1214] sm:$0xff]
  %v1216 = vld [vmem:[%s1214 + $0x8] sm:$0xff]
  %v1217 = vld [vmem:[%s1214 + $0x10] sm:$0xff]
  %v1218 = vld [vmem:[%s1214 + $0x18] sm:$0xff]
  %v1219 = vld [vmem:[#allocation2] sm:$0xf]
  %v1220 = vld [vmem:[%s2] sm:$0xff]
  %v1221 = vld [vmem:[%s2 + $0x8] sm:$0xff]
  %v1222 = vld [vmem:[%s2 + $0x10] sm:$0xff]
  %v1223 = vld [vmem:[%s2 + $0x18] sm:$0xff]
  %v1224 = vld [vmem:[%s2 + $0x20] sm:$0xff]
  %v1225 = vld [vmem:[%s2 + $0x28] sm:$0xff]
  %v1226 = vld [vmem:[%s2 + $0x30] sm:$0xff]
  %v1227 = vld [vmem:[%s2 + $0x38] sm:$0xff]
  %v1228 = vld [vmem:[%s2 + $0x40] sm:$0xff]
  %v1229 = vld [vmem:[%s2 + $0x48] sm:$0xff]
  %v1230 = vld [vmem:[%s2 + $0x50] sm:$0xff]
  %v1231 = vld [vmem:[%s2 + $0x58] sm:$0xff]
  %v1232 = vld [vmem:[%s2 + $0x60] sm:$0xff]
  %v1233 = vld [vmem:[%s2 + $0x68] sm:$0xff]
  %v1234 = vld [vmem:[%s2 + $0x70] sm:$0xff]
  %v1235 = vld [vmem:[%s2 + $0x78] sm:$0xff]
  %v1236 = vld [vmem:[%s2 + $0x80] sm:$0xff]
  %v1237 = vld [vmem:[%s2 + $0x88] sm:$0xff]
  %v1238 = vld [vmem:[%s2 + $0x90] sm:$0xff]
  %v1239 = vld [vmem:[%s2 + $0x98] sm:$0xff]
  %v1240 = vld [vmem:[%s2 + $0xa0] sm:$0xff]
  %v1241 = vld [vmem:[%s2 + $0xa8] sm:$0xff]
  %v1242 = vld [vmem:[%s2 + $0xb0] sm:$0xff]
  %v1243 = vld [vmem:[%s2 + $0xb8] sm:$0xff]
  %v1244 = vld [vmem:[%s2 + $0xc0] sm:$0xff]
  %v1245 = vld [vmem:[%s2 + $0xc8] sm:$0xff]
  %v1246 = vld [vmem:[%s2 + $0xd0] sm:$0xff]
  %v1247 = vld [vmem:[%s2 + $0xd8] sm:$0xff]
  %v1248 = vld [vmem:[%s2 + $0xe0] sm:$0xff]
  %v1249 = vld [vmem:[%s2 + $0xe8] sm:$0xff]
  %v1250 = vld [vmem:[%s2 + $0xf0] sm:$0xff]
  %v1251 = vld [vmem:[%s2 + $0xf8] sm:$0xff]
  %v1284 = vunpack.c.l.b16 %v1220
  %v1285 = vunpack.c.h.b16 %v1220
  %v1286 = vunpack.c.l.b16 %v1221
  %v1287 = vunpack.c.h.b16 %v1221
  %v1288 = vunpack.c.l.b16 %v1222
  %v1289 = vunpack.c.h.b16 %v1222
  %v1290 = vunpack.c.l.b16 %v1223
  %v1291 = vunpack.c.h.b16 %v1223
  %v1292 = vunpack.c.l.b16 %v1224
  %v1293 = vunpack.c.h.b16 %v1224
  %v1294 = vunpack.c.l.b16 %v1225
  %v1295 = vunpack.c.h.b16 %v1225
  %v1296 = vunpack.c.l.b16 %v1226
  %v1297 = vunpack.c.h.b16 %v1226
  %v1298 = vunpack.c.l.b16 %v1227
  %v1299 = vunpack.c.h.b16 %v1227
  %v1300 = vunpack.c.l.b16 %v1228
  %v1301 = vunpack.c.h.b16 %v1228
  %v1302 = vunpack.c.l.b16 %v1229
  %v1303 = vunpack.c.h.b16 %v1229
  %v1304 = vunpack.c.l.b16 %v1230
  %v1305 = vunpack.c.h.b16 %v1230
  %v1306 = vunpack.c.l.b16 %v1231
  %v1307 = vunpack.c.h.b16 %v1231
  %v1308 = vunpack.c.l.b16 %v1232
  %v1309 = vunpack.c.h.b16 %v1232
  %v1310 = vunpack.c.l.b16 %v1233
  %v1311 = vunpack.c.h.b16 %v1233
  %v1312 = vunpack.c.l.b16 %v1234
  %v1313 = vunpack.c.h.b16 %v1234
  %v1314 = vunpack.c.l.b16 %v1235
  %v1315 = vunpack.c.h.b16 %v1235
  %v1316 = vunpack.c.l.b16 %v1236
  %v1317 = vunpack.c.h.b16 %v1236
  %v1318 = vunpack.c.l.b16 %v1237
  %v1319 = vunpack.c.h.b16 %v1237
  %v1320 = vunpack.c.l.b16 %v1238
  %v1321 = vunpack.c.h.b16 %v1238
  %v1322 = vunpack.c.l.b16 %v1239
  %v1323 = vunpack.c.h.b16 %v1239
  %v1324 = vunpack.c.l.b16 %v1240
  %v1325 = vunpack.c.h.b16 %v1240
  %v1326 = vunpack.c.l.b16 %v1241
  %v1327 = vunpack.c.h.b16 %v1241
  %v1328 = vunpack.c.l.b16 %v1242
  %v1329 = vunpack.c.h.b16 %v1242
  %v1330 = vunpack.c.l.b16 %v1243
  %v1331 = vunpack.c.h.b16 %v1243
  %v1332 = vunpack.c.l.b16 %v1244
  %v1333 = vunpack.c.h.b16 %v1244
  %v1334 = vunpack.c.l.b16 %v1245
  %v1335 = vunpack.c.h.b16 %v1245
  %v1336 = vunpack.c.l.b16 %v1246
  %v1337 = vunpack.c.h.b16 %v1246
  %v1338 = vunpack.c.l.b16 %v1247
  %v1339 = vunpack.c.h.b16 %v1247
  %v1340 = vunpack.c.l.b16 %v1248
  %v1341 = vunpack.c.h.b16 %v1248
  %v1342 = vunpack.c.l.b16 %v1249
  %v1343 = vunpack.c.h.b16 %v1249
  %v1344 = vunpack.c.l.b16 %v1250
  %v1345 = vunpack.c.h.b16 %v1250
  %v1346 = vunpack.c.l.b16 %v1251
  %v1347 = vunpack.c.h.b16 %v1251
  %v1348 = vpack.c.b16 %v1288, %v1284
  %v1349 = vpack.c.b16 %v1289, %v1285
  %v1350 = vpack.c.b16 %v1290, %v1286
  %v1351 = vpack.c.b16 %v1291, %v1287
  %v1352 = vpack.c.b16 %v1296, %v1292
  %v1353 = vpack.c.b16 %v1297, %v1293
  %v1354 = vpack.c.b16 %v1298, %v1294
  %v1355 = vpack.c.b16 %v1299, %v1295
  %v1356 = vpack.c.b16 %v1304, %v1300
  %v1357 = vpack.c.b16 %v1305, %v1301
  %v1358 = vpack.c.b16 %v1306, %v1302
  %v1359 = vpack.c.b16 %v1307, %v1303
  %v1360 = vpack.c.b16 %v1312, %v1308
  %v1361 = vpack.c.b16 %v1313, %v1309
  %v1362 = vpack.c.b16 %v1314, %v1310
  %v1363 = vpack.c.b16 %v1315, %v1311
  %v1364 = vpack.c.b16 %v1320, %v1316
  %v1365 = vpack.c.b16 %v1321, %v1317
  %v1366 = vpack.c.b16 %v1322, %v1318
  %v1367 = vpack.c.b16 %v1323, %v1319
  %v1368 = vpack.c.b16 %v1328, %v1324
  %v1369 = vpack.c.b16 %v1329, %v1325
  %v1370 = vpack.c.b16 %v1330, %v1326
  %v1371 = vpack.c.b16 %v1331, %v1327
  %v1372 = vpack.c.b16 %v1336, %v1332
  %v1373 = vpack.c.b16 %v1337, %v1333
  %v1374 = vpack.c.b16 %v1338, %v1334
  %v1375 = vpack.c.b16 %v1339, %v1335
  %v1376 = vpack.c.b16 %v1344, %v1340
  %v1377 = vpack.c.b16 %v1345, %v1341
  %v1378 = vpack.c.b16 %v1346, %v1342
  %v1379 = vpack.c.b16 %v1347, %v1343
  %1412 = vmatprep.subr.bf16.mxu0 %v1377
  %1413 = vmatpush1.bf16.msra.mxu0 %v1376
  %1414 = vmatprep.subr.bf16.mxu0 %v1373
  %1415 = vmatpush1.bf16.msra.mxu0 %v1372
  %1416 = vmatprep.subr.bf16.mxu0 %v1369
  %1417 = vmatpush1.bf16.msra.mxu0 %v1368
  %1418 = vmatprep.subr.bf16.mxu0 %v1365
  %1419 = vmatpush1.bf16.msra.mxu0 %v1364
  %1420 = vmatprep.subr.bf16.mxu0 %v1361
  %1421 = vmatpush1.bf16.msra.mxu0 %v1360
  %1422 = vmatprep.subr.bf16.mxu0 %v1357
  %1423 = vmatpush1.bf16.msra.mxu0 %v1356
  %1424 = vmatprep.subr.bf16.mxu0 %v1353
  %1425 = vmatpush1.bf16.msra.mxu0 %v1352
  %1426 = vmatprep.subr.bf16.mxu0 %v1349
  %1427 = vmatpush1.bf16.msra.mxu0 %v1348
  %1428 = vmatprep.subr.bf16.mxu0 0
  %1429 = vmatpush2.bf16.msra.mxu0 0
  %1430 = vmatprep.subr.bf16.mxu0 0
  %1431 = vmatpush2.bf16.msra.mxu0 0
  %1432 = vmatprep.subr.bf16.mxu0 0
  %1433 = vmatpush2.bf16.msra.mxu0 0
  %1434 = vmatprep.subr.bf16.mxu0 0
  %1435 = vmatpush2.bf16.msra.mxu0 0
  %1436 = vmatprep.subr.bf16.mxu0 0
  %1437 = vmatpush2.bf16.msra.mxu0 0
  %1438 = vmatprep.subr.bf16.mxu0 0
  %1439 = vmatpush2.bf16.msra.mxu0 0
  %1440 = vmatprep.subr.bf16.mxu0 0
  %1441 = vmatpush2.bf16.msra.mxu0 0
  %1442 = vmatprep.subr.bf16.mxu0 0
  %1443 = vmatpush2.bf16.msra.mxu0 0
  %1444 = vmatprep.mubr.bf16.mxu0 0
  %1445 = vmatmul.mubr.bf16.gmra.mxu0 %v1219
  %v1446 = vpop.f32.mrf.mxu0
  %v1447 = vadd.f32 0.0, %v1446
  %v1448 = vpop.f32.mrf.mxu0
  %v1449 = vadd.f32 0.0, %v1448
  %v1450 = vpop.f32.mrf.mxu0
  %v1451 = vpop.f32.mrf.mxu0
  %1452 = vdwg.mxu0
  %1453 = vmatprep.subr.bf16.mxu0 %v1379
  %1454 = vmatpush1.bf16.msra.mxu0 %v1378
  %1455 = vmatprep.subr.bf16.mxu0 %v1375
  %1456 = vmatpush1.bf16.msra.mxu0 %v1374
  %1457 = vmatprep.subr.bf16.mxu0 %v1371
  %1458 = vmatpush1.bf16.msra.mxu0 %v1370
  %1459 = vmatprep.subr.bf16.mxu0 %v1367
  %1460 = vmatpush1.bf16.msra.mxu0 %v1366
  %1461 = vmatprep.subr.bf16.mxu0 %v1363
  %1462 = vmatpush1.bf16.msra.mxu0 %v1362
  %1463 = vmatprep.subr.bf16.mxu0 %v1359
  %1464 = vmatpush1.bf16.msra.mxu0 %v1358
  %1465 = vmatprep.subr.bf16.mxu0 %v1355
  %1466 = vmatpush1.bf16.msra.mxu0 %v1354
  %1467 = vmatprep.subr.bf16.mxu0 %v1351
  %1468 = vmatpush1.bf16.msra.mxu0 %v1350
  %1469 = vmatprep.subr.bf16.mxu0 0
  %1470 = vmatpush2.bf16.msra.mxu0 0
  %1471 = vmatprep.subr.bf16.mxu0 0
  %1472 = vmatpush2.bf16.msra.mxu0 0
  %1473 = vmatprep.subr.bf16.mxu0 0
  %1474 = vmatpush2.bf16.msra.mxu0 0
  %1475 = vmatprep.subr.bf16.mxu0 0
  %1476 = vmatpush2.bf16.msra.mxu0 0
  %1477 = vmatprep.subr.bf16.mxu0 0
  %1478 = vmatpush2.bf16.msra.mxu0 0
  %1479 = vmatprep.subr.bf16.mxu0 0
  %1480 = vmatpush2.bf16.msra.mxu0 0
  %1481 = vmatprep.subr.bf16.mxu0 0
  %1482 = vmatpush2.bf16.msra.mxu0 0
  %1483 = vmatprep.subr.bf16.mxu0 0
  %1484 = vmatpush2.bf16.msra.mxu0 0
  %1485 = vmatprep.mubr.bf16.mxu0 0
  %1486 = vmatmul.mubr.bf16.gmra.mxu0 %v1219
  %v1487 = vpop.f32.mrf.mxu0
  %v1488 = vadd.f32 0.0, %v1487
  %v1489 = vpop.f32.mrf.mxu0
  %v1490 = vadd.f32 0.0, %v1489
  %v1491 = vpop.f32.mrf.mxu0
  %v1492 = vpop.f32.mrf.mxu0
  %1493 = vdwg.mxu0
  %v1494 = vadd.f32 %v1215, %v1447
  %v1495 = vadd.f32 %v1216, %v1449
  %v1496 = vadd.f32 %v1217, %v1488
  %v1497 = vadd.f32 %v1218, %v1490
  %v1498 = vxor.u32 %v1494, 2147483648
  %v1499 = vmul.f32 %v1498, 1.442695
  %v1500 = vpow.pop %v1499
  %v1501 = vadd.f32 %v1500, 1.0
  %v1502 = vrcp.pop %v1501
  %v1503 = vmul.f32 1.0, %v1502
  %v1504 = vxor.u32 %v1495, 2147483648
  %v1505 = vmul.f32 %v1504, 1.442695
  %v1506 = vpow.pop %v1505
  %v1507 = vadd.f32 %v1506, 1.0
  %v1508 = vrcp.pop %v1507
  %v1509 = vmul.f32 1.0, %v1508
  %v1510 = vtanh.pop %v1496
  %v1511 = vxor.u32 %v1497, 2147483648
  %v1512 = vmul.f32 %v1511, 1.442695
  %v1513 = vpow.pop %v1512
  %v1514 = vadd.f32 %v1513, 1.0
  %v1515 = vrcp.pop %v1514
  %v1516 = vmul.f32 1.0, %v1515
  %v1517 = vld [vmem:[#allocation3] sm:$0xff]
  %v1518 = vmul.f32 %v1509, %v1517
  %v1519 = vmul.f32 %v1503, %v1510
  %v1520 = vadd.f32 %v1518, %v1519
  %v1521 = vtanh.pop %v1520
  %v1522 = vmul.f32 %v1516, %v1521
  %1523 = vst [vmem:[#allocation3] sm:$0xff] %v1520
  %v1524 = vpack.c.bf16 %v1522, %v1522
  %1525 = vst [vmem:[#allocation2] sm:$0xf] %v1524
  %s1526 = scalar_lea.vmem [#allocation4], 128
  %v1527 = vld [vmem:[%s1526] sm:$0xff]
  %v1528 = vld [vmem:[%s1526 + $0x8] sm:$0xff]
  %v1529 = vld [vmem:[%s1526 + $0x10] sm:$0xff]
  %v1530 = vld [vmem:[%s1526 + $0x18] sm:$0xff]
  %v1531 = vld [vmem:[#allocation2] sm:$0xf]
  %v1532 = vld [vmem:[%s2] sm:$0xff]
  %v1533 = vld [vmem:[%s2 + $0x8] sm:$0xff]
  %v1534 = vld [vmem:[%s2 + $0x10] sm:$0xff]
  %v1535 = vld [vmem:[%s2 + $0x18] sm:$0xff]
  %v1536 = vld [vmem:[%s2 + $0x20] sm:$0xff]
  %v1537 = vld [vmem:[%s2 + $0x28] sm:$0xff]
  %v1538 = vld [vmem:[%s2 + $0x30] sm:$0xff]
  %v1539 = vld [vmem:[%s2 + $0x38] sm:$0xff]
  %v1540 = vld [vmem:[%s2 + $0x40] sm:$0xff]
  %v1541 = vld [vmem:[%s2 + $0x48] sm:$0xff]
  %v1542 = vld [vmem:[%s2 + $0x50] sm:$0xff]
  %v1543 = vld [vmem:[%s2 + $0x58] sm:$0xff]
  %v1544 = vld [vmem:[%s2 + $0x60] sm:$0xff]
  %v1545 = vld [vmem:[%s2 + $0x68] sm:$0xff]
  %v1546 = vld [vmem:[%s2 + $0x70] sm:$0xff]
  %v1547 = vld [vmem:[%s2 + $0x78] sm:$0xff]
  %v1548 = vld [vmem:[%s2 + $0x80] sm:$0xff]
  %v1549 = vld [vmem:[%s2 + $0x88] sm:$0xff]
  %v1550 = vld [vmem:[%s2 + $0x90] sm:$0xff]
  %v1551 = vld [vmem:[%s2 + $0x98] sm:$0xff]
  %v1552 = vld [vmem:[%s2 + $0xa0] sm:$0xff]
  %v1553 = vld [vmem:[%s2 + $0xa8] sm:$0xff]
  %v1554 = vld [vmem:[%s2 + $0xb0] sm:$0xff]
  %v1555 = vld [vmem:[%s2 + $0xb8] sm:$0xff]
  %v1556 = vld [vmem:[%s2 + $0xc0] sm:$0xff]
  %v1557 = vld [vmem:[%s2 + $0xc8] sm:$0xff]
  %v1558 = vld [vmem:[%s2 + $0xd0] sm:$0xff]
  %v1559 = vld [vmem:[%s2 + $0xd8] sm:$0xff]
  %v1560 = vld [vmem:[%s2 + $0xe0] sm:$0xff]
  %v1561 = vld [vmem:[%s2 + $0xe8] sm:$0xff]
  %v1562 = vld [vmem:[%s2 + $0xf0] sm:$0xff]
  %v1563 = vld [vmem:[%s2 + $0xf8] sm:$0xff]
  %v1596 = vunpack.c.l.b16 %v1532
  %v1597 = vunpack.c.h.b16 %v1532
  %v1598 = vunpack.c.l.b16 %v1533
  %v1599 = vunpack.c.h.b16 %v1533
  %v1600 = vunpack.c.l.b16 %v1534
  %v1601 = vunpack.c.h.b16 %v1534
  %v1602 = vunpack.c.l.b16 %v1535
  %v1603 = vunpack.c.h.b16 %v1535
  %v1604 = vunpack.c.l.b16 %v1536
  %v1605 = vunpack.c.h.b16 %v1536
  %v1606 = vunpack.c.l.b16 %v1537
  %v1607 = vunpack.c.h.b16 %v1537
  %v1608 = vunpack.c.l.b16 %v1538
  %v1609 = vunpack.c.h.b16 %v1538
  %v1610 = vunpack.c.l.b16 %v1539
  %v1611 = vunpack.c.h.b16 %v1539
  %v1612 = vunpack.c.l.b16 %v1540
  %v1613 = vunpack.c.h.b16 %v1540
  %v1614 = vunpack.c.l.b16 %v1541
  %v1615 = vunpack.c.h.b16 %v1541
  %v1616 = vunpack.c.l.b16 %v1542
  %v1617 = vunpack.c.h.b16 %v1542
  %v1618 = vunpack.c.l.b16 %v1543
  %v1619 = vunpack.c.h.b16 %v1543
  %v1620 = vunpack.c.l.b16 %v1544
  %v1621 = vunpack.c.h.b16 %v1544
  %v1622 = vunpack.c.l.b16 %v1545
  %v1623 = vunpack.c.h.b16 %v1545
  %v1624 = vunpack.c.l.b16 %v1546
  %v1625 = vunpack.c.h.b16 %v1546
  %v1626 = vunpack.c.l.b16 %v1547
  %v1627 = vunpack.c.h.b16 %v1547
  %v1628 = vunpack.c.l.b16 %v1548
  %v1629 = vunpack.c.h.b16 %v1548
  %v1630 = vunpack.c.l.b16 %v1549
  %v1631 = vunpack.c.h.b16 %v1549
  %v1632 = vunpack.c.l.b16 %v1550
  %v1633 = vunpack.c.h.b16 %v1550
  %v1634 = vunpack.c.l.b16 %v1551
  %v1635 = vunpack.c.h.b16 %v1551
  %v1636 = vunpack.c.l.b16 %v1552
  %v1637 = vunpack.c.h.b16 %v1552
  %v1638 = vunpack.c.l.b16 %v1553
  %v1639 = vunpack.c.h.b16 %v1553
  %v1640 = vunpack.c.l.b16 %v1554
  %v1641 = vunpack.c.h.b16 %v1554
  %v1642 = vunpack.c.l.b16 %v1555
  %v1643 = vunpack.c.h.b16 %v1555
  %v1644 = vunpack.c.l.b16 %v1556
  %v1645 = vunpack.c.h.b16 %v1556
  %v1646 = vunpack.c.l.b16 %v1557
  %v1647 = vunpack.c.h.b16 %v1557
  %v1648 = vunpack.c.l.b16 %v1558
  %v1649 = vunpack.c.h.b16 %v1558
  %v1650 = vunpack.c.l.b16 %v1559
  %v1651 = vunpack.c.h.b16 %v1559
  %v1652 = vunpack.c.l.b16 %v1560
  %v1653 = vunpack.c.h.b16 %v1560
  %v1654 = vunpack.c.l.b16 %v1561
  %v1655 = vunpack.c.h.b16 %v1561
  %v1656 = vunpack.c.l.b16 %v1562
  %v1657 = vunpack.c.h.b16 %v1562
  %v1658 = vunpack.c.l.b16 %v1563
  %v1659 = vunpack.c.h.b16 %v1563
  %v1660 = vpack.c.b16 %v1600, %v1596
  %v1661 = vpack.c.b16 %v1601, %v1597
  %v1662 = vpack.c.b16 %v1602, %v1598
  %v1663 = vpack.c.b16 %v1603, %v1599
  %v1664 = vpack.c.b16 %v1608, %v1604
  %v1665 = vpack.c.b16 %v1609, %v1605
  %v1666 = vpack.c.b16 %v1610, %v1606
  %v1667 = vpack.c.b16 %v1611, %v1607
  %v1668 = vpack.c.b16 %v1616, %v1612
  %v1669 = vpack.c.b16 %v1617, %v1613
  %v1670 = vpack.c.b16 %v1618, %v1614
  %v1671 = vpack.c.b16 %v1619, %v1615
  %v1672 = vpack.c.b16 %v1624, %v1620
  %v1673 = vpack.c.b16 %v1625, %v1621
  %v1674 = vpack.c.b16 %v1626, %v1622
  %v1675 = vpack.c.b16 %v1627, %v1623
  %v1676 = vpack.c.b16 %v1632, %v1628
  %v1677 = vpack.c.b16 %v1633, %v1629
  %v1678 = vpack.c.b16 %v1634, %v1630
  %v1679 = vpack.c.b16 %v1635, %v1631
  %v1680 = vpack.c.b16 %v1640, %v1636
  %v1681 = vpack.c.b16 %v1641, %v1637
  %v1682 = vpack.c.b16 %v1642, %v1638
  %v1683 = vpack.c.b16 %v1643, %v1639
  %v1684 = vpack.c.b16 %v1648, %v1644
  %v1685 = vpack.c.b16 %v1649, %v1645
  %v1686 = vpack.c.b16 %v1650, %v1646
  %v1687 = vpack.c.b16 %v1651, %v1647
  %v1688 = vpack.c.b16 %v1656, %v1652
  %v1689 = vpack.c.b16 %v1657, %v1653
  %v1690 = vpack.c.b16 %v1658, %v1654
  %v1691 = vpack.c.b16 %v1659, %v1655
  %1724 = vmatprep.subr.bf16.mxu0 %v1689
  %1725 = vmatpush1.bf16.msra.mxu0 %v1688
  %1726 = vmatprep.subr.bf16.mxu0 %v1685
  %1727 = vmatpush1.bf16.msra.mxu0 %v1684
  %1728 = vmatprep.subr.bf16.mxu0 %v1681
  %1729 = vmatpush1.bf16.msra.mxu0 %v1680
  %1730 = vmatprep.subr.bf16.mxu0 %v1677
  %1731 = vmatpush1.bf16.msra.mxu0 %v1676
  %1732 = vmatprep.subr.bf16.mxu0 %v1673
  %1733 = vmatpush1.bf16.msra.mxu0 %v1672
  %1734 = vmatprep.subr.bf16.mxu0 %v1669
  %1735 = vmatpush1.bf16.msra.mxu0 %v1668
  %1736 = vmatprep.subr.bf16.mxu0 %v1665
  %1737 = vmatpush1.bf16.msra.mxu0 %v1664
  %1738 = vmatprep.subr.bf16.mxu0 %v1661
  %1739 = vmatpush1.bf16.msra.mxu0 %v1660
  %1740 = vmatprep.subr.bf16.mxu0 0
  %1741 = vmatpush2.bf16.msra.mxu0 0
  %1742 = vmatprep.subr.bf16.mxu0 0
  %1743 = vmatpush2.bf16.msra.mxu0 0
  %1744 = vmatprep.subr.bf16.mxu0 0
  %1745 = vmatpush2.bf16.msra.mxu0 0
  %1746 = vmatprep.subr.bf16.mxu0 0
  %1747 = vmatpush2.bf16.msra.mxu0 0
  %1748 = vmatprep.subr.bf16.mxu0 0
  %1749 = vmatpush2.bf16.msra.mxu0 0
  %1750 = vmatprep.subr.bf16.mxu0 0
  %1751 = vmatpush2.bf16.msra.mxu0 0
  %1752 = vmatprep.subr.bf16.mxu0 0
  %1753 = vmatpush2.bf16.msra.mxu0 0
  %1754 = vmatprep.subr.bf16.mxu0 0
  %1755 = vmatpush2.bf16.msra.mxu0 0
  %1756 = vmatprep.mubr.bf16.mxu0 0
  %1757 = vmatmul.mubr.bf16.gmra.mxu0 %v1531
  %v1758 = vpop.f32.mrf.mxu0
  %v1759 = vadd.f32 0.0, %v1758
  %v1760 = vpop.f32.mrf.mxu0
  %v1761 = vadd.f32 0.0, %v1760
  %v1762 = vpop.f32.mrf.mxu0
  %v1763 = vpop.f32.mrf.mxu0
  %1764 = vdwg.mxu0
  %1765 = vmatprep.subr.bf16.mxu0 %v1691
  %1766 = vmatpush1.bf16.msra.mxu0 %v1690
  %1767 = vmatprep.subr.bf16.mxu0 %v1687
  %1768 = vmatpush1.bf16.msra.mxu0 %v1686
  %1769 = vmatprep.subr.bf16.mxu0 %v1683
  %1770 = vmatpush1.bf16.msra.mxu0 %v1682
  %1771 = vmatprep.subr.bf16.mxu0 %v1679
  %1772 = vmatpush1.bf16.msra.mxu0 %v1678
  %1773 = vmatprep.subr.bf16.mxu0 %v1675
  %1774 = vmatpush1.bf16.msra.mxu0 %v1674
  %1775 = vmatprep.subr.bf16.mxu0 %v1671
  %1776 = vmatpush1.bf16.msra.mxu0 %v1670
  %1777 = vmatprep.subr.bf16.mxu0 %v1667
  %1778 = vmatpush1.bf16.msra.mxu0 %v1666
  %1779 = vmatprep.subr.bf16.mxu0 %v1663
  %1780 = vmatpush1.bf16.msra.mxu0 %v1662
  %1781 = vmatprep.subr.bf16.mxu0 0
  %1782 = vmatpush2.bf16.msra.mxu0 0
  %1783 = vmatprep.subr.bf16.mxu0 0
  %1784 = vmatpush2.bf16.msra.mxu0 0
  %1785 = vmatprep.subr.bf16.mxu0 0
  %1786 = vmatpush2.bf16.msra.mxu0 0
  %1787 = vmatprep.subr.bf16.mxu0 0
  %1788 = vmatpush2.bf16.msra.mxu0 0
  %1789 = vmatprep.subr.bf16.mxu0 0
  %1790 = vmatpush2.bf16.msra.mxu0 0
  %1791 = vmatprep.subr.bf16.mxu0 0
  %1792 = vmatpush2.bf16.msra.mxu0 0
  %1793 = vmatprep.subr.bf16.mxu0 0
  %1794 = vmatpush2.bf16.msra.mxu0 0
  %1795 = vmatprep.subr.bf16.mxu0 0
  %1796 = vmatpush2.bf16.msra.mxu0 0
  %1797 = vmatprep.mubr.bf16.mxu0 0
  %1798 = vmatmul.mubr.bf16.gmra.mxu0 %v1531
  %v1799 = vpop.f32.mrf.mxu0
  %v1800 = vadd.f32 0.0, %v1799
  %v1801 = vpop.f32.mrf.mxu0
  %v1802 = vadd.f32 0.0, %v1801
  %v1803 = vpop.f32.mrf.mxu0
  %v1804 = vpop.f32.mrf.mxu0
  %1805 = vdwg.mxu0
  %v1806 = vadd.f32 %v1527, %v1759
  %v1807 = vadd.f32 %v1528, %v1761
  %v1808 = vadd.f32 %v1529, %v1800
  %v1809 = vadd.f32 %v1530, %v1802
  %v1810 = vxor.u32 %v1806, 2147483648
  %v1811 = vmul.f32 %v1810, 1.442695
  %v1812 = vpow.pop %v1811
  %v1813 = vadd.f32 %v1812, 1.0
  %v1814 = vrcp.pop %v1813
  %v1815 = vmul.f32 1.0, %v1814
  %v1816 = vxor.u32 %v1807, 2147483648
  %v1817 = vmul.f32 %v1816, 1.442695
  %v1818 = vpow.pop %v1817
  %v1819 = vadd.f32 %v1818, 1.0
  %v1820 = vrcp.pop %v1819
  %v1821 = vmul.f32 1.0, %v1820
  %v1822 = vtanh.pop %v1808
  %v1823 = vxor.u32 %v1809, 2147483648
  %v1824 = vmul.f32 %v1823, 1.442695
  %v1825 = vpow.pop %v1824
  %v1826 = vadd.f32 %v1825, 1.0
  %v1827 = vrcp.pop %v1826
  %v1828 = vmul.f32 1.0, %v1827
  %v1829 = vld [vmem:[#allocation3] sm:$0xff]
  %v1830 = vmul.f32 %v1821, %v1829
  %v1831 = vmul.f32 %v1815, %v1822
  %v1832 = vadd.f32 %v1830, %v1831
  %v1833 = vtanh.pop %v1832
  %v1834 = vmul.f32 %v1828, %v1833
  %1835 = vst [vmem:[#allocation3] sm:$0xff] %v1832
  %v1836 = vpack.c.bf16 %v1834, %v1834
  %1837 = vst [vmem:[#allocation2] sm:$0xf] %v1836
  %s1838 = scalar_lea.vmem [#allocation4], 160
  %v1839 = vld [vmem:[%s1838] sm:$0xff]
  %v1840 = vld [vmem:[%s1838 + $0x8] sm:$0xff]
  %v1841 = vld [vmem:[%s1838 + $0x10] sm:$0xff]
  %v1842 = vld [vmem:[%s1838 + $0x18] sm:$0xff]
  %v1843 = vld [vmem:[#allocation2] sm:$0xf]
  %v1844 = vld [vmem:[%s2] sm:$0xff]
  %v1845 = vld [vmem:[%s2 + $0x8] sm:$0xff]
  %v1846 = vld [vmem:[%s2 + $0x10] sm:$0xff]
  %v1847 = vld [vmem:[%s2 + $0x18] sm:$0xff]
  %v1848 = vld [vmem:[%s2 + $0x20] sm:$0xff]
  %v1849 = vld [vmem:[%s2 + $0x28] sm:$0xff]
  %v1850 = vld [vmem:[%s2 + $0x30] sm:$0xff]
  %v1851 = vld [vmem:[%s2 + $0x38] sm:$0xff]
  %v1852 = vld [vmem:[%s2 + $0x40] sm:$0xff]
  %v1853 = vld [vmem:[%s2 + $0x48] sm:$0xff]
  %v1854 = vld [vmem:[%s2 + $0x50] sm:$0xff]
  %v1855 = vld [vmem:[%s2 + $0x58] sm:$0xff]
  %v1856 = vld [vmem:[%s2 + $0x60] sm:$0xff]
  %v1857 = vld [vmem:[%s2 + $0x68] sm:$0xff]
  %v1858 = vld [vmem:[%s2 + $0x70] sm:$0xff]
  %v1859 = vld [vmem:[%s2 + $0x78] sm:$0xff]
  %v1860 = vld [vmem:[%s2 + $0x80] sm:$0xff]
  %v1861 = vld [vmem:[%s2 + $0x88] sm:$0xff]
  %v1862 = vld [vmem:[%s2 + $0x90] sm:$0xff]
  %v1863 = vld [vmem:[%s2 + $0x98] sm:$0xff]
  %v1864 = vld [vmem:[%s2 + $0xa0] sm:$0xff]
  %v1865 = vld [vmem:[%s2 + $0xa8] sm:$0xff]
  %v1866 = vld [vmem:[%s2 + $0xb0] sm:$0xff]
  %v1867 = vld [vmem:[%s2 + $0xb8] sm:$0xff]
  %v1868 = vld [vmem:[%s2 + $0xc0] sm:$0xff]
  %v1869 = vld [vmem:[%s2 + $0xc8] sm:$0xff]
  %v1870 = vld [vmem:[%s2 + $0xd0] sm:$0xff]
  %v1871 = vld [vmem:[%s2 + $0xd8] sm:$0xff]
  %v1872 = vld [vmem:[%s2 + $0xe0] sm:$0xff]
  %v1873 = vld [vmem:[%s2 + $0xe8] sm:$0xff]
  %v1874 = vld [vmem:[%s2 + $0xf0] sm:$0xff]
  %v1875 = vld [vmem:[%s2 + $0xf8] sm:$0xff]
  %v1908 = vunpack.c.l.b16 %v1844
  %v1909 = vunpack.c.h.b16 %v1844
  %v1910 = vunpack.c.l.b16 %v1845
  %v1911 = vunpack.c.h.b16 %v1845
  %v1912 = vunpack.c.l.b16 %v1846
  %v1913 = vunpack.c.h.b16 %v1846
  %v1914 = vunpack.c.l.b16 %v1847
  %v1915 = vunpack.c.h.b16 %v1847
  %v1916 = vunpack.c.l.b16 %v1848
  %v1917 = vunpack.c.h.b16 %v1848
  %v1918 = vunpack.c.l.b16 %v1849
  %v1919 = vunpack.c.h.b16 %v1849
  %v1920 = vunpack.c.l.b16 %v1850
  %v1921 = vunpack.c.h.b16 %v1850
  %v1922 = vunpack.c.l.b16 %v1851
  %v1923 = vunpack.c.h.b16 %v1851
  %v1924 = vunpack.c.l.b16 %v1852
  %v1925 = vunpack.c.h.b16 %v1852
  %v1926 = vunpack.c.l.b16 %v1853
  %v1927 = vunpack.c.h.b16 %v1853
  %v1928 = vunpack.c.l.b16 %v1854
  %v1929 = vunpack.c.h.b16 %v1854
  %v1930 = vunpack.c.l.b16 %v1855
  %v1931 = vunpack.c.h.b16 %v1855
  %v1932 = vunpack.c.l.b16 %v1856
  %v1933 = vunpack.c.h.b16 %v1856
  %v1934 = vunpack.c.l.b16 %v1857
  %v1935 = vunpack.c.h.b16 %v1857
  %v1936 = vunpack.c.l.b16 %v1858
  %v1937 = vunpack.c.h.b16 %v1858
  %v1938 = vunpack.c.l.b16 %v1859
  %v1939 = vunpack.c.h.b16 %v1859
  %v1940 = vunpack.c.l.b16 %v1860
  %v1941 = vunpack.c.h.b16 %v1860
  %v1942 = vunpack.c.l.b16 %v1861
  %v1943 = vunpack.c.h.b16 %v1861
  %v1944 = vunpack.c.l.b16 %v1862
  %v1945 = vunpack.c.h.b16 %v1862
  %v1946 = vunpack.c.l.b16 %v1863
  %v1947 = vunpack.c.h.b16 %v1863
  %v1948 = vunpack.c.l.b16 %v1864
  %v1949 = vunpack.c.h.b16 %v1864
  %v1950 = vunpack.c.l.b16 %v1865
  %v1951 = vunpack.c.h.b16 %v1865
  %v1952 = vunpack.c.l.b16 %v1866
  %v1953 = vunpack.c.h.b16 %v1866
  %v1954 = vunpack.c.l.b16 %v1867
  %v1955 = vunpack.c.h.b16 %v1867
  %v1956 = vunpack.c.l.b16 %v1868
  %v1957 = vunpack.c.h.b16 %v1868
  %v1958 = vunpack.c.l.b16 %v1869
  %v1959 = vunpack.c.h.b16 %v1869
  %v1960 = vunpack.c.l.b16 %v1870
  %v1961 = vunpack.c.h.b16 %v1870
  %v1962 = vunpack.c.l.b16 %v1871
  %v1963 = vunpack.c.h.b16 %v1871
  %v1964 = vunpack.c.l.b16 %v1872
  %v1965 = vunpack.c.h.b16 %v1872
  %v1966 = vunpack.c.l.b16 %v1873
  %v1967 = vunpack.c.h.b16 %v1873
  %v1968 = vunpack.c.l.b16 %v1874
  %v1969 = vunpack.c.h.b16 %v1874
  %v1970 = vunpack.c.l.b16 %v1875
  %v1971 = vunpack.c.h.b16 %v1875
  %v1972 = vpack.c.b16 %v1912, %v1908
  %v1973 = vpack.c.b16 %v1913, %v1909
  %v1974 = vpack.c.b16 %v1914, %v1910
  %v1975 = vpack.c.b16 %v1915, %v1911
  %v1976 = vpack.c.b16 %v1920, %v1916
  %v1977 = vpack.c.b16 %v1921, %v1917
  %v1978 = vpack.c.b16 %v1922, %v1918
  %v1979 = vpack.c.b16 %v1923, %v1919
  %v1980 = vpack.c.b16 %v1928, %v1924
  %v1981 = vpack.c.b16 %v1929, %v1925
  %v1982 = vpack.c.b16 %v1930, %v1926
  %v1983 = vpack.c.b16 %v1931, %v1927
  %v1984 = vpack.c.b16 %v1936, %v1932
  %v1985 = vpack.c.b16 %v1937, %v1933
  %v1986 = vpack.c.b16 %v1938, %v1934
  %v1987 = vpack.c.b16 %v1939, %v1935
  %v1988 = vpack.c.b16 %v1944, %v1940
  %v1989 = vpack.c.b16 %v1945, %v1941
  %v1990 = vpack.c.b16 %v1946, %v1942
  %v1991 = vpack.c.b16 %v1947, %v1943
  %v1992 = vpack.c.b16 %v1952, %v1948
  %v1993 = vpack.c.b16 %v1953, %v1949
  %v1994 = vpack.c.b16 %v1954, %v1950
  %v1995 = vpack.c.b16 %v1955, %v1951
  %v1996 = vpack.c.b16 %v1960, %v1956
  %v1997 = vpack.c.b16 %v1961, %v1957
  %v1998 = vpack.c.b16 %v1962, %v1958
  %v1999 = vpack.c.b16 %v1963, %v1959
  %v2000 = vpack.c.b16 %v1968, %v1964
  %v2001 = vpack.c.b16 %v1969, %v1965
  %v2002 = vpack.c.b16 %v1970, %v1966
  %v2003 = vpack.c.b16 %v1971, %v1967
  %2036 = vmatprep.subr.bf16.mxu0 %v2001
  %2037 = vmatpush1.bf16.msra.mxu0 %v2000
  %2038 = vmatprep.subr.bf16.mxu0 %v1997
  %2039 = vmatpush1.bf16.msra.mxu0 %v1996
  %2040 = vmatprep.subr.bf16.mxu0 %v1993
  %2041 = vmatpush1.bf16.msra.mxu0 %v1992
  %2042 = vmatprep.subr.bf16.mxu0 %v1989
  %2043 = vmatpush1.bf16.msra.mxu0 %v1988
  %2044 = vmatprep.subr.bf16.mxu0 %v1985
  %2045 = vmatpush1.bf16.msra.mxu0 %v1984
  %2046 = vmatprep.subr.bf16.mxu0 %v1981
  %2047 = vmatpush1.bf16.msra.mxu0 %v1980
  %2048 = vmatprep.subr.bf16.mxu0 %v1977
  %2049 = vmatpush1.bf16.msra.mxu0 %v1976
  %2050 = vmatprep.subr.bf16.mxu0 %v1973
  %2051 = vmatpush1.bf16.msra.mxu0 %v1972
  %2052 = vmatprep.subr.bf16.mxu0 0
  %2053 = vmatpush2.bf16.msra.mxu0 0
  %2054 = vmatprep.subr.bf16.mxu0 0
  %2055 = vmatpush2.bf16.msra.mxu0 0
  %2056 = vmatprep.subr.bf16.mxu0 0
  %2057 = vmatpush2.bf16.msra.mxu0 0
  %2058 = vmatprep.subr.bf16.mxu0 0
  %2059 = vmatpush2.bf16.msra.mxu0 0
  %2060 = vmatprep.subr.bf16.mxu0 0
  %2061 = vmatpush2.bf16.msra.mxu0 0
  %2062 = vmatprep.subr.bf16.mxu0 0
  %2063 = vmatpush2.bf16.msra.mxu0 0
  %2064 = vmatprep.subr.bf16.mxu0 0
  %2065 = vmatpush2.bf16.msra.mxu0 0
  %2066 = vmatprep.subr.bf16.mxu0 0
  %2067 = vmatpush2.bf16.msra.mxu0 0
  %2068 = vmatprep.mubr.bf16.mxu0 0
  %2069 = vmatmul.mubr.bf16.gmra.mxu0 %v1843
  %v2070 = vpop.f32.mrf.mxu0
  %v2071 = vadd.f32 0.0, %v2070
  %v2072 = vpop.f32.mrf.mxu0
  %v2073 = vadd.f32 0.0, %v2072
  %v2074 = vpop.f32.mrf.mxu0
  %v2075 = vpop.f32.mrf.mxu0
  %2076 = vdwg.mxu0
  %2077 = vmatprep.subr.bf16.mxu0 %v2003
  %2078 = vmatpush1.bf16.msra.mxu0 %v2002
  %2079 = vmatprep.subr.bf16.mxu0 %v1999
  %2080 = vmatpush1.bf16.msra.mxu0 %v1998
  %2081 = vmatprep.subr.bf16.mxu0 %v1995
  %2082 = vmatpush1.bf16.msra.mxu0 %v1994
  %2083 = vmatprep.subr.bf16.mxu0 %v1991
  %2084 = vmatpush1.bf16.msra.mxu0 %v1990
  %2085 = vmatprep.subr.bf16.mxu0 %v1987
  %2086 = vmatpush1.bf16.msra.mxu0 %v1986
  %2087 = vmatprep.subr.bf16.mxu0 %v1983
  %2088 = vmatpush1.bf16.msra.mxu0 %v1982
  %2089 = vmatprep.subr.bf16.mxu0 %v1979
  %2090 = vmatpush1.bf16.msra.mxu0 %v1978
  %2091 = vmatprep.subr.bf16.mxu0 %v1975
  %2092 = vmatpush1.bf16.msra.mxu0 %v1974
  %2093 = vmatprep.subr.bf16.mxu0 0
  %2094 = vmatpush2.bf16.msra.mxu0 0
  %2095 = vmatprep.subr.bf16.mxu0 0
  %2096 = vmatpush2.bf16.msra.mxu0 0
  %2097 = vmatprep.subr.bf16.mxu0 0
  %2098 = vmatpush2.bf16.msra.mxu0 0
  %2099 = vmatprep.subr.bf16.mxu0 0
  %2100 = vmatpush2.bf16.msra.mxu0 0
  %2101 = vmatprep.subr.bf16.mxu0 0
  %2102 = vmatpush2.bf16.msra.mxu0 0
  %2103 = vmatprep.subr.bf16.mxu0 0
  %2104 = vmatpush2.bf16.msra.mxu0 0
  %2105 = vmatprep.subr.bf16.mxu0 0
  %2106 = vmatpush2.bf16.msra.mxu0 0
  %2107 = vmatprep.subr.bf16.mxu0 0
  %2108 = vmatpush2.bf16.msra.mxu0 0
  %2109 = vmatprep.mubr.bf16.mxu0 0
  %2110 = vmatmul.mubr.bf16.gmra.mxu0 %v1843
  %v2111 = vpop.f32.mrf.mxu0
  %v2112 = vadd.f32 0.0, %v2111
  %v2113 = vpop.f32.mrf.mxu0
  %v2114 = vadd.f32 0.0, %v2113
  %v2115 = vpop.f32.mrf.mxu0
  %v2116 = vpop.f32.mrf.mxu0
  %2117 = vdwg.mxu0
  %v2118 = vadd.f32 %v1839, %v2071
  %v2119 = vadd.f32 %v1840, %v2073
  %v2120 = vadd.f32 %v1841, %v2112
  %v2121 = vadd.f32 %v1842, %v2114
  %v2122 = vxor.u32 %v2118, 2147483648
  %v2123 = vmul.f32 %v2122, 1.442695
  %v2124 = vpow.pop %v2123
  %v2125 = vadd.f32 %v2124, 1.0
  %v2126 = vrcp.pop %v2125
  %v2127 = vmul.f32 1.0, %v2126
  %v2128 = vxor.u32 %v2119, 2147483648
  %v2129 = vmul.f32 %v2128, 1.442695
  %v2130 = vpow.pop %v2129
  %v2131 = vadd.f32 %v2130, 1.0
  %v2132 = vrcp.pop %v2131
  %v2133 = vmul.f32 1.0, %v2132
  %v2134 = vtanh.pop %v2120
  %v2135 = vxor.u32 %v2121, 2147483648
  %v2136 = vmul.f32 %v2135, 1.442695
  %v2137 = vpow.pop %v2136
  %v2138 = vadd.f32 %v2137, 1.0
  %v2139 = vrcp.pop %v2138
  %v2140 = vmul.f32 1.0, %v2139
  %v2141 = vld [vmem:[#allocation3] sm:$0xff]
  %v2142 = vmul.f32 %v2133, %v2141
  %v2143 = vmul.f32 %v2127, %v2134
  %v2144 = vadd.f32 %v2142, %v2143
  %v2145 = vtanh.pop %v2144
  %v2146 = vmul.f32 %v2140, %v2145
  %2147 = vst [vmem:[#allocation3] sm:$0xff] %v2144
  %v2148 = vpack.c.bf16 %v2146, %v2146
  %2149 = vst [vmem:[#allocation2] sm:$0xf] %v2148
  %s2150 = scalar_lea.vmem [#allocation4], 192
  %v2151 = vld [vmem:[%s2150] sm:$0xff]
  %v2152 = vld [vmem:[%s2150 + $0x8] sm:$0xff]
  %v2153 = vld [vmem:[%s2150 + $0x10] sm:$0xff]
  %v2154 = vld [vmem:[%s2150 + $0x18] sm:$0xff]
  %v2155 = vld [vmem:[#allocation2] sm:$0xf]
  %v2156 = vld [vmem:[%s2] sm:$0xff]
  %v2157 = vld [vmem:[%s2 + $0x8] sm:$0xff]
  %v2158 = vld [vmem:[%s2 + $0x10] sm:$0xff]
  %v2159 = vld [vmem:[%s2 + $0x18] sm:$0xff]
  %v2160 = vld [vmem:[%s2 + $0x20] sm:$0xff]
  %v2161 = vld [vmem:[%s2 + $0x28] sm:$0xff]
  %v2162 = vld [vmem:[%s2 + $0x30] sm:$0xff]
  %v2163 = vld [vmem:[%s2 + $0x38] sm:$0xff]
  %v2164 = vld [vmem:[%s2 + $0x40] sm:$0xff]
  %v2165 = vld [vmem:[%s2 + $0x48] sm:$0xff]
  %v2166 = vld [vmem:[%s2 + $0x50] sm:$0xff]
  %v2167 = vld [vmem:[%s2 + $0x58] sm:$0xff]
  %v2168 = vld [vmem:[%s2 + $0x60] sm:$0xff]
  %v2169 = vld [vmem:[%s2 + $0x68] sm:$0xff]
  %v2170 = vld [vmem:[%s2 + $0x70] sm:$0xff]
  %v2171 = vld [vmem:[%s2 + $0x78] sm:$0xff]
  %v2172 = vld [vmem:[%s2 + $0x80] sm:$0xff]
  %v2173 = vld [vmem:[%s2 + $0x88] sm:$0xff]
  %v2174 = vld [vmem:[%s2 + $0x90] sm:$0xff]
  %v2175 = vld [vmem:[%s2 + $0x98] sm:$0xff]
  %v2176 = vld [vmem:[%s2 + $0xa0] sm:$0xff]
  %v2177 = vld [vmem:[%s2 + $0xa8] sm:$0xff]
  %v2178 = vld [vmem:[%s2 + $0xb0] sm:$0xff]
  %v2179 = vld [vmem:[%s2 + $0xb8] sm:$0xff]
  %v2180 = vld [vmem:[%s2 + $0xc0] sm:$0xff]
  %v2181 = vld [vmem:[%s2 + $0xc8] sm:$0xff]
  %v2182 = vld [vmem:[%s2 + $0xd0] sm:$0xff]
  %v2183 = vld [vmem:[%s2 + $0xd8] sm:$0xff]
  %v2184 = vld [vmem:[%s2 + $0xe0] sm:$0xff]
  %v2185 = vld [vmem:[%s2 + $0xe8] sm:$0xff]
  %v2186 = vld [vmem:[%s2 + $0xf0] sm:$0xff]
  %v2187 = vld [vmem:[%s2 + $0xf8] sm:$0xff]
  %v2220 = vunpack.c.l.b16 %v2156
  %v2221 = vunpack.c.h.b16 %v2156
  %v2222 = vunpack.c.l.b16 %v2157
  %v2223 = vunpack.c.h.b16 %v2157
  %v2224 = vunpack.c.l.b16 %v2158
  %v2225 = vunpack.c.h.b16 %v2158
  %v2226 = vunpack.c.l.b16 %v2159
  %v2227 = vunpack.c.h.b16 %v2159
  %v2228 = vunpack.c.l.b16 %v2160
  %v2229 = vunpack.c.h.b16 %v2160
  %v2230 = vunpack.c.l.b16 %v2161
  %v2231 = vunpack.c.h.b16 %v2161
  %v2232 = vunpack.c.l.b16 %v2162
  %v2233 = vunpack.c.h.b16 %v2162
  %v2234 = vunpack.c.l.b16 %v2163
  %v2235 = vunpack.c.h.b16 %v2163
  %v2236 = vunpack.c.l.b16 %v2164
  %v2237 = vunpack.c.h.b16 %v2164
  %v2238 = vunpack.c.l.b16 %v2165
  %v2239 = vunpack.c.h.b16 %v2165
  %v2240 = vunpack.c.l.b16 %v2166
  %v2241 = vunpack.c.h.b16 %v2166
  %v2242 = vunpack.c.l.b16 %v2167
  %v2243 = vunpack.c.h.b16 %v2167
  %v2244 = vunpack.c.l.b16 %v2168
  %v2245 = vunpack.c.h.b16 %v2168
  %v2246 = vunpack.c.l.b16 %v2169
  %v2247 = vunpack.c.h.b16 %v2169
  %v2248 = vunpack.c.l.b16 %v2170
  %v2249 = vunpack.c.h.b16 %v2170
  %v2250 = vunpack.c.l.b16 %v2171
  %v2251 = vunpack.c.h.b16 %v2171
  %v2252 = vunpack.c.l.b16 %v2172
  %v2253 = vunpack.c.h.b16 %v2172
  %v2254 = vunpack.c.l.b16 %v2173
  %v2255 = vunpack.c.h.b16 %v2173
  %v2256 = vunpack.c.l.b16 %v2174
  %v2257 = vunpack.c.h.b16 %v2174
  %v2258 = vunpack.c.l.b16 %v2175
  %v2259 = vunpack.c.h.b16 %v2175
  %v2260 = vunpack.c.l.b16 %v2176
  %v2261 = vunpack.c.h.b16 %v2176
  %v2262 = vunpack.c.l.b16 %v2177
  %v2263 = vunpack.c.h.b16 %v2177
  %v2264 = vunpack.c.l.b16 %v2178
  %v2265 = vunpack.c.h.b16 %v2178
  %v2266 = vunpack.c.l.b16 %v2179
  %v2267 = vunpack.c.h.b16 %v2179
  %v2268 = vunpack.c.l.b16 %v2180
  %v2269 = vunpack.c.h.b16 %v2180
  %v2270 = vunpack.c.l.b16 %v2181
  %v2271 = vunpack.c.h.b16 %v2181
  %v2272 = vunpack.c.l.b16 %v2182
  %v2273 = vunpack.c.h.b16 %v2182
  %v2274 = vunpack.c.l.b16 %v2183
  %v2275 = vunpack.c.h.b16 %v2183
  %v2276 = vunpack.c.l.b16 %v2184
  %v2277 = vunpack.c.h.b16 %v2184
  %v2278 = vunpack.c.l.b16 %v2185
  %v2279 = vunpack.c.h.b16 %v2185
  %v2280 = vunpack.c.l.b16 %v2186
  %v2281 = vunpack.c.h.b16 %v2186
  %v2282 = vunpack.c.l.b16 %v2187
  %v2283 = vunpack.c.h.b16 %v2187
  %v2284 = vpack.c.b16 %v2224, %v2220
  %v2285 = vpack.c.b16 %v2225, %v2221
  %v2286 = vpack.c.b16 %v2226, %v2222
  %v2287 = vpack.c.b16 %v2227, %v2223
  %v2288 = vpack.c.b16 %v2232, %v2228
  %v2289 = vpack.c.b16 %v2233, %v2229
  %v2290 = vpack.c.b16 %v2234, %v2230
  %v2291 = vpack.c.b16 %v2235, %v2231
  %v2292 = vpack.c.b16 %v2240, %v2236
  %v2293 = vpack.c.b16 %v2241, %v2237
  %v2294 = vpack.c.b16 %v2242, %v2238
  %v2295 = vpack.c.b16 %v2243, %v2239
  %v2296 = vpack.c.b16 %v2248, %v2244
  %v2297 = vpack.c.b16 %v2249, %v2245
  %v2298 = vpack.c.b16 %v2250, %v2246
  %v2299 = vpack.c.b16 %v2251, %v2247
  %v2300 = vpack.c.b16 %v2256, %v2252
  %v2301 = vpack.c.b16 %v2257, %v2253
  %v2302 = vpack.c.b16 %v2258, %v2254
  %v2303 = vpack.c.b16 %v2259, %v2255
  %v2304 = vpack.c.b16 %v2264, %v2260
  %v2305 = vpack.c.b16 %v2265, %v2261
  %v2306 = vpack.c.b16 %v2266, %v2262
  %v2307 = vpack.c.b16 %v2267, %v2263
  %v2308 = vpack.c.b16 %v2272, %v2268
  %v2309 = vpack.c.b16 %v2273, %v2269
  %v2310 = vpack.c.b16 %v2274, %v2270
  %v2311 = vpack.c.b16 %v2275, %v2271
  %v2312 = vpack.c.b16 %v2280, %v2276
  %v2313 = vpack.c.b16 %v2281, %v2277
  %v2314 = vpack.c.b16 %v2282, %v2278
  %v2315 = vpack.c.b16 %v2283, %v2279
  %2348 = vmatprep.subr.bf16.mxu0 %v2313
  %2349 = vmatpush1.bf16.msra.mxu0 %v2312
  %2350 = vmatprep.subr.bf16.mxu0 %v2309
  %2351 = vmatpush1.bf16.msra.mxu0 %v2308
  %2352 = vmatprep.subr.bf16.mxu0 %v2305
  %2353 = vmatpush1.bf16.msra.mxu0 %v2304
  %2354 = vmatprep.subr.bf16.mxu0 %v2301
  %2355 = vmatpush1.bf16.msra.mxu0 %v2300
  %2356 = vmatprep.subr.bf16.mxu0 %v2297
  %2357 = vmatpush1.bf16.msra.mxu0 %v2296
  %2358 = vmatprep.subr.bf16.mxu0 %v2293
  %2359 = vmatpush1.bf16.msra.mxu0 %v2292
  %2360 = vmatprep.subr.bf16.mxu0 %v2289
  %2361 = vmatpush1.bf16.msra.mxu0 %v2288
  %2362 = vmatprep.subr.bf16.mxu0 %v2285
  %2363 = vmatpush1.bf16.msra.mxu0 %v2284
  %2364 = vmatprep.subr.bf16.mxu0 0
  %2365 = vmatpush2.bf16.msra.mxu0 0
  %2366 = vmatprep.subr.bf16.mxu0 0
  %2367 = vmatpush2.bf16.msra.mxu0 0
  %2368 = vmatprep.subr.bf16.mxu0 0
  %2369 = vmatpush2.bf16.msra.mxu0 0
  %2370 = vmatprep.subr.bf16.mxu0 0
  %2371 = vmatpush2.bf16.msra.mxu0 0
  %2372 = vmatprep.subr.bf16.mxu0 0
  %2373 = vmatpush2.bf16.msra.mxu0 0
  %2374 = vmatprep.subr.bf16.mxu0 0
  %2375 = vmatpush2.bf16.msra.mxu0 0
  %2376 = vmatprep.subr.bf16.mxu0 0
  %2377 = vmatpush2.bf16.msra.mxu0 0
  %2378 = vmatprep.subr.bf16.mxu0 0
  %2379 = vmatpush2.bf16.msra.mxu0 0
  %2380 = vmatprep.mubr.bf16.mxu0 0
  %2381 = vmatmul.mubr.bf16.gmra.mxu0 %v2155
  %v2382 = vpop.f32.mrf.mxu0
  %v2383 = vadd.f32 0.0, %v2382
  %v2384 = vpop.f32.mrf.mxu0
  %v2385 = vadd.f32 0.0, %v2384
  %v2386 = vpop.f32.mrf.mxu0
  %v2387 = vpop.f32.mrf.mxu0
  %2388 = vdwg.mxu0
  %2389 = vmatprep.subr.bf16.mxu0 %v2315
  %2390 = vmatpush1.bf16.msra.mxu0 %v2314
  %2391 = vmatprep.subr.bf16.mxu0 %v2311
  %2392 = vmatpush1.bf16.msra.mxu0 %v2310
  %2393 = vmatprep.subr.bf16.mxu0 %v2307
  %2394 = vmatpush1.bf16.msra.mxu0 %v2306
  %2395 = vmatprep.subr.bf16.mxu0 %v2303
  %2396 = vmatpush1.bf16.msra.mxu0 %v2302
  %2397 = vmatprep.subr.bf16.mxu0 %v2299
  %2398 = vmatpush1.bf16.msra.mxu0 %v2298
  %2399 = vmatprep.subr.bf16.mxu0 %v2295
  %2400 = vmatpush1.bf16.msra.mxu0 %v2294
  %2401 = vmatprep.subr.bf16.mxu0 %v2291
  %2402 = vmatpush1.bf16.msra.mxu0 %v2290
  %2403 = vmatprep.subr.bf16.mxu0 %v2287
  %2404 = vmatpush1.bf16.msra.mxu0 %v2286
  %2405 = vmatprep.subr.bf16.mxu0 0
  %2406 = vmatpush2.bf16.msra.mxu0 0
  %2407 = vmatprep.subr.bf16.mxu0 0
  %2408 = vmatpush2.bf16.msra.mxu0 0
  %2409 = vmatprep.subr.bf16.mxu0 0
  %2410 = vmatpush2.bf16.msra.mxu0 0
  %2411 = vmatprep.subr.bf16.mxu0 0
  %2412 = vmatpush2.bf16.msra.mxu0 0
  %2413 = vmatprep.subr.bf16.mxu0 0
  %2414 = vmatpush2.bf16.msra.mxu0 0
  %2415 = vmatprep.subr.bf16.mxu0 0
  %2416 = vmatpush2.bf16.msra.mxu0 0
  %2417 = vmatprep.subr.bf16.mxu0 0
  %2418 = vmatpush2.bf16.msra.mxu0 0
  %2419 = vmatprep.subr.bf16.mxu0 0
  %2420 = vmatpush2.bf16.msra.mxu0 0
  %2421 = vmatprep.mubr.bf16.mxu0 0
  %2422 = vmatmul.mubr.bf16.gmra.mxu0 %v2155
  %v2423 = vpop.f32.mrf.mxu0
  %v2424 = vadd.f32 0.0, %v2423
  %v2425 = vpop.f32.mrf.mxu0
  %v2426 = vadd.f32 0.0, %v2425
  %v2427 = vpop.f32.mrf.mxu0
  %v2428 = vpop.f32.mrf.mxu0
  %2429 = vdwg.mxu0
  %v2430 = vadd.f32 %v2151, %v2383
  %v2431 = vadd.f32 %v2152, %v2385
  %v2432 = vadd.f32 %v2153, %v2424
  %v2433 = vadd.f32 %v2154, %v2426
  %v2434 = vxor.u32 %v2430, 2147483648
  %v2435 = vmul.f32 %v2434, 1.442695
  %v2436 = vpow.pop %v2435
  %v2437 = vadd.f32 %v2436, 1.0
  %v2438 = vrcp.pop %v2437
  %v2439 = vmul.f32 1.0, %v2438
  %v2440 = vxor.u32 %v2431, 2147483648
  %v2441 = vmul.f32 %v2440, 1.442695
  %v2442 = vpow.pop %v2441
  %v2443 = vadd.f32 %v2442, 1.0
  %v2444 = vrcp.pop %v2443
  %v2445 = vmul.f32 1.0, %v2444
  %v2446 = vtanh.pop %v2432
  %v2447 = vxor.u32 %v2433, 2147483648
  %v2448 = vmul.f32 %v2447, 1.442695
  %v2449 = vpow.pop %v2448
  %v2450 = vadd.f32 %v2449, 1.0
  %v2451 = vrcp.pop %v2450
  %v2452 = vmul.f32 1.0, %v2451
  %v2453 = vld [vmem:[#allocation3] sm:$0xff]
  %v2454 = vmul.f32 %v2445, %v2453
  %v2455 = vmul.f32 %v2439, %v2446
  %v2456 = vadd.f32 %v2454, %v2455
  %v2457 = vtanh.pop %v2456
  %v2458 = vmul.f32 %v2452, %v2457
  %2459 = vst [vmem:[#allocation3] sm:$0xff] %v2456
  %v2460 = vpack.c.bf16 %v2458, %v2458
  %2461 = vst [vmem:[#allocation2] sm:$0xf] %v2460
  %s2462 = scalar_lea.vmem [#allocation4], 224
  %v2463 = vld [vmem:[%s2462] sm:$0xff]
  %v2464 = vld [vmem:[%s2462 + $0x8] sm:$0xff]
  %v2465 = vld [vmem:[%s2462 + $0x10] sm:$0xff]
  %v2466 = vld [vmem:[%s2462 + $0x18] sm:$0xff]
  %v2467 = vld [vmem:[#allocation2] sm:$0xf]
  %v2468 = vld [vmem:[%s2] sm:$0xff]
  %v2469 = vld [vmem:[%s2 + $0x8] sm:$0xff]
  %v2470 = vld [vmem:[%s2 + $0x10] sm:$0xff]
  %v2471 = vld [vmem:[%s2 + $0x18] sm:$0xff]
  %v2472 = vld [vmem:[%s2 + $0x20] sm:$0xff]
  %v2473 = vld [vmem:[%s2 + $0x28] sm:$0xff]
  %v2474 = vld [vmem:[%s2 + $0x30] sm:$0xff]
  %v2475 = vld [vmem:[%s2 + $0x38] sm:$0xff]
  %v2476 = vld [vmem:[%s2 + $0x40] sm:$0xff]
  %v2477 = vld [vmem:[%s2 + $0x48] sm:$0xff]
  %v2478 = vld [vmem:[%s2 + $0x50] sm:$0xff]
  %v2479 = vld [vmem:[%s2 + $0x58] sm:$0xff]
  %v2480 = vld [vmem:[%s2 + $0x60] sm:$0xff]
  %v2481 = vld [vmem:[%s2 + $0x68] sm:$0xff]
  %v2482 = vld [vmem:[%s2 + $0x70] sm:$0xff]
  %v2483 = vld [vmem:[%s2 + $0x78] sm:$0xff]
  %v2484 = vld [vmem:[%s2 + $0x80] sm:$0xff]
  %v2485 = vld [vmem:[%s2 + $0x88] sm:$0xff]
  %v2486 = vld [vmem:[%s2 + $0x90] sm:$0xff]
  %v2487 = vld [vmem:[%s2 + $0x98] sm:$0xff]
  %v2488 = vld [vmem:[%s2 + $0xa0] sm:$0xff]
  %v2489 = vld [vmem:[%s2 + $0xa8] sm:$0xff]
  %v2490 = vld [vmem:[%s2 + $0xb0] sm:$0xff]
  %v2491 = vld [vmem:[%s2 + $0xb8] sm:$0xff]
  %v2492 = vld [vmem:[%s2 + $0xc0] sm:$0xff]
  %v2493 = vld [vmem:[%s2 + $0xc8] sm:$0xff]
  %v2494 = vld [vmem:[%s2 + $0xd0] sm:$0xff]
  %v2495 = vld [vmem:[%s2 + $0xd8] sm:$0xff]
  %v2496 = vld [vmem:[%s2 + $0xe0] sm:$0xff]
  %v2497 = vld [vmem:[%s2 + $0xe8] sm:$0xff]
  %v2498 = vld [vmem:[%s2 + $0xf0] sm:$0xff]
  %v2499 = vld [vmem:[%s2 + $0xf8] sm:$0xff]
  %v2532 = vunpack.c.l.b16 %v2468
  %v2533 = vunpack.c.h.b16 %v2468
  %v2534 = vunpack.c.l.b16 %v2469
  %v2535 = vunpack.c.h.b16 %v2469
  %v2536 = vunpack.c.l.b16 %v2470
  %v2537 = vunpack.c.h.b16 %v2470
  %v2538 = vunpack.c.l.b16 %v2471
  %v2539 = vunpack.c.h.b16 %v2471
  %v2540 = vunpack.c.l.b16 %v2472
  %v2541 = vunpack.c.h.b16 %v2472
  %v2542 = vunpack.c.l.b16 %v2473
  %v2543 = vunpack.c.h.b16 %v2473
  %v2544 = vunpack.c.l.b16 %v2474
  %v2545 = vunpack.c.h.b16 %v2474
  %v2546 = vunpack.c.l.b16 %v2475
  %v2547 = vunpack.c.h.b16 %v2475
  %v2548 = vunpack.c.l.b16 %v2476
  %v2549 = vunpack.c.h.b16 %v2476
  %v2550 = vunpack.c.l.b16 %v2477
  %v2551 = vunpack.c.h.b16 %v2477
  %v2552 = vunpack.c.l.b16 %v2478
  %v2553 = vunpack.c.h.b16 %v2478
  %v2554 = vunpack.c.l.b16 %v2479
  %v2555 = vunpack.c.h.b16 %v2479
  %v2556 = vunpack.c.l.b16 %v2480
  %v2557 = vunpack.c.h.b16 %v2480
  %v2558 = vunpack.c.l.b16 %v2481
  %v2559 = vunpack.c.h.b16 %v2481
  %v2560 = vunpack.c.l.b16 %v2482
  %v2561 = vunpack.c.h.b16 %v2482
  %v2562 = vunpack.c.l.b16 %v2483
  %v2563 = vunpack.c.h.b16 %v2483
  %v2564 = vunpack.c.l.b16 %v2484
  %v2565 = vunpack.c.h.b16 %v2484
  %v2566 = vunpack.c.l.b16 %v2485
  %v2567 = vunpack.c.h.b16 %v2485
  %v2568 = vunpack.c.l.b16 %v2486
  %v2569 = vunpack.c.h.b16 %v2486
  %v2570 = vunpack.c.l.b16 %v2487
  %v2571 = vunpack.c.h.b16 %v2487
  %v2572 = vunpack.c.l.b16 %v2488
  %v2573 = vunpack.c.h.b16 %v2488
  %v2574 = vunpack.c.l.b16 %v2489
  %v2575 = vunpack.c.h.b16 %v2489
  %v2576 = vunpack.c.l.b16 %v2490
  %v2577 = vunpack.c.h.b16 %v2490
  %v2578 = vunpack.c.l.b16 %v2491
  %v2579 = vunpack.c.h.b16 %v2491
  %v2580 = vunpack.c.l.b16 %v2492
  %v2581 = vunpack.c.h.b16 %v2492
  %v2582 = vunpack.c.l.b16 %v2493
  %v2583 = vunpack.c.h.b16 %v2493
  %v2584 = vunpack.c.l.b16 %v2494
  %v2585 = vunpack.c.h.b16 %v2494
  %v2586 = vunpack.c.l.b16 %v2495
  %v2587 = vunpack.c.h.b16 %v2495
  %v2588 = vunpack.c.l.b16 %v2496
  %v2589 = vunpack.c.h.b16 %v2496
  %v2590 = vunpack.c.l.b16 %v2497
  %v2591 = vunpack.c.h.b16 %v2497
  %v2592 = vunpack.c.l.b16 %v2498
  %v2593 = vunpack.c.h.b16 %v2498
  %v2594 = vunpack.c.l.b16 %v2499
  %v2595 = vunpack.c.h.b16 %v2499
  %v2596 = vpack.c.b16 %v2536, %v2532
  %v2597 = vpack.c.b16 %v2537, %v2533
  %v2598 = vpack.c.b16 %v2538, %v2534
  %v2599 = vpack.c.b16 %v2539, %v2535
  %v2600 = vpack.c.b16 %v2544, %v2540
  %v2601 = vpack.c.b16 %v2545, %v2541
  %v2602 = vpack.c.b16 %v2546, %v2542
  %v2603 = vpack.c.b16 %v2547, %v2543
  %v2604 = vpack.c.b16 %v2552, %v2548
  %v2605 = vpack.c.b16 %v2553, %v2549
  %v2606 = vpack.c.b16 %v2554, %v2550
  %v2607 = vpack.c.b16 %v2555, %v2551
  %v2608 = vpack.c.b16 %v2560, %v2556
  %v2609 = vpack.c.b16 %v2561, %v2557
  %v2610 = vpack.c.b16 %v2562, %v2558
  %v2611 = vpack.c.b16 %v2563, %v2559
  %v2612 = vpack.c.b16 %v2568, %v2564
  %v2613 = vpack.c.b16 %v2569, %v2565
  %v2614 = vpack.c.b16 %v2570, %v2566
  %v2615 = vpack.c.b16 %v2571, %v2567
  %v2616 = vpack.c.b16 %v2576, %v2572
  %v2617 = vpack.c.b16 %v2577, %v2573
  %v2618 = vpack.c.b16 %v2578, %v2574
  %v2619 = vpack.c.b16 %v2579, %v2575
  %v2620 = vpack.c.b16 %v2584, %v2580
  %v2621 = vpack.c.b16 %v2585, %v2581
  %v2622 = vpack.c.b16 %v2586, %v2582
  %v2623 = vpack.c.b16 %v2587, %v2583
  %v2624 = vpack.c.b16 %v2592, %v2588
  %v2625 = vpack.c.b16 %v2593, %v2589
  %v2626 = vpack.c.b16 %v2594, %v2590
  %v2627 = vpack.c.b16 %v2595, %v2591
  %2660 = vmatprep.subr.bf16.mxu0 %v2625
  %2661 = vmatpush1.bf16.msra.mxu0 %v2624
  %2662 = vmatprep.subr.bf16.mxu0 %v2621
  %2663 = vmatpush1.bf16.msra.mxu0 %v2620
  %2664 = vmatprep.subr.bf16.mxu0 %v2617
  %2665 = vmatpush1.bf16.msra.mxu0 %v2616
  %2666 = vmatprep.subr.bf16.mxu0 %v2613
  %2667 = vmatpush1.bf16.msra.mxu0 %v2612
  %2668 = vmatprep.subr.bf16.mxu0 %v2609
  %2669 = vmatpush1.bf16.msra.mxu0 %v2608
  %2670 = vmatprep.subr.bf16.mxu0 %v2605
  %2671 = vmatpush1.bf16.msra.mxu0 %v2604
  %2672 = vmatprep.subr.bf16.mxu0 %v2601
  %2673 = vmatpush1.bf16.msra.mxu0 %v2600
  %2674 = vmatprep.subr.bf16.mxu0 %v2597
  %2675 = vmatpush1.bf16.msra.mxu0 %v2596
  %2676 = vmatprep.subr.bf16.mxu0 0
  %2677 = vmatpush2.bf16.msra.mxu0 0
  %2678 = vmatprep.subr.bf16.mxu0 0
  %2679 = vmatpush2.bf16.msra.mxu0 0
  %2680 = vmatprep.subr.bf16.mxu0 0
  %2681 = vmatpush2.bf16.msra.mxu0 0
  %2682 = vmatprep.subr.bf16.mxu0 0
  %2683 = vmatpush2.bf16.msra.mxu0 0
  %2684 = vmatprep.subr.bf16.mxu0 0
  %2685 = vmatpush2.bf16.msra.mxu0 0
  %2686 = vmatprep.subr.bf16.mxu0 0
  %2687 = vmatpush2.bf16.msra.mxu0 0
  %2688 = vmatprep.subr.bf16.mxu0 0
  %2689 = vmatpush2.bf16.msra.mxu0 0
  %2690 = vmatprep.subr.bf16.mxu0 0
  %2691 = vmatpush2.bf16.msra.mxu0 0
  %2692 = vmatprep.mubr.bf16.mxu0 0
  %2693 = vmatmul.mubr.bf16.gmra.mxu0 %v2467
  %v2694 = vpop.f32.mrf.mxu0
  %v2695 = vadd.f32 0.0, %v2694
  %v2696 = vpop.f32.mrf.mxu0
  %v2697 = vadd.f32 0.0, %v2696
  %v2698 = vpop.f32.mrf.mxu0
  %v2699 = vpop.f32.mrf.mxu0
  %2700 = vdwg.mxu0
  %2701 = vmatprep.subr.bf16.mxu0 %v2627
  %2702 = vmatpush1.bf16.msra.mxu0 %v2626
  %2703 = vmatprep.subr.bf16.mxu0 %v2623
  %2704 = vmatpush1.bf16.msra.mxu0 %v2622
  %2705 = vmatprep.subr.bf16.mxu0 %v2619
  %2706 = vmatpush1.bf16.msra.mxu0 %v2618
  %2707 = vmatprep.subr.bf16.mxu0 %v2615
  %2708 = vmatpush1.bf16.msra.mxu0 %v2614
  %2709 = vmatprep.subr.bf16.mxu0 %v2611
  %2710 = vmatpush1.bf16.msra.mxu0 %v2610
  %2711 = vmatprep.subr.bf16.mxu0 %v2607
  %2712 = vmatpush1.bf16.msra.mxu0 %v2606
  %2713 = vmatprep.subr.bf16.mxu0 %v2603
  %2714 = vmatpush1.bf16.msra.mxu0 %v2602
  %2715 = vmatprep.subr.bf16.mxu0 %v2599
  %2716 = vmatpush1.bf16.msra.mxu0 %v2598
  %2717 = vmatprep.subr.bf16.mxu0 0
  %2718 = vmatpush2.bf16.msra.mxu0 0
  %2719 = vmatprep.subr.bf16.mxu0 0
  %2720 = vmatpush2.bf16.msra.mxu0 0
  %2721 = vmatprep.subr.bf16.mxu0 0
  %2722 = vmatpush2.bf16.msra.mxu0 0
  %2723 = vmatprep.subr.bf16.mxu0 0
  %2724 = vmatpush2.bf16.msra.mxu0 0
  %2725 = vmatprep.subr.bf16.mxu0 0
  %2726 = vmatpush2.bf16.msra.mxu0 0
  %2727 = vmatprep.subr.bf16.mxu0 0
  %2728 = vmatpush2.bf16.msra.mxu0 0
  %2729 = vmatprep.subr.bf16.mxu0 0
  %2730 = vmatpush2.bf16.msra.mxu0 0
  %2731 = vmatprep.subr.bf16.mxu0 0
  %2732 = vmatpush2.bf16.msra.mxu0 0
  %2733 = vmatprep.mubr.bf16.mxu0 0
  %2734 = vmatmul.mubr.bf16.gmra.mxu0 %v2467
  %v2735 = vpop.f32.mrf.mxu0
  %v2736 = vadd.f32 0.0, %v2735
  %v2737 = vpop.f32.mrf.mxu0
  %v2738 = vadd.f32 0.0, %v2737
  %v2739 = vpop.f32.mrf.mxu0
  %v2740 = vpop.f32.mrf.mxu0
  %2741 = vdwg.mxu0
  %v2742 = vadd.f32 %v2463, %v2695
  %v2743 = vadd.f32 %v2464, %v2697
  %v2744 = vadd.f32 %v2465, %v2736
  %v2745 = vadd.f32 %v2466, %v2738
  %v2746 = vxor.u32 %v2742, 2147483648
  %v2747 = vmul.f32 %v2746, 1.442695
  %v2748 = vpow.pop %v2747
  %v2749 = vadd.f32 %v2748, 1.0
  %v2750 = vrcp.pop %v2749
  %v2751 = vmul.f32 1.0, %v2750
  %v2752 = vxor.u32 %v2743, 2147483648
  %v2753 = vmul.f32 %v2752, 1.442695
  %v2754 = vpow.pop %v2753
  %v2755 = vadd.f32 %v2754, 1.0
  %v2756 = vrcp.pop %v2755
  %v2757 = vmul.f32 1.0, %v2756
  %v2758 = vtanh.pop %v2744
  %v2759 = vxor.u32 %v2745, 2147483648
  %v2760 = vmul.f32 %v2759, 1.442695
  %v2761 = vpow.pop %v2760
  %v2762 = vadd.f32 %v2761, 1.0
  %v2763 = vrcp.pop %v2762
  %v2764 = vmul.f32 1.0, %v2763
  %v2765 = vld [vmem:[#allocation3] sm:$0xff]
  %v2766 = vmul.f32 %v2757, %v2765
  %v2767 = vmul.f32 %v2751, %v2758
  %v2768 = vadd.f32 %v2766, %v2767
  %v2769 = vtanh.pop %v2768
  %v2770 = vmul.f32 %v2764, %v2769
  %2771 = vst [vmem:[#allocation3] sm:$0xff] %v2768
  %v2772 = vpack.c.bf16 %v2770, %v2770
  %2773 = vst [vmem:[#allocation2] sm:$0xf] %v2772
  // Predicated region
  $region30: #{lstm_model_forward.1} parent=0 // pred_check
    %p2774 = pneg %p24
  $region31: #{lstm_model_forward.1} parent=0 // pred_check_branch
    %2776 = sbr.rel (%p2774) target = $region33
  $region32: #{lstm_model_forward.1} parent=0 // pred_region
    %v2777 = vld [vmem:[#allocation2] sm:$0xf]
    %v2778 = vld [vmem:[%s4] sm:$0xf]
    %v2779 = vld [vmem:[%s4 + $0x4] sm:$0xf]
    %v2780 = vld [vmem:[%s4 + $0x8] sm:$0xf]
    %v2781 = vld [vmem:[%s4 + $0xc] sm:$0xf]
    %v2782 = vld [vmem:[%s4 + $0x10] sm:$0xf]
    %v2783 = vld [vmem:[%s4 + $0x14] sm:$0xf]
    %v2784 = vld [vmem:[%s4 + $0x18] sm:$0xf]
    %v2785 = vld [vmem:[%s4 + $0x1c] sm:$0xf]
    %v2786 = vld [vmem:[%s4 + $0x20] sm:$0xf]
    %v2787 = vld [vmem:[%s4 + $0x24] sm:$0xf]
    %v2788 = vld [vmem:[%s4 + $0x28] sm:$0xf]
    %v2789 = vld [vmem:[%s4 + $0x2c] sm:$0xf]
    %v2790 = vld [vmem:[%s4 + $0x30] sm:$0xf]
    %v2791 = vld [vmem:[%s4 + $0x34] sm:$0xf]
    %v2792 = vld [vmem:[%s4 + $0x38] sm:$0xf]
    %v2793 = vld [vmem:[%s4 + $0x3c] sm:$0xf]
    %v2794 = vld [vmem:[%s5] sm:$0x1]
    %v2796 = vlaneseq
    %v2797 = vshrl.u32 %v2796, 7
    %v2798 = vsub.s32 0, %v2797
    %v2799 = vrot.slane %v2794, %v2798
    %v2817 = vunpack.c.l.b16 %v2778
    %v2818 = vunpack.c.l.b16 %v2779
    %v2819 = vunpack.c.l.b16 %v2780
    %v2820 = vunpack.c.l.b16 %v2781
    %v2821 = vunpack.c.l.b16 %v2782
    %v2822 = vunpack.c.l.b16 %v2783
    %v2823 = vunpack.c.l.b16 %v2784
    %v2824 = vunpack.c.l.b16 %v2785
    %v2825 = vunpack.c.l.b16 %v2786
    %v2826 = vunpack.c.l.b16 %v2787
    %v2827 = vunpack.c.l.b16 %v2788
    %v2828 = vunpack.c.l.b16 %v2789
    %v2829 = vunpack.c.l.b16 %v2790
    %v2830 = vunpack.c.l.b16 %v2791
    %v2831 = vunpack.c.l.b16 %v2792
    %v2832 = vunpack.c.l.b16 %v2793
    %v2833 = vpack.c.b16 %v2818, %v2817
    %v2834 = vpack.c.b16 %v2820, %v2819
    %v2835 = vpack.c.b16 %v2822, %v2821
    %v2836 = vpack.c.b16 %v2824, %v2823
    %v2837 = vpack.c.b16 %v2826, %v2825
    %v2838 = vpack.c.b16 %v2828, %v2827
    %v2839 = vpack.c.b16 %v2830, %v2829
    %v2840 = vpack.c.b16 %v2832, %v2831
    %2849 = vmatprep.subr.bf16.mxu0 0
    %2850 = vmatpush1.bf16.msra.mxu0 %v2840
    %2851 = vmatprep.subr.bf16.mxu0 0
    %2852 = vmatpush1.bf16.msra.mxu0 %v2839
    %2853 = vmatprep.subr.bf16.mxu0 0
    %2854 = vmatpush1.bf16.msra.mxu0 %v2838
    %2855 = vmatprep.subr.bf16.mxu0 0
    %2856 = vmatpush1.bf16.msra.mxu0 %v2837
    %2857 = vmatprep.subr.bf16.mxu0 0
    %2858 = vmatpush1.bf16.msra.mxu0 %v2836
    %2859 = vmatprep.subr.bf16.mxu0 0
    %2860 = vmatpush1.bf16.msra.mxu0 %v2835
    %2861 = vmatprep.subr.bf16.mxu0 0
    %2862 = vmatpush1.bf16.msra.mxu0 %v2834
    %2863 = vmatprep.subr.bf16.mxu0 0
    %2864 = vmatpush1.bf16.msra.mxu0 %v2833
    %2865 = vmatprep.subr.bf16.mxu0 0
    %2866 = vmatpush2.bf16.msra.mxu0 0
    %2867 = vmatprep.subr.bf16.mxu0 0
    %2868 = vmatpush2.bf16.msra.mxu0 0
    %2869 = vmatprep.subr.bf16.mxu0 0
    %2870 = vmatpush2.bf16.msra.mxu0 0
    %2871 = vmatprep.subr.bf16.mxu0 0
    %2872 = vmatpush2.bf16.msra.mxu0 0
    %2873 = vmatprep.subr.bf16.mxu0 0
    %2874 = vmatpush2.bf16.msra.mxu0 0
    %2875 = vmatprep.subr.bf16.mxu0 0
    %2876 = vmatpush2.bf16.msra.mxu0 0
    %2877 = vmatprep.subr.bf16.mxu0 0
    %2878 = vmatpush2.bf16.msra.mxu0 0
    %2879 = vmatprep.subr.bf16.mxu0 0
    %2880 = vmatpush2.bf16.msra.mxu0 0
    %2881 = vmatprep.mubr.bf16.mxu0 0
    %2882 = vmatmul.mubr.bf16.gmra.mxu0 %v2777
    %v2883 = vpop.f32.mrf.mxu0
    %v2884 = vadd.f32 %v2799, %v2883
    %v2885 = vpop.f32.mrf.mxu0
    %v2886 = vpop.f32.mrf.mxu0
    %v2887 = vpop.f32.mrf.mxu0
    %2888 = vdwg.mxu0
    %2889 = vst [vmem:[%s6] sm:$0xff] %v2884
  $region33: #{lstm_model_forward.1} parent=0 // pred_fallthru
    _
  // Predicated region
  $region34: #{lstm_model_forward.1} parent=0 // pred_check
    _
  $region35: #{lstm_model_forward.1} parent=0 // pred_check_branch
    %2891 = sbr.rel (0) target = $region37
  $region36: #{lstm_model_forward.1} parent=0 // pred_region
    _
  $region37: #{lstm_model_forward.1} parent=0 // pred_fallthru
    _
  // Predicated region
  $region38: #{lstm_model_forward.1} parent=0 // pred_check
    _
  $region39: #{lstm_model_forward.1} parent=0 // pred_check_branch
    %2893 = sbr.rel (0) target = $region41
  $region40: #{lstm_model_forward.1} parent=0 // pred_region
    _
  $region41: #{lstm_model_forward.1} parent=0 // pred_fallthru
    _

// kernel: lstm_model_forward.1
$region0: #{lstm_model_forward.1}
  #allocation0 [shape = 'u32[]', space=smem, size = 0x4, offset = 0x4, fixed_abs, tag = 'smem constant byte address 0x4 - core index']
  #allocation1 [shape = 'u32[144,128]{1,0:T(1,128)}', space=vmem, size = 0x12000, scoped, tag = 'internal scratch']
  #allocation2 [shape = 'bf16[8,128]{1,0:T(8,128)(2,1)}', space=vmem, size = 0x800, scoped, tag = 'scratch operand']
  #allocation3 [shape = 'f32[8,128]{1,0:T(8,128)}', space=vmem, size = 0x1000, scoped, tag = 'scratch operand']
  #allocation4 [shape = 'f32[8,8,512]{2,1,0:T(8,128)}', space=vmem, size = 0x20000, scoped, tag = 'scratch operand']
  %s0 = inlined_call_operand.vmem [shape: f32[8,8,16], index: 0, kind: input, shape index: {}]
  %s1 = inlined_call_operand.vmem [shape: bf16[16,512], index: 1, kind: input, shape index: {}]
  %s2 = inlined_call_operand.vmem [shape: bf16[128,512], index: 2, kind: input, shape index: {}]
  %s3 = inlined_call_operand.vmem [shape: f32[1,512], index: 3, kind: input, shape index: {}]
  %s4 = inlined_call_operand.vmem [shape: bf16[128,128], index: 4, kind: input, shape index: {}]
  %s5 = inlined_call_operand.vmem [shape: f32[1,128], index: 5, kind: input, shape index: {}]
  %s6 = inlined_call_operand.vmem [shape: f32[8,128], index: 6, kind: output, shape index: {}]
  %s7 = sld [smem:[#allocation0]]
  $region42: #{lstm_model_forward.1} parent=0
    _
  %s9 = ssub.s32 1, %s7
  %s10 = scalar_select 0, %s9, %s7
  // Predicated region
  $region2: #{lstm_model_forward.1} parent=0 // pred_check
    _
  $region3: #{lstm_model_forward.1} parent=0 // pred_check_branch
    %12 = sbr.rel (0) target = $region5
  $region4: #{lstm_model_forward.1} parent=0 // pred_region
    _
  $region5: #{lstm_model_forward.1} parent=0 // pred_fallthru
    _
  // Predicated region
  $region6: #{lstm_model_forward.1} parent=0 // pred_check
    _
  $region7: #{lstm_model_forward.1} parent=0 // pred_check_branch
    %14 = sbr.rel (0) target = $region9
  $region8: #{lstm_model_forward.1} parent=0 // pred_region
    _
  $region9: #{lstm_model_forward.1} parent=0 // pred_fallthru
    _
  // Predicated region
  $region10: #{lstm_model_forward.1} parent=0 // pred_check
    _
  $region11: #{lstm_model_forward.1} parent=0 // pred_check_branch
    %16 = sbr.rel (0) target = $region13
  $region12: #{lstm_model_forward.1} parent=0 // pred_region
    _
  $region13: #{lstm_model_forward.1} parent=0 // pred_fallthru
    _
  // Predicated region
  $region14: #{lstm_model_forward.1} parent=0 // pred_check
    _
  $region15: #{lstm_model_forward.1} parent=0 // pred_check_branch
    %18 = sbr.rel (0) target = $region17
  $region16: #{lstm_model_forward.1} parent=0 // pred_region
    _
  $region17: #{lstm_model_forward.1} parent=0 // pred_fallthru
    _
  // Predicated region
  $region18: #{lstm_model_forward.1} parent=0 // pred_check
    _
  $region19: #{lstm_model_forward.1} parent=0 // pred_check_branch
    %20 = sbr.rel (0) target = $region21
  $region20: #{lstm_model_forward.1} parent=0 // pred_region
    _
  $region21: #{lstm_model_forward.1} parent=0 // pred_fallthru
    _
  // Predicated region
  $region22: #{lstm_model_forward.1} parent=0 // pred_check
    _
  $region23: #{lstm_model_forward.1} parent=0 // pred_check_branch
    %22 = sbr.rel (0) target = $region25
  $region24: #{lstm_model_forward.1} parent=0 // pred_region
    _
  $region25: #{lstm_model_forward.1} parent=0 // pred_fallthru
    _
  %p24 = scmp.eq.s32.totalorder 0, 0
  // Predicated region
  $region26: #{lstm_model_forward.1} parent=0 // pred_check
    %p25 = pneg %p24
  $region27: #{lstm_model_forward.1} parent=0 // pred_check_branch
    %27 = sbr.rel (%p25) target = $region29
  $region28: #{lstm_model_forward.1} parent=0 // pred_region
    %28 = vst [vmem:[#allocation2] sm:$0xf] 0
    %29 = vst [vmem:[#allocation3] sm:$0xff] 0.0
  $region29: #{lstm_model_forward.1} parent=0 // pred_fallthru
    _
  %v30 = vld [vmem:[%s0] sm:$0xff]
  %v31 = vpack.c.bf16 %v30, %v30
  %v32 = vld [vmem:[%s1] sm:$0xff]
  %v33 = vld [vmem:[%s1 + $0x8] sm:$0xff]
  %v34 = vld [vmem:[%s1 + $0x10] sm:$0xff]
  %v35 = vld [vmem:[%s1 + $0x18] sm:$0xff]
  %v36 = vld [vmem:[%s3] sm:$0xf]
  %v38 = vlaneseq
  %v39 = vshrl.u32 %v38, 7
  %v40 = vsub.s32 0, %v39
  %v41 = vrot.slane %v36, %v40
  %v42 = vlaneseq
  %v43 = vshrl.u32 %v42, 7
  %v44 = vsub.s32 1, %v43
  %v45 = vrot.slane %v36, %v44
  %v46 = vlaneseq
  %v47 = vshrl.u32 %v46, 7
  %v48 = vsub.s32 2, %v47
  %v49 = vrot.slane %v36, %v48
  %v50 = vlaneseq
  %v51 = vshrl.u32 %v50, 7
  %v52 = vsub.s32 3, %v51
  %v53 = vrot.slane %v36, %v52
  %v62 = vunpack.c.l.b16 %v32
  %v63 = vunpack.c.h.b16 %v32
  %v64 = vunpack.c.l.b16 %v33
  %v65 = vunpack.c.h.b16 %v33
  %v66 = vunpack.c.l.b16 %v34
  %v67 = vunpack.c.h.b16 %v34
  %v68 = vunpack.c.l.b16 %v35
  %v69 = vunpack.c.h.b16 %v35
  %v70 = vpack.c.b16 %v66, %v62
  %v71 = vpack.c.b16 %v67, %v63
  %v72 = vpack.c.b16 %v68, %v64
  %v73 = vpack.c.b16 %v69, %v65
  %vm78 = vcmask 130048
  %v80 = vsel %vm78, %v31, 0
  %82 = vmatprep.subr.bf16.mxu0 0
  %83 = vmatpush1.bf16.msra.mxu0 0
  %84 = vmatprep.subr.bf16.mxu0 0
  %85 = vmatpush1.bf16.msra.mxu0 0
  %86 = vmatprep.subr.bf16.mxu0 0
  %87 = vmatpush1.bf16.msra.mxu0 0
  %88 = vmatprep.subr.bf16.mxu0 0
  %89 = vmatpush1.bf16.msra.mxu0 0
  %90 = vmatprep.subr.bf16.mxu0 0
  %91 = vmatpush1.bf16.msra.mxu0 0
  %92 = vmatprep.subr.bf16.mxu0 0
  %93 = vmatpush1.bf16.msra.mxu0 0
  %94 = vmatprep.subr.bf16.mxu0 0
  %95 = vmatpush1.bf16.msra.mxu0 0
  %96 = vmatprep.subr.bf16.mxu0 %v71
  %97 = vmatpush1.bf16.msra.mxu0 %v70
  %98 = vmatprep.subr.bf16.mxu0 0
  %99 = vmatpush2.bf16.msra.mxu0 0
  %100 = vmatprep.subr.bf16.mxu0 0
  %101 = vmatpush2.bf16.msra.mxu0 0
  %102 = vmatprep.subr.bf16.mxu0 0
  %103 = vmatpush2.bf16.msra.mxu0 0
  %104 = vmatprep.subr.bf16.mxu0 0
  %105 = vmatpush2.bf16.msra.mxu0 0
  %106 = vmatprep.subr.bf16.mxu0 0
  %107 = vmatpush2.bf16.msra.mxu0 0
  %108 = vmatprep.subr.bf16.mxu0 0
  %109 = vmatpush2.bf16.msra.mxu0 0
  %110 = vmatprep.subr.bf16.mxu0 0
  %111 = vmatpush2.bf16.msra.mxu0 0
  %112 = vmatprep.subr.bf16.mxu0 0
  %113 = vmatpush2.bf16.msra.mxu0 0
  %114 = vmatprep.mubr.bf16.mxu0 0
  %115 = vmatmul.mubr.bf16.gmra.mxu0 %v80
  %v116 = vpop.f32.mrf.mxu0
  %v117 = vadd.f32 %v41, %v116
  %v118 = vpop.f32.mrf.mxu0
  %v119 = vadd.f32 %v45, %v118
  %v120 = vpop.f32.mrf.mxu0
  %v121 = vpop.f32.mrf.mxu0
  %122 = vdwg.mxu0
  %123 = vmatprep.subr.bf16.mxu0 0
  %124 = vmatpush1.bf16.msra.mxu0 0
  %125 = vmatprep.subr.bf16.mxu0 0
  %126 = vmatpush1.bf16.msra.mxu0 0
  %127 = vmatprep.subr.bf16.mxu0 0
  %128 = vmatpush1.bf16.msra.mxu0 0
  %129 = vmatprep.subr.bf16.mxu0 0
  %130 = vmatpush1.bf16.msra.mxu0 0
  %131 = vmatprep.subr.bf16.mxu0 0
  %132 = vmatpush1.bf16.msra.mxu0 0
  %133 = vmatprep.subr.bf16.mxu0 0
  %134 = vmatpush1.bf16.msra.mxu0 0
  %135 = vmatprep.subr.bf16.mxu0 0
  %136 = vmatpush1.bf16.msra.mxu0 0
  %137 = vmatprep.subr.bf16.mxu0 %v73
  %138 = vmatpush1.bf16.msra.mxu0 %v72
  %139 = vmatprep.subr.bf16.mxu0 0
  %140 = vmatpush2.bf16.msra.mxu0 0
  %141 = vmatprep.subr.bf16.mxu0 0
  %142 = vmatpush2.bf16.msra.mxu0 0
  %143 = vmatprep.subr.bf16.mxu0 0
  %144 = vmatpush2.bf16.msra.mxu0 0
  %145 = vmatprep.subr.bf16.mxu0 0
  %146 = vmatpush2.bf16.msra.mxu0 0
  %147 = vmatprep.subr.bf16.mxu0 0
  %148 = vmatpush2.bf16.msra.mxu0 0
  %149 = vmatprep.subr.bf16.mxu0 0
  %150 = vmatpush2.bf16.msra.mxu0 0
  %151 = vmatprep.subr.bf16.mxu0 0
  %152 = vmatpush2.bf16.msra.mxu0 0
  %153 = vmatprep.subr.bf16.mxu0 0
  %154 = vmatpush2.bf16.msra.mxu0 0
  %155 = vmatprep.mubr.bf16.mxu0 0
  %156 = vmatmul.mubr.bf16.gmra.mxu0 %v80
  %v157 = vpop.f32.mrf.mxu0
  %v158 = vadd.f32 %v49, %v157
  %v159 = vpop.f32.mrf.mxu0
  %v160 = vadd.f32 %v53, %v159
  %v161 = vpop.f32.mrf.mxu0
  %v162 = vpop.f32.mrf.mxu0
  %163 = vdwg.mxu0
  %v164 = vld [vmem:[#allocation2] sm:$0xf]
  %v165 = vld [vmem:[%s2] sm:$0xff]
  %v166 = vld [vmem:[%s2 + $0x8] sm:$0xff]
  %v167 = vld [vmem:[%s2 + $0x10] sm:$0xff]
  %v168 = vld [vmem:[%s2 + $0x18] sm:$0xff]
  %v169 = vld [vmem:[%s2 + $0x20] sm:$0xff]
  %v170 = vld [vmem:[%s2 + $0x28] sm:$0xff]
  %v171 = vld [vmem:[%s2 + $0x30] sm:$0xff]
  %v172 = vld [vmem:[%s2 + $0x38] sm:$0xff]
  %v173 = vld [vmem:[%s2 + $0x40] sm:$0xff]
  %v174 = vld [vmem:[%s2 + $0x48] sm:$0xff]
  %v175 = vld [vmem:[%s2 + $0x50] sm:$0xff]
  %v176 = vld [vmem:[%s2 + $0x58] sm:$0xff]
  %v177 = vld [vmem:[%s2 + $0x60] sm:$0xff]
  %v178 = vld [vmem:[%s2 + $0x68] sm:$0xff]
  %v179 = vld [vmem:[%s2 + $0x70] sm:$0xff]
  %v180 = vld [vmem:[%s2 + $0x78] sm:$0xff]
  %v181 = vld [vmem:[%s2 + $0x80] sm:$0xff]
  %v182 = vld [vmem:[%s2 + $0x88] sm:$0xff]
  %v183 = vld [vmem:[%s2 + $0x90] sm:$0xff]
  %v184 = vld [vmem:[%s2 + $0x98] sm:$0xff]
  %v185 = vld [vmem:[%s2 + $0xa0] sm:$0xff]
  %v186 = vld [vmem:[%s2 + $0xa8] sm:$0xff]
  %v187 = vld [vmem:[%s2 + $0xb0] sm:$0xff]
  %v188 = vld [vmem:[%s2 + $0xb8] sm:$0xff]
  %v189 = vld [vmem:[%s2 + $0xc0] sm:$0xff]
  %v190 = vld [vmem:[%s2 + $0xc8] sm:$0xff]
  %v191 = vld [vmem:[%s2 + $0xd0] sm:$0xff]
  %v192 = vld [vmem:[%s2 + $0xd8] sm:$0xff]
  %v193 = vld [vmem:[%s2 + $0xe0] sm:$0xff]
  %v194 = vld [vmem:[%s2 + $0xe8] sm:$0xff]
  %v195 = vld [vmem:[%s2 + $0xf0] sm:$0xff]
  %v196 = vld [vmem:[%s2 + $0xf8] sm:$0xff]
  %v229 = vunpack.c.l.b16 %v165
  %v230 = vunpack.c.h.b16 %v165
  %v231 = vunpack.c.l.b16 %v166
  %v232 = vunpack.c.h.b16 %v166
  %v233 = vunpack.c.l.b16 %v167
  %v234 = vunpack.c.h.b16 %v167
  %v235 = vunpack.c.l.b16 %v168
  %v236 = vunpack.c.h.b16 %v168
  %v237 = vunpack.c.l.b16 %v169
  %v238 = vunpack.c.h.b16 %v169
  %v239 = vunpack.c.l.b16 %v170
  %v240 = vunpack.c.h.b16 %v170
  %v241 = vunpack.c.l.b16 %v171
  %v242 = vunpack.c.h.b16 %v171
  %v243 = vunpack.c.l.b16 %v172
  %v244 = vunpack.c.h.b16 %v172
  %v245 = vunpack.c.l.b16 %v173
  %v246 = vunpack.c.h.b16 %v173
  %v247 = vunpack.c.l.b16 %v174
  %v248 = vunpack.c.h.b16 %v174
  %v249 = vunpack.c.l.b16 %v175
  %v250 = vunpack.c.h.b16 %v175
  %v251 = vunpack.c.l.b16 %v176
  %v252 = vunpack.c.h.b16 %v176
  %v253 = vunpack.c.l.b16 %v177
  %v254 = vunpack.c.h.b16 %v177
  %v255 = vunpack.c.l.b16 %v178
  %v256 = vunpack.c.h.b16 %v178
  %v257 = vunpack.c.l.b16 %v179
  %v258 = vunpack.c.h.b16 %v179
  %v259 = vunpack.c.l.b16 %v180
  %v260 = vunpack.c.h.b16 %v180
  %v261 = vunpack.c.l.b16 %v181
  %v262 = vunpack.c.h.b16 %v181
  %v263 = vunpack.c.l.b16 %v182
  %v264 = vunpack.c.h.b16 %v182
  %v265 = vunpack.c.l.b16 %v183
  %v266 = vunpack.c.h.b16 %v183
  %v267 = vunpack.c.l.b16 %v184
  %v268 = vunpack.c.h.b16 %v184
  %v269 = vunpack.c.l.b16 %v185
  %v270 = vunpack.c.h.b16 %v185
  %v271 = vunpack.c.l.b16 %v186
  %v272 = vunpack.c.h.b16 %v186
  %v273 = vunpack.c.l.b16 %v187
  %v274 = vunpack.c.h.b16 %v187
  %v275 = vunpack.c.l.b16 %v188
  %v276 = vunpack.c.h.b16 %v188
  %v277 = vunpack.c.l.b16 %v189
  %v278 = vunpack.c.h.b16 %v189
  %v279 = vunpack.c.l.b16 %v190
  %v280 = vunpack.c.h.b16 %v190
  %v281 = vunpack.c.l.b16 %v191
  %v282 = vunpack.c.h.b16 %v191
  %v283 = vunpack.c.l.b16 %v192
  %v284 = vunpack.c.h.b16 %v192
  %v285 = vunpack.c.l.b16 %v193
  %v286 = vunpack.c.h.b16 %v193
  %v287 = vunpack.c.l.b16 %v194
  %v288 = vunpack.c.h.b16 %v194
  %v289 = vunpack.c.l.b16 %v195
  %v290 = vunpack.c.h.b16 %v195
  %v291 = vunpack.c.l.b16 %v196
  %v292 = vunpack.c.h.b16 %v196
  %v293 = vpack.c.b16 %v233, %v229
  %v294 = vpack.c.b16 %v234, %v230
  %v295 = vpack.c.b16 %v235, %v231
  %v296 = vpack.c.b16 %v236, %v232
  %v297 = vpack.c.b16 %v241, %v237
  %v298 = vpack.c.b16 %v242, %v238
  %v299 = vpack.c.b16 %v243, %v239
  %v300 = vpack.c.b16 %v244, %v240
  %v301 = vpack.c.b16 %v249, %v245
  %v302 = vpack.c.b16 %v250, %v246
  %v303 = vpack.c.b16 %v251, %v247
  %v304 = vpack.c.b16 %v252, %v248
  %v305 = vpack.c.b16 %v257, %v253
  %v306 = vpack.c.b16 %v258, %v254
  %v307 = vpack.c.b16 %v259, %v255
  %v308 = vpack.c.b16 %v260, %v256
  %v309 = vpack.c.b16 %v265, %v261
  %v310 = vpack.c.b16 %v266, %v262
  %v311 = vpack.c.b16 %v267, %v263
  %v312 = vpack.c.b16 %v268, %v264
  %v313 = vpack.c.b16 %v273, %v269
  %v314 = vpack.c.b16 %v274, %v270
  %v315 = vpack.c.b16 %v275, %v271
  %v316 = vpack.c.b16 %v276, %v272
  %v317 = vpack.c.b16 %v281, %v277
  %v318 = vpack.c.b16 %v282, %v278
  %v319 = vpack.c.b16 %v283, %v279
  %v320 = vpack.c.b16 %v284, %v280
  %v321 = vpack.c.b16 %v289, %v285
  %v322 = vpack.c.b16 %v290, %v286
  %v323 = vpack.c.b16 %v291, %v287
  %v324 = vpack.c.b16 %v292, %v288
  %357 = vmatprep.subr.bf16.mxu0 %v322
  %358 = vmatpush1.bf16.msra.mxu0 %v321
  %359 = vmatprep.subr.bf16.mxu0 %v318
  %360 = vmatpush1.bf16.msra.mxu0 %v317
  %361 = vmatprep.subr.bf16.mxu0 %v314
  %362 = vmatpush1.bf16.msra.mxu0 %v313
  %363 = vmatprep.subr.bf16.mxu0 %v310
  %364 = vmatpush1.bf16.msra.mxu0 %v309
  %365 = vmatprep.subr.bf16.mxu0 %v306
  %366 = vmatpush1.bf16.msra.mxu0 %v305
  %367 = vmatprep.subr.bf16.mxu0 %v302
  %368 = vmatpush1.bf16.msra.mxu0 %v301
  %369 = vmatprep.subr.bf16.mxu0 %v298
  %370 = vmatpush1.bf16.msra.mxu0 %v297
  %371 = vmatprep.subr.bf16.mxu0 %v294
  %372 = vmatpush1.bf16.msra.mxu0 %v293
  %373 = vmatprep.subr.bf16.mxu0 0
  %374 = vmatpush2.bf16.msra.mxu0 0
  %375 = vmatprep.subr.bf16.mxu0 0
  %376 = vmatpush2.bf16.msra.mxu0 0
  %377 = vmatprep.subr.bf16.mxu0 0
  %378 = vmatpush2.bf16.msra.mxu0 0
  %379 = vmatprep.subr.bf16.mxu0 0
  %380 = vmatpush2.bf16.msra.mxu0 0
  %381 = vmatprep.subr.bf16.mxu0 0
  %382 = vmatpush2.bf16.msra.mxu0 0
  %383 = vmatprep.subr.bf16.mxu0 0
  %384 = vmatpush2.bf16.msra.mxu0 0
  %385 = vmatprep.subr.bf16.mxu0 0
  %386 = vmatpush2.bf16.msra.mxu0 0
  %387 = vmatprep.subr.bf16.mxu0 0
  %388 = vmatpush2.bf16.msra.mxu0 0
  %389 = vmatprep.mubr.bf16.mxu0 0
  %390 = vmatmul.mubr.bf16.gmra.mxu0 %v164
  %v391 = vpop.f32.mrf.mxu0
  %v392 = vadd.f32 0.0, %v391
  %v393 = vpop.f32.mrf.mxu0
  %v394 = vadd.f32 0.0, %v393
  %v395 = vpop.f32.mrf.mxu0
  %v396 = vpop.f32.mrf.mxu0
  %397 = vdwg.mxu0
  %398 = vmatprep.subr.bf16.mxu0 %v324
  %399 = vmatpush1.bf16.msra.mxu0 %v323
  %400 = vmatprep.subr.bf16.mxu0 %v320
  %401 = vmatpush1.bf16.msra.mxu0 %v319
  %402 = vmatprep.subr.bf16.mxu0 %v316
  %403 = vmatpush1.bf16.msra.mxu0 %v315
  %404 = vmatprep.subr.bf16.mxu0 %v312
  %405 = vmatpush1.bf16.msra.mxu0 %v311
  %406 = vmatprep.subr.bf16.mxu0 %v308
  %407 = vmatpush1.bf16.msra.mxu0 %v307
  %408 = vmatprep.subr.bf16.mxu0 %v304
  %409 = vmatpush1.bf16.msra.mxu0 %v303
  %410 = vmatprep.subr.bf16.mxu0 %v300
  %411 = vmatpush1.bf16.msra.mxu0 %v299
  %412 = vmatprep.subr.bf16.mxu0 %v296
  %413 = vmatpush1.bf16.msra.mxu0 %v295
  %414 = vmatprep.subr.bf16.mxu0 0
  %415 = vmatpush2.bf16.msra.mxu0 0
  %416 = vmatprep.subr.bf16.mxu0 0
  %417 = vmatpush2.bf16.msra.mxu0 0
  %418 = vmatprep.subr.bf16.mxu0 0
  %419 = vmatpush2.bf16.msra.mxu0 0
  %420 = vmatprep.subr.bf16.mxu0 0
  %421 = vmatpush2.bf16.msra.mxu0 0
  %422 = vmatprep.subr.bf16.mxu0 0
  %423 = vmatpush2.bf16.msra.mxu0 0
  %424 = vmatprep.subr.bf16.mxu0 0
  %425 = vmatpush2.bf16.msra.mxu0 0
  %426 = vmatprep.subr.bf16.mxu0 0
  %427 = vmatpush2.bf16.msra.mxu0 0
  %428 = vmatprep.subr.bf16.mxu0 0
  %429 = vmatpush2.bf16.msra.mxu0 0
  %430 = vmatprep.mubr.bf16.mxu0 0
  %431 = vmatmul.mubr.bf16.gmra.mxu0 %v164
  %v432 = vpop.f32.mrf.mxu0
  %v433 = vadd.f32 0.0, %v432
  %v434 = vpop.f32.mrf.mxu0
  %v435 = vadd.f32 0.0, %v434
  %v436 = vpop.f32.mrf.mxu0
  %v437 = vpop.f32.mrf.mxu0
  %438 = vdwg.mxu0
  %v439 = vadd.f32 %v117, %v392
  %v440 = vadd.f32 %v119, %v394
  %v441 = vadd.f32 %v158, %v433
  %v442 = vadd.f32 %v160, %v435
  %v443 = vxor.u32 %v439, 2147483648
  %v444 = vmul.f32 %v443, 1.442695
  %v445 = vpow.pop %v444
  %v446 = vadd.f32 %v445, 1.0
  %v447 = vrcp.pop %v446
  %v448 = vmul.f32 1.0, %v447
  %v449 = vxor.u32 %v440, 2147483648
  %v450 = vmul.f32 %v449, 1.442695
  %v451 = vpow.pop %v450
  %v452 = vadd.f32 %v451, 1.0
  %v453 = vrcp.pop %v452
  %v454 = vmul.f32 1.0, %v453
  %v455 = vtanh.pop %v441
  %v456 = vxor.u32 %v442, 2147483648
  %v457 = vmul.f32 %v456, 1.442695
  %v458 = vpow.pop %v457
  %v459 = vadd.f32 %v458, 1.0
  %v460 = vrcp.pop %v459
  %v461 = vmul.f32 1.0, %v460
  %v462 = vld [vmem:[#allocation3] sm:$0xff]
  %v463 = vmul.f32 %v454, %v462
  %v464 = vmul.f32 %v448, %v455
  %v465 = vadd.f32 %v463, %v464
  %v466 = vtanh.pop %v465
  %v467 = vmul.f32 %v461, %v466
  %468 = vst [vmem:[#allocation3] sm:$0xff] %v465
  %v469 = vpack.c.bf16 %v467, %v467
  %470 = vst [vmem:[#allocation2] sm:$0xf] %v469
  %s471 = scalar_lea.vmem %s0, 8
  %v472 = vld [vmem:[%s471] sm:$0xff]
  %v473 = vpack.c.bf16 %v472, %v472
  %v474 = vld [vmem:[%s1] sm:$0xff]
  %v475 = vld [vmem:[%s1 + $0x8] sm:$0xff]
  %v476 = vld [vmem:[%s1 + $0x10] sm:$0xff]
  %v477 = vld [vmem:[%s1 + $0x18] sm:$0xff]
  %v478 = vld [vmem:[%s3] sm:$0xf]
  %v480 = vlaneseq
  %v481 = vshrl.u32 %v480, 7
  %v482 = vsub.s32 0, %v481
  %v483 = vrot.slane %v478, %v482
  %v484 = vlaneseq
  %v485 = vshrl.u32 %v484, 7
  %v486 = vsub.s32 1, %v485
  %v487 = vrot.slane %v478, %v486
  %v488 = vlaneseq
  %v489 = vshrl.u32 %v488, 7
  %v490 = vsub.s32 2, %v489
  %v491 = vrot.slane %v478, %v490
  %v492 = vlaneseq
  %v493 = vshrl.u32 %v492, 7
  %v494 = vsub.s32 3, %v493
  %v495 = vrot.slane %v478, %v494
  %v504 = vunpack.c.l.b16 %v474
  %v505 = vunpack.c.h.b16 %v474
  %v506 = vunpack.c.l.b16 %v475
  %v507 = vunpack.c.h.b16 %v475
  %v508 = vunpack.c.l.b16 %v476
  %v509 = vunpack.c.h.b16 %v476
  %v510 = vunpack.c.l.b16 %v477
  %v511 = vunpack.c.h.b16 %v477
  %v512 = vpack.c.b16 %v508, %v504
  %v513 = vpack.c.b16 %v509, %v505
  %v514 = vpack.c.b16 %v510, %v506
  %v515 = vpack.c.b16 %v511, %v507
  %v521 = vsel %vm78, %v473, 0
  %523 = vmatprep.subr.bf16.mxu0 0
  %524 = vmatpush1.bf16.msra.mxu0 0
  %525 = vmatprep.subr.bf16.mxu0 0
  %526 = vmatpush1.bf16.msra.mxu0 0
  %527 = vmatprep.subr.bf16.mxu0 0
  %528 = vmatpush1.bf16.msra.mxu0 0
  %529 = vmatprep.subr.bf16.mxu0 0
  %530 = vmatpush1.bf16.msra.mxu0 0
  %531 = vmatprep.subr.bf16.mxu0 0
  %532 = vmatpush1.bf16.msra.mxu0 0
  %533 = vmatprep.subr.bf16.mxu0 0
  %534 = vmatpush1.bf16.msra.mxu0 0
  %535 = vmatprep.subr.bf16.mxu0 0
  %536 = vmatpush1.bf16.msra.mxu0 0
  %537 = vmatprep.subr.bf16.mxu0 %v513
  %538 = vmatpush1.bf16.msra.mxu0 %v512
  %539 = vmatprep.subr.bf16.mxu0 0
  %540 = vmatpush2.bf16.msra.mxu0 0
  %541 = vmatprep.subr.bf16.mxu0 0
  %542 = vmatpush2.bf16.msra.mxu0 0
  %543 = vmatprep.subr.bf16.mxu0 0
  %544 = vmatpush2.bf16.msra.mxu0 0
  %545 = vmatprep.subr.bf16.mxu0 0
  %546 = vmatpush2.bf16.msra.mxu0 0
  %547 = vmatprep.subr.bf16.mxu0 0
  %548 = vmatpush2.bf16.msra.mxu0 0
  %549 = vmatprep.subr.bf16.mxu0 0
  %550 = vmatpush2.bf16.msra.mxu0 0
  %551 = vmatprep.subr.bf16.mxu0 0
  %552 = vmatpush2.bf16.msra.mxu0 0
  %553 = vmatprep.subr.bf16.mxu0 0
  %554 = vmatpush2.bf16.msra.mxu0 0
  %555 = vmatprep.mubr.bf16.mxu0 0
  %556 = vmatmul.mubr.bf16.gmra.mxu0 %v521
  %v557 = vpop.f32.mrf.mxu0
  %v558 = vadd.f32 %v483, %v557
  %v559 = vpop.f32.mrf.mxu0
  %v560 = vadd.f32 %v487, %v559
  %v561 = vpop.f32.mrf.mxu0
  %v562 = vpop.f32.mrf.mxu0
  %563 = vdwg.mxu0
  %564 = vmatprep.subr.bf16.mxu0 0
  %565 = vmatpush1.bf16.msra.mxu0 0
  %566 = vmatprep.subr.bf16.mxu0 0
  %567 = vmatpush1.bf16.msra.mxu0 0
  %568 = vmatprep.subr.bf16.mxu0 0
  %569 = vmatpush1.bf16.msra.mxu0 0
  %570 = vmatprep.subr.bf16.mxu0 0
  %571 = vmatpush1.bf16.msra.mxu0 0
  %572 = vmatprep.subr.bf16.mxu0 0
  %573 = vmatpush1.bf16.msra.mxu0 0
  %574 = vmatprep.subr.bf16.mxu0 0
  %575 = vmatpush1.bf16.msra.mxu0 0
  %576 = vmatprep.subr.bf16.mxu0 0
  %577 = vmatpush1.bf16.msra.mxu0 0
  %578 = vmatprep.subr.bf16.mxu0 %v515
  %579 = vmatpush1.bf16.msra.mxu0 %v514
  %580 = vmatprep.subr.bf16.mxu0 0
  %581 = vmatpush2.bf16.msra.mxu0 0
  %582 = vmatprep.subr.bf16.mxu0 0
  %583 = vmatpush2.bf16.msra.mxu0 0
  %584 = vmatprep.subr.bf16.mxu0 0
  %585 = vmatpush2.bf16.msra.mxu0 0
  %586 = vmatprep.subr.bf16.mxu0 0
  %587 = vmatpush2.bf16.msra.mxu0 0
  %588 = vmatprep.subr.bf16.mxu0 0
  %589 = vmatpush2.bf16.msra.mxu0 0
  %590 = vmatprep.subr.bf16.mxu0 0
  %591 = vmatpush2.bf16.msra.mxu0 0
  %592 = vmatprep.subr.bf16.mxu0 0
  %593 = vmatpush2.bf16.msra.mxu0 0
  %594 = vmatprep.subr.bf16.mxu0 0
  %595 = vmatpush2.bf16.msra.mxu0 0
  %596 = vmatprep.mubr.bf16.mxu0 0
  %597 = vmatmul.mubr.bf16.gmra.mxu0 %v521
  %v598 = vpop.f32.mrf.mxu0
  %v599 = vadd.f32 %v491, %v598
  %v600 = vpop.f32.mrf.mxu0
  %v601 = vadd.f32 %v495, %v600
  %v602 = vpop.f32.mrf.mxu0
  %v603 = vpop.f32.mrf.mxu0
  %604 = vdwg.mxu0
  %v605 = vld [vmem:[#allocation2] sm:$0xf]
  %v606 = vld [vmem:[%s2] sm:$0xff]
  %v607 = vld [vmem:[%s2 + $0x8] sm:$0xff]
  %v608 = vld [vmem:[%s2 + $0x10] sm:$0xff]
  %v609 = vld [vmem:[%s2 + $0x18] sm:$0xff]
  %v610 = vld [vmem:[%s2 + $0x20] sm:$0xff]
  %v611 = vld [vmem:[%s2 + $0x28] sm:$0xff]
  %v612 = vld [vmem:[%s2 + $0x30] sm:$0xff]
  %v613 = vld [vmem:[%s2 + $0x38] sm:$0xff]
  %v614 = vld [vmem:[%s2 + $0x40] sm:$0xff]
  %v615 = vld [vmem:[%s2 + $0x48] sm:$0xff]
  %v616 = vld [vmem:[%s2 + $0x50] sm:$0xff]
  %v617 = vld [vmem:[%s2 + $0x58] sm:$0xff]
  %v618 = vld [vmem:[%s2 + $0x60] sm:$0xff]
  %v619 = vld [vmem:[%s2 + $0x68] sm:$0xff]
  %v620 = vld [vmem:[%s2 + $0x70] sm:$0xff]
  %v621 = vld [vmem:[%s2 + $0x78] sm:$0xff]
  %v622 = vld [vmem:[%s2 + $0x80] sm:$0xff]
  %v623 = vld [vmem:[%s2 + $0x88] sm:$0xff]
  %v624 = vld [vmem:[%s2 + $0x90] sm:$0xff]
  %v625 = vld [vmem:[%s2 + $0x98] sm:$0xff]
  %v626 = vld [vmem:[%s2 + $0xa0] sm:$0xff]
  %v627 = vld [vmem:[%s2 + $0xa8] sm:$0xff]
  %v628 = vld [vmem:[%s2 + $0xb0] sm:$0xff]
  %v629 = vld [vmem:[%s2 + $0xb8] sm:$0xff]
  %v630 = vld [vmem:[%s2 + $0xc0] sm:$0xff]
  %v631 = vld [vmem:[%s2 + $0xc8] sm:$0xff]
  %v632 = vld [vmem:[%s2 + $0xd0] sm:$0xff]
  %v633 = vld [vmem:[%s2 + $0xd8] sm:$0xff]
  %v634 = vld [vmem:[%s2 + $0xe0] sm:$0xff]
  %v635 = vld [vmem:[%s2 + $0xe8] sm:$0xff]
  %v636 = vld [vmem:[%s2 + $0xf0] sm:$0xff]
  %v637 = vld [vmem:[%s2 + $0xf8] sm:$0xff]
  %v670 = vunpack.c.l.b16 %v606
  %v671 = vunpack.c.h.b16 %v606
  %v672 = vunpack.c.l.b16 %v607
  %v673 = vunpack.c.h.b16 %v607
  %v674 = vunpack.c.l.b16 %v608
  %v675 = vunpack.c.h.b16 %v608
  %v676 = vunpack.c.l.b16 %v609
  %v677 = vunpack.c.h.b16 %v609
  %v678 = vunpack.c.l.b16 %v610
  %v679 = vunpack.c.h.b16 %v610
  %v680 = vunpack.c.l.b16 %v611
  %v681 = vunpack.c.h.b16 %v611
  %v682 = vunpack.c.l.b16 %v612
  %v683 = vunpack.c.h.b16 %v612
  %v684 = vunpack.c.l.b16 %v613
  %v685 = vunpack.c.h.b16 %v613
  %v686 = vunpack.c.l.b16 %v614
  %v687 = vunpack.c.h.b16 %v614
  %v688 = vunpack.c.l.b16 %v615
  %v689 = vunpack.c.h.b16 %v615
  %v690 = vunpack.c.l.b16 %v616
  %v691 = vunpack.c.h.b16 %v616
  %v692 = vunpack.c.l.b16 %v617
  %v693 = vunpack.c.h.b16 %v617
  %v694 = vunpack.c.l.b16 %v618
  %v695 = vunpack.c.h.b16 %v618
  %v696 = vunpack.c.l.b16 %v619
  %v697 = vunpack.c.h.b16 %v619
  %v698 = vunpack.c.l.b16 %v620
  %v699 = vunpack.c.h.b16 %v620
  %v700 = vunpack.c.l.b16 %v621
  %v701 = vunpack.c.h.b16 %v621
  %v702 = vunpack.c.l.b16 %v622
  %v703 = vunpack.c.h.b16 %v622
  %v704 = vunpack.c.l.b16 %v623
  %v705 = vunpack.c.h.b16 %v623
  %v706 = vunpack.c.l.b16 %v624
  %v707 = vunpack.c.h.b16 %v624
  %v708 = vunpack.c.l.b16 %v625
  %v709 = vunpack.c.h.b16 %v625
  %v710 = vunpack.c.l.b16 %v626
  %v711 = vunpack.c.h.b16 %v626
  %v712 = vunpack.c.l.b16 %v627
  %v713 = vunpack.c.h.b16 %v627
  %v714 = vunpack.c.l.b16 %v628
  %v715 = vunpack.c.h.b16 %v628
  %v716 = vunpack.c.l.b16 %v629
  %v717 = vunpack.c.h.b16 %v629
  %v718 = vunpack.c.l.b16 %v630
  %v719 = vunpack.c.h.b16 %v630
  %v720 = vunpack.c.l.b16 %v631
  %v721 = vunpack.c.h.b16 %v631
  %v722 = vunpack.c.l.b16 %v632
  %v723 = vunpack.c.h.b16 %v632
  %v724 = vunpack.c.l.b16 %v633
  %v725 = vunpack.c.h.b16 %v633
  %v726 = vunpack.c.l.b16 %v634
  %v727 = vunpack.c.h.b16 %v634
  %v728 = vunpack.c.l.b16 %v635
  %v729 = vunpack.c.h.b16 %v635
  %v730 = vunpack.c.l.b16 %v636
  %v731 = vunpack.c.h.b16 %v636
  %v732 = vunpack.c.l.b16 %v637
  %v733 = vunpack.c.h.b16 %v637
  %v734 = vpack.c.b16 %v674, %v670
  %v735 = vpack.c.b16 %v675, %v671
  %v736 = vpack.c.b16 %v676, %v672
  %v737 = vpack.c.b16 %v677, %v673
  %v738 = vpack.c.b16 %v682, %v678
  %v739 = vpack.c.b16 %v683, %v679
  %v740 = vpack.c.b16 %v684, %v680
  %v741 = vpack.c.b16 %v685, %v681
  %v742 = vpack.c.b16 %v690, %v686
  %v743 = vpack.c.b16 %v691, %v687
  %v744 = vpack.c.b16 %v692, %v688
  %v745 = vpack.c.b16 %v693, %v689
  %v746 = vpack.c.b16 %v698, %v694
  %v747 = vpack.c.b16 %v699, %v695
  %v748 = vpack.c.b16 %v700, %v696
  %v749 = vpack.c.b16 %v701, %v697
  %v750 = vpack.c.b16 %v706, %v702
  %v751 = vpack.c.b16 %v707, %v703
  %v752 = vpack.c.b16 %v708, %v704
  %v753 = vpack.c.b16 %v709, %v705
  %v754 = vpack.c.b16 %v714, %v710
  %v755 = vpack.c.b16 %v715, %v711
  %v756 = vpack.c.b16 %v716, %v712
  %v757 = vpack.c.b16 %v717, %v713
  %v758 = vpack.c.b16 %v722, %v718
  %v759 = vpack.c.b16 %v723, %v719
  %v760 = vpack.c.b16 %v724, %v720
  %v761 = vpack.c.b16 %v725, %v721
  %v762 = vpack.c.b16 %v730, %v726
  %v763 = vpack.c.b16 %v731, %v727
  %v764 = vpack.c.b16 %v732, %v728
  %v765 = vpack.c.b16 %v733, %v729
  %798 = vmatprep.subr.bf16.mxu0 %v763
  %799 = vmatpush1.bf16.msra.mxu0 %v762
  %800 = vmatprep.subr.bf16.mxu0 %v759
  %801 = vmatpush1.bf16.msra.mxu0 %v758
  %802 = vmatprep.subr.bf16.mxu0 %v755
  %803 = vmatpush1.bf16.msra.mxu0 %v754
  %804 = vmatprep.subr.bf16.mxu0 %v751
  %805 = vmatpush1.bf16.msra.mxu0 %v750
  %806 = vmatprep.subr.bf16.mxu0 %v747
  %807 = vmatpush1.bf16.msra.mxu0 %v746
  %808 = vmatprep.subr.bf16.mxu0 %v743
  %809 = vmatpush1.bf16.msra.mxu0 %v742
  %810 = vmatprep.subr.bf16.mxu0 %v739
  %811 = vmatpush1.bf16.msra.mxu0 %v738
  %812 = vmatprep.subr.bf16.mxu0 %v735
  %813 = vmatpush1.bf16.msra.mxu0 %v734
  %814 = vmatprep.subr.bf16.mxu0 0
  %815 = vmatpush2.bf16.msra.mxu0 0
  %816 = vmatprep.subr.bf16.mxu0 0
  %817 = vmatpush2.bf16.msra.mxu0 0
  %818 = vmatprep.subr.bf16.mxu0 0
  %819 = vmatpush2.bf16.msra.mxu0 0
  %820 = vmatprep.subr.bf16.mxu0 0
  %821 = vmatpush2.bf16.msra.mxu0 0
  %822 = vmatprep.subr.bf16.mxu0 0
  %823 = vmatpush2.bf16.msra.mxu0 0
  %824 = vmatprep.subr.bf16.mxu0 0
  %825 = vmatpush2.bf16.msra.mxu0 0
  %826 = vmatprep.subr.bf16.mxu0 0
  %827 = vmatpush2.bf16.msra.mxu0 0
  %828 = vmatprep.subr.bf16.mxu0 0
  %829 = vmatpush2.bf16.msra.mxu0 0
  %830 = vmatprep.mubr.bf16.mxu0 0
  %831 = vmatmul.mubr.bf16.gmra.mxu0 %v605
  %v832 = vpop.f32.mrf.mxu0
  %v833 = vadd.f32 0.0, %v832
  %v834 = vpop.f32.mrf.mxu0
  %v835 = vadd.f32 0.0, %v834
  %v836 = vpop.f32.mrf.mxu0
  %v837 = vpop.f32.mrf.mxu0
  %838 = vdwg.mxu0
  %839 = vmatprep.subr.bf16.mxu0 %v765
  %840 = vmatpush1.bf16.msra.mxu0 %v764
  %841 = vmatprep.subr.bf16.mxu0 %v761
  %842 = vmatpush1.bf16.msra.mxu0 %v760
  %843 = vmatprep.subr.bf16.mxu0 %v757
  %844 = vmatpush1.bf16.msra.mxu0 %v756
  %845 = vmatprep.subr.bf16.mxu0 %v753
  %846 = vmatpush1.bf16.msra.mxu0 %v752
  %847 = vmatprep.subr.bf16.mxu0 %v749
  %848 = vmatpush1.bf16.msra.mxu0 %v748
  %849 = vmatprep.subr.bf16.mxu0 %v745
  %850 = vmatpush1.bf16.msra.mxu0 %v744
  %851 = vmatprep.subr.bf16.mxu0 %v741
  %852 = vmatpush1.bf16.msra.mxu0 %v740
  %853 = vmatprep.subr.bf16.mxu0 %v737
  %854 = vmatpush1.bf16.msra.mxu0 %v736
  %855 = vmatprep.subr.bf16.mxu0 0
  %856 = vmatpush2.bf16.msra.mxu0 0
  %857 = vmatprep.subr.bf16.mxu0 0
  %858 = vmatpush2.bf16.msra.mxu0 0
  %859 = vmatprep.subr.bf16.mxu0 0
  %860 = vmatpush2.bf16.msra.mxu0 0
  %861 = vmatprep.subr.bf16.mxu0 0
  %862 = vmatpush2.bf16.msra.mxu0 0
  %863 = vmatprep.subr.bf16.mxu0 0
  %864 = vmatpush2.bf16.msra.mxu0 0
  %865 = vmatprep.subr.bf16.mxu0 0
  %866 = vmatpush2.bf16.msra.mxu0 0
  %867 = vmatprep.subr.bf16.mxu0 0
  %868 = vmatpush2.bf16.msra.mxu0 0
  %869 = vmatprep.subr.bf16.mxu0 0
  %870 = vmatpush2.bf16.msra.mxu0 0
  %871 = vmatprep.mubr.bf16.mxu0 0
  %872 = vmatmul.mubr.bf16.gmra.mxu0 %v605
  %v873 = vpop.f32.mrf.mxu0
  %v874 = vadd.f32 0.0, %v873
  %v875 = vpop.f32.mrf.mxu0
  %v876 = vadd.f32 0.0, %v875
  %v877 = vpop.f32.mrf.mxu0
  %v878 = vpop.f32.mrf.mxu0
  %879 = vdwg.mxu0
  %v880 = vadd.f32 %v558, %v833
  %v881 = vadd.f32 %v560, %v835
  %v882 = vadd.f32 %v599, %v874
  %v883 = vadd.f32 %v601, %v876
  %v884 = vxor.u32 %v880, 2147483648
  %v885 = vmul.f32 %v884, 1.442695
  %v886 = vpow.pop %v885
  %v887 = vadd.f32 %v886, 1.0
  %v888 = vrcp.pop %v887
  %v889 = vmul.f32 1.0, %v888
  %v890 = vxor.u32 %v881, 2147483648
  %v891 = vmul.f32 %v890, 1.442695
  %v892 = vpow.pop %v891
  %v893 = vadd.f32 %v892, 1.0
  %v894 = vrcp.pop %v893
  %v895 = vmul.f32 1.0, %v894
  %v896 = vtanh.pop %v882
  %v897 = vxor.u32 %v883, 2147483648
  %v898 = vmul.f32 %v897, 1.442695
  %v899 = vpow.pop %v898
  %v900 = vadd.f32 %v899, 1.0
  %v901 = vrcp.pop %v900
  %v902 = vmul.f32 1.0, %v901
  %v903 = vld [vmem:[#allocation3] sm:$0xff]
  %v904 = vmul.f32 %v895, %v903
  %v905 = vmul.f32 %v889, %v896
  %v906 = vadd.f32 %v904, %v905
  %v907 = vtanh.pop %v906
  %v908 = vmul.f32 %v902, %v907
  %909 = vst [vmem:[#allocation3] sm:$0xff] %v906
  %v910 = vpack.c.bf16 %v908, %v908
  %911 = vst [vmem:[#allocation2] sm:$0xf] %v910
  %s912 = scalar_lea.vmem %s0, 16
  %v913 = vld [vmem:[%s912] sm:$0xff]
  %v914 = vpack.c.bf16 %v913, %v913
  %v915 = vld [vmem:[%s1] sm:$0xff]
  %v916 = vld [vmem:[%s1 + $0x8] sm:$0xff]
  %v917 = vld [vmem:[%s1 + $0x10] sm:$0xff]
  %v918 = vld [vmem:[%s1 + $0x18] sm:$0xff]
  %v919 = vld [vmem:[%s3] sm:$0xf]
  %v921 = vlaneseq
  %v922 = vshrl.u32 %v921, 7
  %v923 = vsub.s32 0, %v922
  %v924 = vrot.slane %v919, %v923
  %v925 = vlaneseq
  %v926 = vshrl.u32 %v925, 7
  %v927 = vsub.s32 1, %v926
  %v928 = vrot.slane %v919, %v927
  %v929 = vlaneseq
  %v930 = vshrl.u32 %v929, 7
  %v931 = vsub.s32 2, %v930
  %v932 = vrot.slane %v919, %v931
  %v933 = vlaneseq
  %v934 = vshrl.u32 %v933, 7
  %v935 = vsub.s32 3, %v934
  %v936 = vrot.slane %v919, %v935
  %v945 = vunpack.c.l.b16 %v915
  %v946 = vunpack.c.h.b16 %v915
  %v947 = vunpack.c.l.b16 %v916
  %v948 = vunpack.c.h.b16 %v916
  %v949 = vunpack.c.l.b16 %v917
  %v950 = vunpack.c.h.b16 %v917
  %v951 = vunpack.c.l.b16 %v918
  %v952 = vunpack.c.h.b16 %v918
  %v953 = vpack.c.b16 %v949, %v945
  %v954 = vpack.c.b16 %v950, %v946
  %v955 = vpack.c.b16 %v951, %v947
  %v956 = vpack.c.b16 %v952, %v948
  %v962 = vsel %vm78, %v914, 0
  %964 = vmatprep.subr.bf16.mxu0 0
  %965 = vmatpush1.bf16.msra.mxu0 0
  %966 = vmatprep.subr.bf16.mxu0 0
  %967 = vmatpush1.bf16.msra.mxu0 0
  %968 = vmatprep.subr.bf16.mxu0 0
  %969 = vmatpush1.bf16.msra.mxu0 0
  %970 = vmatprep.subr.bf16.mxu0 0
  %971 = vmatpush1.bf16.msra.mxu0 0
  %972 = vmatprep.subr.bf16.mxu0 0
  %973 = vmatpush1.bf16.msra.mxu0 0
  %974 = vmatprep.subr.bf16.mxu0 0
  %975 = vmatpush1.bf16.msra.mxu0 0
  %976 = vmatprep.subr.bf16.mxu0 0
  %977 = vmatpush1.bf16.msra.mxu0 0
  %978 = vmatprep.subr.bf16.mxu0 %v954
  %979 = vmatpush1.bf16.msra.mxu0 %v953
  %980 = vmatprep.subr.bf16.mxu0 0
  %981 = vmatpush2.bf16.msra.mxu0 0
  %982 = vmatprep.subr.bf16.mxu0 0
  %983 = vmatpush2.bf16.msra.mxu0 0
  %984 = vmatprep.subr.bf16.mxu0 0
  %985 = vmatpush2.bf16.msra.mxu0 0
  %986 = vmatprep.subr.bf16.mxu0 0
  %987 = vmatpush2.bf16.msra.mxu0 0
  %988 = vmatprep.subr.bf16.mxu0 0
  %989 = vmatpush2.bf16.msra.mxu0 0
  %990 = vmatprep.subr.bf16.mxu0 0
  %991 = vmatpush2.bf16.msra.mxu0 0
  %992 = vmatprep.subr.bf16.mxu0 0
  %993 = vmatpush2.bf16.msra.mxu0 0
  %994 = vmatprep.subr.bf16.mxu0 0
  %995 = vmatpush2.bf16.msra.mxu0 0
  %996 = vmatprep.mubr.bf16.mxu0 0
  %997 = vmatmul.mubr.bf16.gmra.mxu0 %v962
  %v998 = vpop.f32.mrf.mxu0
  %v999 = vadd.f32 %v924, %v998
  %v1000 = vpop.f32.mrf.mxu0
  %v1001 = vadd.f32 %v928, %v1000
  %v1002 = vpop.f32.mrf.mxu0
  %v1003 = vpop.f32.mrf.mxu0
  %1004 = vdwg.mxu0
  %1005 = vmatprep.subr.bf16.mxu0 0
  %1006 = vmatpush1.bf16.msra.mxu0 0
  %1007 = vmatprep.subr.bf16.mxu0 0
  %1008 = vmatpush1.bf16.msra.mxu0 0
  %1009 = vmatprep.subr.bf16.mxu0 0
  %1010 = vmatpush1.bf16.msra.mxu0 0
  %1011 = vmatprep.subr.bf16.mxu0 0
  %1012 = vmatpush1.bf16.msra.mxu0 0
  %1013 = vmatprep.subr.bf16.mxu0 0
  %1014 = vmatpush1.bf16.msra.mxu0 0
  %1015 = vmatprep.subr.bf16.mxu0 0
  %1016 = vmatpush1.bf16.msra.mxu0 0
  %1017 = vmatprep.subr.bf16.mxu0 0
  %1018 = vmatpush1.bf16.msra.mxu0 0
  %1019 = vmatprep.subr.bf16.mxu0 %v956
  %1020 = vmatpush1.bf16.msra.mxu0 %v955
  %1021 = vmatprep.subr.bf16.mxu0 0
  %1022 = vmatpush2.bf16.msra.mxu0 0
  %1023 = vmatprep.subr.bf16.mxu0 0
  %1024 = vmatpush2.bf16.msra.mxu0 0
  %1025 = vmatprep.subr.bf16.mxu0 0
  %1026 = vmatpush2.bf16.msra.mxu0 0
  %1027 = vmatprep.subr.bf16.mxu0 0
  %1028 = vmatpush2.bf16.msra.mxu0 0
  %1029 = vmatprep.subr.bf16.mxu0 0
  %1030 = vmatpush2.bf16.msra.mxu0 0
  %1031 = vmatprep.subr.bf16.mxu0 0
  %1032 = vmatpush2.bf16.msra.mxu0 0
  %1033 = vmatprep.subr.bf16.mxu0 0
  %1034 = vmatpush2.bf16.msra.mxu0 0
  %1035 = vmatprep.subr.bf16.mxu0 0
  %1036 = vmatpush2.bf16.msra.mxu0 0
  %1037 = vmatprep.mubr.bf16.mxu0 0
  %1038 = vmatmul.mubr.bf16.gmra.mxu0 %v962
  %v1039 = vpop.f32.mrf.mxu0
  %v1040 = vadd.f32 %v932, %v1039
  %v1041 = vpop.f32.mrf.mxu0
  %v1042 = vadd.f32 %v936, %v1041
  %v1043 = vpop.f32.mrf.mxu0
  %v1044 = vpop.f32.mrf.mxu0
  %1045 = vdwg.mxu0
  %v1046 = vld [vmem:[#allocation2] sm:$0xf]
  %v1047 = vld [vmem:[%s2] sm:$0xff]
  %v1048 = vld [vmem:[%s2 + $0x8] sm:$0xff]
  %v1049 = vld [vmem:[%s2 + $0x10] sm:$0xff]
  %v1050 = vld [vmem:[%s2 + $0x18] sm:$0xff]
  %v1051 = vld [vmem:[%s2 + $0x20] sm:$0xff]
  %v1052 = vld [vmem:[%s2 + $0x28] sm:$0xff]
  %v1053 = vld [vmem:[%s2 + $0x30] sm:$0xff]
  %v1054 = vld [vmem:[%s2 + $0x38] sm:$0xff]
  %v1055 = vld [vmem:[%s2 + $0x40] sm:$0xff]
  %v1056 = vld [vmem:[%s2 + $0x48] sm:$0xff]
  %v1057 = vld [vmem:[%s2 + $0x50] sm:$0xff]
  %v1058 = vld [vmem:[%s2 + $0x58] sm:$0xff]
  %v1059 = vld [vmem:[%s2 + $0x60] sm:$0xff]
  %v1060 = vld [vmem:[%s2 + $0x68] sm:$0xff]
  %v1061 = vld [vmem:[%s2 + $0x70] sm:$0xff]
  %v1062 = vld [vmem:[%s2 + $0x78] sm:$0xff]
  %v1063 = vld [vmem:[%s2 + $0x80] sm:$0xff]
  %v1064 = vld [vmem:[%s2 + $0x88] sm:$0xff]
  %v1065 = vld [vmem:[%s2 + $0x90] sm:$0xff]
  %v1066 = vld [vmem:[%s2 + $0x98] sm:$0xff]
  %v1067 = vld [vmem:[%s2 + $0xa0] sm:$0xff]
  %v1068 = vld [vmem:[%s2 + $0xa8] sm:$0xff]
  %v1069 = vld [vmem:[%s2 + $0xb0] sm:$0xff]
  %v1070 = vld [vmem:[%s2 + $0xb8] sm:$0xff]
  %v1071 = vld [vmem:[%s2 + $0xc0] sm:$0xff]
  %v1072 = vld [vmem:[%s2 + $0xc8] sm:$0xff]
  %v1073 = vld [vmem:[%s2 + $0xd0] sm:$0xff]
  %v1074 = vld [vmem:[%s2 + $0xd8] sm:$0xff]
  %v1075 = vld [vmem:[%s2 + $0xe0] sm:$0xff]
  %v1076 = vld [vmem:[%s2 + $0xe8] sm:$0xff]
  %v1077 = vld [vmem:[%s2 + $0xf0] sm:$0xff]
  %v1078 = vld [vmem:[%s2 + $0xf8] sm:$0xff]
  %v1111 = vunpack.c.l.b16 %v1047
  %v1112 = vunpack.c.h.b16 %v1047
  %v1113 = vunpack.c.l.b16 %v1048
  %v1114 = vunpack.c.h.b16 %v1048
  %v1115 = vunpack.c.l.b16 %v1049
  %v1116 = vunpack.c.h.b16 %v1049
  %v1117 = vunpack.c.l.b16 %v1050
  %v1118 = vunpack.c.h.b16 %v1050
  %v1119 = vunpack.c.l.b16 %v1051
  %v1120 = vunpack.c.h.b16 %v1051
  %v1121 = vunpack.c.l.b16 %v1052
  %v1122 = vunpack.c.h.b16 %v1052
  %v1123 = vunpack.c.l.b16 %v1053
  %v1124 = vunpack.c.h.b16 %v1053
  %v1125 = vunpack.c.l.b16 %v1054
  %v1126 = vunpack.c.h.b16 %v1054
  %v1127 = vunpack.c.l.b16 %v1055
  %v1128 = vunpack.c.h.b16 %v1055
  %v1129 = vunpack.c.l.b16 %v1056
  %v1130 = vunpack.c.h.b16 %v1056
  %v1131 = vunpack.c.l.b16 %v1057
  %v1132 = vunpack.c.h.b16 %v1057
  %v1133 = vunpack.c.l.b16 %v1058
  %v1134 = vunpack.c.h.b16 %v1058
  %v1135 = vunpack.c.l.b16 %v1059
  %v1136 = vunpack.c.h.b16 %v1059
  %v1137 = vunpack.c.l.b16 %v1060
  %v1138 = vunpack.c.h.b16 %v1060
  %v1139 = vunpack.c.l.b16 %v1061
  %v1140 = vunpack.c.h.b16 %v1061
  %v1141 = vunpack.c.l.b16 %v1062
  %v1142 = vunpack.c.h.b16 %v1062
  %v1143 = vunpack.c.l.b16 %v1063
  %v1144 = vunpack.c.h.b16 %v1063
  %v1145 = vunpack.c.l.b16 %v1064
  %v1146 = vunpack.c.h.b16 %v1064
  %v1147 = vunpack.c.l.b16 %v1065
  %v1148 = vunpack.c.h.b16 %v1065
  %v1149 = vunpack.c.l.b16 %v1066
  %v1150 = vunpack.c.h.b16 %v1066
  %v1151 = vunpack.c.l.b16 %v1067
  %v1152 = vunpack.c.h.b16 %v1067
  %v1153 = vunpack.c.l.b16 %v1068
  %v1154 = vunpack.c.h.b16 %v1068
  %v1155 = vunpack.c.l.b16 %v1069
  %v1156 = vunpack.c.h.b16 %v1069
  %v1157 = vunpack.c.l.b16 %v1070
  %v1158 = vunpack.c.h.b16 %v1070
  %v1159 = vunpack.c.l.b16 %v1071
  %v1160 = vunpack.c.h.b16 %v1071
  %v1161 = vunpack.c.l.b16 %v1072
  %v1162 = vunpack.c.h.b16 %v1072
  %v1163 = vunpack.c.l.b16 %v1073
  %v1164 = vunpack.c.h.b16 %v1073
  %v1165 = vunpack.c.l.b16 %v1074
  %v1166 = vunpack.c.h.b16 %v1074
  %v1167 = vunpack.c.l.b16 %v1075
  %v1168 = vunpack.c.h.b16 %v1075
  %v1169 = vunpack.c.l.b16 %v1076
  %v1170 = vunpack.c.h.b16 %v1076
  %v1171 = vunpack.c.l.b16 %v1077
  %v1172 = vunpack.c.h.b16 %v1077
  %v1173 = vunpack.c.l.b16 %v1078
  %v1174 = vunpack.c.h.b16 %v1078
  %v1175 = vpack.c.b16 %v1115, %v1111
  %v1176 = vpack.c.b16 %v1116, %v1112
  %v1177 = vpack.c.b16 %v1117, %v1113
  %v1178 = vpack.c.b16 %v1118, %v1114
  %v1179 = vpack.c.b16 %v1123, %v1119
  %v1180 = vpack.c.b16 %v1124, %v1120
  %v1181 = vpack.c.b16 %v1125, %v1121
  %v1182 = vpack.c.b16 %v1126, %v1122
  %v1183 = vpack.c.b16 %v1131, %v1127
  %v1184 = vpack.c.b16 %v1132, %v1128
  %v1185 = vpack.c.b16 %v1133, %v1129
  %v1186 = vpack.c.b16 %v1134, %v1130
  %v1187 = vpack.c.b16 %v1139, %v1135
  %v1188 = vpack.c.b16 %v1140, %v1136
  %v1189 = vpack.c.b16 %v1141, %v1137
  %v1190 = vpack.c.b16 %v1142, %v1138
  %v1191 = vpack.c.b16 %v1147, %v1143
  %v1192 = vpack.c.b16 %v1148, %v1144
  %v1193 = vpack.c.b16 %v1149, %v1145
  %v1194 = vpack.c.b16 %v1150, %v1146
  %v1195 = vpack.c.b16 %v1155, %v1151
  %v1196 = vpack.c.b16 %v1156, %v1152
  %v1197 = vpack.c.b16 %v1157, %v1153
  %v1198 = vpack.c.b16 %v1158, %v1154
  %v1199 = vpack.c.b16 %v1163, %v1159
  %v1200 = vpack.c.b16 %v1164, %v1160
  %v1201 = vpack.c.b16 %v1165, %v1161
  %v1202 = vpack.c.b16 %v1166, %v1162
  %v1203 = vpack.c.b16 %v1171, %v1167
  %v1204 = vpack.c.b16 %v1172, %v1168
  %v1205 = vpack.c.b16 %v1173, %v1169
  %v1206 = vpack.c.b16 %v1174, %v1170
  %1239 = vmatprep.subr.bf16.mxu0 %v1204
  %1240 = vmatpush1.bf16.msra.mxu0 %v1203
  %1241 = vmatprep.subr.bf16.mxu0 %v1200
  %1242 = vmatpush1.bf16.msra.mxu0 %v1199
  %1243 = vmatprep.subr.bf16.mxu0 %v1196
  %1244 = vmatpush1.bf16.msra.mxu0 %v1195
  %1245 = vmatprep.subr.bf16.mxu0 %v1192
  %1246 = vmatpush1.bf16.msra.mxu0 %v1191
  %1247 = vmatprep.subr.bf16.mxu0 %v1188
  %1248 = vmatpush1.bf16.msra.mxu0 %v1187
  %1249 = vmatprep.subr.bf16.mxu0 %v1184
  %1250 = vmatpush1.bf16.msra.mxu0 %v1183
  %1251 = vmatprep.subr.bf16.mxu0 %v1180
  %1252 = vmatpush1.bf16.msra.mxu0 %v1179
  %1253 = vmatprep.subr.bf16.mxu0 %v1176
  %1254 = vmatpush1.bf16.msra.mxu0 %v1175
  %1255 = vmatprep.subr.bf16.mxu0 0
  %1256 = vmatpush2.bf16.msra.mxu0 0
  %1257 = vmatprep.subr.bf16.mxu0 0
  %1258 = vmatpush2.bf16.msra.mxu0 0
  %1259 = vmatprep.subr.bf16.mxu0 0
  %1260 = vmatpush2.bf16.msra.mxu0 0
  %1261 = vmatprep.subr.bf16.mxu0 0
  %1262 = vmatpush2.bf16.msra.mxu0 0
  %1263 = vmatprep.subr.bf16.mxu0 0
  %1264 = vmatpush2.bf16.msra.mxu0 0
  %1265 = vmatprep.subr.bf16.mxu0 0
  %1266 = vmatpush2.bf16.msra.mxu0 0
  %1267 = vmatprep.subr.bf16.mxu0 0
  %1268 = vmatpush2.bf16.msra.mxu0 0
  %1269 = vmatprep.subr.bf16.mxu0 0
  %1270 = vmatpush2.bf16.msra.mxu0 0
  %1271 = vmatprep.mubr.bf16.mxu0 0
  %1272 = vmatmul.mubr.bf16.gmra.mxu0 %v1046
  %v1273 = vpop.f32.mrf.mxu0
  %v1274 = vadd.f32 0.0, %v1273
  %v1275 = vpop.f32.mrf.mxu0
  %v1276 = vadd.f32 0.0, %v1275
  %v1277 = vpop.f32.mrf.mxu0
  %v1278 = vpop.f32.mrf.mxu0
  %1279 = vdwg.mxu0
  %1280 = vmatprep.subr.bf16.mxu0 %v1206
  %1281 = vmatpush1.bf16.msra.mxu0 %v1205
  %1282 = vmatprep.subr.bf16.mxu0 %v1202
  %1283 = vmatpush1.bf16.msra.mxu0 %v1201
  %1284 = vmatprep.subr.bf16.mxu0 %v1198
  %1285 = vmatpush1.bf16.msra.mxu0 %v1197
  %1286 = vmatprep.subr.bf16.mxu0 %v1194
  %1287 = vmatpush1.bf16.msra.mxu0 %v1193
  %1288 = vmatprep.subr.bf16.mxu0 %v1190
  %1289 = vmatpush1.bf16.msra.mxu0 %v1189
  %1290 = vmatprep.subr.bf16.mxu0 %v1186
  %1291 = vmatpush1.bf16.msra.mxu0 %v1185
  %1292 = vmatprep.subr.bf16.mxu0 %v1182
  %1293 = vmatpush1.bf16.msra.mxu0 %v1181
  %1294 = vmatprep.subr.bf16.mxu0 %v1178
  %1295 = vmatpush1.bf16.msra.mxu0 %v1177
  %1296 = vmatprep.subr.bf16.mxu0 0
  %1297 = vmatpush2.bf16.msra.mxu0 0
  %1298 = vmatprep.subr.bf16.mxu0 0
  %1299 = vmatpush2.bf16.msra.mxu0 0
  %1300 = vmatprep.subr.bf16.mxu0 0
  %1301 = vmatpush2.bf16.msra.mxu0 0
  %1302 = vmatprep.subr.bf16.mxu0 0
  %1303 = vmatpush2.bf16.msra.mxu0 0
  %1304 = vmatprep.subr.bf16.mxu0 0
  %1305 = vmatpush2.bf16.msra.mxu0 0
  %1306 = vmatprep.subr.bf16.mxu0 0
  %1307 = vmatpush2.bf16.msra.mxu0 0
  %1308 = vmatprep.subr.bf16.mxu0 0
  %1309 = vmatpush2.bf16.msra.mxu0 0
  %1310 = vmatprep.subr.bf16.mxu0 0
  %1311 = vmatpush2.bf16.msra.mxu0 0
  %1312 = vmatprep.mubr.bf16.mxu0 0
  %1313 = vmatmul.mubr.bf16.gmra.mxu0 %v1046
  %v1314 = vpop.f32.mrf.mxu0
  %v1315 = vadd.f32 0.0, %v1314
  %v1316 = vpop.f32.mrf.mxu0
  %v1317 = vadd.f32 0.0, %v1316
  %v1318 = vpop.f32.mrf.mxu0
  %v1319 = vpop.f32.mrf.mxu0
  %1320 = vdwg.mxu0
  %v1321 = vadd.f32 %v999, %v1274
  %v1322 = vadd.f32 %v1001, %v1276
  %v1323 = vadd.f32 %v1040, %v1315
  %v1324 = vadd.f32 %v1042, %v1317
  %v1325 = vxor.u32 %v1321, 2147483648
  %v1326 = vmul.f32 %v1325, 1.442695
  %v1327 = vpow.pop %v1326
  %v1328 = vadd.f32 %v1327, 1.0
  %v1329 = vrcp.pop %v1328
  %v1330 = vmul.f32 1.0, %v1329
  %v1331 = vxor.u32 %v1322, 2147483648
  %v1332 = vmul.f32 %v1331, 1.442695
  %v1333 = vpow.pop %v1332
  %v1334 = vadd.f32 %v1333, 1.0
  %v1335 = vrcp.pop %v1334
  %v1336 = vmul.f32 1.0, %v1335
  %v1337 = vtanh.pop %v1323
  %v1338 = vxor.u32 %v1324, 2147483648
  %v1339 = vmul.f32 %v1338, 1.442695
  %v1340 = vpow.pop %v1339
  %v1341 = vadd.f32 %v1340, 1.0
  %v1342 = vrcp.pop %v1341
  %v1343 = vmul.f32 1.0, %v1342
  %v1344 = vld [vmem:[#allocation3] sm:$0xff]
  %v1345 = vmul.f32 %v1336, %v1344
  %v1346 = vmul.f32 %v1330, %v1337
  %v1347 = vadd.f32 %v1345, %v1346
  %v1348 = vtanh.pop %v1347
  %v1349 = vmul.f32 %v1343, %v1348
  %1350 = vst [vmem:[#allocation3] sm:$0xff] %v1347
  %v1351 = vpack.c.bf16 %v1349, %v1349
  %1352 = vst [vmem:[#allocation2] sm:$0xf] %v1351
  %s1353 = scalar_lea.vmem %s0, 24
  %v1354 = vld [vmem:[%s1353] sm:$0xff]
  %v1355 = vpack.c.bf16 %v1354, %v1354
  %v1356 = vld [vmem:[%s1] sm:$0xff]
  %v1357 = vld [vmem:[%s1 + $0x8] sm:$0xff]
  %v1358 = vld [vmem:[%s1 + $0x10] sm:$0xff]
  %v1359 = vld [vmem:[%s1 + $0x18] sm:$0xff]
  %v1360 = vld [vmem:[%s3] sm:$0xf]
  %v1362 = vlaneseq
  %v1363 = vshrl.u32 %v1362, 7
  %v1364 = vsub.s32 0, %v1363
  %v1365 = vrot.slane %v1360, %v1364
  %v1366 = vlaneseq
  %v1367 = vshrl.u32 %v1366, 7
  %v1368 = vsub.s32 1, %v1367
  %v1369 = vrot.slane %v1360, %v1368
  %v1370 = vlaneseq
  %v1371 = vshrl.u32 %v1370, 7
  %v1372 = vsub.s32 2, %v1371
  %v1373 = vrot.slane %v1360, %v1372
  %v1374 = vlaneseq
  %v1375 = vshrl.u32 %v1374, 7
  %v1376 = vsub.s32 3, %v1375
  %v1377 = vrot.slane %v1360, %v1376
  %v1386 = vunpack.c.l.b16 %v1356
  %v1387 = vunpack.c.h.b16 %v1356
  %v1388 = vunpack.c.l.b16 %v1357
  %v1389 = vunpack.c.h.b16 %v1357
  %v1390 = vunpack.c.l.b16 %v1358
  %v1391 = vunpack.c.h.b16 %v1358
  %v1392 = vunpack.c.l.b16 %v1359
  %v1393 = vunpack.c.h.b16 %v1359
  %v1394 = vpack.c.b16 %v1390, %v1386
  %v1395 = vpack.c.b16 %v1391, %v1387
  %v1396 = vpack.c.b16 %v1392, %v1388
  %v1397 = vpack.c.b16 %v1393, %v1389
  %v1403 = vsel %vm78, %v1355, 0
  %1405 = vmatprep.subr.bf16.mxu0 0
  %1406 = vmatpush1.bf16.msra.mxu0 0
  %1407 = vmatprep.subr.bf16.mxu0 0
  %1408 = vmatpush1.bf16.msra.mxu0 0
  %1409 = vmatprep.subr.bf16.mxu0 0
  %1410 = vmatpush1.bf16.msra.mxu0 0
  %1411 = vmatprep.subr.bf16.mxu0 0
  %1412 = vmatpush1.bf16.msra.mxu0 0
  %1413 = vmatprep.subr.bf16.mxu0 0
  %1414 = vmatpush1.bf16.msra.mxu0 0
  %1415 = vmatprep.subr.bf16.mxu0 0
  %1416 = vmatpush1.bf16.msra.mxu0 0
  %1417 = vmatprep.subr.bf16.mxu0 0
  %1418 = vmatpush1.bf16.msra.mxu0 0
  %1419 = vmatprep.subr.bf16.mxu0 %v1395
  %1420 = vmatpush1.bf16.msra.mxu0 %v1394
  %1421 = vmatprep.subr.bf16.mxu0 0
  %1422 = vmatpush2.bf16.msra.mxu0 0
  %1423 = vmatprep.subr.bf16.mxu0 0
  %1424 = vmatpush2.bf16.msra.mxu0 0
  %1425 = vmatprep.subr.bf16.mxu0 0
  %1426 = vmatpush2.bf16.msra.mxu0 0
  %1427 = vmatprep.subr.bf16.mxu0 0
  %1428 = vmatpush2.bf16.msra.mxu0 0
  %1429 = vmatprep.subr.bf16.mxu0 0
  %1430 = vmatpush2.bf16.msra.mxu0 0
  %1431 = vmatprep.subr.bf16.mxu0 0
  %1432 = vmatpush2.bf16.msra.mxu0 0
  %1433 = vmatprep.subr.bf16.mxu0 0
  %1434 = vmatpush2.bf16.msra.mxu0 0
  %1435 = vmatprep.subr.bf16.mxu0 0
  %1436 = vmatpush2.bf16.msra.mxu0 0
  %1437 = vmatprep.mubr.bf16.mxu0 0
  %1438 = vmatmul.mubr.bf16.gmra.mxu0 %v1403
  %v1439 = vpop.f32.mrf.mxu0
  %v1440 = vadd.f32 %v1365, %v1439
  %v1441 = vpop.f32.mrf.mxu0
  %v1442 = vadd.f32 %v1369, %v1441
  %v1443 = vpop.f32.mrf.mxu0
  %v1444 = vpop.f32.mrf.mxu0
  %1445 = vdwg.mxu0
  %1446 = vmatprep.subr.bf16.mxu0 0
  %1447 = vmatpush1.bf16.msra.mxu0 0
  %1448 = vmatprep.subr.bf16.mxu0 0
  %1449 = vmatpush1.bf16.msra.mxu0 0
  %1450 = vmatprep.subr.bf16.mxu0 0
  %1451 = vmatpush1.bf16.msra.mxu0 0
  %1452 = vmatprep.subr.bf16.mxu0 0
  %1453 = vmatpush1.bf16.msra.mxu0 0
  %1454 = vmatprep.subr.bf16.mxu0 0
  %1455 = vmatpush1.bf16.msra.mxu0 0
  %1456 = vmatprep.subr.bf16.mxu0 0
  %1457 = vmatpush1.bf16.msra.mxu0 0
  %1458 = vmatprep.subr.bf16.mxu0 0
  %1459 = vmatpush1.bf16.msra.mxu0 0
  %1460 = vmatprep.subr.bf16.mxu0 %v1397
  %1461 = vmatpush1.bf16.msra.mxu0 %v1396
  %1462 = vmatprep.subr.bf16.mxu0 0
  %1463 = vmatpush2.bf16.msra.mxu0 0
  %1464 = vmatprep.subr.bf16.mxu0 0
  %1465 = vmatpush2.bf16.msra.mxu0 0
  %1466 = vmatprep.subr.bf16.mxu0 0
  %1467 = vmatpush2.bf16.msra.mxu0 0
  %1468 = vmatprep.subr.bf16.mxu0 0
  %1469 = vmatpush2.bf16.msra.mxu0 0
  %1470 = vmatprep.subr.bf16.mxu0 0
  %1471 = vmatpush2.bf16.msra.mxu0 0
  %1472 = vmatprep.subr.bf16.mxu0 0
  %1473 = vmatpush2.bf16.msra.mxu0 0
  %1474 = vmatprep.subr.bf16.mxu0 0
  %1475 = vmatpush2.bf16.msra.mxu0 0
  %1476 = vmatprep.subr.bf16.mxu0 0
  %1477 = vmatpush2.bf16.msra.mxu0 0
  %1478 = vmatprep.mubr.bf16.mxu0 0
  %1479 = vmatmul.mubr.bf16.gmra.mxu0 %v1403
  %v1480 = vpop.f32.mrf.mxu0
  %v1481 = vadd.f32 %v1373, %v1480
  %v1482 = vpop.f32.mrf.mxu0
  %v1483 = vadd.f32 %v1377, %v1482
  %v1484 = vpop.f32.mrf.mxu0
  %v1485 = vpop.f32.mrf.mxu0
  %1486 = vdwg.mxu0
  %v1487 = vld [vmem:[#allocation2] sm:$0xf]
  %v1488 = vld [vmem:[%s2] sm:$0xff]
  %v1489 = vld [vmem:[%s2 + $0x8] sm:$0xff]
  %v1490 = vld [vmem:[%s2 + $0x10] sm:$0xff]
  %v1491 = vld [vmem:[%s2 + $0x18] sm:$0xff]
  %v1492 = vld [vmem:[%s2 + $0x20] sm:$0xff]
  %v1493 = vld [vmem:[%s2 + $0x28] sm:$0xff]
  %v1494 = vld [vmem:[%s2 + $0x30] sm:$0xff]
  %v1495 = vld [vmem:[%s2 + $0x38] sm:$0xff]
  %v1496 = vld [vmem:[%s2 + $0x40] sm:$0xff]
  %v1497 = vld [vmem:[%s2 + $0x48] sm:$0xff]
  %v1498 = vld [vmem:[%s2 + $0x50] sm:$0xff]
  %v1499 = vld [vmem:[%s2 + $0x58] sm:$0xff]
  %v1500 = vld [vmem:[%s2 + $0x60] sm:$0xff]
  %v1501 = vld [vmem:[%s2 + $0x68] sm:$0xff]
  %v1502 = vld [vmem:[%s2 + $0x70] sm:$0xff]
  %v1503 = vld [vmem:[%s2 + $0x78] sm:$0xff]
  %v1504 = vld [vmem:[%s2 + $0x80] sm:$0xff]
  %v1505 = vld [vmem:[%s2 + $0x88] sm:$0xff]
  %v1506 = vld [vmem:[%s2 + $0x90] sm:$0xff]
  %v1507 = vld [vmem:[%s2 + $0x98] sm:$0xff]
  %v1508 = vld [vmem:[%s2 + $0xa0] sm:$0xff]
  %v1509 = vld [vmem:[%s2 + $0xa8] sm:$0xff]
  %v1510 = vld [vmem:[%s2 + $0xb0] sm:$0xff]
  %v1511 = vld [vmem:[%s2 + $0xb8] sm:$0xff]
  %v1512 = vld [vmem:[%s2 + $0xc0] sm:$0xff]
  %v1513 = vld [vmem:[%s2 + $0xc8] sm:$0xff]
  %v1514 = vld [vmem:[%s2 + $0xd0] sm:$0xff]
  %v1515 = vld [vmem:[%s2 + $0xd8] sm:$0xff]
  %v1516 = vld [vmem:[%s2 + $0xe0] sm:$0xff]
  %v1517 = vld [vmem:[%s2 + $0xe8] sm:$0xff]
  %v1518 = vld [vmem:[%s2 + $0xf0] sm:$0xff]
  %v1519 = vld [vmem:[%s2 + $0xf8] sm:$0xff]
  %v1552 = vunpack.c.l.b16 %v1488
  %v1553 = vunpack.c.h.b16 %v1488
  %v1554 = vunpack.c.l.b16 %v1489
  %v1555 = vunpack.c.h.b16 %v1489
  %v1556 = vunpack.c.l.b16 %v1490
  %v1557 = vunpack.c.h.b16 %v1490
  %v1558 = vunpack.c.l.b16 %v1491
  %v1559 = vunpack.c.h.b16 %v1491
  %v1560 = vunpack.c.l.b16 %v1492
  %v1561 = vunpack.c.h.b16 %v1492
  %v1562 = vunpack.c.l.b16 %v1493
  %v1563 = vunpack.c.h.b16 %v1493
  %v1564 = vunpack.c.l.b16 %v1494
  %v1565 = vunpack.c.h.b16 %v1494
  %v1566 = vunpack.c.l.b16 %v1495
  %v1567 = vunpack.c.h.b16 %v1495
  %v1568 = vunpack.c.l.b16 %v1496
  %v1569 = vunpack.c.h.b16 %v1496
  %v1570 = vunpack.c.l.b16 %v1497
  %v1571 = vunpack.c.h.b16 %v1497
  %v1572 = vunpack.c.l.b16 %v1498
  %v1573 = vunpack.c.h.b16 %v1498
  %v1574 = vunpack.c.l.b16 %v1499
  %v1575 = vunpack.c.h.b16 %v1499
  %v1576 = vunpack.c.l.b16 %v1500
  %v1577 = vunpack.c.h.b16 %v1500
  %v1578 = vunpack.c.l.b16 %v1501
  %v1579 = vunpack.c.h.b16 %v1501
  %v1580 = vunpack.c.l.b16 %v1502
  %v1581 = vunpack.c.h.b16 %v1502
  %v1582 = vunpack.c.l.b16 %v1503
  %v1583 = vunpack.c.h.b16 %v1503
  %v1584 = vunpack.c.l.b16 %v1504
  %v1585 = vunpack.c.h.b16 %v1504
  %v1586 = vunpack.c.l.b16 %v1505
  %v1587 = vunpack.c.h.b16 %v1505
  %v1588 = vunpack.c.l.b16 %v1506
  %v1589 = vunpack.c.h.b16 %v1506
  %v1590 = vunpack.c.l.b16 %v1507
  %v1591 = vunpack.c.h.b16 %v1507
  %v1592 = vunpack.c.l.b16 %v1508
  %v1593 = vunpack.c.h.b16 %v1508
  %v1594 = vunpack.c.l.b16 %v1509
  %v1595 = vunpack.c.h.b16 %v1509
  %v1596 = vunpack.c.l.b16 %v1510
  %v1597 = vunpack.c.h.b16 %v1510
  %v1598 = vunpack.c.l.b16 %v1511
  %v1599 = vunpack.c.h.b16 %v1511
  %v1600 = vunpack.c.l.b16 %v1512
  %v1601 = vunpack.c.h.b16 %v1512
  %v1602 = vunpack.c.l.b16 %v1513
  %v1603 = vunpack.c.h.b16 %v1513
  %v1604 = vunpack.c.l.b16 %v1514
  %v1605 = vunpack.c.h.b16 %v1514
  %v1606 = vunpack.c.l.b16 %v1515
  %v1607 = vunpack.c.h.b16 %v1515
  %v1608 = vunpack.c.l.b16 %v1516
  %v1609 = vunpack.c.h.b16 %v1516
  %v1610 = vunpack.c.l.b16 %v1517
  %v1611 = vunpack.c.h.b16 %v1517
  %v1612 = vunpack.c.l.b16 %v1518
  %v1613 = vunpack.c.h.b16 %v1518
  %v1614 = vunpack.c.l.b16 %v1519
  %v1615 = vunpack.c.h.b16 %v1519
  %v1616 = vpack.c.b16 %v1556, %v1552
  %v1617 = vpack.c.b16 %v1557, %v1553
  %v1618 = vpack.c.b16 %v1558, %v1554
  %v1619 = vpack.c.b16 %v1559, %v1555
  %v1620 = vpack.c.b16 %v1564, %v1560
  %v1621 = vpack.c.b16 %v1565, %v1561
  %v1622 = vpack.c.b16 %v1566, %v1562
  %v1623 = vpack.c.b16 %v1567, %v1563
  %v1624 = vpack.c.b16 %v1572, %v1568
  %v1625 = vpack.c.b16 %v1573, %v1569
  %v1626 = vpack.c.b16 %v1574, %v1570
  %v1627 = vpack.c.b16 %v1575, %v1571
  %v1628 = vpack.c.b16 %v1580, %v1576
  %v1629 = vpack.c.b16 %v1581, %v1577
  %v1630 = vpack.c.b16 %v1582, %v1578
  %v1631 = vpack.c.b16 %v1583, %v1579
  %v1632 = vpack.c.b16 %v1588, %v1584
  %v1633 = vpack.c.b16 %v1589, %v1585
  %v1634 = vpack.c.b16 %v1590, %v1586
  %v1635 = vpack.c.b16 %v1591, %v1587
  %v1636 = vpack.c.b16 %v1596, %v1592
  %v1637 = vpack.c.b16 %v1597, %v1593
  %v1638 = vpack.c.b16 %v1598, %v1594
  %v1639 = vpack.c.b16 %v1599, %v1595
  %v1640 = vpack.c.b16 %v1604, %v1600
  %v1641 = vpack.c.b16 %v1605, %v1601
  %v1642 = vpack.c.b16 %v1606, %v1602
  %v1643 = vpack.c.b16 %v1607, %v1603
  %v1644 = vpack.c.b16 %v1612, %v1608
  %v1645 = vpack.c.b16 %v1613, %v1609
  %v1646 = vpack.c.b16 %v1614, %v1610
  %v1647 = vpack.c.b16 %v1615, %v1611
  %1680 = vmatprep.subr.bf16.mxu0 %v1645
  %1681 = vmatpush1.bf16.msra.mxu0 %v1644
  %1682 = vmatprep.subr.bf16.mxu0 %v1641
  %1683 = vmatpush1.bf16.msra.mxu0 %v1640
  %1684 = vmatprep.subr.bf16.mxu0 %v1637
  %1685 = vmatpush1.bf16.msra.mxu0 %v1636
  %1686 = vmatprep.subr.bf16.mxu0 %v1633
  %1687 = vmatpush1.bf16.msra.mxu0 %v1632
  %1688 = vmatprep.subr.bf16.mxu0 %v1629
  %1689 = vmatpush1.bf16.msra.mxu0 %v1628
  %1690 = vmatprep.subr.bf16.mxu0 %v1625
  %1691 = vmatpush1.bf16.msra.mxu0 %v1624
  %1692 = vmatprep.subr.bf16.mxu0 %v1621
  %1693 = vmatpush1.bf16.msra.mxu0 %v1620
  %1694 = vmatprep.subr.bf16.mxu0 %v1617
  %1695 = vmatpush1.bf16.msra.mxu0 %v1616
  %1696 = vmatprep.subr.bf16.mxu0 0
  %1697 = vmatpush2.bf16.msra.mxu0 0
  %1698 = vmatprep.subr.bf16.mxu0 0
  %1699 = vmatpush2.bf16.msra.mxu0 0
  %1700 = vmatprep.subr.bf16.mxu0 0
  %1701 = vmatpush2.bf16.msra.mxu0 0
  %1702 = vmatprep.subr.bf16.mxu0 0
  %1703 = vmatpush2.bf16.msra.mxu0 0
  %1704 = vmatprep.subr.bf16.mxu0 0
  %1705 = vmatpush2.bf16.msra.mxu0 0
  %1706 = vmatprep.subr.bf16.mxu0 0
  %1707 = vmatpush2.bf16.msra.mxu0 0
  %1708 = vmatprep.subr.bf16.mxu0 0
  %1709 = vmatpush2.bf16.msra.mxu0 0
  %1710 = vmatprep.subr.bf16.mxu0 0
  %1711 = vmatpush2.bf16.msra.mxu0 0
  %1712 = vmatprep.mubr.bf16.mxu0 0
  %1713 = vmatmul.mubr.bf16.gmra.mxu0 %v1487
  %v1714 = vpop.f32.mrf.mxu0
  %v1715 = vadd.f32 0.0, %v1714
  %v1716 = vpop.f32.mrf.mxu0
  %v1717 = vadd.f32 0.0, %v1716
  %v1718 = vpop.f32.mrf.mxu0
  %v1719 = vpop.f32.mrf.mxu0
  %1720 = vdwg.mxu0
  %1721 = vmatprep.subr.bf16.mxu0 %v1647
  %1722 = vmatpush1.bf16.msra.mxu0 %v1646
  %1723 = vmatprep.subr.bf16.mxu0 %v1643
  %1724 = vmatpush1.bf16.msra.mxu0 %v1642
  %1725 = vmatprep.subr.bf16.mxu0 %v1639
  %1726 = vmatpush1.bf16.msra.mxu0 %v1638
  %1727 = vmatprep.subr.bf16.mxu0 %v1635
  %1728 = vmatpush1.bf16.msra.mxu0 %v1634
  %1729 = vmatprep.subr.bf16.mxu0 %v1631
  %1730 = vmatpush1.bf16.msra.mxu0 %v1630
  %1731 = vmatprep.subr.bf16.mxu0 %v1627
  %1732 = vmatpush1.bf16.msra.mxu0 %v1626
  %1733 = vmatprep.subr.bf16.mxu0 %v1623
  %1734 = vmatpush1.bf16.msra.mxu0 %v1622
  %1735 = vmatprep.subr.bf16.mxu0 %v1619
  %1736 = vmatpush1.bf16.msra.mxu0 %v1618
  %1737 = vmatprep.subr.bf16.mxu0 0
  %1738 = vmatpush2.bf16.msra.mxu0 0
  %1739 = vmatprep.subr.bf16.mxu0 0
  %1740 = vmatpush2.bf16.msra.mxu0 0
  %1741 = vmatprep.subr.bf16.mxu0 0
  %1742 = vmatpush2.bf16.msra.mxu0 0
  %1743 = vmatprep.subr.bf16.mxu0 0
  %1744 = vmatpush2.bf16.msra.mxu0 0
  %1745 = vmatprep.subr.bf16.mxu0 0
  %1746 = vmatpush2.bf16.msra.mxu0 0
  %1747 = vmatprep.subr.bf16.mxu0 0
  %1748 = vmatpush2.bf16.msra.mxu0 0
  %1749 = vmatprep.subr.bf16.mxu0 0
  %1750 = vmatpush2.bf16.msra.mxu0 0
  %1751 = vmatprep.subr.bf16.mxu0 0
  %1752 = vmatpush2.bf16.msra.mxu0 0
  %1753 = vmatprep.mubr.bf16.mxu0 0
  %1754 = vmatmul.mubr.bf16.gmra.mxu0 %v1487
  %v1755 = vpop.f32.mrf.mxu0
  %v1756 = vadd.f32 0.0, %v1755
  %v1757 = vpop.f32.mrf.mxu0
  %v1758 = vadd.f32 0.0, %v1757
  %v1759 = vpop.f32.mrf.mxu0
  %v1760 = vpop.f32.mrf.mxu0
  %1761 = vdwg.mxu0
  %v1762 = vadd.f32 %v1440, %v1715
  %v1763 = vadd.f32 %v1442, %v1717
  %v1764 = vadd.f32 %v1481, %v1756
  %v1765 = vadd.f32 %v1483, %v1758
  %v1766 = vxor.u32 %v1762, 2147483648
  %v1767 = vmul.f32 %v1766, 1.442695
  %v1768 = vpow.pop %v1767
  %v1769 = vadd.f32 %v1768, 1.0
  %v1770 = vrcp.pop %v1769
  %v1771 = vmul.f32 1.0, %v1770
  %v1772 = vxor.u32 %v1763, 2147483648
  %v1773 = vmul.f32 %v1772, 1.442695
  %v1774 = vpow.pop %v1773
  %v1775 = vadd.f32 %v1774, 1.0
  %v1776 = vrcp.pop %v1775
  %v1777 = vmul.f32 1.0, %v1776
  %v1778 = vtanh.pop %v1764
  %v1779 = vxor.u32 %v1765, 2147483648
  %v1780 = vmul.f32 %v1779, 1.442695
  %v1781 = vpow.pop %v1780
  %v1782 = vadd.f32 %v1781, 1.0
  %v1783 = vrcp.pop %v1782
  %v1784 = vmul.f32 1.0, %v1783
  %v1785 = vld [vmem:[#allocation3] sm:$0xff]
  %v1786 = vmul.f32 %v1777, %v1785
  %v1787 = vmul.f32 %v1771, %v1778
  %v1788 = vadd.f32 %v1786, %v1787
  %v1789 = vtanh.pop %v1788
  %v1790 = vmul.f32 %v1784, %v1789
  %1791 = vst [vmem:[#allocation3] sm:$0xff] %v1788
  %v1792 = vpack.c.bf16 %v1790, %v1790
  %1793 = vst [vmem:[#allocation2] sm:$0xf] %v1792
  %s1794 = scalar_lea.vmem %s0, 32
  %v1795 = vld [vmem:[%s1794] sm:$0xff]
  %v1796 = vpack.c.bf16 %v1795, %v1795
  %v1797 = vld [vmem:[%s1] sm:$0xff]
  %v1798 = vld [vmem:[%s1 + $0x8] sm:$0xff]
  %v1799 = vld [vmem:[%s1 + $0x10] sm:$0xff]
  %v1800 = vld [vmem:[%s1 + $0x18] sm:$0xff]
  %v1801 = vld [vmem:[%s3] sm:$0xf]
  %v1803 = vlaneseq
  %v1804 = vshrl.u32 %v1803, 7
  %v1805 = vsub.s32 0, %v1804
  %v1806 = vrot.slane %v1801, %v1805
  %v1807 = vlaneseq
  %v1808 = vshrl.u32 %v1807, 7
  %v1809 = vsub.s32 1, %v1808
  %v1810 = vrot.slane %v1801, %v1809
  %v1811 = vlaneseq
  %v1812 = vshrl.u32 %v1811, 7
  %v1813 = vsub.s32 2, %v1812
  %v1814 = vrot.slane %v1801, %v1813
  %v1815 = vlaneseq
  %v1816 = vshrl.u32 %v1815, 7
  %v1817 = vsub.s32 3, %v1816
  %v1818 = vrot.slane %v1801, %v1817
  %v1827 = vunpack.c.l.b16 %v1797
  %v1828 = vunpack.c.h.b16 %v1797
  %v1829 = vunpack.c.l.b16 %v1798
  %v1830 = vunpack.c.h.b16 %v1798
  %v1831 = vunpack.c.l.b16 %v1799
  %v1832 = vunpack.c.h.b16 %v1799
  %v1833 = vunpack.c.l.b16 %v1800
  %v1834 = vunpack.c.h.b16 %v1800
  %v1835 = vpack.c.b16 %v1831, %v1827
  %v1836 = vpack.c.b16 %v1832, %v1828
  %v1837 = vpack.c.b16 %v1833, %v1829
  %v1838 = vpack.c.b16 %v1834, %v1830
  %v1844 = vsel %vm78, %v1796, 0
  %1846 = vmatprep.subr.bf16.mxu0 0
  %1847 = vmatpush1.bf16.msra.mxu0 0
  %1848 = vmatprep.subr.bf16.mxu0 0
  %1849 = vmatpush1.bf16.msra.mxu0 0
  %1850 = vmatprep.subr.bf16.mxu0 0
  %1851 = vmatpush1.bf16.msra.mxu0 0
  %1852 = vmatprep.subr.bf16.mxu0 0
  %1853 = vmatpush1.bf16.msra.mxu0 0
  %1854 = vmatprep.subr.bf16.mxu0 0
  %1855 = vmatpush1.bf16.msra.mxu0 0
  %1856 = vmatprep.subr.bf16.mxu0 0
  %1857 = vmatpush1.bf16.msra.mxu0 0
  %1858 = vmatprep.subr.bf16.mxu0 0
  %1859 = vmatpush1.bf16.msra.mxu0 0
  %1860 = vmatprep.subr.bf16.mxu0 %v1836
  %1861 = vmatpush1.bf16.msra.mxu0 %v1835
  %1862 = vmatprep.subr.bf16.mxu0 0
  %1863 = vmatpush2.bf16.msra.mxu0 0
  %1864 = vmatprep.subr.bf16.mxu0 0
  %1865 = vmatpush2.bf16.msra.mxu0 0
  %1866 = vmatprep.subr.bf16.mxu0 0
  %1867 = vmatpush2.bf16.msra.mxu0 0
  %1868 = vmatprep.subr.bf16.mxu0 0
  %1869 = vmatpush2.bf16.msra.mxu0 0
  %1870 = vmatprep.subr.bf16.mxu0 0
  %1871 = vmatpush2.bf16.msra.mxu0 0
  %1872 = vmatprep.subr.bf16.mxu0 0
  %1873 = vmatpush2.bf16.msra.mxu0 0
  %1874 = vmatprep.subr.bf16.mxu0 0
  %1875 = vmatpush2.bf16.msra.mxu0 0
  %1876 = vmatprep.subr.bf16.mxu0 0
  %1877 = vmatpush2.bf16.msra.mxu0 0
  %1878 = vmatprep.mubr.bf16.mxu0 0
  %1879 = vmatmul.mubr.bf16.gmra.mxu0 %v1844
  %v1880 = vpop.f32.mrf.mxu0
  %v1881 = vadd.f32 %v1806, %v1880
  %v1882 = vpop.f32.mrf.mxu0
  %v1883 = vadd.f32 %v1810, %v1882
  %v1884 = vpop.f32.mrf.mxu0
  %v1885 = vpop.f32.mrf.mxu0
  %1886 = vdwg.mxu0
  %1887 = vmatprep.subr.bf16.mxu0 0
  %1888 = vmatpush1.bf16.msra.mxu0 0
  %1889 = vmatprep.subr.bf16.mxu0 0
  %1890 = vmatpush1.bf16.msra.mxu0 0
  %1891 = vmatprep.subr.bf16.mxu0 0
  %1892 = vmatpush1.bf16.msra.mxu0 0
  %1893 = vmatprep.subr.bf16.mxu0 0
  %1894 = vmatpush1.bf16.msra.mxu0 0
  %1895 = vmatprep.subr.bf16.mxu0 0
  %1896 = vmatpush1.bf16.msra.mxu0 0
  %1897 = vmatprep.subr.bf16.mxu0 0
  %1898 = vmatpush1.bf16.msra.mxu0 0
  %1899 = vmatprep.subr.bf16.mxu0 0
  %1900 = vmatpush1.bf16.msra.mxu0 0
  %1901 = vmatprep.subr.bf16.mxu0 %v1838
  %1902 = vmatpush1.bf16.msra.mxu0 %v1837
  %1903 = vmatprep.subr.bf16.mxu0 0
  %1904 = vmatpush2.bf16.msra.mxu0 0
  %1905 = vmatprep.subr.bf16.mxu0 0
  %1906 = vmatpush2.bf16.msra.mxu0 0
  %1907 = vmatprep.subr.bf16.mxu0 0
  %1908 = vmatpush2.bf16.msra.mxu0 0
  %1909 = vmatprep.subr.bf16.mxu0 0
  %1910 = vmatpush2.bf16.msra.mxu0 0
  %1911 = vmatprep.subr.bf16.mxu0 0
  %1912 = vmatpush2.bf16.msra.mxu0 0
  %1913 = vmatprep.subr.bf16.mxu0 0
  %1914 = vmatpush2.bf16.msra.mxu0 0
  %1915 = vmatprep.subr.bf16.mxu0 0
  %1916 = vmatpush2.bf16.msra.mxu0 0
  %1917 = vmatprep.subr.bf16.mxu0 0
  %1918 = vmatpush2.bf16.msra.mxu0 0
  %1919 = vmatprep.mubr.bf16.mxu0 0
  %1920 = vmatmul.mubr.bf16.gmra.mxu0 %v1844
  %v1921 = vpop.f32.mrf.mxu0
  %v1922 = vadd.f32 %v1814, %v1921
  %v1923 = vpop.f32.mrf.mxu0
  %v1924 = vadd.f32 %v1818, %v1923
  %v1925 = vpop.f32.mrf.mxu0
  %v1926 = vpop.f32.mrf.mxu0
  %1927 = vdwg.mxu0
  %v1928 = vld [vmem:[#allocation2] sm:$0xf]
  %v1929 = vld [vmem:[%s2] sm:$0xff]
  %v1930 = vld [vmem:[%s2 + $0x8] sm:$0xff]
  %v1931 = vld [vmem:[%s2 + $0x10] sm:$0xff]
  %v1932 = vld [vmem:[%s2 + $0x18] sm:$0xff]
  %v1933 = vld [vmem:[%s2 + $0x20] sm:$0xff]
  %v1934 = vld [vmem:[%s2 + $0x28] sm:$0xff]
  %v1935 = vld [vmem:[%s2 + $0x30] sm:$0xff]
  %v1936 = vld [vmem:[%s2 + $0x38] sm:$0xff]
  %v1937 = vld [vmem:[%s2 + $0x40] sm:$0xff]
  %v1938 = vld [vmem:[%s2 + $0x48] sm:$0xff]
  %v1939 = vld [vmem:[%s2 + $0x50] sm:$0xff]
  %v1940 = vld [vmem:[%s2 + $0x58] sm:$0xff]
  %v1941 = vld [vmem:[%s2 + $0x60] sm:$0xff]
  %v1942 = vld [vmem:[%s2 + $0x68] sm:$0xff]
  %v1943 = vld [vmem:[%s2 + $0x70] sm:$0xff]
  %v1944 = vld [vmem:[%s2 + $0x78] sm:$0xff]
  %v1945 = vld [vmem:[%s2 + $0x80] sm:$0xff]
  %v1946 = vld [vmem:[%s2 + $0x88] sm:$0xff]
  %v1947 = vld [vmem:[%s2 + $0x90] sm:$0xff]
  %v1948 = vld [vmem:[%s2 + $0x98] sm:$0xff]
  %v1949 = vld [vmem:[%s2 + $0xa0] sm:$0xff]
  %v1950 = vld [vmem:[%s2 + $0xa8] sm:$0xff]
  %v1951 = vld [vmem:[%s2 + $0xb0] sm:$0xff]
  %v1952 = vld [vmem:[%s2 + $0xb8] sm:$0xff]
  %v1953 = vld [vmem:[%s2 + $0xc0] sm:$0xff]
  %v1954 = vld [vmem:[%s2 + $0xc8] sm:$0xff]
  %v1955 = vld [vmem:[%s2 + $0xd0] sm:$0xff]
  %v1956 = vld [vmem:[%s2 + $0xd8] sm:$0xff]
  %v1957 = vld [vmem:[%s2 + $0xe0] sm:$0xff]
  %v1958 = vld [vmem:[%s2 + $0xe8] sm:$0xff]
  %v1959 = vld [vmem:[%s2 + $0xf0] sm:$0xff]
  %v1960 = vld [vmem:[%s2 + $0xf8] sm:$0xff]
  %v1993 = vunpack.c.l.b16 %v1929
  %v1994 = vunpack.c.h.b16 %v1929
  %v1995 = vunpack.c.l.b16 %v1930
  %v1996 = vunpack.c.h.b16 %v1930
  %v1997 = vunpack.c.l.b16 %v1931
  %v1998 = vunpack.c.h.b16 %v1931
  %v1999 = vunpack.c.l.b16 %v1932
  %v2000 = vunpack.c.h.b16 %v1932
  %v2001 = vunpack.c.l.b16 %v1933
  %v2002 = vunpack.c.h.b16 %v1933
  %v2003 = vunpack.c.l.b16 %v1934
  %v2004 = vunpack.c.h.b16 %v1934
  %v2005 = vunpack.c.l.b16 %v1935
  %v2006 = vunpack.c.h.b16 %v1935
  %v2007 = vunpack.c.l.b16 %v1936
  %v2008 = vunpack.c.h.b16 %v1936
  %v2009 = vunpack.c.l.b16 %v1937
  %v2010 = vunpack.c.h.b16 %v1937
  %v2011 = vunpack.c.l.b16 %v1938
  %v2012 = vunpack.c.h.b16 %v1938
  %v2013 = vunpack.c.l.b16 %v1939
  %v2014 = vunpack.c.h.b16 %v1939
  %v2015 = vunpack.c.l.b16 %v1940
  %v2016 = vunpack.c.h.b16 %v1940
  %v2017 = vunpack.c.l.b16 %v1941
  %v2018 = vunpack.c.h.b16 %v1941
  %v2019 = vunpack.c.l.b16 %v1942
  %v2020 = vunpack.c.h.b16 %v1942
  %v2021 = vunpack.c.l.b16 %v1943
  %v2022 = vunpack.c.h.b16 %v1943
  %v2023 = vunpack.c.l.b16 %v1944
  %v2024 = vunpack.c.h.b16 %v1944
  %v2025 = vunpack.c.l.b16 %v1945
  %v2026 = vunpack.c.h.b16 %v1945
  %v2027 = vunpack.c.l.b16 %v1946
  %v2028 = vunpack.c.h.b16 %v1946
  %v2029 = vunpack.c.l.b16 %v1947
  %v2030 = vunpack.c.h.b16 %v1947
  %v2031 = vunpack.c.l.b16 %v1948
  %v2032 = vunpack.c.h.b16 %v1948
  %v2033 = vunpack.c.l.b16 %v1949
  %v2034 = vunpack.c.h.b16 %v1949
  %v2035 = vunpack.c.l.b16 %v1950
  %v2036 = vunpack.c.h.b16 %v1950
  %v2037 = vunpack.c.l.b16 %v1951
  %v2038 = vunpack.c.h.b16 %v1951
  %v2039 = vunpack.c.l.b16 %v1952
  %v2040 = vunpack.c.h.b16 %v1952
  %v2041 = vunpack.c.l.b16 %v1953
  %v2042 = vunpack.c.h.b16 %v1953
  %v2043 = vunpack.c.l.b16 %v1954
  %v2044 = vunpack.c.h.b16 %v1954
  %v2045 = vunpack.c.l.b16 %v1955
  %v2046 = vunpack.c.h.b16 %v1955
  %v2047 = vunpack.c.l.b16 %v1956
  %v2048 = vunpack.c.h.b16 %v1956
  %v2049 = vunpack.c.l.b16 %v1957
  %v2050 = vunpack.c.h.b16 %v1957
  %v2051 = vunpack.c.l.b16 %v1958
  %v2052 = vunpack.c.h.b16 %v1958
  %v2053 = vunpack.c.l.b16 %v1959
  %v2054 = vunpack.c.h.b16 %v1959
  %v2055 = vunpack.c.l.b16 %v1960
  %v2056 = vunpack.c.h.b16 %v1960
  %v2057 = vpack.c.b16 %v1997, %v1993
  %v2058 = vpack.c.b16 %v1998, %v1994
  %v2059 = vpack.c.b16 %v1999, %v1995
  %v2060 = vpack.c.b16 %v2000, %v1996
  %v2061 = vpack.c.b16 %v2005, %v2001
  %v2062 = vpack.c.b16 %v2006, %v2002
  %v2063 = vpack.c.b16 %v2007, %v2003
  %v2064 = vpack.c.b16 %v2008, %v2004
  %v2065 = vpack.c.b16 %v2013, %v2009
  %v2066 = vpack.c.b16 %v2014, %v2010
  %v2067 = vpack.c.b16 %v2015, %v2011
  %v2068 = vpack.c.b16 %v2016, %v2012
  %v2069 = vpack.c.b16 %v2021, %v2017
  %v2070 = vpack.c.b16 %v2022, %v2018
  %v2071 = vpack.c.b16 %v2023, %v2019
  %v2072 = vpack.c.b16 %v2024, %v2020
  %v2073 = vpack.c.b16 %v2029, %v2025
  %v2074 = vpack.c.b16 %v2030, %v2026
  %v2075 = vpack.c.b16 %v2031, %v2027
  %v2076 = vpack.c.b16 %v2032, %v2028
  %v2077 = vpack.c.b16 %v2037, %v2033
  %v2078 = vpack.c.b16 %v2038, %v2034
  %v2079 = vpack.c.b16 %v2039, %v2035
  %v2080 = vpack.c.b16 %v2040, %v2036
  %v2081 = vpack.c.b16 %v2045, %v2041
  %v2082 = vpack.c.b16 %v2046, %v2042
  %v2083 = vpack.c.b16 %v2047, %v2043
  %v2084 = vpack.c.b16 %v2048, %v2044
  %v2085 = vpack.c.b16 %v2053, %v2049
  %v2086 = vpack.c.b16 %v2054, %v2050
  %v2087 = vpack.c.b16 %v2055, %v2051
  %v2088 = vpack.c.b16 %v2056, %v2052
  %2121 = vmatprep.subr.bf16.mxu0 %v2086
  %2122 = vmatpush1.bf16.msra.mxu0 %v2085
  %2123 = vmatprep.subr.bf16.mxu0 %v2082
  %2124 = vmatpush1.bf16.msra.mxu0 %v2081
  %2125 = vmatprep.subr.bf16.mxu0 %v2078
  %2126 = vmatpush1.bf16.msra.mxu0 %v2077
  %2127 = vmatprep.subr.bf16.mxu0 %v2074
  %2128 = vmatpush1.bf16.msra.mxu0 %v2073
  %2129 = vmatprep.subr.bf16.mxu0 %v2070
  %2130 = vmatpush1.bf16.msra.mxu0 %v2069
  %2131 = vmatprep.subr.bf16.mxu0 %v2066
  %2132 = vmatpush1.bf16.msra.mxu0 %v2065
  %2133 = vmatprep.subr.bf16.mxu0 %v2062
  %2134 = vmatpush1.bf16.msra.mxu0 %v2061
  %2135 = vmatprep.subr.bf16.mxu0 %v2058
  %2136 = vmatpush1.bf16.msra.mxu0 %v2057
  %2137 = vmatprep.subr.bf16.mxu0 0
  %2138 = vmatpush2.bf16.msra.mxu0 0
  %2139 = vmatprep.subr.bf16.mxu0 0
  %2140 = vmatpush2.bf16.msra.mxu0 0
  %2141 = vmatprep.subr.bf16.mxu0 0
  %2142 = vmatpush2.bf16.msra.mxu0 0
  %2143 = vmatprep.subr.bf16.mxu0 0
  %2144 = vmatpush2.bf16.msra.mxu0 0
  %2145 = vmatprep.subr.bf16.mxu0 0
  %2146 = vmatpush2.bf16.msra.mxu0 0
  %2147 = vmatprep.subr.bf16.mxu0 0
  %2148 = vmatpush2.bf16.msra.mxu0 0
  %2149 = vmatprep.subr.bf16.mxu0 0
  %2150 = vmatpush2.bf16.msra.mxu0 0
  %2151 = vmatprep.subr.bf16.mxu0 0
  %2152 = vmatpush2.bf16.msra.mxu0 0
  %2153 = vmatprep.mubr.bf16.mxu0 0
  %2154 = vmatmul.mubr.bf16.gmra.mxu0 %v1928
  %v2155 = vpop.f32.mrf.mxu0
  %v2156 = vadd.f32 0.0, %v2155
  %v2157 = vpop.f32.mrf.mxu0
  %v2158 = vadd.f32 0.0, %v2157
  %v2159 = vpop.f32.mrf.mxu0
  %v2160 = vpop.f32.mrf.mxu0
  %2161 = vdwg.mxu0
  %2162 = vmatprep.subr.bf16.mxu0 %v2088
  %2163 = vmatpush1.bf16.msra.mxu0 %v2087
  %2164 = vmatprep.subr.bf16.mxu0 %v2084
  %2165 = vmatpush1.bf16.msra.mxu0 %v2083
  %2166 = vmatprep.subr.bf16.mxu0 %v2080
  %2167 = vmatpush1.bf16.msra.mxu0 %v2079
  %2168 = vmatprep.subr.bf16.mxu0 %v2076
  %2169 = vmatpush1.bf16.msra.mxu0 %v2075
  %2170 = vmatprep.subr.bf16.mxu0 %v2072
  %2171 = vmatpush1.bf16.msra.mxu0 %v2071
  %2172 = vmatprep.subr.bf16.mxu0 %v2068
  %2173 = vmatpush1.bf16.msra.mxu0 %v2067
  %2174 = vmatprep.subr.bf16.mxu0 %v2064
  %2175 = vmatpush1.bf16.msra.mxu0 %v2063
  %2176 = vmatprep.subr.bf16.mxu0 %v2060
  %2177 = vmatpush1.bf16.msra.mxu0 %v2059
  %2178 = vmatprep.subr.bf16.mxu0 0
  %2179 = vmatpush2.bf16.msra.mxu0 0
  %2180 = vmatprep.subr.bf16.mxu0 0
  %2181 = vmatpush2.bf16.msra.mxu0 0
  %2182 = vmatprep.subr.bf16.mxu0 0
  %2183 = vmatpush2.bf16.msra.mxu0 0
  %2184 = vmatprep.subr.bf16.mxu0 0
  %2185 = vmatpush2.bf16.msra.mxu0 0
  %2186 = vmatprep.subr.bf16.mxu0 0
  %2187 = vmatpush2.bf16.msra.mxu0 0
  %2188 = vmatprep.subr.bf16.mxu0 0
  %2189 = vmatpush2.bf16.msra.mxu0 0
  %2190 = vmatprep.subr.bf16.mxu0 0
  %2191 = vmatpush2.bf16.msra.mxu0 0
  %2192 = vmatprep.subr.bf16.mxu0 0
  %2193 = vmatpush2.bf16.msra.mxu0 0
  %2194 = vmatprep.mubr.bf16.mxu0 0
  %2195 = vmatmul.mubr.bf16.gmra.mxu0 %v1928
  %v2196 = vpop.f32.mrf.mxu0
  %v2197 = vadd.f32 0.0, %v2196
  %v2198 = vpop.f32.mrf.mxu0
  %v2199 = vadd.f32 0.0, %v2198
  %v2200 = vpop.f32.mrf.mxu0
  %v2201 = vpop.f32.mrf.mxu0
  %2202 = vdwg.mxu0
  %v2203 = vadd.f32 %v1881, %v2156
  %v2204 = vadd.f32 %v1883, %v2158
  %v2205 = vadd.f32 %v1922, %v2197
  %v2206 = vadd.f32 %v1924, %v2199
  %v2207 = vxor.u32 %v2203, 2147483648
  %v2208 = vmul.f32 %v2207, 1.442695
  %v2209 = vpow.pop %v2208
  %v2210 = vadd.f32 %v2209, 1.0
  %v2211 = vrcp.pop %v2210
  %v2212 = vmul.f32 1.0, %v2211
  %v2213 = vxor.u32 %v2204, 2147483648
  %v2214 = vmul.f32 %v2213, 1.442695
  %v2215 = vpow.pop %v2214
  %v2216 = vadd.f32 %v2215, 1.0
  %v2217 = vrcp.pop %v2216
  %v2218 = vmul.f32 1.0, %v2217
  %v2219 = vtanh.pop %v2205
  %v2220 = vxor.u32 %v2206, 2147483648
  %v2221 = vmul.f32 %v2220, 1.442695
  %v2222 = vpow.pop %v2221
  %v2223 = vadd.f32 %v2222, 1.0
  %v2224 = vrcp.pop %v2223
  %v2225 = vmul.f32 1.0, %v2224
  %v2226 = vld [vmem:[#allocation3] sm:$0xff]
  %v2227 = vmul.f32 %v2218, %v2226
  %v2228 = vmul.f32 %v2212, %v2219
  %v2229 = vadd.f32 %v2227, %v2228
  %v2230 = vtanh.pop %v2229
  %v2231 = vmul.f32 %v2225, %v2230
  %2232 = vst [vmem:[#allocation3] sm:$0xff] %v2229
  %v2233 = vpack.c.bf16 %v2231, %v2231
  %2234 = vst [vmem:[#allocation2] sm:$0xf] %v2233
  %s2235 = scalar_lea.vmem %s0, 40
  %v2236 = vld [vmem:[%s2235] sm:$0xff]
  %v2237 = vpack.c.bf16 %v2236, %v2236
  %v2238 = vld [vmem:[%s1] sm:$0xff]
  %v2239 = vld [vmem:[%s1 + $0x8] sm:$0xff]
  %v2240 = vld [vmem:[%s1 + $0x10] sm:$0xff]
  %v2241 = vld [vmem:[%s1 + $0x18] sm:$0xff]
  %v2242 = vld [vmem:[%s3] sm:$0xf]
  %v2244 = vlaneseq
  %v2245 = vshrl.u32 %v2244, 7
  %v2246 = vsub.s32 0, %v2245
  %v2247 = vrot.slane %v2242, %v2246
  %v2248 = vlaneseq
  %v2249 = vshrl.u32 %v2248, 7
  %v2250 = vsub.s32 1, %v2249
  %v2251 = vrot.slane %v2242, %v2250
  %v2252 = vlaneseq
  %v2253 = vshrl.u32 %v2252, 7
  %v2254 = vsub.s32 2, %v2253
  %v2255 = vrot.slane %v2242, %v2254
  %v2256 = vlaneseq
  %v2257 = vshrl.u32 %v2256, 7
  %v2258 = vsub.s32 3, %v2257
  %v2259 = vrot.slane %v2242, %v2258
  %v2268 = vunpack.c.l.b16 %v2238
  %v2269 = vunpack.c.h.b16 %v2238
  %v2270 = vunpack.c.l.b16 %v2239
  %v2271 = vunpack.c.h.b16 %v2239
  %v2272 = vunpack.c.l.b16 %v2240
  %v2273 = vunpack.c.h.b16 %v2240
  %v2274 = vunpack.c.l.b16 %v2241
  %v2275 = vunpack.c.h.b16 %v2241
  %v2276 = vpack.c.b16 %v2272, %v2268
  %v2277 = vpack.c.b16 %v2273, %v2269
  %v2278 = vpack.c.b16 %v2274, %v2270
  %v2279 = vpack.c.b16 %v2275, %v2271
  %v2285 = vsel %vm78, %v2237, 0
  %2287 = vmatprep.subr.bf16.mxu0 0
  %2288 = vmatpush1.bf16.msra.mxu0 0
  %2289 = vmatprep.subr.bf16.mxu0 0
  %2290 = vmatpush1.bf16.msra.mxu0 0
  %2291 = vmatprep.subr.bf16.mxu0 0
  %2292 = vmatpush1.bf16.msra.mxu0 0
  %2293 = vmatprep.subr.bf16.mxu0 0
  %2294 = vmatpush1.bf16.msra.mxu0 0
  %2295 = vmatprep.subr.bf16.mxu0 0
  %2296 = vmatpush1.bf16.msra.mxu0 0
  %2297 = vmatprep.subr.bf16.mxu0 0
  %2298 = vmatpush1.bf16.msra.mxu0 0
  %2299 = vmatprep.subr.bf16.mxu0 0
  %2300 = vmatpush1.bf16.msra.mxu0 0
  %2301 = vmatprep.subr.bf16.mxu0 %v2277
  %2302 = vmatpush1.bf16.msra.mxu0 %v2276
  %2303 = vmatprep.subr.bf16.mxu0 0
  %2304 = vmatpush2.bf16.msra.mxu0 0
  %2305 = vmatprep.subr.bf16.mxu0 0
  %2306 = vmatpush2.bf16.msra.mxu0 0
  %2307 = vmatprep.subr.bf16.mxu0 0
  %2308 = vmatpush2.bf16.msra.mxu0 0
  %2309 = vmatprep.subr.bf16.mxu0 0
  %2310 = vmatpush2.bf16.msra.mxu0 0
  %2311 = vmatprep.subr.bf16.mxu0 0
  %2312 = vmatpush2.bf16.msra.mxu0 0
  %2313 = vmatprep.subr.bf16.mxu0 0
  %2314 = vmatpush2.bf16.msra.mxu0 0
  %2315 = vmatprep.subr.bf16.mxu0 0
  %2316 = vmatpush2.bf16.msra.mxu0 0
  %2317 = vmatprep.subr.bf16.mxu0 0
  %2318 = vmatpush2.bf16.msra.mxu0 0
  %2319 = vmatprep.mubr.bf16.mxu0 0
  %2320 = vmatmul.mubr.bf16.gmra.mxu0 %v2285
  %v2321 = vpop.f32.mrf.mxu0
  %v2322 = vadd.f32 %v2247, %v2321
  %v2323 = vpop.f32.mrf.mxu0
  %v2324 = vadd.f32 %v2251, %v2323
  %v2325 = vpop.f32.mrf.mxu0
  %v2326 = vpop.f32.mrf.mxu0
  %2327 = vdwg.mxu0
  %2328 = vmatprep.subr.bf16.mxu0 0
  %2329 = vmatpush1.bf16.msra.mxu0 0
  %2330 = vmatprep.subr.bf16.mxu0 0
  %2331 = vmatpush1.bf16.msra.mxu0 0
  %2332 = vmatprep.subr.bf16.mxu0 0
  %2333 = vmatpush1.bf16.msra.mxu0 0
  %2334 = vmatprep.subr.bf16.mxu0 0
  %2335 = vmatpush1.bf16.msra.mxu0 0
  %2336 = vmatprep.subr.bf16.mxu0 0
  %2337 = vmatpush1.bf16.msra.mxu0 0
  %2338 = vmatprep.subr.bf16.mxu0 0
  %2339 = vmatpush1.bf16.msra.mxu0 0
  %2340 = vmatprep.subr.bf16.mxu0 0
  %2341 = vmatpush1.bf16.msra.mxu0 0
  %2342 = vmatprep.subr.bf16.mxu0 %v2279
  %2343 = vmatpush1.bf16.msra.mxu0 %v2278
  %2344 = vmatprep.subr.bf16.mxu0 0
  %2345 = vmatpush2.bf16.msra.mxu0 0
  %2346 = vmatprep.subr.bf16.mxu0 0
  %2347 = vmatpush2.bf16.msra.mxu0 0
  %2348 = vmatprep.subr.bf16.mxu0 0
  %2349 = vmatpush2.bf16.msra.mxu0 0
  %2350 = vmatprep.subr.bf16.mxu0 0
  %2351 = vmatpush2.bf16.msra.mxu0 0
  %2352 = vmatprep.subr.bf16.mxu0 0
  %2353 = vmatpush2.bf16.msra.mxu0 0
  %2354 = vmatprep.subr.bf16.mxu0 0
  %2355 = vmatpush2.bf16.msra.mxu0 0
  %2356 = vmatprep.subr.bf16.mxu0 0
  %2357 = vmatpush2.bf16.msra.mxu0 0
  %2358 = vmatprep.subr.bf16.mxu0 0
  %2359 = vmatpush2.bf16.msra.mxu0 0
  %2360 = vmatprep.mubr.bf16.mxu0 0
  %2361 = vmatmul.mubr.bf16.gmra.mxu0 %v2285
  %v2362 = vpop.f32.mrf.mxu0
  %v2363 = vadd.f32 %v2255, %v2362
  %v2364 = vpop.f32.mrf.mxu0
  %v2365 = vadd.f32 %v2259, %v2364
  %v2366 = vpop.f32.mrf.mxu0
  %v2367 = vpop.f32.mrf.mxu0
  %2368 = vdwg.mxu0
  %v2369 = vld [vmem:[#allocation2] sm:$0xf]
  %v2370 = vld [vmem:[%s2] sm:$0xff]
  %v2371 = vld [vmem:[%s2 + $0x8] sm:$0xff]
  %v2372 = vld [vmem:[%s2 + $0x10] sm:$0xff]
  %v2373 = vld [vmem:[%s2 + $0x18] sm:$0xff]
  %v2374 = vld [vmem:[%s2 + $0x20] sm:$0xff]
  %v2375 = vld [vmem:[%s2 + $0x28] sm:$0xff]
  %v2376 = vld [vmem:[%s2 + $0x30] sm:$0xff]
  %v2377 = vld [vmem:[%s2 + $0x38] sm:$0xff]
  %v2378 = vld [vmem:[%s2 + $0x40] sm:$0xff]
  %v2379 = vld [vmem:[%s2 + $0x48] sm:$0xff]
  %v2380 = vld [vmem:[%s2 + $0x50] sm:$0xff]
  %v2381 = vld [vmem:[%s2 + $0x58] sm:$0xff]
  %v2382 = vld [vmem:[%s2 + $0x60] sm:$0xff]
  %v2383 = vld [vmem:[%s2 + $0x68] sm:$0xff]
  %v2384 = vld [vmem:[%s2 + $0x70] sm:$0xff]
  %v2385 = vld [vmem:[%s2 + $0x78] sm:$0xff]
  %v2386 = vld [vmem:[%s2 + $0x80] sm:$0xff]
  %v2387 = vld [vmem:[%s2 + $0x88] sm:$0xff]
  %v2388 = vld [vmem:[%s2 + $0x90] sm:$0xff]
  %v2389 = vld [vmem:[%s2 + $0x98] sm:$0xff]
  %v2390 = vld [vmem:[%s2 + $0xa0] sm:$0xff]
  %v2391 = vld [vmem:[%s2 + $0xa8] sm:$0xff]
  %v2392 = vld [vmem:[%s2 + $0xb0] sm:$0xff]
  %v2393 = vld [vmem:[%s2 + $0xb8] sm:$0xff]
  %v2394 = vld [vmem:[%s2 + $0xc0] sm:$0xff]
  %v2395 = vld [vmem:[%s2 + $0xc8] sm:$0xff]
  %v2396 = vld [vmem:[%s2 + $0xd0] sm:$0xff]
  %v2397 = vld [vmem:[%s2 + $0xd8] sm:$0xff]
  %v2398 = vld [vmem:[%s2 + $0xe0] sm:$0xff]
  %v2399 = vld [vmem:[%s2 + $0xe8] sm:$0xff]
  %v2400 = vld [vmem:[%s2 + $0xf0] sm:$0xff]
  %v2401 = vld [vmem:[%s2 + $0xf8] sm:$0xff]
  %v2434 = vunpack.c.l.b16 %v2370
  %v2435 = vunpack.c.h.b16 %v2370
  %v2436 = vunpack.c.l.b16 %v2371
  %v2437 = vunpack.c.h.b16 %v2371
  %v2438 = vunpack.c.l.b16 %v2372
  %v2439 = vunpack.c.h.b16 %v2372
  %v2440 = vunpack.c.l.b16 %v2373
  %v2441 = vunpack.c.h.b16 %v2373
  %v2442 = vunpack.c.l.b16 %v2374
  %v2443 = vunpack.c.h.b16 %v2374
  %v2444 = vunpack.c.l.b16 %v2375
  %v2445 = vunpack.c.h.b16 %v2375
  %v2446 = vunpack.c.l.b16 %v2376
  %v2447 = vunpack.c.h.b16 %v2376
  %v2448 = vunpack.c.l.b16 %v2377
  %v2449 = vunpack.c.h.b16 %v2377
  %v2450 = vunpack.c.l.b16 %v2378
  %v2451 = vunpack.c.h.b16 %v2378
  %v2452 = vunpack.c.l.b16 %v2379
  %v2453 = vunpack.c.h.b16 %v2379
  %v2454 = vunpack.c.l.b16 %v2380
  %v2455 = vunpack.c.h.b16 %v2380
  %v2456 = vunpack.c.l.b16 %v2381
  %v2457 = vunpack.c.h.b16 %v2381
  %v2458 = vunpack.c.l.b16 %v2382
  %v2459 = vunpack.c.h.b16 %v2382
  %v2460 = vunpack.c.l.b16 %v2383
  %v2461 = vunpack.c.h.b16 %v2383
  %v2462 = vunpack.c.l.b16 %v2384
  %v2463 = vunpack.c.h.b16 %v2384
  %v2464 = vunpack.c.l.b16 %v2385
  %v2465 = vunpack.c.h.b16 %v2385
  %v2466 = vunpack.c.l.b16 %v2386
  %v2467 = vunpack.c.h.b16 %v2386
  %v2468 = vunpack.c.l.b16 %v2387
  %v2469 = vunpack.c.h.b16 %v2387
  %v2470 = vunpack.c.l.b16 %v2388
  %v2471 = vunpack.c.h.b16 %v2388
  %v2472 = vunpack.c.l.b16 %v2389
  %v2473 = vunpack.c.h.b16 %v2389
  %v2474 = vunpack.c.l.b16 %v2390
  %v2475 = vunpack.c.h.b16 %v2390
  %v2476 = vunpack.c.l.b16 %v2391
  %v2477 = vunpack.c.h.b16 %v2391
  %v2478 = vunpack.c.l.b16 %v2392
  %v2479 = vunpack.c.h.b16 %v2392
  %v2480 = vunpack.c.l.b16 %v2393
  %v2481 = vunpack.c.h.b16 %v2393
  %v2482 = vunpack.c.l.b16 %v2394
  %v2483 = vunpack.c.h.b16 %v2394
  %v2484 = vunpack.c.l.b16 %v2395
  %v2485 = vunpack.c.h.b16 %v2395
  %v2486 = vunpack.c.l.b16 %v2396
  %v2487 = vunpack.c.h.b16 %v2396
  %v2488 = vunpack.c.l.b16 %v2397
  %v2489 = vunpack.c.h.b16 %v2397
  %v2490 = vunpack.c.l.b16 %v2398
  %v2491 = vunpack.c.h.b16 %v2398
  %v2492 = vunpack.c.l.b16 %v2399
  %v2493 = vunpack.c.h.b16 %v2399
  %v2494 = vunpack.c.l.b16 %v2400
  %v2495 = vunpack.c.h.b16 %v2400
  %v2496 = vunpack.c.l.b16 %v2401
  %v2497 = vunpack.c.h.b16 %v2401
  %v2498 = vpack.c.b16 %v2438, %v2434
  %v2499 = vpack.c.b16 %v2439, %v2435
  %v2500 = vpack.c.b16 %v2440, %v2436
  %v2501 = vpack.c.b16 %v2441, %v2437
  %v2502 = vpack.c.b16 %v2446, %v2442
  %v2503 = vpack.c.b16 %v2447, %v2443
  %v2504 = vpack.c.b16 %v2448, %v2444
  %v2505 = vpack.c.b16 %v2449, %v2445
  %v2506 = vpack.c.b16 %v2454, %v2450
  %v2507 = vpack.c.b16 %v2455, %v2451
  %v2508 = vpack.c.b16 %v2456, %v2452
  %v2509 = vpack.c.b16 %v2457, %v2453
  %v2510 = vpack.c.b16 %v2462, %v2458
  %v2511 = vpack.c.b16 %v2463, %v2459
  %v2512 = vpack.c.b16 %v2464, %v2460
  %v2513 = vpack.c.b16 %v2465, %v2461
  %v2514 = vpack.c.b16 %v2470, %v2466
  %v2515 = vpack.c.b16 %v2471, %v2467
  %v2516 = vpack.c.b16 %v2472, %v2468
  %v2517 = vpack.c.b16 %v2473, %v2469
  %v2518 = vpack.c.b16 %v2478, %v2474
  %v2519 = vpack.c.b16 %v2479, %v2475
  %v2520 = vpack.c.b16 %v2480, %v2476
  %v2521 = vpack.c.b16 %v2481, %v2477
  %v2522 = vpack.c.b16 %v2486, %v2482
  %v2523 = vpack.c.b16 %v2487, %v2483
  %v2524 = vpack.c.b16 %v2488, %v2484
  %v2525 = vpack.c.b16 %v2489, %v2485
  %v2526 = vpack.c.b16 %v2494, %v2490
  %v2527 = vpack.c.b16 %v2495, %v2491
  %v2528 = vpack.c.b16 %v2496, %v2492
  %v2529 = vpack.c.b16 %v2497, %v2493
  %2562 = vmatprep.subr.bf16.mxu0 %v2527
  %2563 = vmatpush1.bf16.msra.mxu0 %v2526
  %2564 = vmatprep.subr.bf16.mxu0 %v2523
  %2565 = vmatpush1.bf16.msra.mxu0 %v2522
  %2566 = vmatprep.subr.bf16.mxu0 %v2519
  %2567 = vmatpush1.bf16.msra.mxu0 %v2518
  %2568 = vmatprep.subr.bf16.mxu0 %v2515
  %2569 = vmatpush1.bf16.msra.mxu0 %v2514
  %2570 = vmatprep.subr.bf16.mxu0 %v2511
  %2571 = vmatpush1.bf16.msra.mxu0 %v2510
  %2572 = vmatprep.subr.bf16.mxu0 %v2507
  %2573 = vmatpush1.bf16.msra.mxu0 %v2506
  %2574 = vmatprep.subr.bf16.mxu0 %v2503
  %2575 = vmatpush1.bf16.msra.mxu0 %v2502
  %2576 = vmatprep.subr.bf16.mxu0 %v2499
  %2577 = vmatpush1.bf16.msra.mxu0 %v2498
  %2578 = vmatprep.subr.bf16.mxu0 0
  %2579 = vmatpush2.bf16.msra.mxu0 0
  %2580 = vmatprep.subr.bf16.mxu0 0
  %2581 = vmatpush2.bf16.msra.mxu0 0
  %2582 = vmatprep.subr.bf16.mxu0 0
  %2583 = vmatpush2.bf16.msra.mxu0 0
  %2584 = vmatprep.subr.bf16.mxu0 0
  %2585 = vmatpush2.bf16.msra.mxu0 0
  %2586 = vmatprep.subr.bf16.mxu0 0
  %2587 = vmatpush2.bf16.msra.mxu0 0
  %2588 = vmatprep.subr.bf16.mxu0 0
  %2589 = vmatpush2.bf16.msra.mxu0 0
  %2590 = vmatprep.subr.bf16.mxu0 0
  %2591 = vmatpush2.bf16.msra.mxu0 0
  %2592 = vmatprep.subr.bf16.mxu0 0
  %2593 = vmatpush2.bf16.msra.mxu0 0
  %2594 = vmatprep.mubr.bf16.mxu0 0
  %2595 = vmatmul.mubr.bf16.gmra.mxu0 %v2369
  %v2596 = vpop.f32.mrf.mxu0
  %v2597 = vadd.f32 0.0, %v2596
  %v2598 = vpop.f32.mrf.mxu0
  %v2599 = vadd.f32 0.0, %v2598
  %v2600 = vpop.f32.mrf.mxu0
  %v2601 = vpop.f32.mrf.mxu0
  %2602 = vdwg.mxu0
  %2603 = vmatprep.subr.bf16.mxu0 %v2529
  %2604 = vmatpush1.bf16.msra.mxu0 %v2528
  %2605 = vmatprep.subr.bf16.mxu0 %v2525
  %2606 = vmatpush1.bf16.msra.mxu0 %v2524
  %2607 = vmatprep.subr.bf16.mxu0 %v2521
  %2608 = vmatpush1.bf16.msra.mxu0 %v2520
  %2609 = vmatprep.subr.bf16.mxu0 %v2517
  %2610 = vmatpush1.bf16.msra.mxu0 %v2516
  %2611 = vmatprep.subr.bf16.mxu0 %v2513
  %2612 = vmatpush1.bf16.msra.mxu0 %v2512
  %2613 = vmatprep.subr.bf16.mxu0 %v2509
  %2614 = vmatpush1.bf16.msra.mxu0 %v2508
  %2615 = vmatprep.subr.bf16.mxu0 %v2505
  %2616 = vmatpush1.bf16.msra.mxu0 %v2504
  %2617 = vmatprep.subr.bf16.mxu0 %v2501
  %2618 = vmatpush1.bf16.msra.mxu0 %v2500
  %2619 = vmatprep.subr.bf16.mxu0 0
  %2620 = vmatpush2.bf16.msra.mxu0 0
  %2621 = vmatprep.subr.bf16.mxu0 0
  %2622 = vmatpush2.bf16.msra.mxu0 0
  %2623 = vmatprep.subr.bf16.mxu0 0
  %2624 = vmatpush2.bf16.msra.mxu0 0
  %2625 = vmatprep.subr.bf16.mxu0 0
  %2626 = vmatpush2.bf16.msra.mxu0 0
  %2627 = vmatprep.subr.bf16.mxu0 0
  %2628 = vmatpush2.bf16.msra.mxu0 0
  %2629 = vmatprep.subr.bf16.mxu0 0
  %2630 = vmatpush2.bf16.msra.mxu0 0
  %2631 = vmatprep.subr.bf16.mxu0 0
  %2632 = vmatpush2.bf16.msra.mxu0 0
  %2633 = vmatprep.subr.bf16.mxu0 0
  %2634 = vmatpush2.bf16.msra.mxu0 0
  %2635 = vmatprep.mubr.bf16.mxu0 0
  %2636 = vmatmul.mubr.bf16.gmra.mxu0 %v2369
  %v2637 = vpop.f32.mrf.mxu0
  %v2638 = vadd.f32 0.0, %v2637
  %v2639 = vpop.f32.mrf.mxu0
  %v2640 = vadd.f32 0.0, %v2639
  %v2641 = vpop.f32.mrf.mxu0
  %v2642 = vpop.f32.mrf.mxu0
  %2643 = vdwg.mxu0
  %v2644 = vadd.f32 %v2322, %v2597
  %v2645 = vadd.f32 %v2324, %v2599
  %v2646 = vadd.f32 %v2363, %v2638
  %v2647 = vadd.f32 %v2365, %v2640
  %v2648 = vxor.u32 %v2644, 2147483648
  %v2649 = vmul.f32 %v2648, 1.442695
  %v2650 = vpow.pop %v2649
  %v2651 = vadd.f32 %v2650, 1.0
  %v2652 = vrcp.pop %v2651
  %v2653 = vmul.f32 1.0, %v2652
  %v2654 = vxor.u32 %v2645, 2147483648
  %v2655 = vmul.f32 %v2654, 1.442695
  %v2656 = vpow.pop %v2655
  %v2657 = vadd.f32 %v2656, 1.0
  %v2658 = vrcp.pop %v2657
  %v2659 = vmul.f32 1.0, %v2658
  %v2660 = vtanh.pop %v2646
  %v2661 = vxor.u32 %v2647, 2147483648
  %v2662 = vmul.f32 %v2661, 1.442695
  %v2663 = vpow.pop %v2662
  %v2664 = vadd.f32 %v2663, 1.0
  %v2665 = vrcp.pop %v2664
  %v2666 = vmul.f32 1.0, %v2665
  %v2667 = vld [vmem:[#allocation3] sm:$0xff]
  %v2668 = vmul.f32 %v2659, %v2667
  %v2669 = vmul.f32 %v2653, %v2660
  %v2670 = vadd.f32 %v2668, %v2669
  %v2671 = vtanh.pop %v2670
  %v2672 = vmul.f32 %v2666, %v2671
  %2673 = vst [vmem:[#allocation3] sm:$0xff] %v2670
  %v2674 = vpack.c.bf16 %v2672, %v2672
  %2675 = vst [vmem:[#allocation2] sm:$0xf] %v2674
  %s2676 = scalar_lea.vmem %s0, 48
  %v2677 = vld [vmem:[%s2676] sm:$0xff]
  %v2678 = vpack.c.bf16 %v2677, %v2677
  %v2679 = vld [vmem:[%s1] sm:$0xff]
  %v2680 = vld [vmem:[%s1 + $0x8] sm:$0xff]
  %v2681 = vld [vmem:[%s1 + $0x10] sm:$0xff]
  %v2682 = vld [vmem:[%s1 + $0x18] sm:$0xff]
  %v2683 = vld [vmem:[%s3] sm:$0xf]
  %v2685 = vlaneseq
  %v2686 = vshrl.u32 %v2685, 7
  %v2687 = vsub.s32 0, %v2686
  %v2688 = vrot.slane %v2683, %v2687
  %v2689 = vlaneseq
  %v2690 = vshrl.u32 %v2689, 7
  %v2691 = vsub.s32 1, %v2690
  %v2692 = vrot.slane %v2683, %v2691
  %v2693 = vlaneseq
  %v2694 = vshrl.u32 %v2693, 7
  %v2695 = vsub.s32 2, %v2694
  %v2696 = vrot.slane %v2683, %v2695
  %v2697 = vlaneseq
  %v2698 = vshrl.u32 %v2697, 7
  %v2699 = vsub.s32 3, %v2698
  %v2700 = vrot.slane %v2683, %v2699
  %v2709 = vunpack.c.l.b16 %v2679
  %v2710 = vunpack.c.h.b16 %v2679
  %v2711 = vunpack.c.l.b16 %v2680
  %v2712 = vunpack.c.h.b16 %v2680
  %v2713 = vunpack.c.l.b16 %v2681
  %v2714 = vunpack.c.h.b16 %v2681
  %v2715 = vunpack.c.l.b16 %v2682
  %v2716 = vunpack.c.h.b16 %v2682
  %v2717 = vpack.c.b16 %v2713, %v2709
  %v2718 = vpack.c.b16 %v2714, %v2710
  %v2719 = vpack.c.b16 %v2715, %v2711
  %v2720 = vpack.c.b16 %v2716, %v2712
  %v2726 = vsel %vm78, %v2678, 0
  %2728 = vmatprep.subr.bf16.mxu0 0
  %2729 = vmatpush1.bf16.msra.mxu0 0
  %2730 = vmatprep.subr.bf16.mxu0 0
  %2731 = vmatpush1.bf16.msra.mxu0 0
  %2732 = vmatprep.subr.bf16.mxu0 0
  %2733 = vmatpush1.bf16.msra.mxu0 0
  %2734 = vmatprep.subr.bf16.mxu0 0
  %2735 = vmatpush1.bf16.msra.mxu0 0
  %2736 = vmatprep.subr.bf16.mxu0 0
  %2737 = vmatpush1.bf16.msra.mxu0 0
  %2738 = vmatprep.subr.bf16.mxu0 0
  %2739 = vmatpush1.bf16.msra.mxu0 0
  %2740 = vmatprep.subr.bf16.mxu0 0
  %2741 = vmatpush1.bf16.msra.mxu0 0
  %2742 = vmatprep.subr.bf16.mxu0 %v2718
  %2743 = vmatpush1.bf16.msra.mxu0 %v2717
  %2744 = vmatprep.subr.bf16.mxu0 0
  %2745 = vmatpush2.bf16.msra.mxu0 0
  %2746 = vmatprep.subr.bf16.mxu0 0
  %2747 = vmatpush2.bf16.msra.mxu0 0
  %2748 = vmatprep.subr.bf16.mxu0 0
  %2749 = vmatpush2.bf16.msra.mxu0 0
  %2750 = vmatprep.subr.bf16.mxu0 0
  %2751 = vmatpush2.bf16.msra.mxu0 0
  %2752 = vmatprep.subr.bf16.mxu0 0
  %2753 = vmatpush2.bf16.msra.mxu0 0
  %2754 = vmatprep.subr.bf16.mxu0 0
  %2755 = vmatpush2.bf16.msra.mxu0 0
  %2756 = vmatprep.subr.bf16.mxu0 0
  %2757 = vmatpush2.bf16.msra.mxu0 0
  %2758 = vmatprep.subr.bf16.mxu0 0
  %2759 = vmatpush2.bf16.msra.mxu0 0
  %2760 = vmatprep.mubr.bf16.mxu0 0
  %2761 = vmatmul.mubr.bf16.gmra.mxu0 %v2726
  %v2762 = vpop.f32.mrf.mxu0
  %v2763 = vadd.f32 %v2688, %v2762
  %v2764 = vpop.f32.mrf.mxu0
  %v2765 = vadd.f32 %v2692, %v2764
  %v2766 = vpop.f32.mrf.mxu0
  %v2767 = vpop.f32.mrf.mxu0
  %2768 = vdwg.mxu0
  %2769 = vmatprep.subr.bf16.mxu0 0
  %2770 = vmatpush1.bf16.msra.mxu0 0
  %2771 = vmatprep.subr.bf16.mxu0 0
  %2772 = vmatpush1.bf16.msra.mxu0 0
  %2773 = vmatprep.subr.bf16.mxu0 0
  %2774 = vmatpush1.bf16.msra.mxu0 0
  %2775 = vmatprep.subr.bf16.mxu0 0
  %2776 = vmatpush1.bf16.msra.mxu0 0
  %2777 = vmatprep.subr.bf16.mxu0 0
  %2778 = vmatpush1.bf16.msra.mxu0 0
  %2779 = vmatprep.subr.bf16.mxu0 0
  %2780 = vmatpush1.bf16.msra.mxu0 0
  %2781 = vmatprep.subr.bf16.mxu0 0
  %2782 = vmatpush1.bf16.msra.mxu0 0
  %2783 = vmatprep.subr.bf16.mxu0 %v2720
  %2784 = vmatpush1.bf16.msra.mxu0 %v2719
  %2785 = vmatprep.subr.bf16.mxu0 0
  %2786 = vmatpush2.bf16.msra.mxu0 0
  %2787 = vmatprep.subr.bf16.mxu0 0
  %2788 = vmatpush2.bf16.msra.mxu0 0
  %2789 = vmatprep.subr.bf16.mxu0 0
  %2790 = vmatpush2.bf16.msra.mxu0 0
  %2791 = vmatprep.subr.bf16.mxu0 0
  %2792 = vmatpush2.bf16.msra.mxu0 0
  %2793 = vmatprep.subr.bf16.mxu0 0
  %2794 = vmatpush2.bf16.msra.mxu0 0
  %2795 = vmatprep.subr.bf16.mxu0 0
  %2796 = vmatpush2.bf16.msra.mxu0 0
  %2797 = vmatprep.subr.bf16.mxu0 0
  %2798 = vmatpush2.bf16.msra.mxu0 0
  %2799 = vmatprep.subr.bf16.mxu0 0
  %2800 = vmatpush2.bf16.msra.mxu0 0
  %2801 = vmatprep.mubr.bf16.mxu0 0
  %2802 = vmatmul.mubr.bf16.gmra.mxu0 %v2726
  %v2803 = vpop.f32.mrf.mxu0
  %v2804 = vadd.f32 %v2696, %v2803
  %v2805 = vpop.f32.mrf.mxu0
  %v2806 = vadd.f32 %v2700, %v2805
  %v2807 = vpop.f32.mrf.mxu0
  %v2808 = vpop.f32.mrf.mxu0
  %2809 = vdwg.mxu0
  %v2810 = vld [vmem:[#allocation2] sm:$0xf]
  %v2811 = vld [vmem:[%s2] sm:$0xff]
  %v2812 = vld [vmem:[%s2 + $0x8] sm:$0xff]
  %v2813 = vld [vmem:[%s2 + $0x10] sm:$0xff]
  %v2814 = vld [vmem:[%s2 + $0x18] sm:$0xff]
  %v2815 = vld [vmem:[%s2 + $0x20] sm:$0xff]
  %v2816 = vld [vmem:[%s2 + $0x28] sm:$0xff]
  %v2817 = vld [vmem:[%s2 + $0x30] sm:$0xff]
  %v2818 = vld [vmem:[%s2 + $0x38] sm:$0xff]
  %v2819 = vld [vmem:[%s2 + $0x40] sm:$0xff]
  %v2820 = vld [vmem:[%s2 + $0x48] sm:$0xff]
  %v2821 = vld [vmem:[%s2 + $0x50] sm:$0xff]
  %v2822 = vld [vmem:[%s2 + $0x58] sm:$0xff]
  %v2823 = vld [vmem:[%s2 + $0x60] sm:$0xff]
  %v2824 = vld [vmem:[%s2 + $0x68] sm:$0xff]
  %v2825 = vld [vmem:[%s2 + $0x70] sm:$0xff]
  %v2826 = vld [vmem:[%s2 + $0x78] sm:$0xff]
  %v2827 = vld [vmem:[%s2 + $0x80] sm:$0xff]
  %v2828 = vld [vmem:[%s2 + $0x88] sm:$0xff]
  %v2829 = vld [vmem:[%s2 + $0x90] sm:$0xff]
  %v2830 = vld [vmem:[%s2 + $0x98] sm:$0xff]
  %v2831 = vld [vmem:[%s2 + $0xa0] sm:$0xff]
  %v2832 = vld [vmem:[%s2 + $0xa8] sm:$0xff]
  %v2833 = vld [vmem:[%s2 + $0xb0] sm:$0xff]
  %v2834 = vld [vmem:[%s2 + $0xb8] sm:$0xff]
  %v2835 = vld [vmem:[%s2 + $0xc0] sm:$0xff]
  %v2836 = vld [vmem:[%s2 + $0xc8] sm:$0xff]
  %v2837 = vld [vmem:[%s2 + $0xd0] sm:$0xff]
  %v2838 = vld [vmem:[%s2 + $0xd8] sm:$0xff]
  %v2839 = vld [vmem:[%s2 + $0xe0] sm:$0xff]
  %v2840 = vld [vmem:[%s2 + $0xe8] sm:$0xff]
  %v2841 = vld [vmem:[%s2 + $0xf0] sm:$0xff]
  %v2842 = vld [vmem:[%s2 + $0xf8] sm:$0xff]
  %v2875 = vunpack.c.l.b16 %v2811
  %v2876 = vunpack.c.h.b16 %v2811
  %v2877 = vunpack.c.l.b16 %v2812
  %v2878 = vunpack.c.h.b16 %v2812
  %v2879 = vunpack.c.l.b16 %v2813
  %v2880 = vunpack.c.h.b16 %v2813
  %v2881 = vunpack.c.l.b16 %v2814
  %v2882 = vunpack.c.h.b16 %v2814
  %v2883 = vunpack.c.l.b16 %v2815
  %v2884 = vunpack.c.h.b16 %v2815
  %v2885 = vunpack.c.l.b16 %v2816
  %v2886 = vunpack.c.h.b16 %v2816
  %v2887 = vunpack.c.l.b16 %v2817
  %v2888 = vunpack.c.h.b16 %v2817
  %v2889 = vunpack.c.l.b16 %v2818
  %v2890 = vunpack.c.h.b16 %v2818
  %v2891 = vunpack.c.l.b16 %v2819
  %v2892 = vunpack.c.h.b16 %v2819
  %v2893 = vunpack.c.l.b16 %v2820
  %v2894 = vunpack.c.h.b16 %v2820
  %v2895 = vunpack.c.l.b16 %v2821
  %v2896 = vunpack.c.h.b16 %v2821
  %v2897 = vunpack.c.l.b16 %v2822
  %v2898 = vunpack.c.h.b16 %v2822
  %v2899 = vunpack.c.l.b16 %v2823
  %v2900 = vunpack.c.h.b16 %v2823
  %v2901 = vunpack.c.l.b16 %v2824
  %v2902 = vunpack.c.h.b16 %v2824
  %v2903 = vunpack.c.l.b16 %v2825
  %v2904 = vunpack.c.h.b16 %v2825
  %v2905 = vunpack.c.l.b16 %v2826
  %v2906 = vunpack.c.h.b16 %v2826
  %v2907 = vunpack.c.l.b16 %v2827
  %v2908 = vunpack.c.h.b16 %v2827
  %v2909 = vunpack.c.l.b16 %v2828
  %v2910 = vunpack.c.h.b16 %v2828
  %v2911 = vunpack.c.l.b16 %v2829
  %v2912 = vunpack.c.h.b16 %v2829
  %v2913 = vunpack.c.l.b16 %v2830
  %v2914 = vunpack.c.h.b16 %v2830
  %v2915 = vunpack.c.l.b16 %v2831
  %v2916 = vunpack.c.h.b16 %v2831
  %v2917 = vunpack.c.l.b16 %v2832
  %v2918 = vunpack.c.h.b16 %v2832
  %v2919 = vunpack.c.l.b16 %v2833
  %v2920 = vunpack.c.h.b16 %v2833
  %v2921 = vunpack.c.l.b16 %v2834
  %v2922 = vunpack.c.h.b16 %v2834
  %v2923 = vunpack.c.l.b16 %v2835
  %v2924 = vunpack.c.h.b16 %v2835
  %v2925 = vunpack.c.l.b16 %v2836
  %v2926 = vunpack.c.h.b16 %v2836
  %v2927 = vunpack.c.l.b16 %v2837
  %v2928 = vunpack.c.h.b16 %v2837
  %v2929 = vunpack.c.l.b16 %v2838
  %v2930 = vunpack.c.h.b16 %v2838
  %v2931 = vunpack.c.l.b16 %v2839
  %v2932 = vunpack.c.h.b16 %v2839
  %v2933 = vunpack.c.l.b16 %v2840
  %v2934 = vunpack.c.h.b16 %v2840
  %v2935 = vunpack.c.l.b16 %v2841
  %v2936 = vunpack.c.h.b16 %v2841
  %v2937 = vunpack.c.l.b16 %v2842
  %v2938 = vunpack.c.h.b16 %v2842
  %v2939 = vpack.c.b16 %v2879, %v2875
  %v2940 = vpack.c.b16 %v2880, %v2876
  %v2941 = vpack.c.b16 %v2881, %v2877
  %v2942 = vpack.c.b16 %v2882, %v2878
  %v2943 = vpack.c.b16 %v2887, %v2883
  %v2944 = vpack.c.b16 %v2888, %v2884
  %v2945 = vpack.c.b16 %v2889, %v2885
  %v2946 = vpack.c.b16 %v2890, %v2886
  %v2947 = vpack.c.b16 %v2895, %v2891
  %v2948 = vpack.c.b16 %v2896, %v2892
  %v2949 = vpack.c.b16 %v2897, %v2893
  %v2950 = vpack.c.b16 %v2898, %v2894
  %v2951 = vpack.c.b16 %v2903, %v2899
  %v2952 = vpack.c.b16 %v2904, %v2900
  %v2953 = vpack.c.b16 %v2905, %v2901
  %v2954 = vpack.c.b16 %v2906, %v2902
  %v2955 = vpack.c.b16 %v2911, %v2907
  %v2956 = vpack.c.b16 %v2912, %v2908
  %v2957 = vpack.c.b16 %v2913, %v2909
  %v2958 = vpack.c.b16 %v2914, %v2910
  %v2959 = vpack.c.b16 %v2919, %v2915
  %v2960 = vpack.c.b16 %v2920, %v2916
  %v2961 = vpack.c.b16 %v2921, %v2917
  %v2962 = vpack.c.b16 %v2922, %v2918
  %v2963 = vpack.c.b16 %v2927, %v2923
  %v2964 = vpack.c.b16 %v2928, %v2924
  %v2965 = vpack.c.b16 %v2929, %v2925
  %v2966 = vpack.c.b16 %v2930, %v2926
  %v2967 = vpack.c.b16 %v2935, %v2931
  %v2968 = vpack.c.b16 %v2936, %v2932
  %v2969 = vpack.c.b16 %v2937, %v2933
  %v2970 = vpack.c.b16 %v2938, %v2934
  %3003 = vmatprep.subr.bf16.mxu0 %v2968
  %3004 = vmatpush1.bf16.msra.mxu0 %v2967
  %3005 = vmatprep.subr.bf16.mxu0 %v2964
  %3006 = vmatpush1.bf16.msra.mxu0 %v2963
  %3007 = vmatprep.subr.bf16.mxu0 %v2960
  %3008 = vmatpush1.bf16.msra.mxu0 %v2959
  %3009 = vmatprep.subr.bf16.mxu0 %v2956
  %3010 = vmatpush1.bf16.msra.mxu0 %v2955
  %3011 = vmatprep.subr.bf16.mxu0 %v2952
  %3012 = vmatpush1.bf16.msra.mxu0 %v2951
  %3013 = vmatprep.subr.bf16.mxu0 %v2948
  %3014 = vmatpush1.bf16.msra.mxu0 %v2947
  %3015 = vmatprep.subr.bf16.mxu0 %v2944
  %3016 = vmatpush1.bf16.msra.mxu0 %v2943
  %3017 = vmatprep.subr.bf16.mxu0 %v2940
  %3018 = vmatpush1.bf16.msra.mxu0 %v2939
  %3019 = vmatprep.subr.bf16.mxu0 0
  %3020 = vmatpush2.bf16.msra.mxu0 0
  %3021 = vmatprep.subr.bf16.mxu0 0
  %3022 = vmatpush2.bf16.msra.mxu0 0
  %3023 = vmatprep.subr.bf16.mxu0 0
  %3024 = vmatpush2.bf16.msra.mxu0 0
  %3025 = vmatprep.subr.bf16.mxu0 0
  %3026 = vmatpush2.bf16.msra.mxu0 0
  %3027 = vmatprep.subr.bf16.mxu0 0
  %3028 = vmatpush2.bf16.msra.mxu0 0
  %3029 = vmatprep.subr.bf16.mxu0 0
  %3030 = vmatpush2.bf16.msra.mxu0 0
  %3031 = vmatprep.subr.bf16.mxu0 0
  %3032 = vmatpush2.bf16.msra.mxu0 0
  %3033 = vmatprep.subr.bf16.mxu0 0
  %3034 = vmatpush2.bf16.msra.mxu0 0
  %3035 = vmatprep.mubr.bf16.mxu0 0
  %3036 = vmatmul.mubr.bf16.gmra.mxu0 %v2810
  %v3037 = vpop.f32.mrf.mxu0
  %v3038 = vadd.f32 0.0, %v3037
  %v3039 = vpop.f32.mrf.mxu0
  %v3040 = vadd.f32 0.0, %v3039
  %v3041 = vpop.f32.mrf.mxu0
  %v3042 = vpop.f32.mrf.mxu0
  %3043 = vdwg.mxu0
  %3044 = vmatprep.subr.bf16.mxu0 %v2970
  %3045 = vmatpush1.bf16.msra.mxu0 %v2969
  %3046 = vmatprep.subr.bf16.mxu0 %v2966
  %3047 = vmatpush1.bf16.msra.mxu0 %v2965
  %3048 = vmatprep.subr.bf16.mxu0 %v2962
  %3049 = vmatpush1.bf16.msra.mxu0 %v2961
  %3050 = vmatprep.subr.bf16.mxu0 %v2958
  %3051 = vmatpush1.bf16.msra.mxu0 %v2957
  %3052 = vmatprep.subr.bf16.mxu0 %v2954
  %3053 = vmatpush1.bf16.msra.mxu0 %v2953
  %3054 = vmatprep.subr.bf16.mxu0 %v2950
  %3055 = vmatpush1.bf16.msra.mxu0 %v2949
  %3056 = vmatprep.subr.bf16.mxu0 %v2946
  %3057 = vmatpush1.bf16.msra.mxu0 %v2945
  %3058 = vmatprep.subr.bf16.mxu0 %v2942
  %3059 = vmatpush1.bf16.msra.mxu0 %v2941
  %3060 = vmatprep.subr.bf16.mxu0 0
  %3061 = vmatpush2.bf16.msra.mxu0 0
  %3062 = vmatprep.subr.bf16.mxu0 0
  %3063 = vmatpush2.bf16.msra.mxu0 0
  %3064 = vmatprep.subr.bf16.mxu0 0
  %3065 = vmatpush2.bf16.msra.mxu0 0
  %3066 = vmatprep.subr.bf16.mxu0 0
  %3067 = vmatpush2.bf16.msra.mxu0 0
  %3068 = vmatprep.subr.bf16.mxu0 0
  %3069 = vmatpush2.bf16.msra.mxu0 0
  %3070 = vmatprep.subr.bf16.mxu0 0
  %3071 = vmatpush2.bf16.msra.mxu0 0
  %3072 = vmatprep.subr.bf16.mxu0 0
  %3073 = vmatpush2.bf16.msra.mxu0 0
  %3074 = vmatprep.subr.bf16.mxu0 0
  %3075 = vmatpush2.bf16.msra.mxu0 0
  %3076 = vmatprep.mubr.bf16.mxu0 0
  %3077 = vmatmul.mubr.bf16.gmra.mxu0 %v2810
  %v3078 = vpop.f32.mrf.mxu0
  %v3079 = vadd.f32 0.0, %v3078
  %v3080 = vpop.f32.mrf.mxu0
  %v3081 = vadd.f32 0.0, %v3080
  %v3082 = vpop.f32.mrf.mxu0
  %v3083 = vpop.f32.mrf.mxu0
  %3084 = vdwg.mxu0
  %v3085 = vadd.f32 %v2763, %v3038
  %v3086 = vadd.f32 %v2765, %v3040
  %v3087 = vadd.f32 %v2804, %v3079
  %v3088 = vadd.f32 %v2806, %v3081
  %v3089 = vxor.u32 %v3085, 2147483648
  %v3090 = vmul.f32 %v3089, 1.442695
  %v3091 = vpow.pop %v3090
  %v3092 = vadd.f32 %v3091, 1.0
  %v3093 = vrcp.pop %v3092
  %v3094 = vmul.f32 1.0, %v3093
  %v3095 = vxor.u32 %v3086, 2147483648
  %v3096 = vmul.f32 %v3095, 1.442695
  %v3097 = vpow.pop %v3096
  %v3098 = vadd.f32 %v3097, 1.0
  %v3099 = vrcp.pop %v3098
  %v3100 = vmul.f32 1.0, %v3099
  %v3101 = vtanh.pop %v3087
  %v3102 = vxor.u32 %v3088, 2147483648
  %v3103 = vmul.f32 %v3102, 1.442695
  %v3104 = vpow.pop %v3103
  %v3105 = vadd.f32 %v3104, 1.0
  %v3106 = vrcp.pop %v3105
  %v3107 = vmul.f32 1.0, %v3106
  %v3108 = vld [vmem:[#allocation3] sm:$0xff]
  %v3109 = vmul.f32 %v3100, %v3108
  %v3110 = vmul.f32 %v3094, %v3101
  %v3111 = vadd.f32 %v3109, %v3110
  %v3112 = vtanh.pop %v3111
  %v3113 = vmul.f32 %v3107, %v3112
  %3114 = vst [vmem:[#allocation3] sm:$0xff] %v3111
  %v3115 = vpack.c.bf16 %v3113, %v3113
  %3116 = vst [vmem:[#allocation2] sm:$0xf] %v3115
  %s3117 = scalar_lea.vmem %s0, 56
  %v3118 = vld [vmem:[%s3117] sm:$0xff]
  %v3119 = vpack.c.bf16 %v3118, %v3118
  %v3120 = vld [vmem:[%s1] sm:$0xff]
  %v3121 = vld [vmem:[%s1 + $0x8] sm:$0xff]
  %v3122 = vld [vmem:[%s1 + $0x10] sm:$0xff]
  %v3123 = vld [vmem:[%s1 + $0x18] sm:$0xff]
  %v3124 = vld [vmem:[%s3] sm:$0xf]
  %v3126 = vlaneseq
  %v3127 = vshrl.u32 %v3126, 7
  %v3128 = vsub.s32 0, %v3127
  %v3129 = vrot.slane %v3124, %v3128
  %v3130 = vlaneseq
  %v3131 = vshrl.u32 %v3130, 7
  %v3132 = vsub.s32 1, %v3131
  %v3133 = vrot.slane %v3124, %v3132
  %v3134 = vlaneseq
  %v3135 = vshrl.u32 %v3134, 7
  %v3136 = vsub.s32 2, %v3135
  %v3137 = vrot.slane %v3124, %v3136
  %v3138 = vlaneseq
  %v3139 = vshrl.u32 %v3138, 7
  %v3140 = vsub.s32 3, %v3139
  %v3141 = vrot.slane %v3124, %v3140
  %v3150 = vunpack.c.l.b16 %v3120
  %v3151 = vunpack.c.h.b16 %v3120
  %v3152 = vunpack.c.l.b16 %v3121
  %v3153 = vunpack.c.h.b16 %v3121
  %v3154 = vunpack.c.l.b16 %v3122
  %v3155 = vunpack.c.h.b16 %v3122
  %v3156 = vunpack.c.l.b16 %v3123
  %v3157 = vunpack.c.h.b16 %v3123
  %v3158 = vpack.c.b16 %v3154, %v3150
  %v3159 = vpack.c.b16 %v3155, %v3151
  %v3160 = vpack.c.b16 %v3156, %v3152
  %v3161 = vpack.c.b16 %v3157, %v3153
  %v3167 = vsel %vm78, %v3119, 0
  %3169 = vmatprep.subr.bf16.mxu0 0
  %3170 = vmatpush1.bf16.msra.mxu0 0
  %3171 = vmatprep.subr.bf16.mxu0 0
  %3172 = vmatpush1.bf16.msra.mxu0 0
  %3173 = vmatprep.subr.bf16.mxu0 0
  %3174 = vmatpush1.bf16.msra.mxu0 0
  %3175 = vmatprep.subr.bf16.mxu0 0
  %3176 = vmatpush1.bf16.msra.mxu0 0
  %3177 = vmatprep.subr.bf16.mxu0 0
  %3178 = vmatpush1.bf16.msra.mxu0 0
  %3179 = vmatprep.subr.bf16.mxu0 0
  %3180 = vmatpush1.bf16.msra.mxu0 0
  %3181 = vmatprep.subr.bf16.mxu0 0
  %3182 = vmatpush1.bf16.msra.mxu0 0
  %3183 = vmatprep.subr.bf16.mxu0 %v3159
  %3184 = vmatpush1.bf16.msra.mxu0 %v3158
  %3185 = vmatprep.subr.bf16.mxu0 0
  %3186 = vmatpush2.bf16.msra.mxu0 0
  %3187 = vmatprep.subr.bf16.mxu0 0
  %3188 = vmatpush2.bf16.msra.mxu0 0
  %3189 = vmatprep.subr.bf16.mxu0 0
  %3190 = vmatpush2.bf16.msra.mxu0 0
  %3191 = vmatprep.subr.bf16.mxu0 0
  %3192 = vmatpush2.bf16.msra.mxu0 0
  %3193 = vmatprep.subr.bf16.mxu0 0
  %3194 = vmatpush2.bf16.msra.mxu0 0
  %3195 = vmatprep.subr.bf16.mxu0 0
  %3196 = vmatpush2.bf16.msra.mxu0 0
  %3197 = vmatprep.subr.bf16.mxu0 0
  %3198 = vmatpush2.bf16.msra.mxu0 0
  %3199 = vmatprep.subr.bf16.mxu0 0
  %3200 = vmatpush2.bf16.msra.mxu0 0
  %3201 = vmatprep.mubr.bf16.mxu0 0
  %3202 = vmatmul.mubr.bf16.gmra.mxu0 %v3167
  %v3203 = vpop.f32.mrf.mxu0
  %v3204 = vadd.f32 %v3129, %v3203
  %v3205 = vpop.f32.mrf.mxu0
  %v3206 = vadd.f32 %v3133, %v3205
  %v3207 = vpop.f32.mrf.mxu0
  %v3208 = vpop.f32.mrf.mxu0
  %3209 = vdwg.mxu0
  %3210 = vmatprep.subr.bf16.mxu0 0
  %3211 = vmatpush1.bf16.msra.mxu0 0
  %3212 = vmatprep.subr.bf16.mxu0 0
  %3213 = vmatpush1.bf16.msra.mxu0 0
  %3214 = vmatprep.subr.bf16.mxu0 0
  %3215 = vmatpush1.bf16.msra.mxu0 0
  %3216 = vmatprep.subr.bf16.mxu0 0
  %3217 = vmatpush1.bf16.msra.mxu0 0
  %3218 = vmatprep.subr.bf16.mxu0 0
  %3219 = vmatpush1.bf16.msra.mxu0 0
  %3220 = vmatprep.subr.bf16.mxu0 0
  %3221 = vmatpush1.bf16.msra.mxu0 0
  %3222 = vmatprep.subr.bf16.mxu0 0
  %3223 = vmatpush1.bf16.msra.mxu0 0
  %3224 = vmatprep.subr.bf16.mxu0 %v3161
  %3225 = vmatpush1.bf16.msra.mxu0 %v3160
  %3226 = vmatprep.subr.bf16.mxu0 0
  %3227 = vmatpush2.bf16.msra.mxu0 0
  %3228 = vmatprep.subr.bf16.mxu0 0
  %3229 = vmatpush2.bf16.msra.mxu0 0
  %3230 = vmatprep.subr.bf16.mxu0 0
  %3231 = vmatpush2.bf16.msra.mxu0 0
  %3232 = vmatprep.subr.bf16.mxu0 0
  %3233 = vmatpush2.bf16.msra.mxu0 0
  %3234 = vmatprep.subr.bf16.mxu0 0
  %3235 = vmatpush2.bf16.msra.mxu0 0
  %3236 = vmatprep.subr.bf16.mxu0 0
  %3237 = vmatpush2.bf16.msra.mxu0 0
  %3238 = vmatprep.subr.bf16.mxu0 0
  %3239 = vmatpush2.bf16.msra.mxu0 0
  %3240 = vmatprep.subr.bf16.mxu0 0
  %3241 = vmatpush2.bf16.msra.mxu0 0
  %3242 = vmatprep.mubr.bf16.mxu0 0
  %3243 = vmatmul.mubr.bf16.gmra.mxu0 %v3167
  %v3244 = vpop.f32.mrf.mxu0
  %v3245 = vadd.f32 %v3137, %v3244
  %v3246 = vpop.f32.mrf.mxu0
  %v3247 = vadd.f32 %v3141, %v3246
  %v3248 = vpop.f32.mrf.mxu0
  %v3249 = vpop.f32.mrf.mxu0
  %3250 = vdwg.mxu0
  %v3251 = vld [vmem:[#allocation2] sm:$0xf]
  %v3252 = vld [vmem:[%s2] sm:$0xff]
  %v3253 = vld [vmem:[%s2 + $0x8] sm:$0xff]
  %v3254 = vld [vmem:[%s2 + $0x10] sm:$0xff]
  %v3255 = vld [vmem:[%s2 + $0x18] sm:$0xff]
  %v3256 = vld [vmem:[%s2 + $0x20] sm:$0xff]
  %v3257 = vld [vmem:[%s2 + $0x28] sm:$0xff]
  %v3258 = vld [vmem:[%s2 + $0x30] sm:$0xff]
  %v3259 = vld [vmem:[%s2 + $0x38] sm:$0xff]
  %v3260 = vld [vmem:[%s2 + $0x40] sm:$0xff]
  %v3261 = vld [vmem:[%s2 + $0x48] sm:$0xff]
  %v3262 = vld [vmem:[%s2 + $0x50] sm:$0xff]
  %v3263 = vld [vmem:[%s2 + $0x58] sm:$0xff]
  %v3264 = vld [vmem:[%s2 + $0x60] sm:$0xff]
  %v3265 = vld [vmem:[%s2 + $0x68] sm:$0xff]
  %v3266 = vld [vmem:[%s2 + $0x70] sm:$0xff]
  %v3267 = vld [vmem:[%s2 + $0x78] sm:$0xff]
  %v3268 = vld [vmem:[%s2 + $0x80] sm:$0xff]
  %v3269 = vld [vmem:[%s2 + $0x88] sm:$0xff]
  %v3270 = vld [vmem:[%s2 + $0x90] sm:$0xff]
  %v3271 = vld [vmem:[%s2 + $0x98] sm:$0xff]
  %v3272 = vld [vmem:[%s2 + $0xa0] sm:$0xff]
  %v3273 = vld [vmem:[%s2 + $0xa8] sm:$0xff]
  %v3274 = vld [vmem:[%s2 + $0xb0] sm:$0xff]
  %v3275 = vld [vmem:[%s2 + $0xb8] sm:$0xff]
  %v3276 = vld [vmem:[%s2 + $0xc0] sm:$0xff]
  %v3277 = vld [vmem:[%s2 + $0xc8] sm:$0xff]
  %v3278 = vld [vmem:[%s2 + $0xd0] sm:$0xff]
  %v3279 = vld [vmem:[%s2 + $0xd8] sm:$0xff]
  %v3280 = vld [vmem:[%s2 + $0xe0] sm:$0xff]
  %v3281 = vld [vmem:[%s2 + $0xe8] sm:$0xff]
  %v3282 = vld [vmem:[%s2 + $0xf0] sm:$0xff]
  %v3283 = vld [vmem:[%s2 + $0xf8] sm:$0xff]
  %v3316 = vunpack.c.l.b16 %v3252
  %v3317 = vunpack.c.h.b16 %v3252
  %v3318 = vunpack.c.l.b16 %v3253
  %v3319 = vunpack.c.h.b16 %v3253
  %v3320 = vunpack.c.l.b16 %v3254
  %v3321 = vunpack.c.h.b16 %v3254
  %v3322 = vunpack.c.l.b16 %v3255
  %v3323 = vunpack.c.h.b16 %v3255
  %v3324 = vunpack.c.l.b16 %v3256
  %v3325 = vunpack.c.h.b16 %v3256
  %v3326 = vunpack.c.l.b16 %v3257
  %v3327 = vunpack.c.h.b16 %v3257
  %v3328 = vunpack.c.l.b16 %v3258
  %v3329 = vunpack.c.h.b16 %v3258
  %v3330 = vunpack.c.l.b16 %v3259
  %v3331 = vunpack.c.h.b16 %v3259
  %v3332 = vunpack.c.l.b16 %v3260
  %v3333 = vunpack.c.h.b16 %v3260
  %v3334 = vunpack.c.l.b16 %v3261
  %v3335 = vunpack.c.h.b16 %v3261
  %v3336 = vunpack.c.l.b16 %v3262
  %v3337 = vunpack.c.h.b16 %v3262
  %v3338 = vunpack.c.l.b16 %v3263
  %v3339 = vunpack.c.h.b16 %v3263
  %v3340 = vunpack.c.l.b16 %v3264
  %v3341 = vunpack.c.h.b16 %v3264
  %v3342 = vunpack.c.l.b16 %v3265
  %v3343 = vunpack.c.h.b16 %v3265
  %v3344 = vunpack.c.l.b16 %v3266
  %v3345 = vunpack.c.h.b16 %v3266
  %v3346 = vunpack.c.l.b16 %v3267
  %v3347 = vunpack.c.h.b16 %v3267
  %v3348 = vunpack.c.l.b16 %v3268
  %v3349 = vunpack.c.h.b16 %v3268
  %v3350 = vunpack.c.l.b16 %v3269
  %v3351 = vunpack.c.h.b16 %v3269
  %v3352 = vunpack.c.l.b16 %v3270
  %v3353 = vunpack.c.h.b16 %v3270
  %v3354 = vunpack.c.l.b16 %v3271
  %v3355 = vunpack.c.h.b16 %v3271
  %v3356 = vunpack.c.l.b16 %v3272
  %v3357 = vunpack.c.h.b16 %v3272
  %v3358 = vunpack.c.l.b16 %v3273
  %v3359 = vunpack.c.h.b16 %v3273
  %v3360 = vunpack.c.l.b16 %v3274
  %v3361 = vunpack.c.h.b16 %v3274
  %v3362 = vunpack.c.l.b16 %v3275
  %v3363 = vunpack.c.h.b16 %v3275
  %v3364 = vunpack.c.l.b16 %v3276
  %v3365 = vunpack.c.h.b16 %v3276
  %v3366 = vunpack.c.l.b16 %v3277
  %v3367 = vunpack.c.h.b16 %v3277
  %v3368 = vunpack.c.l.b16 %v3278
  %v3369 = vunpack.c.h.b16 %v3278
  %v3370 = vunpack.c.l.b16 %v3279
  %v3371 = vunpack.c.h.b16 %v3279
  %v3372 = vunpack.c.l.b16 %v3280
  %v3373 = vunpack.c.h.b16 %v3280
  %v3374 = vunpack.c.l.b16 %v3281
  %v3375 = vunpack.c.h.b16 %v3281
  %v3376 = vunpack.c.l.b16 %v3282
  %v3377 = vunpack.c.h.b16 %v3282
  %v3378 = vunpack.c.l.b16 %v3283
  %v3379 = vunpack.c.h.b16 %v3283
  %v3380 = vpack.c.b16 %v3320, %v3316
  %v3381 = vpack.c.b16 %v3321, %v3317
  %v3382 = vpack.c.b16 %v3322, %v3318
  %v3383 = vpack.c.b16 %v3323, %v3319
  %v3384 = vpack.c.b16 %v3328, %v3324
  %v3385 = vpack.c.b16 %v3329, %v3325
  %v3386 = vpack.c.b16 %v3330, %v3326
  %v3387 = vpack.c.b16 %v3331, %v3327
  %v3388 = vpack.c.b16 %v3336, %v3332
  %v3389 = vpack.c.b16 %v3337, %v3333
  %v3390 = vpack.c.b16 %v3338, %v3334
  %v3391 = vpack.c.b16 %v3339, %v3335
  %v3392 = vpack.c.b16 %v3344, %v3340
  %v3393 = vpack.c.b16 %v3345, %v3341
  %v3394 = vpack.c.b16 %v3346, %v3342
  %v3395 = vpack.c.b16 %v3347, %v3343
  %v3396 = vpack.c.b16 %v3352, %v3348
  %v3397 = vpack.c.b16 %v3353, %v3349
  %v3398 = vpack.c.b16 %v3354, %v3350
  %v3399 = vpack.c.b16 %v3355, %v3351
  %v3400 = vpack.c.b16 %v3360, %v3356
  %v3401 = vpack.c.b16 %v3361, %v3357
  %v3402 = vpack.c.b16 %v3362, %v3358
  %v3403 = vpack.c.b16 %v3363, %v3359
  %v3404 = vpack.c.b16 %v3368, %v3364
  %v3405 = vpack.c.b16 %v3369, %v3365
  %v3406 = vpack.c.b16 %v3370, %v3366
  %v3407 = vpack.c.b16 %v3371, %v3367
  %v3408 = vpack.c.b16 %v3376, %v3372
  %v3409 = vpack.c.b16 %v3377, %v3373
  %v3410 = vpack.c.b16 %v3378, %v3374
  %v3411 = vpack.c.b16 %v3379, %v3375
  %3444 = vmatprep.subr.bf16.mxu0 %v3409
  %3445 = vmatpush1.bf16.msra.mxu0 %v3408
  %3446 = vmatprep.subr.bf16.mxu0 %v3405
  %3447 = vmatpush1.bf16.msra.mxu0 %v3404
  %3448 = vmatprep.subr.bf16.mxu0 %v3401
  %3449 = vmatpush1.bf16.msra.mxu0 %v3400
  %3450 = vmatprep.subr.bf16.mxu0 %v3397
  %3451 = vmatpush1.bf16.msra.mxu0 %v3396
  %3452 = vmatprep.subr.bf16.mxu0 %v3393
  %3453 = vmatpush1.bf16.msra.mxu0 %v3392
  %3454 = vmatprep.subr.bf16.mxu0 %v3389
  %3455 = vmatpush1.bf16.msra.mxu0 %v3388
  %3456 = vmatprep.subr.bf16.mxu0 %v3385
  %3457 = vmatpush1.bf16.msra.mxu0 %v3384
  %3458 = vmatprep.subr.bf16.mxu0 %v3381
  %3459 = vmatpush1.bf16.msra.mxu0 %v3380
  %3460 = vmatprep.subr.bf16.mxu0 0
  %3461 = vmatpush2.bf16.msra.mxu0 0
  %3462 = vmatprep.subr.bf16.mxu0 0
  %3463 = vmatpush2.bf16.msra.mxu0 0
  %3464 = vmatprep.subr.bf16.mxu0 0
  %3465 = vmatpush2.bf16.msra.mxu0 0
  %3466 = vmatprep.subr.bf16.mxu0 0
  %3467 = vmatpush2.bf16.msra.mxu0 0
  %3468 = vmatprep.subr.bf16.mxu0 0
  %3469 = vmatpush2.bf16.msra.mxu0 0
  %3470 = vmatprep.subr.bf16.mxu0 0
  %3471 = vmatpush2.bf16.msra.mxu0 0
  %3472 = vmatprep.subr.bf16.mxu0 0
  %3473 = vmatpush2.bf16.msra.mxu0 0
  %3474 = vmatprep.subr.bf16.mxu0 0
  %3475 = vmatpush2.bf16.msra.mxu0 0
  %3476 = vmatprep.mubr.bf16.mxu0 0
  %3477 = vmatmul.mubr.bf16.gmra.mxu0 %v3251
  %v3478 = vpop.f32.mrf.mxu0
  %v3479 = vadd.f32 0.0, %v3478
  %v3480 = vpop.f32.mrf.mxu0
  %v3481 = vadd.f32 0.0, %v3480
  %v3482 = vpop.f32.mrf.mxu0
  %v3483 = vpop.f32.mrf.mxu0
  %3484 = vdwg.mxu0
  %3485 = vmatprep.subr.bf16.mxu0 %v3411
  %3486 = vmatpush1.bf16.msra.mxu0 %v3410
  %3487 = vmatprep.subr.bf16.mxu0 %v3407
  %3488 = vmatpush1.bf16.msra.mxu0 %v3406
  %3489 = vmatprep.subr.bf16.mxu0 %v3403
  %3490 = vmatpush1.bf16.msra.mxu0 %v3402
  %3491 = vmatprep.subr.bf16.mxu0 %v3399
  %3492 = vmatpush1.bf16.msra.mxu0 %v3398
  %3493 = vmatprep.subr.bf16.mxu0 %v3395
  %3494 = vmatpush1.bf16.msra.mxu0 %v3394
  %3495 = vmatprep.subr.bf16.mxu0 %v3391
  %3496 = vmatpush1.bf16.msra.mxu0 %v3390
  %3497 = vmatprep.subr.bf16.mxu0 %v3387
  %3498 = vmatpush1.bf16.msra.mxu0 %v3386
  %3499 = vmatprep.subr.bf16.mxu0 %v3383
  %3500 = vmatpush1.bf16.msra.mxu0 %v3382
  %3501 = vmatprep.subr.bf16.mxu0 0
  %3502 = vmatpush2.bf16.msra.mxu0 0
  %3503 = vmatprep.subr.bf16.mxu0 0
  %3504 = vmatpush2.bf16.msra.mxu0 0
  %3505 = vmatprep.subr.bf16.mxu0 0
  %3506 = vmatpush2.bf16.msra.mxu0 0
  %3507 = vmatprep.subr.bf16.mxu0 0
  %3508 = vmatpush2.bf16.msra.mxu0 0
  %3509 = vmatprep.subr.bf16.mxu0 0
  %3510 = vmatpush2.bf16.msra.mxu0 0
  %3511 = vmatprep.subr.bf16.mxu0 0
  %3512 = vmatpush2.bf16.msra.mxu0 0
  %3513 = vmatprep.subr.bf16.mxu0 0
  %3514 = vmatpush2.bf16.msra.mxu0 0
  %3515 = vmatprep.subr.bf16.mxu0 0
  %3516 = vmatpush2.bf16.msra.mxu0 0
  %3517 = vmatprep.mubr.bf16.mxu0 0
  %3518 = vmatmul.mubr.bf16.gmra.mxu0 %v3251
  %v3519 = vpop.f32.mrf.mxu0
  %v3520 = vadd.f32 0.0, %v3519
  %v3521 = vpop.f32.mrf.mxu0
  %v3522 = vadd.f32 0.0, %v3521
  %v3523 = vpop.f32.mrf.mxu0
  %v3524 = vpop.f32.mrf.mxu0
  %3525 = vdwg.mxu0
  %v3526 = vadd.f32 %v3204, %v3479
  %v3527 = vadd.f32 %v3206, %v3481
  %v3528 = vadd.f32 %v3245, %v3520
  %v3529 = vadd.f32 %v3247, %v3522
  %v3530 = vxor.u32 %v3526, 2147483648
  %v3531 = vmul.f32 %v3530, 1.442695
  %v3532 = vpow.pop %v3531
  %v3533 = vadd.f32 %v3532, 1.0
  %v3534 = vrcp.pop %v3533
  %v3535 = vmul.f32 1.0, %v3534
  %v3536 = vxor.u32 %v3527, 2147483648
  %v3537 = vmul.f32 %v3536, 1.442695
  %v3538 = vpow.pop %v3537
  %v3539 = vadd.f32 %v3538, 1.0
  %v3540 = vrcp.pop %v3539
  %v3541 = vmul.f32 1.0, %v3540
  %v3542 = vtanh.pop %v3528
  %v3543 = vxor.u32 %v3529, 2147483648
  %v3544 = vmul.f32 %v3543, 1.442695
  %v3545 = vpow.pop %v3544
  %v3546 = vadd.f32 %v3545, 1.0
  %v3547 = vrcp.pop %v3546
  %v3548 = vmul.f32 1.0, %v3547
  %v3549 = vld [vmem:[#allocation3] sm:$0xff]
  %v3550 = vmul.f32 %v3541, %v3549
  %v3551 = vmul.f32 %v3535, %v3542
  %v3552 = vadd.f32 %v3550, %v3551
  %v3553 = vtanh.pop %v3552
  %v3554 = vmul.f32 %v3548, %v3553
  %3555 = vst [vmem:[#allocation3] sm:$0xff] %v3552
  %v3556 = vpack.c.bf16 %v3554, %v3554
  %3557 = vst [vmem:[#allocation2] sm:$0xf] %v3556
  // Predicated region
  $region30: #{lstm_model_forward.1} parent=0 // pred_check
    %p3558 = pneg %p24
  $region31: #{lstm_model_forward.1} parent=0 // pred_check_branch
    %3560 = sbr.rel (%p3558) target = $region33
  $region32: #{lstm_model_forward.1} parent=0 // pred_region
    %v3561 = vld [vmem:[#allocation2] sm:$0xf]
    %v3562 = vld [vmem:[%s4] sm:$0xf]
    %v3563 = vld [vmem:[%s4 + $0x4] sm:$0xf]
    %v3564 = vld [vmem:[%s4 + $0x8] sm:$0xf]
    %v3565 = vld [vmem:[%s4 + $0xc] sm:$0xf]
    %v3566 = vld [vmem:[%s4 + $0x10] sm:$0xf]
    %v3567 = vld [vmem:[%s4 + $0x14] sm:$0xf]
    %v3568 = vld [vmem:[%s4 + $0x18] sm:$0xf]
    %v3569 = vld [vmem:[%s4 + $0x1c] sm:$0xf]
    %v3570 = vld [vmem:[%s4 + $0x20] sm:$0xf]
    %v3571 = vld [vmem:[%s4 + $0x24] sm:$0xf]
    %v3572 = vld [vmem:[%s4 + $0x28] sm:$0xf]
    %v3573 = vld [vmem:[%s4 + $0x2c] sm:$0xf]
    %v3574 = vld [vmem:[%s4 + $0x30] sm:$0xf]
    %v3575 = vld [vmem:[%s4 + $0x34] sm:$0xf]
    %v3576 = vld [vmem:[%s4 + $0x38] sm:$0xf]
    %v3577 = vld [vmem:[%s4 + $0x3c] sm:$0xf]
    %v3578 = vld [vmem:[%s5] sm:$0x1]
    %v3580 = vlaneseq
    %v3581 = vshrl.u32 %v3580, 7
    %v3582 = vsub.s32 0, %v3581
    %v3583 = vrot.slane %v3578, %v3582
    %v3601 = vunpack.c.l.b16 %v3562
    %v3602 = vunpack.c.l.b16 %v3563
    %v3603 = vunpack.c.l.b16 %v3564
    %v3604 = vunpack.c.l.b16 %v3565
    %v3605 = vunpack.c.l.b16 %v3566
    %v3606 = vunpack.c.l.b16 %v3567
    %v3607 = vunpack.c.l.b16 %v3568
    %v3608 = vunpack.c.l.b16 %v3569
    %v3609 = vunpack.c.l.b16 %v3570
    %v3610 = vunpack.c.l.b16 %v3571
    %v3611 = vunpack.c.l.b16 %v3572
    %v3612 = vunpack.c.l.b16 %v3573
    %v3613 = vunpack.c.l.b16 %v3574
    %v3614 = vunpack.c.l.b16 %v3575
    %v3615 = vunpack.c.l.b16 %v3576
    %v3616 = vunpack.c.l.b16 %v3577
    %v3617 = vpack.c.b16 %v3602, %v3601
    %v3618 = vpack.c.b16 %v3604, %v3603
    %v3619 = vpack.c.b16 %v3606, %v3605
    %v3620 = vpack.c.b16 %v3608, %v3607
    %v3621 = vpack.c.b16 %v3610, %v3609
    %v3622 = vpack.c.b16 %v3612, %v3611
    %v3623 = vpack.c.b16 %v3614, %v3613
    %v3624 = vpack.c.b16 %v3616, %v3615
    %3633 = vmatprep.subr.bf16.mxu0 0
    %3634 = vmatpush1.bf16.msra.mxu0 %v3624
    %3635 = vmatprep.subr.bf16.mxu0 0
    %3636 = vmatpush1.bf16.msra.mxu0 %v3623
    %3637 = vmatprep.subr.bf16.mxu0 0
    %3638 = vmatpush1.bf16.msra.mxu0 %v3622
    %3639 = vmatprep.subr.bf16.mxu0 0
    %3640 = vmatpush1.bf16.msra.mxu0 %v3621
    %3641 = vmatprep.subr.bf16.mxu0 0
    %3642 = vmatpush1.bf16.msra.mxu0 %v3620
    %3643 = vmatprep.subr.bf16.mxu0 0
    %3644 = vmatpush1.bf16.msra.mxu0 %v3619
    %3645 = vmatprep.subr.bf16.mxu0 0
    %3646 = vmatpush1.bf16.msra.mxu0 %v3618
    %3647 = vmatprep.subr.bf16.mxu0 0
    %3648 = vmatpush1.bf16.msra.mxu0 %v3617
    %3649 = vmatprep.subr.bf16.mxu0 0
    %3650 = vmatpush2.bf16.msra.mxu0 0
    %3651 = vmatprep.subr.bf16.mxu0 0
    %3652 = vmatpush2.bf16.msra.mxu0 0
    %3653 = vmatprep.subr.bf16.mxu0 0
    %3654 = vmatpush2.bf16.msra.mxu0 0
    %3655 = vmatprep.subr.bf16.mxu0 0
    %3656 = vmatpush2.bf16.msra.mxu0 0
    %3657 = vmatprep.subr.bf16.mxu0 0
    %3658 = vmatpush2.bf16.msra.mxu0 0
    %3659 = vmatprep.subr.bf16.mxu0 0
    %3660 = vmatpush2.bf16.msra.mxu0 0
    %3661 = vmatprep.subr.bf16.mxu0 0
    %3662 = vmatpush2.bf16.msra.mxu0 0
    %3663 = vmatprep.subr.bf16.mxu0 0
    %3664 = vmatpush2.bf16.msra.mxu0 0
    %3665 = vmatprep.mubr.bf16.mxu0 0
    %3666 = vmatmul.mubr.bf16.gmra.mxu0 %v3561
    %v3667 = vpop.f32.mrf.mxu0
    %v3668 = vadd.f32 %v3583, %v3667
    %v3669 = vpop.f32.mrf.mxu0
    %v3670 = vpop.f32.mrf.mxu0
    %v3671 = vpop.f32.mrf.mxu0
    %3672 = vdwg.mxu0
    %3673 = vst [vmem:[%s6] sm:$0xff] %v3668
  $region33: #{lstm_model_forward.1} parent=0 // pred_fallthru
    _
  // Predicated region
  $region34: #{lstm_model_forward.1} parent=0 // pred_check
    _
  $region35: #{lstm_model_forward.1} parent=0 // pred_check_branch
    %3675 = sbr.rel (0) target = $region37
  $region36: #{lstm_model_forward.1} parent=0 // pred_region
    _
  $region37: #{lstm_model_forward.1} parent=0 // pred_fallthru
    _
  // Predicated region
  $region38: #{lstm_model_forward.1} parent=0 // pred_check
    _
  $region39: #{lstm_model_forward.1} parent=0 // pred_check_branch
    %3677 = sbr.rel (0) target = $region41
  $region40: #{lstm_model_forward.1} parent=0 // pred_region
    _
  $region41: #{lstm_model_forward.1} parent=0 // pred_fallthru
    _

</llo_original>
